<compile_context>
chip_gen: v7x
topology: tpu7x:2x2x1
jax: 0.10.0
libtpu: 0.0.40
codegen_flags: <defaults>
</compile_context>

<pallas_src>
import functools

import jax
import jax.numpy as jnp
from jax.experimental import pallas as pl
from jax.experimental.pallas import tpu as pltpu


def _leaky_relu(v, slope=0.2):
    return jnp.where(v > 0, v, slope * v)


def vanilla_generator_kernel(x_ref, w1_ref, w2_ref, w3_ref, w4_ref, out_ref):
    """Fused 4-layer MLP on one (TM, n_z) bf16 batch tile.

    Weights are bf16 and VMEM-resident across grid steps (constant index_map);
    the four matmuls run on the MXU with f32 accumulation; LeakyReLU (VPU) and
    tanh (EUP) act on the f32 results, casting to bf16 only before the next dot.
    """
    h = jnp.dot(x_ref[...], w1_ref[...], preferred_element_type=jnp.float32)
    h = _leaky_relu(h).astype(jnp.bfloat16)
    h = jnp.dot(h, w2_ref[...], preferred_element_type=jnp.float32)
    h = _leaky_relu(h).astype(jnp.bfloat16)
    h = jnp.dot(h, w3_ref[...], preferred_element_type=jnp.float32)
    h = _leaky_relu(h).astype(jnp.bfloat16)
    y = jnp.tanh(jnp.dot(h, w4_ref[...], preferred_element_type=jnp.float32))
    out_ref[...] = y.astype(out_ref.dtype)


def _round_up(x, m):
    return ((x + m - 1) // m) * m


def _pick_tm(B, tm_max=512):
    """Batch tile size.

    - Single full-batch tile for B <= 256 (full-extent blocks are always legal,
      and splitting tiny batches only adds per-step overhead).
    - Otherwise >= 2 grid steps (lights up both v7x TensorCores via the
      "parallel" axis), each tile a multiple of 16 rows (bf16 sublane packing)
      and capped near tm_max, sized against v7x's 64 MiB VMEM with
      double-buffered output tiles and weights.
    """
    if B <= 256:
        return B
    if B <= 2 * tm_max:
        return min(_round_up(pl.cdiv(B, 2), 16), B)
    return tm_max


@functools.partial(jax.jit, static_argnames=("n_c", "tm"))
def vanilla_generator_forward(x, w1, w2, w3, w4, n_c=1, tm=None):
    """x: (B, n_z). wi: (in, out) weights (pass bf16 to avoid per-call casts).
    Returns (B, n_c, 32, 32) float32, matching the PyTorch module."""
    B, n_z = x.shape
    n_out = w4.shape[1]
    assert n_out == n_c * 1024, "n_out must equal n_c * 1024 to reshape to 32x32"

    # bf16 weights for the MXU. init_params already stores bf16, so these
    # astypes are no-ops under jit (no per-call HBM cast traffic).
    w1b, w2b, w3b, w4b = (w.astype(jnp.bfloat16) for w in (w1, w2, w3, w4))
    x_bf = x.astype(jnp.bfloat16)  # halves the x-tile DMA

    tm_eff = _pick_tm(B) if tm is None else tm
    if tm_eff >= B:
        tm_eff = B  # one full-batch tile (full-dim block is always legal)
    elif tm_eff % 16:
        tm_eff = min(_round_up(tm_eff, 16), B)
    n_tiles = pl.cdiv(B, tm_eff)  # last block may be partial; OOB writes masked

    weight_elems = n_z * 256 + 256 * 512 + 512 * 1024 + 1024 * n_out
    cost = pl.CostEstimate(
        flops=2 * B * weight_elems,
        transcendentals=B * n_out,
        bytes_accessed=B * n_z * 2 + B * n_out * 4 + weight_elems * 2,
    )

    flat = pl.pallas_call(
        vanilla_generator_kernel,
        out_shape=jax.ShapeDtypeStruct((B, n_out), jnp.float32),
        grid=(n_tiles,),
        in_specs=[
            pl.BlockSpec((tm_eff, n_z), lambda i: (i, 0)),   # batch tile, pipelined
            pl.BlockSpec((n_z, 256), lambda i: (0, 0)),      # weights: constant block
            pl.BlockSpec((256, 512), lambda i: (0, 0)),      #  -> fetched once,
            pl.BlockSpec((512, 1024), lambda i: (0, 0)),     #     VMEM-resident
            pl.BlockSpec((1024, n_out), lambda i: (0, 0)),
        ],
        out_specs=pl.BlockSpec((tm_eff, n_out), lambda i: (i, 0)),
        compiler_params=pltpu.CompilerParams(
            dimension_semantics=("parallel",),   # megacore-shardable batch axis
            vmem_limit_bytes=48 * 1024 * 1024,   # fits v7x 64 MiB with headroom
        ),
        cost_estimate=cost,
    )(x_bf, w1b, w2b, w3b, w4b)

    # PyTorch: x.view(-1, n_c, 32, 32) -> NCHW
    return flat.reshape(-1, n_c, 32, 32)


def init_params(key, n_z, n_c=1, n_out_per_c=1024, dtype=jnp.bfloat16):
    """Deterministic parameter init. Weights stored as (in, out) = W_pytorch.T,
    in bf16 by default so the forward's per-call cast is a no-op."""
    n_out = n_c * n_out_per_c
    k1, k2, k3, k4 = jax.random.split(key, 4)

    def linear_w(k, fan_in, fan_out):
        bound = 1.0 / jnp.sqrt(fan_in)
        w = jax.random.uniform(
            k, (fan_in, fan_out), jnp.float32, minval=-bound, maxval=bound
        )
        return w.astype(dtype)

    w1 = linear_w(k1, n_z, 256)
    w2 = linear_w(k2, 256, 512)
    w3 = linear_w(k3, 512, 1024)
    w4 = linear_w(k4, 1024, n_out)
    return w1, w2, w3, w4


def reference_forward(x, w1, w2, w3, w4, n_c=1):
    """Pure-JAX reference mirroring the kernel's bf16-input / f32-accumulate matmuls."""

    def mm(a, w):
        return jnp.dot(
            a.astype(jnp.bfloat16),
            w.astype(jnp.bfloat16),
            preferred_element_type=jnp.float32,
        )

    h = _leaky_relu(mm(x, w1))
    h = _leaky_relu(mm(h, w2))
    h = _leaky_relu(mm(h, w3))
    y = jnp.tanh(mm(h, w4))
    return y.reshape(-1, n_c, 32, 32)


if __name__ == "__main__":
    key = jax.random.PRNGKey(0)
    k_x, k_p = jax.random.split(key)

    # B deliberately not a multiple of the tile: exercises the masked partial
    # last block and a >=2-step "parallel" grid (v7x megacore path).
    B, n_z, n_c = 300, 64, 1
    x = jax.random.normal(k_x, (B, n_z), dtype=jnp.float32)
    w1, w2, w3, w4 = init_params(k_p, n_z, n_c=n_c)  # bf16 weights (hoisted cast)

    ref = reference_forward(x, w1, w2, w3, w4, n_c=n_c)

    # Default tiling (auto TM, 2 grid steps for B=300).
    out = vanilla_generator_forward(x, w1, w2, w3, w4, n_c=n_c)
    out = jax.block_until_ready(out)
    assert out.shape == (B, n_c, 32, 32), out.shape
    assert jnp.allclose(out, ref, atol=1e-2, rtol=1e-2), (
        "mismatch vs reference; max abs err = "
        f"{float(jnp.max(jnp.abs(out - ref)))}"
    )

    # Explicit small tile: 3-step grid with a 44-row partial last block.
    out2 = vanilla_generator_forward(x, w1, w2, w3, w4, n_c=n_c, tm=128)
    out2 = jax.block_until_ready(out2)
    assert jnp.allclose(out2, ref, atol=1e-2, rtol=1e-2), (
        "tm=128 mismatch vs reference; max abs err = "
        f"{float(jnp.max(jnp.abs(out2 - ref)))}"
    )

    print("KERNEL_OK")
</pallas_src>

<mosaic_0001>
module attributes {stable_mosaic.version = 11 : i64} {
  func.func @vanilla_generator_kernel(%arg0: i32, %arg1: memref<160x64xbf16, #tpu.memory_space<vmem>>, %arg2: memref<64x256xbf16, #tpu.memory_space<vmem>>, %arg3: memref<256x512xbf16, #tpu.memory_space<vmem>>, %arg4: memref<512x1024xbf16, #tpu.memory_space<vmem>>, %arg5: memref<1024x1024xbf16, #tpu.memory_space<vmem>>, %arg6: memref<160x1024xf32, #tpu.memory_space<vmem>>) attributes {dimension_semantics = [#tpu.dimension_semantics<parallel>], iteration_bounds = array<i64: 2>, scalar_prefetch = 0 : i64, scratch_operands = 0 : i64, tpu.core_type = #tpu.core_type<tc>, window_params = [{transform_indices = @transform_0, window_bounds = array<i64: 160, 64>}, {pipeline_mode = #tpu.pipeline_mode<synchronous>, transform_indices = @transform_1, window_bounds = array<i64: 64, 256>}, {pipeline_mode = #tpu.pipeline_mode<synchronous>, transform_indices = @transform_2, window_bounds = array<i64: 256, 512>}, {pipeline_mode = #tpu.pipeline_mode<synchronous>, transform_indices = @transform_3, window_bounds = array<i64: 512, 1024>}, {pipeline_mode = #tpu.pipeline_mode<synchronous>, transform_indices = @transform_4, window_bounds = array<i64: 1024, 1024>}, {transform_indices = @transform_5, window_bounds = array<i64: 160, 1024>}]} {
    %c0 = arith.constant 0 : index
    %c0_0 = arith.constant 0 : index
    %0 = vector.load %arg1[%c0, %c0_0] : memref<160x64xbf16, #tpu.memory_space<vmem>>, vector<160x64xbf16>
    %c0_1 = arith.constant 0 : index
    %c0_2 = arith.constant 0 : index
    %1 = vector.load %arg2[%c0_1, %c0_2] : memref<64x256xbf16, #tpu.memory_space<vmem>>, vector<64x256xbf16>
    %cst = arith.constant dense<0.000000e+00> : vector<160x256xf32>
    %2 = tpu.matmul %0, %1, %cst {dimension_numbers = #tpu.dot_dimension_numbers<[1], [0], [0], [1], [0, 0, 1, 1], [], []>} : vector<160x64xbf16>, vector<64x256xbf16>, vector<160x256xf32> -> vector<160x256xf32>
    %cst_3 = arith.constant 0.000000e+00 : f32
    %3 = vector.broadcast %cst_3 : f32 to vector<160x256xf32>
    %4 = arith.cmpf ogt, %2, %3 : vector<160x256xf32>
    %cst_4 = arith.constant 2.000000e-01 : f32
    %5 = vector.broadcast %cst_4 : f32 to vector<160x256xf32>
    %6 = arith.mulf %5, %2 : vector<160x256xf32>
    %7 = arith.select %4, %2, %6 : vector<160x256xi1>, vector<160x256xf32>
    %8 = arith.truncf %7 : vector<160x256xf32> to vector<160x256xbf16>
    %c0_5 = arith.constant 0 : index
    %c0_6 = arith.constant 0 : index
    %9 = vector.load %arg3[%c0_5, %c0_6] : memref<256x512xbf16, #tpu.memory_space<vmem>>, vector<256x512xbf16>
    %cst_7 = arith.constant dense<0.000000e+00> : vector<160x512xf32>
    %10 = tpu.matmul %8, %9, %cst_7 {dimension_numbers = #tpu.dot_dimension_numbers<[1], [0], [0], [1], [0, 0, 1, 1], [], []>} : vector<160x256xbf16>, vector<256x512xbf16>, vector<160x512xf32> -> vector<160x512xf32>
    %cst_8 = arith.constant 0.000000e+00 : f32
    %11 = vector.broadcast %cst_8 : f32 to vector<160x512xf32>
    %12 = arith.cmpf ogt, %10, %11 : vector<160x512xf32>
    %cst_9 = arith.constant 2.000000e-01 : f32
    %13 = vector.broadcast %cst_9 : f32 to vector<160x512xf32>
    %14 = arith.mulf %13, %10 : vector<160x512xf32>
    %15 = arith.select %12, %10, %14 : vector<160x512xi1>, vector<160x512xf32>
    %16 = arith.truncf %15 : vector<160x512xf32> to vector<160x512xbf16>
    %c0_10 = arith.constant 0 : index
    %c0_11 = arith.constant 0 : index
    %17 = vector.load %arg4[%c0_10, %c0_11] : memref<512x1024xbf16, #tpu.memory_space<vmem>>, vector<512x1024xbf16>
    %cst_12 = arith.constant dense<0.000000e+00> : vector<160x1024xf32>
    %18 = tpu.matmul %16, %17, %cst_12 {dimension_numbers = #tpu.dot_dimension_numbers<[1], [0], [0], [1], [0, 0, 1, 1], [], []>} : vector<160x512xbf16>, vector<512x1024xbf16>, vector<160x1024xf32> -> vector<160x1024xf32>
    %cst_13 = arith.constant 0.000000e+00 : f32
    %19 = vector.broadcast %cst_13 : f32 to vector<160x1024xf32>
    %20 = arith.cmpf ogt, %18, %19 : vector<160x1024xf32>
    %cst_14 = arith.constant 2.000000e-01 : f32
    %21 = vector.broadcast %cst_14 : f32 to vector<160x1024xf32>
    %22 = arith.mulf %21, %18 : vector<160x1024xf32>
    %23 = arith.select %20, %18, %22 : vector<160x1024xi1>, vector<160x1024xf32>
    %24 = arith.truncf %23 : vector<160x1024xf32> to vector<160x1024xbf16>
    %c0_15 = arith.constant 0 : index
    %c0_16 = arith.constant 0 : index
    %25 = vector.load %arg5[%c0_15, %c0_16] : memref<1024x1024xbf16, #tpu.memory_space<vmem>>, vector<1024x1024xbf16>
    %cst_17 = arith.constant dense<0.000000e+00> : vector<160x1024xf32>
    %26 = tpu.matmul %24, %25, %cst_17 {dimension_numbers = #tpu.dot_dimension_numbers<[1], [0], [0], [1], [0, 0, 1, 1], [], []>} : vector<160x1024xbf16>, vector<1024x1024xbf16>, vector<160x1024xf32> -> vector<160x1024xf32>
    %27 = math.tanh %26 : vector<160x1024xf32>
    %c0_18 = arith.constant 0 : index
    %c0_19 = arith.constant 0 : index
    %28 = vector.load %arg6[%c0_18, %c0_19] : memref<160x1024xf32, #tpu.memory_space<vmem>>, vector<160x1024xf32>
    tpu.vector_store %arg6[%c0_18, %c0_19], %27 {strides = array<i32>} : memref<160x1024xf32, #tpu.memory_space<vmem>>, vector<160x1024xf32>,
    return
  }
  func.func @transform_0(%arg0: i32) -> (i32, i32) {
    %c0_i32 = arith.constant 0 : i32
    %c0_i32_0 = arith.constant 0 : i32
    return %arg0, %c0_i32 : i32, i32
  }
  func.func @transform_1(%arg0: i32) -> (i32, i32) {
    %c0_i32 = arith.constant 0 : i32
    %c0_i32_0 = arith.constant 0 : i32
    %c0_i32_1 = arith.constant 0 : i32
    return %c0_i32, %c0_i32_0 : i32, i32
  }
  func.func @transform_2(%arg0: i32) -> (i32, i32) {
    %c0_i32 = arith.constant 0 : i32
    %c0_i32_0 = arith.constant 0 : i32
    %c0_i32_1 = arith.constant 0 : i32
    return %c0_i32, %c0_i32_0 : i32, i32
  }
  func.func @transform_3(%arg0: i32) -> (i32, i32) {
    %c0_i32 = arith.constant 0 : i32
    %c0_i32_0 = arith.constant 0 : i32
    %c0_i32_1 = arith.constant 0 : i32
    return %c0_i32, %c0_i32_0 : i32, i32
  }
  func.func @transform_4(%arg0: i32) -> (i32, i32) {
    %c0_i32 = arith.constant 0 : i32
    %c0_i32_0 = arith.constant 0 : i32
    %c0_i32_1 = arith.constant 0 : i32
    return %c0_i32, %c0_i32_0 : i32, i32
  }
  func.func @transform_5(%arg0: i32) -> (i32, i32) {
    %c0_i32 = arith.constant 0 : i32
    %c0_i32_0 = arith.constant 0 : i32
    return %arg0, %c0_i32 : i32, i32
  }
}

</mosaic_0001>

<llo_original>
// kernel: vanilla_generator_forward.1
$region0: #{vanilla_generator_forward.1}
  #allocation0 [shape = 'u32[]', space=smem, size = 0x4, offset = 0x4, fixed_abs, tag = 'smem constant byte address 0x4 - core index']
  #allocation1 [shape = 'u32[144,128]{1,0:T(1,128)}', space=vmem, size = 0x12000, scoped, tag = 'internal scratch']
  %s0 = inlined_call_operand.vmem [shape: bf16[300,64], index: 0, kind: input, shape index: {}]
  %s1 = inlined_call_operand.hbm [shape: bf16[64,256], index: 1, kind: input, shape index: {}]
  %s2 = inlined_call_operand.hbm [shape: bf16[256,512], index: 2, kind: input, shape index: {}]
  %s3 = inlined_call_operand.hbm [shape: bf16[512,1024], index: 3, kind: input, shape index: {}]
  %s4 = inlined_call_operand.hbm [shape: bf16[1024,1024], index: 4, kind: input, shape index: {}]
  %s5 = inlined_call_operand.vmem [shape: f32[300,1024], index: 5, kind: output, shape index: {}]
  %s6 = sld [smem:[#allocation0]]
  $region95: #{vanilla_generator_forward.1} parent=0
    _
  %s8 = ssub.s32 1, %s6
  %s9 = scalar_select 0, %s8, %s6
  $region1: #{vanilla_generator_forward.1} parent=0
    #allocation2 [shape = 'u8[32768]{0}', space=vmem, size = 0x8000, scoped, tag = 'input window, operand 1, single buffered']
    #allocation3 [shape = 's32[2]{0}', space=sflag, size = 0x8, scoped, tag = 'scoped memory for vanilla_generator_forward.1']
    #allocation4 [shape = 'u8[262144]{0}', space=vmem, size = 0x40000, scoped, tag = 'input window, operand 2, single buffered']
    #allocation5 [shape = 's32[1]{0}', space=sflag, size = 0x4, scoped, tag = 'scoped memory for vanilla_generator_forward.1']
    #allocation6 [shape = 'u8[1048576]{0}', space=vmem, size = 0x100000, scoped, tag = 'input window, operand 3, single buffered']
    #allocation7 [shape = 'u8[2097152]{0}', space=vmem, size = 0x200000, scoped, tag = 'input window, operand 4, single buffered']
    #allocation8 [shape = 's32[1]{0}', space=sflag, size = 0x4, scoped, tag = 'scoped memory for vanilla_generator_forward.1']
    #allocation9 [shape = 'u8[1310720]{0}', space=vmem, size = 0x140000, scoped, tag = 'output window, operand 0']
    %10 = vsyncpa [#allocation3], 0
    %11 = vsyncpa [#allocation5], 0
    %12 = vsyncpa [#allocation8], 0
    loop: start=0, step=1, limit=4
    $region2: #{vanilla_generator_forward.1} parent=1 // loop_pre_header
      _
    $region3: #{vanilla_generator_forward.1} parent=1 // loop_header
      %s14 = sphi 0, %s18
      %p15 = scmp.ge.s32.totalorder %s14, 4
      %s24 = sphi 0, %s26
      %s27 = sphi 0, %s24
      %s28 = sphi 0, %s27
      %s44 = sphi 0, %s28
      %s48 = sphi 0, %s48
      %s50 = sphi 0, %s48
      %s51 = sphi 0, %s50
      %s65 = sphi 0, %s51
      %s69 = sphi 0, %s69
      %s71 = sphi 0, %s69
      %s72 = sphi 0, %s71
      %s86 = sphi 0, %s72
      %s90 = sphi 0, %s90
      %s92 = sphi 0, %s90
      %s93 = sphi 0, %s92
      %s107 = sphi 0, %s93
      %s111 = sphi 0, %s111
      %s113 = sphi 0, %s111
      %s114 = sphi 0, %s113
      %s128 = sphi 0, %s114
      %s134 = sphi 0, %s136
      %s137 = sphi 0, %s134
      %s138 = sphi 0, %s137
      %s154 = sphi 0, %s138
    $region4: #{vanilla_generator_forward.1} parent=1 // loop_header_branch
      %17 = sbr.rel (%p15) target = $region8
    $region5: #{vanilla_generator_forward.1} parent=1 // loop_body
      %s19 = ssub.s32 %s14, 1
      %s20 = ssub.s32 %s14, 2
      %s21 = sadd.s32 %s14, 1
      %s22 = ssub.s32 %s14, %s21
      %p23 = scmp.eq.s32.totalorder %s22, 0
      %s25 = sadd.s32 %s24, 1
      %s26 = scalar_select %p23, %s24, %s25
      %p29 = pneg %p23
      %p30 = scmp.eq.s32.totalorder %s14, 1
      %p31 = por %p29, %p30
      %p32 = scmp.ne.s32.totalorder %s24, %s27
      %p33 = scmp.eq.s32.totalorder %s14, 0
      %p34 = por %p32, %p33
      %p35 = scmp.ne.s32.totalorder %s24, %s27
      %p36 = scmp.eq.s32.totalorder %s19, 1
      %p37 = por %p35, %p36
      %p38 = scmp.ne.s32.totalorder %s27, %s28
      %p39 = scmp.eq.s32.totalorder %s19, 0
      %p40 = por %p38, %p39
      %p41 = scmp.ne.s32.totalorder %s27, %s28
      %p42 = scmp.eq.s32.totalorder %s20, 1
      %p43 = por %p41, %p42
      %p45 = scmp.ne.s32.totalorder %s28, %s44
      %p46 = scmp.eq.s32.totalorder %s20, 0
      %p47 = por %p45, %p46
      %s49 = sadd.s32 %s48, 1
      %p52 = scmp.eq.s32.totalorder %s14, 1
      %p53 = scmp.ne.s32.totalorder %s48, %s50
      %p54 = scmp.eq.s32.totalorder %s14, 0
      %p55 = por %p53, %p54
      %p56 = scmp.ne.s32.totalorder %s48, %s50
      %p57 = scmp.eq.s32.totalorder %s19, 1
      %p58 = por %p56, %p57
      %p59 = scmp.ne.s32.totalorder %s50, %s51
      %p60 = scmp.eq.s32.totalorder %s19, 0
      %p61 = por %p59, %p60
      %p62 = scmp.ne.s32.totalorder %s50, %s51
      %p63 = scmp.eq.s32.totalorder %s20, 1
      %p64 = por %p62, %p63
      %p66 = scmp.ne.s32.totalorder %s51, %s65
      %p67 = scmp.eq.s32.totalorder %s20, 0
      %p68 = por %p66, %p67
      %s70 = sadd.s32 %s69, 1
      %p73 = scmp.eq.s32.totalorder %s14, 1
      %p74 = scmp.ne.s32.totalorder %s69, %s71
      %p75 = scmp.eq.s32.totalorder %s14, 0
      %p76 = por %p74, %p75
      %p77 = scmp.ne.s32.totalorder %s69, %s71
      %p78 = scmp.eq.s32.totalorder %s19, 1
      %p79 = por %p77, %p78
      %p80 = scmp.ne.s32.totalorder %s71, %s72
      %p81 = scmp.eq.s32.totalorder %s19, 0
      %p82 = por %p80, %p81
      %p83 = scmp.ne.s32.totalorder %s71, %s72
      %p84 = scmp.eq.s32.totalorder %s20, 1
      %p85 = por %p83, %p84
      %p87 = scmp.ne.s32.totalorder %s72, %s86
      %p88 = scmp.eq.s32.totalorder %s20, 0
      %p89 = por %p87, %p88
      %s91 = sadd.s32 %s90, 1
      %p94 = scmp.eq.s32.totalorder %s14, 1
      %p95 = scmp.ne.s32.totalorder %s90, %s92
      %p96 = scmp.eq.s32.totalorder %s14, 0
      %p97 = por %p95, %p96
      %p98 = scmp.ne.s32.totalorder %s90, %s92
      %p99 = scmp.eq.s32.totalorder %s19, 1
      %p100 = por %p98, %p99
      %p101 = scmp.ne.s32.totalorder %s92, %s93
      %p102 = scmp.eq.s32.totalorder %s19, 0
      %p103 = por %p101, %p102
      %p104 = scmp.ne.s32.totalorder %s92, %s93
      %p105 = scmp.eq.s32.totalorder %s20, 1
      %p106 = por %p104, %p105
      %p108 = scmp.ne.s32.totalorder %s93, %s107
      %p109 = scmp.eq.s32.totalorder %s20, 0
      %p110 = por %p108, %p109
      %s112 = sadd.s32 %s111, 1
      %p115 = scmp.eq.s32.totalorder %s14, 1
      %p116 = scmp.ne.s32.totalorder %s111, %s113
      %p117 = scmp.eq.s32.totalorder %s14, 0
      %p118 = por %p116, %p117
      %p119 = scmp.ne.s32.totalorder %s111, %s113
      %p120 = scmp.eq.s32.totalorder %s19, 1
      %p121 = por %p119, %p120
      %p122 = scmp.ne.s32.totalorder %s113, %s114
      %p123 = scmp.eq.s32.totalorder %s19, 0
      %p124 = por %p122, %p123
      %p125 = scmp.ne.s32.totalorder %s113, %s114
      %p126 = scmp.eq.s32.totalorder %s20, 1
      %p127 = por %p125, %p126
      %p129 = scmp.ne.s32.totalorder %s114, %s128
      %p130 = scmp.eq.s32.totalorder %s20, 0
      %p131 = por %p129, %p130
      %s132 = ssub.s32 %s14, %s21
      %p133 = scmp.eq.s32.totalorder %s132, 0
      %s135 = sadd.s32 %s134, 1
      %s136 = scalar_select %p133, %s134, %s135
      %p139 = pneg %p133
      %p140 = scmp.eq.s32.totalorder %s14, 1
      %p141 = por %p139, %p140
      %p142 = scmp.ne.s32.totalorder %s134, %s137
      %p143 = scmp.eq.s32.totalorder %s14, 0
      %p144 = por %p142, %p143
      %p145 = scmp.ne.s32.totalorder %s134, %s137
      %p146 = scmp.eq.s32.totalorder %s19, 1
      %p147 = por %p145, %p146
      %p148 = scmp.ne.s32.totalorder %s137, %s138
      %p149 = scmp.eq.s32.totalorder %s19, 0
      %p150 = por %p148, %p149
      %p151 = scmp.ne.s32.totalorder %s137, %s138
      %p152 = scmp.eq.s32.totalorder %s20, 1
      %p153 = por %p151, %p152
      %p155 = scmp.ne.s32.totalorder %s138, %s154
      %p156 = scmp.eq.s32.totalorder %s20, 0
      %p157 = por %p155, %p156
      %p158 = scmp.le.s32.totalorder 1, %s14
      %p159 = scmp.lt.s32.totalorder %s14, 3
      %p160 = pnand %p158, %p159
      %p161 = pneg %p160
      // Predicated region
      $region9: #{vanilla_generator_forward.1} parent=5 // pred_check
        _
      $region10: #{vanilla_generator_forward.1} parent=5 // pred_check_branch
        %163 = sbr.rel (%p160) target = $region12
      $region11: #{vanilla_generator_forward.1} parent=5 // pred_region
        %s164 = ssub.s32 %s14, 1
        // Predicated region
        $region13: #{vanilla_generator_forward.1} parent=11 // pred_check
          %p165 = pneg %p61
        $region14: #{vanilla_generator_forward.1} parent=11 // pred_check_branch
          %167 = sbr.rel (%p165) target = $region16
        $region15: #{vanilla_generator_forward.1} parent=11 // pred_region
          %s169 = ssub.s32 1024, 1024
          %170 = vsyncadd [#allocation3], %s169
          %s171 = sshll.u32 [#allocation2], 4
          %s172 = int_to_ptr.vmem [resolvable:$true] %s171
          %177 = dma.hbm_to_vmem [thread:$0]  %s1, 1024, %s172, [#allocation3], 128, 128, 8
        $region16: #{vanilla_generator_forward.1} parent=11 // pred_fallthru
          _
        // Predicated region
        $region17: #{vanilla_generator_forward.1} parent=11 // pred_check
          %p178 = pneg %p82
        $region18: #{vanilla_generator_forward.1} parent=11 // pred_check_branch
          %180 = sbr.rel (%p178) target = $region20
        $region19: #{vanilla_generator_forward.1} parent=11 // pred_region
          %s182 = ssub.s32 8192, 8192
          %183 = vsyncadd [#allocation5], %s182
          %s184 = sshll.u32 [#allocation4], 4
          %s185 = int_to_ptr.vmem [resolvable:$true] %s184
          %190 = dma.hbm_to_vmem [thread:$0]  %s2, 8192, %s185, [#allocation5], 256, 256, 16
        $region20: #{vanilla_generator_forward.1} parent=11 // pred_fallthru
          _
        // Predicated region
        $region21: #{vanilla_generator_forward.1} parent=11 // pred_check
          %p191 = pneg %p103
        $region22: #{vanilla_generator_forward.1} parent=11 // pred_check_branch
          %193 = sbr.rel (%p191) target = $region24
        $region23: #{vanilla_generator_forward.1} parent=11 // pred_region
          %s195 = ssub.s32 32768, 32768
          %196 = vsyncadd [#allocation5], %s195
          %s197 = sshll.u32 [#allocation6], 4
          %s198 = int_to_ptr.vmem [resolvable:$true] %s197
          %203 = dma.hbm_to_vmem [thread:$0]  %s3, 32768, %s198, [#allocation5], 512, 512, 32
        $region24: #{vanilla_generator_forward.1} parent=11 // pred_fallthru
          _
        // Predicated region
        $region25: #{vanilla_generator_forward.1} parent=11 // pred_check
          %p204 = pneg %p124
        $region26: #{vanilla_generator_forward.1} parent=11 // pred_check_branch
          %206 = sbr.rel (%p204) target = $region28
        $region27: #{vanilla_generator_forward.1} parent=11 // pred_region
          %s208 = ssub.s32 65536, 65536
          %209 = vsyncadd [#allocation8], %s208
          %s210 = sshll.u32 [#allocation7], 4
          %s211 = int_to_ptr.vmem [resolvable:$true] %s210
          %216 = dma.hbm_to_vmem [thread:$0]  %s4, 65536, %s211, [#allocation8], 512, 512, 32
        $region28: #{vanilla_generator_forward.1} parent=11 // pred_fallthru
          _
      $region12: #{vanilla_generator_forward.1} parent=5 // pred_fallthru
        _
      %p217 = scmp.lt.s32.totalorder %s14, 2
      // Predicated region
      $region29: #{vanilla_generator_forward.1} parent=5 // pred_check
        %p218 = pneg %p217
      $region30: #{vanilla_generator_forward.1} parent=5 // pred_check_branch
        %220 = sbr.rel (%p218) target = $region32
      $region31: #{vanilla_generator_forward.1} parent=5 // pred_region
        // Predicated region
        $region33: #{vanilla_generator_forward.1} parent=31 // pred_check
          %p221 = pneg %p34
        $region34: #{vanilla_generator_forward.1} parent=31 // pred_check_branch
          %223 = sbr.rel (%p221) target = $region36
        $region35: #{vanilla_generator_forward.1} parent=31 // pred_region
          %s224 = smul.u32 20, %s14
          %s225 = ssub.s32 38, %s224
          %p226 = scmp.lt.s32.totalorder %s225, 20
          %s227 = scalar_select %p226, %s225, 20
          %s228 = smul.u32 64, %s227
          %p229 = scmp.lt.s32.totalorder %s224, 37
          %s230 = scalar_select %p229, %s224, 37
          %s231 = smul.addr %s230, 4
          %s232 = scalar_lea.vmem %s0, %s231
          %s233 = smul.u32 20, %s14
          %s234 = ssub.s32 38, %s233
          %p235 = scmp.lt.s32.totalorder %s234, 20
          %s236 = scalar_select %p235, %s234, 20
          %s237 = smul.u32 64, %s236
        $region36: #{vanilla_generator_forward.1} parent=31 // pred_fallthru
          _
      $region32: #{vanilla_generator_forward.1} parent=5 // pred_fallthru
        _
      %p238 = scmp.le.s32.totalorder 1, %s14
      %p239 = scmp.lt.s32.totalorder %s14, 3
      %p240 = pnand %p238, %p239
      %p241 = pneg %p240
      // Predicated region
      $region37: #{vanilla_generator_forward.1} parent=5 // pred_check
        _
      $region38: #{vanilla_generator_forward.1} parent=5 // pred_check_branch
        %243 = sbr.rel (%p240) target = $region40
      $region39: #{vanilla_generator_forward.1} parent=5 // pred_region
        %s244 = ssub.s32 %s14, 1
        // Predicated region
        $region41: #{vanilla_generator_forward.1} parent=39 // pred_check
          %p245 = pneg %p61
        $region42: #{vanilla_generator_forward.1} parent=39 // pred_check_branch
          %247 = sbr.rel (%p245) target = $region44
        $region43: #{vanilla_generator_forward.1} parent=39 // pred_region
          %248 = dma.done [#allocation3], 1024
        $region44: #{vanilla_generator_forward.1} parent=39 // pred_fallthru
          _
        // Predicated region
        $region45: #{vanilla_generator_forward.1} parent=39 // pred_check
          %p249 = pneg %p82
        $region46: #{vanilla_generator_forward.1} parent=39 // pred_check_branch
          %251 = sbr.rel (%p249) target = $region48
        $region47: #{vanilla_generator_forward.1} parent=39 // pred_region
          %252 = dma.done [#allocation5], 8192
        $region48: #{vanilla_generator_forward.1} parent=39 // pred_fallthru
          _
        // Predicated region
        $region49: #{vanilla_generator_forward.1} parent=39 // pred_check
          %p253 = pneg %p103
        $region50: #{vanilla_generator_forward.1} parent=39 // pred_check_branch
          %255 = sbr.rel (%p253) target = $region52
        $region51: #{vanilla_generator_forward.1} parent=39 // pred_region
          %256 = dma.done [#allocation5], 32768
        $region52: #{vanilla_generator_forward.1} parent=39 // pred_fallthru
          _
        // Predicated region
        $region53: #{vanilla_generator_forward.1} parent=39 // pred_check
          %p257 = pneg %p124
        $region54: #{vanilla_generator_forward.1} parent=39 // pred_check_branch
          %259 = sbr.rel (%p257) target = $region56
        $region55: #{vanilla_generator_forward.1} parent=39 // pred_region
          %260 = dma.done [#allocation8], 65536
        $region56: #{vanilla_generator_forward.1} parent=39 // pred_fallthru
          _
        %s261 = smul.u32 20, %s19
        %s262 = ssub.s32 38, %s261
        %p263 = scmp.lt.s32.totalorder %s262, 20
        %s264 = scalar_select %p263, %s262, 20
        %s265 = smul.u32 64, %s264
        %p266 = scmp.lt.s32.totalorder %s261, 37
        %s267 = scalar_select %p266, %s261, 37
        %s268 = smul.addr %s267, 4
        %s269 = scalar_lea.vmem %s0, %s268
        %p270 = pneg %p40
        %p271 = pneg %p37
        %p272 = pneg %p61
        %p273 = pneg %p58
        %p274 = pneg %p82
        %p275 = pneg %p79
        %p276 = pneg %p103
        %p277 = pneg %p100
        %p278 = pneg %p124
        %p279 = pneg %p121
        %p280 = pneg %p150
        %p281 = pneg %p147
        %s282 = sand.u32 %s137, 1
        %s283 = sand.u32 %s137, 1
        %s284 = smul.addr %s283, 1280
        %s285 = scalar_lea.vmem [#allocation9], %s284
        %s286 = smul.u32 20, %s19
        %s287 = ssub.s32 38, %s286
        %p288 = scmp.lt.s32.totalorder %s287, 20
        %s289 = scalar_select %p288, %s287, 20
        %s290 = smul.u32 64, %s289
        %p291 = scmp.lt.s32.totalorder %s286, 37
        %s292 = scalar_select %p291, %s286, 37
        %s293 = smul.addr %s292, 4
        %s294 = scalar_lea.vmem %s0, %s293
        %s295 = smul.u32 20, %s19
        %s296 = ssub.s32 38, %s295
        %p297 = scmp.lt.s32.totalorder %s296, 20
        %s298 = scalar_select %p297, %s296, 20
        %s299 = smul.u32 64, %s298
        %s300 = smul.u32 20, %s19
        %s301 = ssub.s32 38, %s300
        %p302 = scmp.lt.s32.totalorder %s301, 20
        %s303 = scalar_select %p302, %s301, 20
        %s304 = smul.u32 128, %s303
        %s305 = smul.u32 %s304, 8
        %v307 = vld [vmem:[%s294] sm:$0xf]
        %v308 = vld [vmem:[%s294 + $0x4] sm:$0xf]
        %v309 = vld [vmem:[%s294 + $0x8] sm:$0xf]
        %v310 = vld [vmem:[%s294 + $0xc] sm:$0xf]
        %v311 = vld [vmem:[%s294 + $0x10] sm:$0xf]
        %v312 = vld [vmem:[%s294 + $0x14] sm:$0xf]
        %v313 = vld [vmem:[%s294 + $0x18] sm:$0xf]
        %v314 = vld [vmem:[%s294 + $0x1c] sm:$0xf]
        %v315 = vld [vmem:[%s294 + $0x20] sm:$0xf]
        %v316 = vld [vmem:[%s294 + $0x24] sm:$0xf]
        %v317 = vld [vmem:[%s294 + $0x28] sm:$0xf]
        %v318 = vld [vmem:[%s294 + $0x2c] sm:$0xf]
        %v319 = vld [vmem:[%s294 + $0x30] sm:$0xf]
        %v320 = vld [vmem:[%s294 + $0x34] sm:$0xf]
        %v321 = vld [vmem:[%s294 + $0x38] sm:$0xf]
        %v322 = vld [vmem:[%s294 + $0x3c] sm:$0xf]
        %v323 = vld [vmem:[%s294 + $0x40] sm:$0xf]
        %v324 = vld [vmem:[%s294 + $0x44] sm:$0xf]
        %v325 = vld [vmem:[%s294 + $0x48] sm:$0xf]
        %v326 = vld [vmem:[%s294 + $0x4c] sm:$0xf]
        %v327 = vld [vmem:[#allocation2] sm:$0xff]
        %v328 = vld [vmem:[#allocation2 + $0x8] sm:$0xff]
        %v329 = vld [vmem:[#allocation2 + $0x10] sm:$0xff]
        %v330 = vld [vmem:[#allocation2 + $0x18] sm:$0xff]
        %v331 = vld [vmem:[#allocation2 + $0x20] sm:$0xff]
        %v332 = vld [vmem:[#allocation2 + $0x28] sm:$0xff]
        %v333 = vld [vmem:[#allocation2 + $0x30] sm:$0xff]
        %v334 = vld [vmem:[#allocation2 + $0x38] sm:$0xff]
        %v355 = vunpack.c.l.b16 %v307
        %v356 = vunpack.c.l.b16 %v308
        %v357 = vunpack.c.l.b16 %v309
        %v358 = vunpack.c.l.b16 %v310
        %v359 = vunpack.c.l.b16 %v311
        %v360 = vunpack.c.l.b16 %v312
        %v361 = vunpack.c.l.b16 %v313
        %v362 = vunpack.c.l.b16 %v314
        %v363 = vunpack.c.l.b16 %v315
        %v364 = vunpack.c.l.b16 %v316
        %v365 = vunpack.c.l.b16 %v317
        %v366 = vunpack.c.l.b16 %v318
        %v367 = vunpack.c.l.b16 %v319
        %v368 = vunpack.c.l.b16 %v320
        %v369 = vunpack.c.l.b16 %v321
        %v370 = vunpack.c.l.b16 %v322
        %v371 = vunpack.c.l.b16 %v323
        %v372 = vunpack.c.l.b16 %v324
        %v373 = vunpack.c.l.b16 %v325
        %v374 = vunpack.c.l.b16 %v326
        %v375 = vpack.c.b16 %v356, %v355
        %v376 = vpack.c.b16 %v358, %v357
        %v377 = vpack.c.b16 %v360, %v359
        %v378 = vpack.c.b16 %v362, %v361
        %v379 = vpack.c.b16 %v364, %v363
        %v380 = vpack.c.b16 %v366, %v365
        %v381 = vpack.c.b16 %v368, %v367
        %v382 = vpack.c.b16 %v370, %v369
        %v383 = vpack.c.b16 %v372, %v371
        %v384 = vpack.c.b16 %v374, %v373
        %v393 = vunpack.c.l.b16 %v327
        %v394 = vunpack.c.h.b16 %v327
        %v395 = vunpack.c.l.b16 %v328
        %v396 = vunpack.c.h.b16 %v328
        %v397 = vunpack.c.l.b16 %v329
        %v398 = vunpack.c.h.b16 %v329
        %v399 = vunpack.c.l.b16 %v330
        %v400 = vunpack.c.h.b16 %v330
        %v401 = vunpack.c.l.b16 %v331
        %v402 = vunpack.c.h.b16 %v331
        %v403 = vunpack.c.l.b16 %v332
        %v404 = vunpack.c.h.b16 %v332
        %v405 = vunpack.c.l.b16 %v333
        %v406 = vunpack.c.h.b16 %v333
        %v407 = vunpack.c.l.b16 %v334
        %v408 = vunpack.c.h.b16 %v334
        %v409 = vpack.c.b16 %v395, %v393
        %v410 = vpack.c.b16 %v396, %v394
        %v411 = vpack.c.b16 %v399, %v397
        %v412 = vpack.c.b16 %v400, %v398
        %v413 = vpack.c.b16 %v403, %v401
        %v414 = vpack.c.b16 %v404, %v402
        %v415 = vpack.c.b16 %v407, %v405
        %v416 = vpack.c.b16 %v408, %v406
        %vm425 = vcmask 523264
        %v427 = vsel %vm425, %v375, 0
        %v430 = vsel %vm425, %v376, 0
        %v433 = vsel %vm425, %v377, 0
        %v436 = vsel %vm425, %v378, 0
        %v439 = vsel %vm425, %v379, 0
        %v442 = vsel %vm425, %v380, 0
        %v445 = vsel %vm425, %v381, 0
        %v448 = vsel %vm425, %v382, 0
        %v451 = vsel %vm425, %v383, 0
        %v454 = vsel %vm425, %v384, 0
        %456 = vmatprep.subr.bf16.mxu0 %v410
        %457 = vmatpush1.bf16.msra.mxu0 %v409
        %458 = vmatprep.subr.bf16.mxu0 %v412
        %459 = vmatpush1.bf16.msra.mxu0 %v411
        %460 = vmatprep.subr.bf16.mxu0 %v414
        %461 = vmatpush1.bf16.msra.mxu0 %v413
        %462 = vmatprep.subr.bf16.mxu0 %v416
        %463 = vmatpush1.bf16.msra.mxu0 %v415
        %464 = vmatprep.subr.bf16.mxu0 0
        %465 = vmatpush1.bf16.msra.mxu0 0
        %466 = vmatprep.subr.bf16.mxu0 0
        %467 = vmatpush1.bf16.msra.mxu0 0
        %468 = vmatprep.subr.bf16.mxu0 0
        %469 = vmatpush1.bf16.msra.mxu0 0
        %470 = vmatprep.subr.bf16.mxu0 0
        %471 = vmatpush1.bf16.msra.mxu0 0
        %472 = vmatprep.subr.bf16.mxu0 0
        %473 = vmatpush1.bf16.msra.mxu0 0
        %474 = vmatprep.subr.bf16.mxu0 0
        %475 = vmatpush1.bf16.msra.mxu0 0
        %476 = vmatprep.subr.bf16.mxu0 0
        %477 = vmatpush1.bf16.msra.mxu0 0
        %478 = vmatprep.subr.bf16.mxu0 0
        %479 = vmatpush1.bf16.msra.mxu0 0
        %480 = vmatprep.subr.bf16.mxu0 0
        %481 = vmatpush1.bf16.msra.mxu0 0
        %482 = vmatprep.subr.bf16.mxu0 0
        %483 = vmatpush1.bf16.msra.mxu0 0
        %484 = vmatprep.subr.bf16.mxu0 0
        %485 = vmatpush1.bf16.msra.mxu0 0
        %486 = vmatprep.subr.bf16.mxu0 0
        %487 = vmatpush1.bf16.msra.mxu0 0
        %488 = vmatprep.mubr.bf16.mxu0 0
        %489 = vmatmul.mubr.bf16.gmra.mrb[0].mxu0 %v427
        %v490 = vpop.f32.mrb[0].mxu0
        %v491 = vadd.f32 0.0, %v490
        %v492 = vpop.f32.mrb[0].mxu0
        %v493 = vadd.f32 0.0, %v492
        %v494 = vpop.f32.mrb[0].mxu0
        %v495 = vadd.f32 0.0, %v494
        %v496 = vpop.f32.mrb[0].mxu0
        %v497 = vadd.f32 0.0, %v496
        %498 = vmatprep.mubr.bf16.mxu0 0
        %499 = vmatmul.mubr.bf16.gmra.mrb[0].mxu0 %v430
        %v500 = vpop.f32.mrb[0].mxu0
        %v501 = vadd.f32 0.0, %v500
        %v502 = vpop.f32.mrb[0].mxu0
        %v503 = vadd.f32 0.0, %v502
        %v504 = vpop.f32.mrb[0].mxu0
        %v505 = vadd.f32 0.0, %v504
        %v506 = vpop.f32.mrb[0].mxu0
        %v507 = vadd.f32 0.0, %v506
        %508 = vmatprep.mubr.bf16.mxu0 0
        %509 = vmatmul.mubr.bf16.gmra.mrb[0].mxu0 %v433
        %v510 = vpop.f32.mrb[0].mxu0
        %v511 = vadd.f32 0.0, %v510
        %v512 = vpop.f32.mrb[0].mxu0
        %v513 = vadd.f32 0.0, %v512
        %v514 = vpop.f32.mrb[0].mxu0
        %v515 = vadd.f32 0.0, %v514
        %v516 = vpop.f32.mrb[0].mxu0
        %v517 = vadd.f32 0.0, %v516
        %518 = vmatprep.mubr.bf16.mxu0 0
        %519 = vmatmul.mubr.bf16.gmra.mrb[0].mxu0 %v436
        %v520 = vpop.f32.mrb[0].mxu0
        %v521 = vadd.f32 0.0, %v520
        %v522 = vpop.f32.mrb[0].mxu0
        %v523 = vadd.f32 0.0, %v522
        %v524 = vpop.f32.mrb[0].mxu0
        %v525 = vadd.f32 0.0, %v524
        %v526 = vpop.f32.mrb[0].mxu0
        %v527 = vadd.f32 0.0, %v526
        %528 = vmatprep.mubr.bf16.mxu0 0
        %529 = vmatmul.mubr.bf16.gmra.mrb[0].mxu0 %v439
        %v530 = vpop.f32.mrb[0].mxu0
        %v531 = vadd.f32 0.0, %v530
        %v532 = vpop.f32.mrb[0].mxu0
        %v533 = vadd.f32 0.0, %v532
        %v534 = vpop.f32.mrb[0].mxu0
        %v535 = vadd.f32 0.0, %v534
        %v536 = vpop.f32.mrb[0].mxu0
        %v537 = vadd.f32 0.0, %v536
        %538 = vmatprep.mubr.bf16.mxu0 0
        %539 = vmatmul.mubr.bf16.gmra.mrb[0].mxu0 %v442
        %v540 = vpop.f32.mrb[0].mxu0
        %v541 = vadd.f32 0.0, %v540
        %v542 = vpop.f32.mrb[0].mxu0
        %v543 = vadd.f32 0.0, %v542
        %v544 = vpop.f32.mrb[0].mxu0
        %v545 = vadd.f32 0.0, %v544
        %v546 = vpop.f32.mrb[0].mxu0
        %v547 = vadd.f32 0.0, %v546
        %548 = vmatprep.mubr.bf16.mxu0 0
        %549 = vmatmul.mubr.bf16.gmra.mrb[0].mxu0 %v445
        %v550 = vpop.f32.mrb[0].mxu0
        %v551 = vadd.f32 0.0, %v550
        %v552 = vpop.f32.mrb[0].mxu0
        %v553 = vadd.f32 0.0, %v552
        %v554 = vpop.f32.mrb[0].mxu0
        %v555 = vadd.f32 0.0, %v554
        %v556 = vpop.f32.mrb[0].mxu0
        %v557 = vadd.f32 0.0, %v556
        %558 = vmatprep.mubr.bf16.mxu0 0
        %559 = vmatmul.mubr.bf16.gmra.mrb[0].mxu0 %v448
        %v560 = vpop.f32.mrb[0].mxu0
        %v561 = vadd.f32 0.0, %v560
        %v562 = vpop.f32.mrb[0].mxu0
        %v563 = vadd.f32 0.0, %v562
        %v564 = vpop.f32.mrb[0].mxu0
        %v565 = vadd.f32 0.0, %v564
        %v566 = vpop.f32.mrb[0].mxu0
        %v567 = vadd.f32 0.0, %v566
        %568 = vmatprep.mubr.bf16.mxu0 0
        %569 = vmatmul.mubr.bf16.gmra.mrb[0].mxu0 %v451
        %v570 = vpop.f32.mrb[0].mxu0
        %v571 = vadd.f32 0.0, %v570
        %v572 = vpop.f32.mrb[0].mxu0
        %v573 = vadd.f32 0.0, %v572
        %v574 = vpop.f32.mrb[0].mxu0
        %v575 = vadd.f32 0.0, %v574
        %v576 = vpop.f32.mrb[0].mxu0
        %v577 = vadd.f32 0.0, %v576
        %578 = vmatprep.mubr.bf16.mxu0 0
        %579 = vmatmul.mubr.bf16.gmra.mrb[0].mxu0 %v454
        %v580 = vpop.f32.mrb[0].mxu0
        %v581 = vadd.f32 0.0, %v580
        %v582 = vpop.f32.mrb[0].mxu0
        %v583 = vadd.f32 0.0, %v582
        %v584 = vpop.f32.mrb[0].mxu0
        %v585 = vadd.f32 0.0, %v584
        %v586 = vpop.f32.mrb[0].mxu0
        %v587 = vadd.f32 0.0, %v586
        %588 = vdwg.mxu0
        %vm589 = vcmp.gt.f32.partialorder %v491, 0.0
        %vm590 = vcmp.gt.f32.partialorder %v493, 0.0
        %vm591 = vcmp.gt.f32.partialorder %v495, 0.0
        %vm592 = vcmp.gt.f32.partialorder %v497, 0.0
        %vm593 = vcmp.gt.f32.partialorder %v501, 0.0
        %vm594 = vcmp.gt.f32.partialorder %v503, 0.0
        %vm595 = vcmp.gt.f32.partialorder %v505, 0.0
        %vm596 = vcmp.gt.f32.partialorder %v507, 0.0
        %vm597 = vcmp.gt.f32.partialorder %v511, 0.0
        %vm598 = vcmp.gt.f32.partialorder %v513, 0.0
        %vm599 = vcmp.gt.f32.partialorder %v515, 0.0
        %vm600 = vcmp.gt.f32.partialorder %v517, 0.0
        %vm601 = vcmp.gt.f32.partialorder %v521, 0.0
        %vm602 = vcmp.gt.f32.partialorder %v523, 0.0
        %vm603 = vcmp.gt.f32.partialorder %v525, 0.0
        %vm604 = vcmp.gt.f32.partialorder %v527, 0.0
        %vm605 = vcmp.gt.f32.partialorder %v531, 0.0
        %vm606 = vcmp.gt.f32.partialorder %v533, 0.0
        %vm607 = vcmp.gt.f32.partialorder %v535, 0.0
        %vm608 = vcmp.gt.f32.partialorder %v537, 0.0
        %vm609 = vcmp.gt.f32.partialorder %v541, 0.0
        %vm610 = vcmp.gt.f32.partialorder %v543, 0.0
        %vm611 = vcmp.gt.f32.partialorder %v545, 0.0
        %vm612 = vcmp.gt.f32.partialorder %v547, 0.0
        %vm613 = vcmp.gt.f32.partialorder %v551, 0.0
        %vm614 = vcmp.gt.f32.partialorder %v553, 0.0
        %vm615 = vcmp.gt.f32.partialorder %v555, 0.0
        %vm616 = vcmp.gt.f32.partialorder %v557, 0.0
        %vm617 = vcmp.gt.f32.partialorder %v561, 0.0
        %vm618 = vcmp.gt.f32.partialorder %v563, 0.0
        %vm619 = vcmp.gt.f32.partialorder %v565, 0.0
        %vm620 = vcmp.gt.f32.partialorder %v567, 0.0
        %vm621 = vcmp.gt.f32.partialorder %v571, 0.0
        %vm622 = vcmp.gt.f32.partialorder %v573, 0.0
        %vm623 = vcmp.gt.f32.partialorder %v575, 0.0
        %vm624 = vcmp.gt.f32.partialorder %v577, 0.0
        %vm625 = vcmp.gt.f32.partialorder %v581, 0.0
        %vm626 = vcmp.gt.f32.partialorder %v583, 0.0
        %vm627 = vcmp.gt.f32.partialorder %v585, 0.0
        %vm628 = vcmp.gt.f32.partialorder %v587, 0.0
        %v629 = vmul.f32 %v491, 0.2
        %v630 = vmul.f32 %v493, 0.2
        %v631 = vmul.f32 %v495, 0.2
        %v632 = vmul.f32 %v497, 0.2
        %v633 = vmul.f32 %v501, 0.2
        %v634 = vmul.f32 %v503, 0.2
        %v635 = vmul.f32 %v505, 0.2
        %v636 = vmul.f32 %v507, 0.2
        %v637 = vmul.f32 %v511, 0.2
        %v638 = vmul.f32 %v513, 0.2
        %v639 = vmul.f32 %v515, 0.2
        %v640 = vmul.f32 %v517, 0.2
        %v641 = vmul.f32 %v521, 0.2
        %v642 = vmul.f32 %v523, 0.2
        %v643 = vmul.f32 %v525, 0.2
        %v644 = vmul.f32 %v527, 0.2
        %v645 = vmul.f32 %v531, 0.2
        %v646 = vmul.f32 %v533, 0.2
        %v647 = vmul.f32 %v535, 0.2
        %v648 = vmul.f32 %v537, 0.2
        %v649 = vmul.f32 %v541, 0.2
        %v650 = vmul.f32 %v543, 0.2
        %v651 = vmul.f32 %v545, 0.2
        %v652 = vmul.f32 %v547, 0.2
        %v653 = vmul.f32 %v551, 0.2
        %v654 = vmul.f32 %v553, 0.2
        %v655 = vmul.f32 %v555, 0.2
        %v656 = vmul.f32 %v557, 0.2
        %v657 = vmul.f32 %v561, 0.2
        %v658 = vmul.f32 %v563, 0.2
        %v659 = vmul.f32 %v565, 0.2
        %v660 = vmul.f32 %v567, 0.2
        %v661 = vmul.f32 %v571, 0.2
        %v662 = vmul.f32 %v573, 0.2
        %v663 = vmul.f32 %v575, 0.2
        %v664 = vmul.f32 %v577, 0.2
        %v665 = vmul.f32 %v581, 0.2
        %v666 = vmul.f32 %v583, 0.2
        %v667 = vmul.f32 %v585, 0.2
        %v668 = vmul.f32 %v587, 0.2
        %v669 = vsel %vm589, %v491, %v629
        %v670 = vsel %vm590, %v493, %v630
        %v671 = vsel %vm591, %v495, %v631
        %v672 = vsel %vm592, %v497, %v632
        %v673 = vsel %vm593, %v501, %v633
        %v674 = vsel %vm594, %v503, %v634
        %v675 = vsel %vm595, %v505, %v635
        %v676 = vsel %vm596, %v507, %v636
        %v677 = vsel %vm597, %v511, %v637
        %v678 = vsel %vm598, %v513, %v638
        %v679 = vsel %vm599, %v515, %v639
        %v680 = vsel %vm600, %v517, %v640
        %v681 = vsel %vm601, %v521, %v641
        %v682 = vsel %vm602, %v523, %v642
        %v683 = vsel %vm603, %v525, %v643
        %v684 = vsel %vm604, %v527, %v644
        %v685 = vsel %vm605, %v531, %v645
        %v686 = vsel %vm606, %v533, %v646
        %v687 = vsel %vm607, %v535, %v647
        %v688 = vsel %vm608, %v537, %v648
        %v689 = vsel %vm609, %v541, %v649
        %v690 = vsel %vm610, %v543, %v650
        %v691 = vsel %vm611, %v545, %v651
        %v692 = vsel %vm612, %v547, %v652
        %v693 = vsel %vm613, %v551, %v653
        %v694 = vsel %vm614, %v553, %v654
        %v695 = vsel %vm615, %v555, %v655
        %v696 = vsel %vm616, %v557, %v656
        %v697 = vsel %vm617, %v561, %v657
        %v698 = vsel %vm618, %v563, %v658
        %v699 = vsel %vm619, %v565, %v659
        %v700 = vsel %vm620, %v567, %v660
        %v701 = vsel %vm621, %v571, %v661
        %v702 = vsel %vm622, %v573, %v662
        %v703 = vsel %vm623, %v575, %v663
        %v704 = vsel %vm624, %v577, %v664
        %v705 = vsel %vm625, %v581, %v665
        %v706 = vsel %vm626, %v583, %v666
        %v707 = vsel %vm627, %v585, %v667
        %v708 = vsel %vm628, %v587, %v668
        %v709 = vpack.c.bf16 %v671, %v669
        %v710 = vpack.c.bf16 %v672, %v670
        %v711 = vpack.c.bf16 %v675, %v673
        %v712 = vpack.c.bf16 %v676, %v674
        %v713 = vpack.c.bf16 %v679, %v677
        %v714 = vpack.c.bf16 %v680, %v678
        %v715 = vpack.c.bf16 %v683, %v681
        %v716 = vpack.c.bf16 %v684, %v682
        %v717 = vpack.c.bf16 %v687, %v685
        %v718 = vpack.c.bf16 %v688, %v686
        %v719 = vpack.c.bf16 %v691, %v689
        %v720 = vpack.c.bf16 %v692, %v690
        %v721 = vpack.c.bf16 %v695, %v693
        %v722 = vpack.c.bf16 %v696, %v694
        %v723 = vpack.c.bf16 %v699, %v697
        %v724 = vpack.c.bf16 %v700, %v698
        %v725 = vpack.c.bf16 %v703, %v701
        %v726 = vpack.c.bf16 %v704, %v702
        %v727 = vpack.c.bf16 %v707, %v705
        %v728 = vpack.c.bf16 %v708, %v706
        %v729 = vld [vmem:[#allocation4] sm:$0xff]
        %v730 = vld [vmem:[#allocation4 + $0x8] sm:$0xff]
        %v731 = vld [vmem:[#allocation4 + $0x10] sm:$0xff]
        %v732 = vld [vmem:[#allocation4 + $0x18] sm:$0xff]
        %v733 = vld [vmem:[#allocation4 + $0x20] sm:$0xff]
        %v734 = vld [vmem:[#allocation4 + $0x28] sm:$0xff]
        %v735 = vld [vmem:[#allocation4 + $0x30] sm:$0xff]
        %v736 = vld [vmem:[#allocation4 + $0x38] sm:$0xff]
        %v737 = vld [vmem:[#allocation4 + $0x40] sm:$0xff]
        %v738 = vld [vmem:[#allocation4 + $0x48] sm:$0xff]
        %v739 = vld [vmem:[#allocation4 + $0x50] sm:$0xff]
        %v740 = vld [vmem:[#allocation4 + $0x58] sm:$0xff]
        %v741 = vld [vmem:[#allocation4 + $0x60] sm:$0xff]
        %v742 = vld [vmem:[#allocation4 + $0x68] sm:$0xff]
        %v743 = vld [vmem:[#allocation4 + $0x70] sm:$0xff]
        %v744 = vld [vmem:[#allocation4 + $0x78] sm:$0xff]
        %v745 = vld [vmem:[#allocation4 + $0x80] sm:$0xff]
        %v746 = vld [vmem:[#allocation4 + $0x88] sm:$0xff]
        %v747 = vld [vmem:[#allocation4 + $0x90] sm:$0xff]
        %v748 = vld [vmem:[#allocation4 + $0x98] sm:$0xff]
        %v749 = vld [vmem:[#allocation4 + $0xa0] sm:$0xff]
        %v750 = vld [vmem:[#allocation4 + $0xa8] sm:$0xff]
        %v751 = vld [vmem:[#allocation4 + $0xb0] sm:$0xff]
        %v752 = vld [vmem:[#allocation4 + $0xb8] sm:$0xff]
        %v753 = vld [vmem:[#allocation4 + $0xc0] sm:$0xff]
        %v754 = vld [vmem:[#allocation4 + $0xc8] sm:$0xff]
        %v755 = vld [vmem:[#allocation4 + $0xd0] sm:$0xff]
        %v756 = vld [vmem:[#allocation4 + $0xd8] sm:$0xff]
        %v757 = vld [vmem:[#allocation4 + $0xe0] sm:$0xff]
        %v758 = vld [vmem:[#allocation4 + $0xe8] sm:$0xff]
        %v759 = vld [vmem:[#allocation4 + $0xf0] sm:$0xff]
        %v760 = vld [vmem:[#allocation4 + $0xf8] sm:$0xff]
        %v761 = vld [vmem:[#allocation4 + $0x100] sm:$0xff]
        %v762 = vld [vmem:[#allocation4 + $0x108] sm:$0xff]
        %v763 = vld [vmem:[#allocation4 + $0x110] sm:$0xff]
        %v764 = vld [vmem:[#allocation4 + $0x118] sm:$0xff]
        %v765 = vld [vmem:[#allocation4 + $0x120] sm:$0xff]
        %v766 = vld [vmem:[#allocation4 + $0x128] sm:$0xff]
        %v767 = vld [vmem:[#allocation4 + $0x130] sm:$0xff]
        %v768 = vld [vmem:[#allocation4 + $0x138] sm:$0xff]
        %v769 = vld [vmem:[#allocation4 + $0x140] sm:$0xff]
        %v770 = vld [vmem:[#allocation4 + $0x148] sm:$0xff]
        %v771 = vld [vmem:[#allocation4 + $0x150] sm:$0xff]
        %v772 = vld [vmem:[#allocation4 + $0x158] sm:$0xff]
        %v773 = vld [vmem:[#allocation4 + $0x160] sm:$0xff]
        %v774 = vld [vmem:[#allocation4 + $0x168] sm:$0xff]
        %v775 = vld [vmem:[#allocation4 + $0x170] sm:$0xff]
        %v776 = vld [vmem:[#allocation4 + $0x178] sm:$0xff]
        %v777 = vld [vmem:[#allocation4 + $0x180] sm:$0xff]
        %v778 = vld [vmem:[#allocation4 + $0x188] sm:$0xff]
        %v779 = vld [vmem:[#allocation4 + $0x190] sm:$0xff]
        %v780 = vld [vmem:[#allocation4 + $0x198] sm:$0xff]
        %v781 = vld [vmem:[#allocation4 + $0x1a0] sm:$0xff]
        %v782 = vld [vmem:[#allocation4 + $0x1a8] sm:$0xff]
        %v783 = vld [vmem:[#allocation4 + $0x1b0] sm:$0xff]
        %v784 = vld [vmem:[#allocation4 + $0x1b8] sm:$0xff]
        %v785 = vld [vmem:[#allocation4 + $0x1c0] sm:$0xff]
        %v786 = vld [vmem:[#allocation4 + $0x1c8] sm:$0xff]
        %v787 = vld [vmem:[#allocation4 + $0x1d0] sm:$0xff]
        %v788 = vld [vmem:[#allocation4 + $0x1d8] sm:$0xff]
        %v789 = vld [vmem:[#allocation4 + $0x1e0] sm:$0xff]
        %v790 = vld [vmem:[#allocation4 + $0x1e8] sm:$0xff]
        %v791 = vld [vmem:[#allocation4 + $0x1f0] sm:$0xff]
        %v792 = vld [vmem:[#allocation4 + $0x1f8] sm:$0xff]
        %v857 = vunpack.c.l.b16 %v729
        %v858 = vunpack.c.h.b16 %v729
        %v859 = vunpack.c.l.b16 %v730
        %v860 = vunpack.c.h.b16 %v730
        %v861 = vunpack.c.l.b16 %v731
        %v862 = vunpack.c.h.b16 %v731
        %v863 = vunpack.c.l.b16 %v732
        %v864 = vunpack.c.h.b16 %v732
        %v865 = vunpack.c.l.b16 %v733
        %v866 = vunpack.c.h.b16 %v733
        %v867 = vunpack.c.l.b16 %v734
        %v868 = vunpack.c.h.b16 %v734
        %v869 = vunpack.c.l.b16 %v735
        %v870 = vunpack.c.h.b16 %v735
        %v871 = vunpack.c.l.b16 %v736
        %v872 = vunpack.c.h.b16 %v736
        %v873 = vunpack.c.l.b16 %v737
        %v874 = vunpack.c.h.b16 %v737
        %v875 = vunpack.c.l.b16 %v738
        %v876 = vunpack.c.h.b16 %v738
        %v877 = vunpack.c.l.b16 %v739
        %v878 = vunpack.c.h.b16 %v739
        %v879 = vunpack.c.l.b16 %v740
        %v880 = vunpack.c.h.b16 %v740
        %v881 = vunpack.c.l.b16 %v741
        %v882 = vunpack.c.h.b16 %v741
        %v883 = vunpack.c.l.b16 %v742
        %v884 = vunpack.c.h.b16 %v742
        %v885 = vunpack.c.l.b16 %v743
        %v886 = vunpack.c.h.b16 %v743
        %v887 = vunpack.c.l.b16 %v744
        %v888 = vunpack.c.h.b16 %v744
        %v889 = vunpack.c.l.b16 %v745
        %v890 = vunpack.c.h.b16 %v745
        %v891 = vunpack.c.l.b16 %v746
        %v892 = vunpack.c.h.b16 %v746
        %v893 = vunpack.c.l.b16 %v747
        %v894 = vunpack.c.h.b16 %v747
        %v895 = vunpack.c.l.b16 %v748
        %v896 = vunpack.c.h.b16 %v748
        %v897 = vunpack.c.l.b16 %v749
        %v898 = vunpack.c.h.b16 %v749
        %v899 = vunpack.c.l.b16 %v750
        %v900 = vunpack.c.h.b16 %v750
        %v901 = vunpack.c.l.b16 %v751
        %v902 = vunpack.c.h.b16 %v751
        %v903 = vunpack.c.l.b16 %v752
        %v904 = vunpack.c.h.b16 %v752
        %v905 = vunpack.c.l.b16 %v753
        %v906 = vunpack.c.h.b16 %v753
        %v907 = vunpack.c.l.b16 %v754
        %v908 = vunpack.c.h.b16 %v754
        %v909 = vunpack.c.l.b16 %v755
        %v910 = vunpack.c.h.b16 %v755
        %v911 = vunpack.c.l.b16 %v756
        %v912 = vunpack.c.h.b16 %v756
        %v913 = vunpack.c.l.b16 %v757
        %v914 = vunpack.c.h.b16 %v757
        %v915 = vunpack.c.l.b16 %v758
        %v916 = vunpack.c.h.b16 %v758
        %v917 = vunpack.c.l.b16 %v759
        %v918 = vunpack.c.h.b16 %v759
        %v919 = vunpack.c.l.b16 %v760
        %v920 = vunpack.c.h.b16 %v760
        %v921 = vunpack.c.l.b16 %v761
        %v922 = vunpack.c.h.b16 %v761
        %v923 = vunpack.c.l.b16 %v762
        %v924 = vunpack.c.h.b16 %v762
        %v925 = vunpack.c.l.b16 %v763
        %v926 = vunpack.c.h.b16 %v763
        %v927 = vunpack.c.l.b16 %v764
        %v928 = vunpack.c.h.b16 %v764
        %v929 = vunpack.c.l.b16 %v765
        %v930 = vunpack.c.h.b16 %v765
        %v931 = vunpack.c.l.b16 %v766
        %v932 = vunpack.c.h.b16 %v766
        %v933 = vunpack.c.l.b16 %v767
        %v934 = vunpack.c.h.b16 %v767
        %v935 = vunpack.c.l.b16 %v768
        %v936 = vunpack.c.h.b16 %v768
        %v937 = vunpack.c.l.b16 %v769
        %v938 = vunpack.c.h.b16 %v769
        %v939 = vunpack.c.l.b16 %v770
        %v940 = vunpack.c.h.b16 %v770
        %v941 = vunpack.c.l.b16 %v771
        %v942 = vunpack.c.h.b16 %v771
        %v943 = vunpack.c.l.b16 %v772
        %v944 = vunpack.c.h.b16 %v772
        %v945 = vunpack.c.l.b16 %v773
        %v946 = vunpack.c.h.b16 %v773
        %v947 = vunpack.c.l.b16 %v774
        %v948 = vunpack.c.h.b16 %v774
        %v949 = vunpack.c.l.b16 %v775
        %v950 = vunpack.c.h.b16 %v775
        %v951 = vunpack.c.l.b16 %v776
        %v952 = vunpack.c.h.b16 %v776
        %v953 = vunpack.c.l.b16 %v777
        %v954 = vunpack.c.h.b16 %v777
        %v955 = vunpack.c.l.b16 %v778
        %v956 = vunpack.c.h.b16 %v778
        %v957 = vunpack.c.l.b16 %v779
        %v958 = vunpack.c.h.b16 %v779
        %v959 = vunpack.c.l.b16 %v780
        %v960 = vunpack.c.h.b16 %v780
        %v961 = vunpack.c.l.b16 %v781
        %v962 = vunpack.c.h.b16 %v781
        %v963 = vunpack.c.l.b16 %v782
        %v964 = vunpack.c.h.b16 %v782
        %v965 = vunpack.c.l.b16 %v783
        %v966 = vunpack.c.h.b16 %v783
        %v967 = vunpack.c.l.b16 %v784
        %v968 = vunpack.c.h.b16 %v784
        %v969 = vunpack.c.l.b16 %v785
        %v970 = vunpack.c.h.b16 %v785
        %v971 = vunpack.c.l.b16 %v786
        %v972 = vunpack.c.h.b16 %v786
        %v973 = vunpack.c.l.b16 %v787
        %v974 = vunpack.c.h.b16 %v787
        %v975 = vunpack.c.l.b16 %v788
        %v976 = vunpack.c.h.b16 %v788
        %v977 = vunpack.c.l.b16 %v789
        %v978 = vunpack.c.h.b16 %v789
        %v979 = vunpack.c.l.b16 %v790
        %v980 = vunpack.c.h.b16 %v790
        %v981 = vunpack.c.l.b16 %v791
        %v982 = vunpack.c.h.b16 %v791
        %v983 = vunpack.c.l.b16 %v792
        %v984 = vunpack.c.h.b16 %v792
        %v985 = vpack.c.b16 %v861, %v857
        %v986 = vpack.c.b16 %v862, %v858
        %v987 = vpack.c.b16 %v863, %v859
        %v988 = vpack.c.b16 %v864, %v860
        %v989 = vpack.c.b16 %v869, %v865
        %v990 = vpack.c.b16 %v870, %v866
        %v991 = vpack.c.b16 %v871, %v867
        %v992 = vpack.c.b16 %v872, %v868
        %v993 = vpack.c.b16 %v877, %v873
        %v994 = vpack.c.b16 %v878, %v874
        %v995 = vpack.c.b16 %v879, %v875
        %v996 = vpack.c.b16 %v880, %v876
        %v997 = vpack.c.b16 %v885, %v881
        %v998 = vpack.c.b16 %v886, %v882
        %v999 = vpack.c.b16 %v887, %v883
        %v1000 = vpack.c.b16 %v888, %v884
        %v1001 = vpack.c.b16 %v893, %v889
        %v1002 = vpack.c.b16 %v894, %v890
        %v1003 = vpack.c.b16 %v895, %v891
        %v1004 = vpack.c.b16 %v896, %v892
        %v1005 = vpack.c.b16 %v901, %v897
        %v1006 = vpack.c.b16 %v902, %v898
        %v1007 = vpack.c.b16 %v903, %v899
        %v1008 = vpack.c.b16 %v904, %v900
        %v1009 = vpack.c.b16 %v909, %v905
        %v1010 = vpack.c.b16 %v910, %v906
        %v1011 = vpack.c.b16 %v911, %v907
        %v1012 = vpack.c.b16 %v912, %v908
        %v1013 = vpack.c.b16 %v917, %v913
        %v1014 = vpack.c.b16 %v918, %v914
        %v1015 = vpack.c.b16 %v919, %v915
        %v1016 = vpack.c.b16 %v920, %v916
        %v1017 = vpack.c.b16 %v925, %v921
        %v1018 = vpack.c.b16 %v926, %v922
        %v1019 = vpack.c.b16 %v927, %v923
        %v1020 = vpack.c.b16 %v928, %v924
        %v1021 = vpack.c.b16 %v933, %v929
        %v1022 = vpack.c.b16 %v934, %v930
        %v1023 = vpack.c.b16 %v935, %v931
        %v1024 = vpack.c.b16 %v936, %v932
        %v1025 = vpack.c.b16 %v941, %v937
        %v1026 = vpack.c.b16 %v942, %v938
        %v1027 = vpack.c.b16 %v943, %v939
        %v1028 = vpack.c.b16 %v944, %v940
        %v1029 = vpack.c.b16 %v949, %v945
        %v1030 = vpack.c.b16 %v950, %v946
        %v1031 = vpack.c.b16 %v951, %v947
        %v1032 = vpack.c.b16 %v952, %v948
        %v1033 = vpack.c.b16 %v957, %v953
        %v1034 = vpack.c.b16 %v958, %v954
        %v1035 = vpack.c.b16 %v959, %v955
        %v1036 = vpack.c.b16 %v960, %v956
        %v1037 = vpack.c.b16 %v965, %v961
        %v1038 = vpack.c.b16 %v966, %v962
        %v1039 = vpack.c.b16 %v967, %v963
        %v1040 = vpack.c.b16 %v968, %v964
        %v1041 = vpack.c.b16 %v973, %v969
        %v1042 = vpack.c.b16 %v974, %v970
        %v1043 = vpack.c.b16 %v975, %v971
        %v1044 = vpack.c.b16 %v976, %v972
        %v1045 = vpack.c.b16 %v981, %v977
        %v1046 = vpack.c.b16 %v982, %v978
        %v1047 = vpack.c.b16 %v983, %v979
        %v1048 = vpack.c.b16 %v984, %v980
        %1113 = vmatprep.subr.bf16.mxu0 %v986
        %1114 = vmatpush1.bf16.msra.mxu0 %v985
        %1115 = vmatprep.subr.bf16.mxu0 %v990
        %1116 = vmatpush1.bf16.msra.mxu0 %v989
        %1117 = vmatprep.subr.bf16.mxu0 %v994
        %1118 = vmatpush1.bf16.msra.mxu0 %v993
        %1119 = vmatprep.subr.bf16.mxu0 %v998
        %1120 = vmatpush1.bf16.msra.mxu0 %v997
        %1121 = vmatprep.subr.bf16.mxu0 %v1002
        %1122 = vmatpush1.bf16.msra.mxu0 %v1001
        %1123 = vmatprep.subr.bf16.mxu0 %v1006
        %1124 = vmatpush1.bf16.msra.mxu0 %v1005
        %1125 = vmatprep.subr.bf16.mxu0 %v1010
        %1126 = vmatpush1.bf16.msra.mxu0 %v1009
        %1127 = vmatprep.subr.bf16.mxu0 %v1014
        %1128 = vmatpush1.bf16.msra.mxu0 %v1013
        %1129 = vmatprep.subr.bf16.mxu0 %v1018
        %1130 = vmatpush1.bf16.msra.mxu0 %v1017
        %1131 = vmatprep.subr.bf16.mxu0 %v1022
        %1132 = vmatpush1.bf16.msra.mxu0 %v1021
        %1133 = vmatprep.subr.bf16.mxu0 %v1026
        %1134 = vmatpush1.bf16.msra.mxu0 %v1025
        %1135 = vmatprep.subr.bf16.mxu0 %v1030
        %1136 = vmatpush1.bf16.msra.mxu0 %v1029
        %1137 = vmatprep.subr.bf16.mxu0 %v1034
        %1138 = vmatpush1.bf16.msra.mxu0 %v1033
        %1139 = vmatprep.subr.bf16.mxu0 %v1038
        %1140 = vmatpush1.bf16.msra.mxu0 %v1037
        %1141 = vmatprep.subr.bf16.mxu0 %v1042
        %1142 = vmatpush1.bf16.msra.mxu0 %v1041
        %1143 = vmatprep.subr.bf16.mxu0 %v1046
        %1144 = vmatpush1.bf16.msra.mxu0 %v1045
        %1145 = vmatprep.mubr.bf16.mxu0 %v710
        %1146 = vmatmul.mubr.bf16.gmra.mrb[0].mxu0 %v709
        %v1147 = vpop.f32.mrb[0].mxu0
        %v1148 = vadd.f32 0.0, %v1147
        %v1149 = vpop.f32.mrb[0].mxu0
        %v1150 = vadd.f32 0.0, %v1149
        %v1151 = vpop.f32.mrb[0].mxu0
        %v1152 = vadd.f32 0.0, %v1151
        %v1153 = vpop.f32.mrb[0].mxu0
        %v1154 = vadd.f32 0.0, %v1153
        %1155 = vmatprep.mubr.bf16.mxu0 %v712
        %1156 = vmatmul.mubr.bf16.gmra.mrb[0].mxu0 %v711
        %v1157 = vpop.f32.mrb[0].mxu0
        %v1158 = vadd.f32 0.0, %v1157
        %v1159 = vpop.f32.mrb[0].mxu0
        %v1160 = vadd.f32 0.0, %v1159
        %v1161 = vpop.f32.mrb[0].mxu0
        %v1162 = vadd.f32 0.0, %v1161
        %v1163 = vpop.f32.mrb[0].mxu0
        %v1164 = vadd.f32 0.0, %v1163
        %1165 = vmatprep.mubr.bf16.mxu0 %v714
        %1166 = vmatmul.mubr.bf16.gmra.mrb[0].mxu0 %v713
        %v1167 = vpop.f32.mrb[0].mxu0
        %v1168 = vadd.f32 0.0, %v1167
        %v1169 = vpop.f32.mrb[0].mxu0
        %v1170 = vadd.f32 0.0, %v1169
        %v1171 = vpop.f32.mrb[0].mxu0
        %v1172 = vadd.f32 0.0, %v1171
        %v1173 = vpop.f32.mrb[0].mxu0
        %v1174 = vadd.f32 0.0, %v1173
        %1175 = vmatprep.mubr.bf16.mxu0 %v716
        %1176 = vmatmul.mubr.bf16.gmra.mrb[0].mxu0 %v715
        %v1177 = vpop.f32.mrb[0].mxu0
        %v1178 = vadd.f32 0.0, %v1177
        %v1179 = vpop.f32.mrb[0].mxu0
        %v1180 = vadd.f32 0.0, %v1179
        %v1181 = vpop.f32.mrb[0].mxu0
        %v1182 = vadd.f32 0.0, %v1181
        %v1183 = vpop.f32.mrb[0].mxu0
        %v1184 = vadd.f32 0.0, %v1183
        %1185 = vmatprep.mubr.bf16.mxu0 %v718
        %1186 = vmatmul.mubr.bf16.gmra.mrb[0].mxu0 %v717
        %v1187 = vpop.f32.mrb[0].mxu0
        %v1188 = vadd.f32 0.0, %v1187
        %v1189 = vpop.f32.mrb[0].mxu0
        %v1190 = vadd.f32 0.0, %v1189
        %v1191 = vpop.f32.mrb[0].mxu0
        %v1192 = vadd.f32 0.0, %v1191
        %v1193 = vpop.f32.mrb[0].mxu0
        %v1194 = vadd.f32 0.0, %v1193
        %1195 = vmatprep.mubr.bf16.mxu0 %v720
        %1196 = vmatmul.mubr.bf16.gmra.mrb[0].mxu0 %v719
        %v1197 = vpop.f32.mrb[0].mxu0
        %v1198 = vadd.f32 0.0, %v1197
        %v1199 = vpop.f32.mrb[0].mxu0
        %v1200 = vadd.f32 0.0, %v1199
        %v1201 = vpop.f32.mrb[0].mxu0
        %v1202 = vadd.f32 0.0, %v1201
        %v1203 = vpop.f32.mrb[0].mxu0
        %v1204 = vadd.f32 0.0, %v1203
        %1205 = vmatprep.mubr.bf16.mxu0 %v722
        %1206 = vmatmul.mubr.bf16.gmra.mrb[0].mxu0 %v721
        %v1207 = vpop.f32.mrb[0].mxu0
        %v1208 = vadd.f32 0.0, %v1207
        %v1209 = vpop.f32.mrb[0].mxu0
        %v1210 = vadd.f32 0.0, %v1209
        %v1211 = vpop.f32.mrb[0].mxu0
        %v1212 = vadd.f32 0.0, %v1211
        %v1213 = vpop.f32.mrb[0].mxu0
        %v1214 = vadd.f32 0.0, %v1213
        %1215 = vmatprep.mubr.bf16.mxu0 %v724
        %1216 = vmatmul.mubr.bf16.gmra.mrb[0].mxu0 %v723
        %v1217 = vpop.f32.mrb[0].mxu0
        %v1218 = vadd.f32 0.0, %v1217
        %v1219 = vpop.f32.mrb[0].mxu0
        %v1220 = vadd.f32 0.0, %v1219
        %v1221 = vpop.f32.mrb[0].mxu0
        %v1222 = vadd.f32 0.0, %v1221
        %v1223 = vpop.f32.mrb[0].mxu0
        %v1224 = vadd.f32 0.0, %v1223
        %1225 = vmatprep.mubr.bf16.mxu0 %v726
        %1226 = vmatmul.mubr.bf16.gmra.mrb[0].mxu0 %v725
        %v1227 = vpop.f32.mrb[0].mxu0
        %v1228 = vadd.f32 0.0, %v1227
        %v1229 = vpop.f32.mrb[0].mxu0
        %v1230 = vadd.f32 0.0, %v1229
        %v1231 = vpop.f32.mrb[0].mxu0
        %v1232 = vadd.f32 0.0, %v1231
        %v1233 = vpop.f32.mrb[0].mxu0
        %v1234 = vadd.f32 0.0, %v1233
        %1235 = vmatprep.mubr.bf16.mxu0 %v728
        %1236 = vmatmul.mubr.bf16.gmra.mrb[0].mxu0 %v727
        %v1237 = vpop.f32.mrb[0].mxu0
        %v1238 = vadd.f32 0.0, %v1237
        %v1239 = vpop.f32.mrb[0].mxu0
        %v1240 = vadd.f32 0.0, %v1239
        %v1241 = vpop.f32.mrb[0].mxu0
        %v1242 = vadd.f32 0.0, %v1241
        %v1243 = vpop.f32.mrb[0].mxu0
        %v1244 = vadd.f32 0.0, %v1243
        %1245 = vdwg.mxu0
        %1246 = vmatprep.subr.bf16.mxu0 %v988
        %1247 = vmatpush1.bf16.msra.mxu0 %v987
        %1248 = vmatprep.subr.bf16.mxu0 %v992
        %1249 = vmatpush1.bf16.msra.mxu0 %v991
        %1250 = vmatprep.subr.bf16.mxu0 %v996
        %1251 = vmatpush1.bf16.msra.mxu0 %v995
        %1252 = vmatprep.subr.bf16.mxu0 %v1000
        %1253 = vmatpush1.bf16.msra.mxu0 %v999
        %1254 = vmatprep.subr.bf16.mxu0 %v1004
        %1255 = vmatpush1.bf16.msra.mxu0 %v1003
        %1256 = vmatprep.subr.bf16.mxu0 %v1008
        %1257 = vmatpush1.bf16.msra.mxu0 %v1007
        %1258 = vmatprep.subr.bf16.mxu0 %v1012
        %1259 = vmatpush1.bf16.msra.mxu0 %v1011
        %1260 = vmatprep.subr.bf16.mxu0 %v1016
        %1261 = vmatpush1.bf16.msra.mxu0 %v1015
        %1262 = vmatprep.subr.bf16.mxu0 %v1020
        %1263 = vmatpush1.bf16.msra.mxu0 %v1019
        %1264 = vmatprep.subr.bf16.mxu0 %v1024
        %1265 = vmatpush1.bf16.msra.mxu0 %v1023
        %1266 = vmatprep.subr.bf16.mxu0 %v1028
        %1267 = vmatpush1.bf16.msra.mxu0 %v1027
        %1268 = vmatprep.subr.bf16.mxu0 %v1032
        %1269 = vmatpush1.bf16.msra.mxu0 %v1031
        %1270 = vmatprep.subr.bf16.mxu0 %v1036
        %1271 = vmatpush1.bf16.msra.mxu0 %v1035
        %1272 = vmatprep.subr.bf16.mxu0 %v1040
        %1273 = vmatpush1.bf16.msra.mxu0 %v1039
        %1274 = vmatprep.subr.bf16.mxu0 %v1044
        %1275 = vmatpush1.bf16.msra.mxu0 %v1043
        %1276 = vmatprep.subr.bf16.mxu0 %v1048
        %1277 = vmatpush1.bf16.msra.mxu0 %v1047
        %1278 = vmatprep.mubr.bf16.mxu0 %v710
        %1279 = vmatmul.mubr.bf16.gmra.mrb[0].mxu0 %v709
        %v1280 = vpop.f32.mrb[0].mxu0
        %v1281 = vadd.f32 0.0, %v1280
        %v1282 = vpop.f32.mrb[0].mxu0
        %v1283 = vadd.f32 0.0, %v1282
        %v1284 = vpop.f32.mrb[0].mxu0
        %v1285 = vadd.f32 0.0, %v1284
        %v1286 = vpop.f32.mrb[0].mxu0
        %v1287 = vadd.f32 0.0, %v1286
        %1288 = vmatprep.mubr.bf16.mxu0 %v712
        %1289 = vmatmul.mubr.bf16.gmra.mrb[0].mxu0 %v711
        %v1290 = vpop.f32.mrb[0].mxu0
        %v1291 = vadd.f32 0.0, %v1290
        %v1292 = vpop.f32.mrb[0].mxu0
        %v1293 = vadd.f32 0.0, %v1292
        %v1294 = vpop.f32.mrb[0].mxu0
        %v1295 = vadd.f32 0.0, %v1294
        %v1296 = vpop.f32.mrb[0].mxu0
        %v1297 = vadd.f32 0.0, %v1296
        %1298 = vmatprep.mubr.bf16.mxu0 %v714
        %1299 = vmatmul.mubr.bf16.gmra.mrb[0].mxu0 %v713
        %v1300 = vpop.f32.mrb[0].mxu0
        %v1301 = vadd.f32 0.0, %v1300
        %v1302 = vpop.f32.mrb[0].mxu0
        %v1303 = vadd.f32 0.0, %v1302
        %v1304 = vpop.f32.mrb[0].mxu0
        %v1305 = vadd.f32 0.0, %v1304
        %v1306 = vpop.f32.mrb[0].mxu0
        %v1307 = vadd.f32 0.0, %v1306
        %1308 = vmatprep.mubr.bf16.mxu0 %v716
        %1309 = vmatmul.mubr.bf16.gmra.mrb[0].mxu0 %v715
        %v1310 = vpop.f32.mrb[0].mxu0
        %v1311 = vadd.f32 0.0, %v1310
        %v1312 = vpop.f32.mrb[0].mxu0
        %v1313 = vadd.f32 0.0, %v1312
        %v1314 = vpop.f32.mrb[0].mxu0
        %v1315 = vadd.f32 0.0, %v1314
        %v1316 = vpop.f32.mrb[0].mxu0
        %v1317 = vadd.f32 0.0, %v1316
        %1318 = vmatprep.mubr.bf16.mxu0 %v718
        %1319 = vmatmul.mubr.bf16.gmra.mrb[0].mxu0 %v717
        %v1320 = vpop.f32.mrb[0].mxu0
        %v1321 = vadd.f32 0.0, %v1320
        %v1322 = vpop.f32.mrb[0].mxu0
        %v1323 = vadd.f32 0.0, %v1322
        %v1324 = vpop.f32.mrb[0].mxu0
        %v1325 = vadd.f32 0.0, %v1324
        %v1326 = vpop.f32.mrb[0].mxu0
        %v1327 = vadd.f32 0.0, %v1326
        %1328 = vmatprep.mubr.bf16.mxu0 %v720
        %1329 = vmatmul.mubr.bf16.gmra.mrb[0].mxu0 %v719
        %v1330 = vpop.f32.mrb[0].mxu0
        %v1331 = vadd.f32 0.0, %v1330
        %v1332 = vpop.f32.mrb[0].mxu0
        %v1333 = vadd.f32 0.0, %v1332
        %v1334 = vpop.f32.mrb[0].mxu0
        %v1335 = vadd.f32 0.0, %v1334
        %v1336 = vpop.f32.mrb[0].mxu0
        %v1337 = vadd.f32 0.0, %v1336
        %1338 = vmatprep.mubr.bf16.mxu0 %v722
        %1339 = vmatmul.mubr.bf16.gmra.mrb[0].mxu0 %v721
        %v1340 = vpop.f32.mrb[0].mxu0
        %v1341 = vadd.f32 0.0, %v1340
        %v1342 = vpop.f32.mrb[0].mxu0
        %v1343 = vadd.f32 0.0, %v1342
        %v1344 = vpop.f32.mrb[0].mxu0
        %v1345 = vadd.f32 0.0, %v1344
        %v1346 = vpop.f32.mrb[0].mxu0
        %v1347 = vadd.f32 0.0, %v1346
        %1348 = vmatprep.mubr.bf16.mxu0 %v724
        %1349 = vmatmul.mubr.bf16.gmra.mrb[0].mxu0 %v723
        %v1350 = vpop.f32.mrb[0].mxu0
        %v1351 = vadd.f32 0.0, %v1350
        %v1352 = vpop.f32.mrb[0].mxu0
        %v1353 = vadd.f32 0.0, %v1352
        %v1354 = vpop.f32.mrb[0].mxu0
        %v1355 = vadd.f32 0.0, %v1354
        %v1356 = vpop.f32.mrb[0].mxu0
        %v1357 = vadd.f32 0.0, %v1356
        %1358 = vmatprep.mubr.bf16.mxu0 %v726
        %1359 = vmatmul.mubr.bf16.gmra.mrb[0].mxu0 %v725
        %v1360 = vpop.f32.mrb[0].mxu0
        %v1361 = vadd.f32 0.0, %v1360
        %v1362 = vpop.f32.mrb[0].mxu0
        %v1363 = vadd.f32 0.0, %v1362
        %v1364 = vpop.f32.mrb[0].mxu0
        %v1365 = vadd.f32 0.0, %v1364
        %v1366 = vpop.f32.mrb[0].mxu0
        %v1367 = vadd.f32 0.0, %v1366
        %1368 = vmatprep.mubr.bf16.mxu0 %v728
        %1369 = vmatmul.mubr.bf16.gmra.mrb[0].mxu0 %v727
        %v1370 = vpop.f32.mrb[0].mxu0
        %v1371 = vadd.f32 0.0, %v1370
        %v1372 = vpop.f32.mrb[0].mxu0
        %v1373 = vadd.f32 0.0, %v1372
        %v1374 = vpop.f32.mrb[0].mxu0
        %v1375 = vadd.f32 0.0, %v1374
        %v1376 = vpop.f32.mrb[0].mxu0
        %v1377 = vadd.f32 0.0, %v1376
        %1378 = vdwg.mxu0
        %vm1379 = vcmp.gt.f32.partialorder %v1148, 0.0
        %vm1380 = vcmp.gt.f32.partialorder %v1150, 0.0
        %vm1381 = vcmp.gt.f32.partialorder %v1281, 0.0
        %vm1382 = vcmp.gt.f32.partialorder %v1283, 0.0
        %vm1383 = vcmp.gt.f32.partialorder %v1152, 0.0
        %vm1384 = vcmp.gt.f32.partialorder %v1154, 0.0
        %vm1385 = vcmp.gt.f32.partialorder %v1285, 0.0
        %vm1386 = vcmp.gt.f32.partialorder %v1287, 0.0
        %vm1387 = vcmp.gt.f32.partialorder %v1158, 0.0
        %vm1388 = vcmp.gt.f32.partialorder %v1160, 0.0
        %vm1389 = vcmp.gt.f32.partialorder %v1291, 0.0
        %vm1390 = vcmp.gt.f32.partialorder %v1293, 0.0
        %vm1391 = vcmp.gt.f32.partialorder %v1162, 0.0
        %vm1392 = vcmp.gt.f32.partialorder %v1164, 0.0
        %vm1393 = vcmp.gt.f32.partialorder %v1295, 0.0
        %vm1394 = vcmp.gt.f32.partialorder %v1297, 0.0
        %vm1395 = vcmp.gt.f32.partialorder %v1168, 0.0
        %vm1396 = vcmp.gt.f32.partialorder %v1170, 0.0
        %vm1397 = vcmp.gt.f32.partialorder %v1301, 0.0
        %vm1398 = vcmp.gt.f32.partialorder %v1303, 0.0
        %vm1399 = vcmp.gt.f32.partialorder %v1172, 0.0
        %vm1400 = vcmp.gt.f32.partialorder %v1174, 0.0
        %vm1401 = vcmp.gt.f32.partialorder %v1305, 0.0
        %vm1402 = vcmp.gt.f32.partialorder %v1307, 0.0
        %vm1403 = vcmp.gt.f32.partialorder %v1178, 0.0
        %vm1404 = vcmp.gt.f32.partialorder %v1180, 0.0
        %vm1405 = vcmp.gt.f32.partialorder %v1311, 0.0
        %vm1406 = vcmp.gt.f32.partialorder %v1313, 0.0
        %vm1407 = vcmp.gt.f32.partialorder %v1182, 0.0
        %vm1408 = vcmp.gt.f32.partialorder %v1184, 0.0
        %vm1409 = vcmp.gt.f32.partialorder %v1315, 0.0
        %vm1410 = vcmp.gt.f32.partialorder %v1317, 0.0
        %vm1411 = vcmp.gt.f32.partialorder %v1188, 0.0
        %vm1412 = vcmp.gt.f32.partialorder %v1190, 0.0
        %vm1413 = vcmp.gt.f32.partialorder %v1321, 0.0
        %vm1414 = vcmp.gt.f32.partialorder %v1323, 0.0
        %vm1415 = vcmp.gt.f32.partialorder %v1192, 0.0
        %vm1416 = vcmp.gt.f32.partialorder %v1194, 0.0
        %vm1417 = vcmp.gt.f32.partialorder %v1325, 0.0
        %vm1418 = vcmp.gt.f32.partialorder %v1327, 0.0
        %vm1419 = vcmp.gt.f32.partialorder %v1198, 0.0
        %vm1420 = vcmp.gt.f32.partialorder %v1200, 0.0
        %vm1421 = vcmp.gt.f32.partialorder %v1331, 0.0
        %vm1422 = vcmp.gt.f32.partialorder %v1333, 0.0
        %vm1423 = vcmp.gt.f32.partialorder %v1202, 0.0
        %vm1424 = vcmp.gt.f32.partialorder %v1204, 0.0
        %vm1425 = vcmp.gt.f32.partialorder %v1335, 0.0
        %vm1426 = vcmp.gt.f32.partialorder %v1337, 0.0
        %vm1427 = vcmp.gt.f32.partialorder %v1208, 0.0
        %vm1428 = vcmp.gt.f32.partialorder %v1210, 0.0
        %vm1429 = vcmp.gt.f32.partialorder %v1341, 0.0
        %vm1430 = vcmp.gt.f32.partialorder %v1343, 0.0
        %vm1431 = vcmp.gt.f32.partialorder %v1212, 0.0
        %vm1432 = vcmp.gt.f32.partialorder %v1214, 0.0
        %vm1433 = vcmp.gt.f32.partialorder %v1345, 0.0
        %vm1434 = vcmp.gt.f32.partialorder %v1347, 0.0
        %vm1435 = vcmp.gt.f32.partialorder %v1218, 0.0
        %vm1436 = vcmp.gt.f32.partialorder %v1220, 0.0
        %vm1437 = vcmp.gt.f32.partialorder %v1351, 0.0
        %vm1438 = vcmp.gt.f32.partialorder %v1353, 0.0
        %vm1439 = vcmp.gt.f32.partialorder %v1222, 0.0
        %vm1440 = vcmp.gt.f32.partialorder %v1224, 0.0
        %vm1441 = vcmp.gt.f32.partialorder %v1355, 0.0
        %vm1442 = vcmp.gt.f32.partialorder %v1357, 0.0
        %vm1443 = vcmp.gt.f32.partialorder %v1228, 0.0
        %vm1444 = vcmp.gt.f32.partialorder %v1230, 0.0
        %vm1445 = vcmp.gt.f32.partialorder %v1361, 0.0
        %vm1446 = vcmp.gt.f32.partialorder %v1363, 0.0
        %vm1447 = vcmp.gt.f32.partialorder %v1232, 0.0
        %vm1448 = vcmp.gt.f32.partialorder %v1234, 0.0
        %vm1449 = vcmp.gt.f32.partialorder %v1365, 0.0
        %vm1450 = vcmp.gt.f32.partialorder %v1367, 0.0
        %vm1451 = vcmp.gt.f32.partialorder %v1238, 0.0
        %vm1452 = vcmp.gt.f32.partialorder %v1240, 0.0
        %vm1453 = vcmp.gt.f32.partialorder %v1371, 0.0
        %vm1454 = vcmp.gt.f32.partialorder %v1373, 0.0
        %vm1455 = vcmp.gt.f32.partialorder %v1242, 0.0
        %vm1456 = vcmp.gt.f32.partialorder %v1244, 0.0
        %vm1457 = vcmp.gt.f32.partialorder %v1375, 0.0
        %vm1458 = vcmp.gt.f32.partialorder %v1377, 0.0
        %v1459 = vmul.f32 %v1148, 0.2
        %v1460 = vmul.f32 %v1150, 0.2
        %v1461 = vmul.f32 %v1281, 0.2
        %v1462 = vmul.f32 %v1283, 0.2
        %v1463 = vmul.f32 %v1152, 0.2
        %v1464 = vmul.f32 %v1154, 0.2
        %v1465 = vmul.f32 %v1285, 0.2
        %v1466 = vmul.f32 %v1287, 0.2
        %v1467 = vmul.f32 %v1158, 0.2
        %v1468 = vmul.f32 %v1160, 0.2
        %v1469 = vmul.f32 %v1291, 0.2
        %v1470 = vmul.f32 %v1293, 0.2
        %v1471 = vmul.f32 %v1162, 0.2
        %v1472 = vmul.f32 %v1164, 0.2
        %v1473 = vmul.f32 %v1295, 0.2
        %v1474 = vmul.f32 %v1297, 0.2
        %v1475 = vmul.f32 %v1168, 0.2
        %v1476 = vmul.f32 %v1170, 0.2
        %v1477 = vmul.f32 %v1301, 0.2
        %v1478 = vmul.f32 %v1303, 0.2
        %v1479 = vmul.f32 %v1172, 0.2
        %v1480 = vmul.f32 %v1174, 0.2
        %v1481 = vmul.f32 %v1305, 0.2
        %v1482 = vmul.f32 %v1307, 0.2
        %v1483 = vmul.f32 %v1178, 0.2
        %v1484 = vmul.f32 %v1180, 0.2
        %v1485 = vmul.f32 %v1311, 0.2
        %v1486 = vmul.f32 %v1313, 0.2
        %v1487 = vmul.f32 %v1182, 0.2
        %v1488 = vmul.f32 %v1184, 0.2
        %v1489 = vmul.f32 %v1315, 0.2
        %v1490 = vmul.f32 %v1317, 0.2
        %v1491 = vmul.f32 %v1188, 0.2
        %v1492 = vmul.f32 %v1190, 0.2
        %v1493 = vmul.f32 %v1321, 0.2
        %v1494 = vmul.f32 %v1323, 0.2
        %v1495 = vmul.f32 %v1192, 0.2
        %v1496 = vmul.f32 %v1194, 0.2
        %v1497 = vmul.f32 %v1325, 0.2
        %v1498 = vmul.f32 %v1327, 0.2
        %v1499 = vmul.f32 %v1198, 0.2
        %v1500 = vmul.f32 %v1200, 0.2
        %v1501 = vmul.f32 %v1331, 0.2
        %v1502 = vmul.f32 %v1333, 0.2
        %v1503 = vmul.f32 %v1202, 0.2
        %v1504 = vmul.f32 %v1204, 0.2
        %v1505 = vmul.f32 %v1335, 0.2
        %v1506 = vmul.f32 %v1337, 0.2
        %v1507 = vmul.f32 %v1208, 0.2
        %v1508 = vmul.f32 %v1210, 0.2
        %v1509 = vmul.f32 %v1341, 0.2
        %v1510 = vmul.f32 %v1343, 0.2
        %v1511 = vmul.f32 %v1212, 0.2
        %v1512 = vmul.f32 %v1214, 0.2
        %v1513 = vmul.f32 %v1345, 0.2
        %v1514 = vmul.f32 %v1347, 0.2
        %v1515 = vmul.f32 %v1218, 0.2
        %v1516 = vmul.f32 %v1220, 0.2
        %v1517 = vmul.f32 %v1351, 0.2
        %v1518 = vmul.f32 %v1353, 0.2
        %v1519 = vmul.f32 %v1222, 0.2
        %v1520 = vmul.f32 %v1224, 0.2
        %v1521 = vmul.f32 %v1355, 0.2
        %v1522 = vmul.f32 %v1357, 0.2
        %v1523 = vmul.f32 %v1228, 0.2
        %v1524 = vmul.f32 %v1230, 0.2
        %v1525 = vmul.f32 %v1361, 0.2
        %v1526 = vmul.f32 %v1363, 0.2
        %v1527 = vmul.f32 %v1232, 0.2
        %v1528 = vmul.f32 %v1234, 0.2
        %v1529 = vmul.f32 %v1365, 0.2
        %v1530 = vmul.f32 %v1367, 0.2
        %v1531 = vmul.f32 %v1238, 0.2
        %v1532 = vmul.f32 %v1240, 0.2
        %v1533 = vmul.f32 %v1371, 0.2
        %v1534 = vmul.f32 %v1373, 0.2
        %v1535 = vmul.f32 %v1242, 0.2
        %v1536 = vmul.f32 %v1244, 0.2
        %v1537 = vmul.f32 %v1375, 0.2
        %v1538 = vmul.f32 %v1377, 0.2
        %v1539 = vsel %vm1379, %v1148, %v1459
        %v1540 = vsel %vm1380, %v1150, %v1460
        %v1541 = vsel %vm1381, %v1281, %v1461
        %v1542 = vsel %vm1382, %v1283, %v1462
        %v1543 = vsel %vm1383, %v1152, %v1463
        %v1544 = vsel %vm1384, %v1154, %v1464
        %v1545 = vsel %vm1385, %v1285, %v1465
        %v1546 = vsel %vm1386, %v1287, %v1466
        %v1547 = vsel %vm1387, %v1158, %v1467
        %v1548 = vsel %vm1388, %v1160, %v1468
        %v1549 = vsel %vm1389, %v1291, %v1469
        %v1550 = vsel %vm1390, %v1293, %v1470
        %v1551 = vsel %vm1391, %v1162, %v1471
        %v1552 = vsel %vm1392, %v1164, %v1472
        %v1553 = vsel %vm1393, %v1295, %v1473
        %v1554 = vsel %vm1394, %v1297, %v1474
        %v1555 = vsel %vm1395, %v1168, %v1475
        %v1556 = vsel %vm1396, %v1170, %v1476
        %v1557 = vsel %vm1397, %v1301, %v1477
        %v1558 = vsel %vm1398, %v1303, %v1478
        %v1559 = vsel %vm1399, %v1172, %v1479
        %v1560 = vsel %vm1400, %v1174, %v1480
        %v1561 = vsel %vm1401, %v1305, %v1481
        %v1562 = vsel %vm1402, %v1307, %v1482
        %v1563 = vsel %vm1403, %v1178, %v1483
        %v1564 = vsel %vm1404, %v1180, %v1484
        %v1565 = vsel %vm1405, %v1311, %v1485
        %v1566 = vsel %vm1406, %v1313, %v1486
        %v1567 = vsel %vm1407, %v1182, %v1487
        %v1568 = vsel %vm1408, %v1184, %v1488
        %v1569 = vsel %vm1409, %v1315, %v1489
        %v1570 = vsel %vm1410, %v1317, %v1490
        %v1571 = vsel %vm1411, %v1188, %v1491
        %v1572 = vsel %vm1412, %v1190, %v1492
        %v1573 = vsel %vm1413, %v1321, %v1493
        %v1574 = vsel %vm1414, %v1323, %v1494
        %v1575 = vsel %vm1415, %v1192, %v1495
        %v1576 = vsel %vm1416, %v1194, %v1496
        %v1577 = vsel %vm1417, %v1325, %v1497
        %v1578 = vsel %vm1418, %v1327, %v1498
        %v1579 = vsel %vm1419, %v1198, %v1499
        %v1580 = vsel %vm1420, %v1200, %v1500
        %v1581 = vsel %vm1421, %v1331, %v1501
        %v1582 = vsel %vm1422, %v1333, %v1502
        %v1583 = vsel %vm1423, %v1202, %v1503
        %v1584 = vsel %vm1424, %v1204, %v1504
        %v1585 = vsel %vm1425, %v1335, %v1505
        %v1586 = vsel %vm1426, %v1337, %v1506
        %v1587 = vsel %vm1427, %v1208, %v1507
        %v1588 = vsel %vm1428, %v1210, %v1508
        %v1589 = vsel %vm1429, %v1341, %v1509
        %v1590 = vsel %vm1430, %v1343, %v1510
        %v1591 = vsel %vm1431, %v1212, %v1511
        %v1592 = vsel %vm1432, %v1214, %v1512
        %v1593 = vsel %vm1433, %v1345, %v1513
        %v1594 = vsel %vm1434, %v1347, %v1514
        %v1595 = vsel %vm1435, %v1218, %v1515
        %v1596 = vsel %vm1436, %v1220, %v1516
        %v1597 = vsel %vm1437, %v1351, %v1517
        %v1598 = vsel %vm1438, %v1353, %v1518
        %v1599 = vsel %vm1439, %v1222, %v1519
        %v1600 = vsel %vm1440, %v1224, %v1520
        %v1601 = vsel %vm1441, %v1355, %v1521
        %v1602 = vsel %vm1442, %v1357, %v1522
        %v1603 = vsel %vm1443, %v1228, %v1523
        %v1604 = vsel %vm1444, %v1230, %v1524
        %v1605 = vsel %vm1445, %v1361, %v1525
        %v1606 = vsel %vm1446, %v1363, %v1526
        %v1607 = vsel %vm1447, %v1232, %v1527
        %v1608 = vsel %vm1448, %v1234, %v1528
        %v1609 = vsel %vm1449, %v1365, %v1529
        %v1610 = vsel %vm1450, %v1367, %v1530
        %v1611 = vsel %vm1451, %v1238, %v1531
        %v1612 = vsel %vm1452, %v1240, %v1532
        %v1613 = vsel %vm1453, %v1371, %v1533
        %v1614 = vsel %vm1454, %v1373, %v1534
        %v1615 = vsel %vm1455, %v1242, %v1535
        %v1616 = vsel %vm1456, %v1244, %v1536
        %v1617 = vsel %vm1457, %v1375, %v1537
        %v1618 = vsel %vm1458, %v1377, %v1538
        %v1619 = vpack.c.bf16 %v1543, %v1539
        %v1620 = vpack.c.bf16 %v1544, %v1540
        %v1621 = vpack.c.bf16 %v1545, %v1541
        %v1622 = vpack.c.bf16 %v1546, %v1542
        %v1623 = vpack.c.bf16 %v1551, %v1547
        %v1624 = vpack.c.bf16 %v1552, %v1548
        %v1625 = vpack.c.bf16 %v1553, %v1549
        %v1626 = vpack.c.bf16 %v1554, %v1550
        %v1627 = vpack.c.bf16 %v1559, %v1555
        %v1628 = vpack.c.bf16 %v1560, %v1556
        %v1629 = vpack.c.bf16 %v1561, %v1557
        %v1630 = vpack.c.bf16 %v1562, %v1558
        %v1631 = vpack.c.bf16 %v1567, %v1563
        %v1632 = vpack.c.bf16 %v1568, %v1564
        %v1633 = vpack.c.bf16 %v1569, %v1565
        %v1634 = vpack.c.bf16 %v1570, %v1566
        %v1635 = vpack.c.bf16 %v1575, %v1571
        %v1636 = vpack.c.bf16 %v1576, %v1572
        %v1637 = vpack.c.bf16 %v1577, %v1573
        %v1638 = vpack.c.bf16 %v1578, %v1574
        %v1639 = vpack.c.bf16 %v1583, %v1579
        %v1640 = vpack.c.bf16 %v1584, %v1580
        %v1641 = vpack.c.bf16 %v1585, %v1581
        %v1642 = vpack.c.bf16 %v1586, %v1582
        %v1643 = vpack.c.bf16 %v1591, %v1587
        %v1644 = vpack.c.bf16 %v1592, %v1588
        %v1645 = vpack.c.bf16 %v1593, %v1589
        %v1646 = vpack.c.bf16 %v1594, %v1590
        %v1647 = vpack.c.bf16 %v1599, %v1595
        %v1648 = vpack.c.bf16 %v1600, %v1596
        %v1649 = vpack.c.bf16 %v1601, %v1597
        %v1650 = vpack.c.bf16 %v1602, %v1598
        %v1651 = vpack.c.bf16 %v1607, %v1603
        %v1652 = vpack.c.bf16 %v1608, %v1604
        %v1653 = vpack.c.bf16 %v1609, %v1605
        %v1654 = vpack.c.bf16 %v1610, %v1606
        %v1655 = vpack.c.bf16 %v1615, %v1611
        %v1656 = vpack.c.bf16 %v1616, %v1612
        %v1657 = vpack.c.bf16 %v1617, %v1613
        %v1658 = vpack.c.bf16 %v1618, %v1614
        %v1659 = vld [vmem:[#allocation6] sm:$0xff]
        %v1660 = vld [vmem:[#allocation6 + $0x8] sm:$0xff]
        %v1661 = vld [vmem:[#allocation6 + $0x10] sm:$0xff]
        %v1662 = vld [vmem:[#allocation6 + $0x18] sm:$0xff]
        %v1663 = vld [vmem:[#allocation6 + $0x20] sm:$0xff]
        %v1664 = vld [vmem:[#allocation6 + $0x28] sm:$0xff]
        %v1665 = vld [vmem:[#allocation6 + $0x30] sm:$0xff]
        %v1666 = vld [vmem:[#allocation6 + $0x38] sm:$0xff]
        %v1667 = vld [vmem:[#allocation6 + $0x40] sm:$0xff]
        %v1668 = vld [vmem:[#allocation6 + $0x48] sm:$0xff]
        %v1669 = vld [vmem:[#allocation6 + $0x50] sm:$0xff]
        %v1670 = vld [vmem:[#allocation6 + $0x58] sm:$0xff]
        %v1671 = vld [vmem:[#allocation6 + $0x60] sm:$0xff]
        %v1672 = vld [vmem:[#allocation6 + $0x68] sm:$0xff]
        %v1673 = vld [vmem:[#allocation6 + $0x70] sm:$0xff]
        %v1674 = vld [vmem:[#allocation6 + $0x78] sm:$0xff]
        %v1675 = vld [vmem:[#allocation6 + $0x80] sm:$0xff]
        %v1676 = vld [vmem:[#allocation6 + $0x88] sm:$0xff]
        %v1677 = vld [vmem:[#allocation6 + $0x90] sm:$0xff]
        %v1678 = vld [vmem:[#allocation6 + $0x98] sm:$0xff]
        %v1679 = vld [vmem:[#allocation6 + $0xa0] sm:$0xff]
        %v1680 = vld [vmem:[#allocation6 + $0xa8] sm:$0xff]
        %v1681 = vld [vmem:[#allocation6 + $0xb0] sm:$0xff]
        %v1682 = vld [vmem:[#allocation6 + $0xb8] sm:$0xff]
        %v1683 = vld [vmem:[#allocation6 + $0xc0] sm:$0xff]
        %v1684 = vld [vmem:[#allocation6 + $0xc8] sm:$0xff]
        %v1685 = vld [vmem:[#allocation6 + $0xd0] sm:$0xff]
        %v1686 = vld [vmem:[#allocation6 + $0xd8] sm:$0xff]
        %v1687 = vld [vmem:[#allocation6 + $0xe0] sm:$0xff]
        %v1688 = vld [vmem:[#allocation6 + $0xe8] sm:$0xff]
        %v1689 = vld [vmem:[#allocation6 + $0xf0] sm:$0xff]
        %v1690 = vld [vmem:[#allocation6 + $0xf8] sm:$0xff]
        %v1691 = vld [vmem:[#allocation6 + $0x100] sm:$0xff]
        %v1692 = vld [vmem:[#allocation6 + $0x108] sm:$0xff]
        %v1693 = vld [vmem:[#allocation6 + $0x110] sm:$0xff]
        %v1694 = vld [vmem:[#allocation6 + $0x118] sm:$0xff]
        %v1695 = vld [vmem:[#allocation6 + $0x120] sm:$0xff]
        %v1696 = vld [vmem:[#allocation6 + $0x128] sm:$0xff]
        %v1697 = vld [vmem:[#allocation6 + $0x130] sm:$0xff]
        %v1698 = vld [vmem:[#allocation6 + $0x138] sm:$0xff]
        %v1699 = vld [vmem:[#allocation6 + $0x140] sm:$0xff]
        %v1700 = vld [vmem:[#allocation6 + $0x148] sm:$0xff]
        %v1701 = vld [vmem:[#allocation6 + $0x150] sm:$0xff]
        %v1702 = vld [vmem:[#allocation6 + $0x158] sm:$0xff]
        %v1703 = vld [vmem:[#allocation6 + $0x160] sm:$0xff]
        %v1704 = vld [vmem:[#allocation6 + $0x168] sm:$0xff]
        %v1705 = vld [vmem:[#allocation6 + $0x170] sm:$0xff]
        %v1706 = vld [vmem:[#allocation6 + $0x178] sm:$0xff]
        %v1707 = vld [vmem:[#allocation6 + $0x180] sm:$0xff]
        %v1708 = vld [vmem:[#allocation6 + $0x188] sm:$0xff]
        %v1709 = vld [vmem:[#allocation6 + $0x190] sm:$0xff]
        %v1710 = vld [vmem:[#allocation6 + $0x198] sm:$0xff]
        %v1711 = vld [vmem:[#allocation6 + $0x1a0] sm:$0xff]
        %v1712 = vld [vmem:[#allocation6 + $0x1a8] sm:$0xff]
        %v1713 = vld [vmem:[#allocation6 + $0x1b0] sm:$0xff]
        %v1714 = vld [vmem:[#allocation6 + $0x1b8] sm:$0xff]
        %v1715 = vld [vmem:[#allocation6 + $0x1c0] sm:$0xff]
        %v1716 = vld [vmem:[#allocation6 + $0x1c8] sm:$0xff]
        %v1717 = vld [vmem:[#allocation6 + $0x1d0] sm:$0xff]
        %v1718 = vld [vmem:[#allocation6 + $0x1d8] sm:$0xff]
        %v1719 = vld [vmem:[#allocation6 + $0x1e0] sm:$0xff]
        %v1720 = vld [vmem:[#allocation6 + $0x1e8] sm:$0xff]
        %v1721 = vld [vmem:[#allocation6 + $0x1f0] sm:$0xff]
        %v1722 = vld [vmem:[#allocation6 + $0x1f8] sm:$0xff]
        %v1723 = vld [vmem:[#allocation6 + $0x200] sm:$0xff]
        %v1724 = vld [vmem:[#allocation6 + $0x208] sm:$0xff]
        %v1725 = vld [vmem:[#allocation6 + $0x210] sm:$0xff]
        %v1726 = vld [vmem:[#allocation6 + $0x218] sm:$0xff]
        %v1727 = vld [vmem:[#allocation6 + $0x220] sm:$0xff]
        %v1728 = vld [vmem:[#allocation6 + $0x228] sm:$0xff]
        %v1729 = vld [vmem:[#allocation6 + $0x230] sm:$0xff]
        %v1730 = vld [vmem:[#allocation6 + $0x238] sm:$0xff]
        %v1731 = vld [vmem:[#allocation6 + $0x240] sm:$0xff]
        %v1732 = vld [vmem:[#allocation6 + $0x248] sm:$0xff]
        %v1733 = vld [vmem:[#allocation6 + $0x250] sm:$0xff]
        %v1734 = vld [vmem:[#allocation6 + $0x258] sm:$0xff]
        %v1735 = vld [vmem:[#allocation6 + $0x260] sm:$0xff]
        %v1736 = vld [vmem:[#allocation6 + $0x268] sm:$0xff]
        %v1737 = vld [vmem:[#allocation6 + $0x270] sm:$0xff]
        %v1738 = vld [vmem:[#allocation6 + $0x278] sm:$0xff]
        %v1739 = vld [vmem:[#allocation6 + $0x280] sm:$0xff]
        %v1740 = vld [vmem:[#allocation6 + $0x288] sm:$0xff]
        %v1741 = vld [vmem:[#allocation6 + $0x290] sm:$0xff]
        %v1742 = vld [vmem:[#allocation6 + $0x298] sm:$0xff]
        %v1743 = vld [vmem:[#allocation6 + $0x2a0] sm:$0xff]
        %v1744 = vld [vmem:[#allocation6 + $0x2a8] sm:$0xff]
        %v1745 = vld [vmem:[#allocation6 + $0x2b0] sm:$0xff]
        %v1746 = vld [vmem:[#allocation6 + $0x2b8] sm:$0xff]
        %v1747 = vld [vmem:[#allocation6 + $0x2c0] sm:$0xff]
        %v1748 = vld [vmem:[#allocation6 + $0x2c8] sm:$0xff]
        %v1749 = vld [vmem:[#allocation6 + $0x2d0] sm:$0xff]
        %v1750 = vld [vmem:[#allocation6 + $0x2d8] sm:$0xff]
        %v1751 = vld [vmem:[#allocation6 + $0x2e0] sm:$0xff]
        %v1752 = vld [vmem:[#allocation6 + $0x2e8] sm:$0xff]
        %v1753 = vld [vmem:[#allocation6 + $0x2f0] sm:$0xff]
        %v1754 = vld [vmem:[#allocation6 + $0x2f8] sm:$0xff]
        %v1755 = vld [vmem:[#allocation6 + $0x300] sm:$0xff]
        %v1756 = vld [vmem:[#allocation6 + $0x308] sm:$0xff]
        %v1757 = vld [vmem:[#allocation6 + $0x310] sm:$0xff]
        %v1758 = vld [vmem:[#allocation6 + $0x318] sm:$0xff]
        %v1759 = vld [vmem:[#allocation6 + $0x320] sm:$0xff]
        %v1760 = vld [vmem:[#allocation6 + $0x328] sm:$0xff]
        %v1761 = vld [vmem:[#allocation6 + $0x330] sm:$0xff]
        %v1762 = vld [vmem:[#allocation6 + $0x338] sm:$0xff]
        %v1763 = vld [vmem:[#allocation6 + $0x340] sm:$0xff]
        %v1764 = vld [vmem:[#allocation6 + $0x348] sm:$0xff]
        %v1765 = vld [vmem:[#allocation6 + $0x350] sm:$0xff]
        %v1766 = vld [vmem:[#allocation6 + $0x358] sm:$0xff]
        %v1767 = vld [vmem:[#allocation6 + $0x360] sm:$0xff]
        %v1768 = vld [vmem:[#allocation6 + $0x368] sm:$0xff]
        %v1769 = vld [vmem:[#allocation6 + $0x370] sm:$0xff]
        %v1770 = vld [vmem:[#allocation6 + $0x378] sm:$0xff]
        %v1771 = vld [vmem:[#allocation6 + $0x380] sm:$0xff]
        %v1772 = vld [vmem:[#allocation6 + $0x388] sm:$0xff]
        %v1773 = vld [vmem:[#allocation6 + $0x390] sm:$0xff]
        %v1774 = vld [vmem:[#allocation6 + $0x398] sm:$0xff]
        %v1775 = vld [vmem:[#allocation6 + $0x3a0] sm:$0xff]
        %v1776 = vld [vmem:[#allocation6 + $0x3a8] sm:$0xff]
        %v1777 = vld [vmem:[#allocation6 + $0x3b0] sm:$0xff]
        %v1778 = vld [vmem:[#allocation6 + $0x3b8] sm:$0xff]
        %v1779 = vld [vmem:[#allocation6 + $0x3c0] sm:$0xff]
        %v1780 = vld [vmem:[#allocation6 + $0x3c8] sm:$0xff]
        %v1781 = vld [vmem:[#allocation6 + $0x3d0] sm:$0xff]
        %v1782 = vld [vmem:[#allocation6 + $0x3d8] sm:$0xff]
        %v1783 = vld [vmem:[#allocation6 + $0x3e0] sm:$0xff]
        %v1784 = vld [vmem:[#allocation6 + $0x3e8] sm:$0xff]
        %v1785 = vld [vmem:[#allocation6 + $0x3f0] sm:$0xff]
        %v1786 = vld [vmem:[#allocation6 + $0x3f8] sm:$0xff]
        %v1787 = vld [vmem:[#allocation6 + $0x400] sm:$0xff]
        %v1788 = vld [vmem:[#allocation6 + $0x408] sm:$0xff]
        %v1789 = vld [vmem:[#allocation6 + $0x410] sm:$0xff]
        %v1790 = vld [vmem:[#allocation6 + $0x418] sm:$0xff]
        %v1791 = vld [vmem:[#allocation6 + $0x420] sm:$0xff]
        %v1792 = vld [vmem:[#allocation6 + $0x428] sm:$0xff]
        %v1793 = vld [vmem:[#allocation6 + $0x430] sm:$0xff]
        %v1794 = vld [vmem:[#allocation6 + $0x438] sm:$0xff]
        %v1795 = vld [vmem:[#allocation6 + $0x440] sm:$0xff]
        %v1796 = vld [vmem:[#allocation6 + $0x448] sm:$0xff]
        %v1797 = vld [vmem:[#allocation6 + $0x450] sm:$0xff]
        %v1798 = vld [vmem:[#allocation6 + $0x458] sm:$0xff]
        %v1799 = vld [vmem:[#allocation6 + $0x460] sm:$0xff]
        %v1800 = vld [vmem:[#allocation6 + $0x468] sm:$0xff]
        %v1801 = vld [vmem:[#allocation6 + $0x470] sm:$0xff]
        %v1802 = vld [vmem:[#allocation6 + $0x478] sm:$0xff]
        %v1803 = vld [vmem:[#allocation6 + $0x480] sm:$0xff]
        %v1804 = vld [vmem:[#allocation6 + $0x488] sm:$0xff]
        %v1805 = vld [vmem:[#allocation6 + $0x490] sm:$0xff]
        %v1806 = vld [vmem:[#allocation6 + $0x498] sm:$0xff]
        %v1807 = vld [vmem:[#allocation6 + $0x4a0] sm:$0xff]
        %v1808 = vld [vmem:[#allocation6 + $0x4a8] sm:$0xff]
        %v1809 = vld [vmem:[#allocation6 + $0x4b0] sm:$0xff]
        %v1810 = vld [vmem:[#allocation6 + $0x4b8] sm:$0xff]
        %v1811 = vld [vmem:[#allocation6 + $0x4c0] sm:$0xff]
        %v1812 = vld [vmem:[#allocation6 + $0x4c8] sm:$0xff]
        %v1813 = vld [vmem:[#allocation6 + $0x4d0] sm:$0xff]
        %v1814 = vld [vmem:[#allocation6 + $0x4d8] sm:$0xff]
        %v1815 = vld [vmem:[#allocation6 + $0x4e0] sm:$0xff]
        %v1816 = vld [vmem:[#allocation6 + $0x4e8] sm:$0xff]
        %v1817 = vld [vmem:[#allocation6 + $0x4f0] sm:$0xff]
        %v1818 = vld [vmem:[#allocation6 + $0x4f8] sm:$0xff]
        %v1819 = vld [vmem:[#allocation6 + $0x500] sm:$0xff]
        %v1820 = vld [vmem:[#allocation6 + $0x508] sm:$0xff]
        %v1821 = vld [vmem:[#allocation6 + $0x510] sm:$0xff]
        %v1822 = vld [vmem:[#allocation6 + $0x518] sm:$0xff]
        %v1823 = vld [vmem:[#allocation6 + $0x520] sm:$0xff]
        %v1824 = vld [vmem:[#allocation6 + $0x528] sm:$0xff]
        %v1825 = vld [vmem:[#allocation6 + $0x530] sm:$0xff]
        %v1826 = vld [vmem:[#allocation6 + $0x538] sm:$0xff]
        %v1827 = vld [vmem:[#allocation6 + $0x540] sm:$0xff]
        %v1828 = vld [vmem:[#allocation6 + $0x548] sm:$0xff]
        %v1829 = vld [vmem:[#allocation6 + $0x550] sm:$0xff]
        %v1830 = vld [vmem:[#allocation6 + $0x558] sm:$0xff]
        %v1831 = vld [vmem:[#allocation6 + $0x560] sm:$0xff]
        %v1832 = vld [vmem:[#allocation6 + $0x568] sm:$0xff]
        %v1833 = vld [vmem:[#allocation6 + $0x570] sm:$0xff]
        %v1834 = vld [vmem:[#allocation6 + $0x578] sm:$0xff]
        %v1835 = vld [vmem:[#allocation6 + $0x580] sm:$0xff]
        %v1836 = vld [vmem:[#allocation6 + $0x588] sm:$0xff]
        %v1837 = vld [vmem:[#allocation6 + $0x590] sm:$0xff]
        %v1838 = vld [vmem:[#allocation6 + $0x598] sm:$0xff]
        %v1839 = vld [vmem:[#allocation6 + $0x5a0] sm:$0xff]
        %v1840 = vld [vmem:[#allocation6 + $0x5a8] sm:$0xff]
        %v1841 = vld [vmem:[#allocation6 + $0x5b0] sm:$0xff]
        %v1842 = vld [vmem:[#allocation6 + $0x5b8] sm:$0xff]
        %v1843 = vld [vmem:[#allocation6 + $0x5c0] sm:$0xff]
        %v1844 = vld [vmem:[#allocation6 + $0x5c8] sm:$0xff]
        %v1845 = vld [vmem:[#allocation6 + $0x5d0] sm:$0xff]
        %v1846 = vld [vmem:[#allocation6 + $0x5d8] sm:$0xff]
        %v1847 = vld [vmem:[#allocation6 + $0x5e0] sm:$0xff]
        %v1848 = vld [vmem:[#allocation6 + $0x5e8] sm:$0xff]
        %v1849 = vld [vmem:[#allocation6 + $0x5f0] sm:$0xff]
        %v1850 = vld [vmem:[#allocation6 + $0x5f8] sm:$0xff]
        %v1851 = vld [vmem:[#allocation6 + $0x600] sm:$0xff]
        %v1852 = vld [vmem:[#allocation6 + $0x608] sm:$0xff]
        %v1853 = vld [vmem:[#allocation6 + $0x610] sm:$0xff]
        %v1854 = vld [vmem:[#allocation6 + $0x618] sm:$0xff]
        %v1855 = vld [vmem:[#allocation6 + $0x620] sm:$0xff]
        %v1856 = vld [vmem:[#allocation6 + $0x628] sm:$0xff]
        %v1857 = vld [vmem:[#allocation6 + $0x630] sm:$0xff]
        %v1858 = vld [vmem:[#allocation6 + $0x638] sm:$0xff]
        %v1859 = vld [vmem:[#allocation6 + $0x640] sm:$0xff]
        %v1860 = vld [vmem:[#allocation6 + $0x648] sm:$0xff]
        %v1861 = vld [vmem:[#allocation6 + $0x650] sm:$0xff]
        %v1862 = vld [vmem:[#allocation6 + $0x658] sm:$0xff]
        %v1863 = vld [vmem:[#allocation6 + $0x660] sm:$0xff]
        %v1864 = vld [vmem:[#allocation6 + $0x668] sm:$0xff]
        %v1865 = vld [vmem:[#allocation6 + $0x670] sm:$0xff]
        %v1866 = vld [vmem:[#allocation6 + $0x678] sm:$0xff]
        %v1867 = vld [vmem:[#allocation6 + $0x680] sm:$0xff]
        %v1868 = vld [vmem:[#allocation6 + $0x688] sm:$0xff]
        %v1869 = vld [vmem:[#allocation6 + $0x690] sm:$0xff]
        %v1870 = vld [vmem:[#allocation6 + $0x698] sm:$0xff]
        %v1871 = vld [vmem:[#allocation6 + $0x6a0] sm:$0xff]
        %v1872 = vld [vmem:[#allocation6 + $0x6a8] sm:$0xff]
        %v1873 = vld [vmem:[#allocation6 + $0x6b0] sm:$0xff]
        %v1874 = vld [vmem:[#allocation6 + $0x6b8] sm:$0xff]
        %v1875 = vld [vmem:[#allocation6 + $0x6c0] sm:$0xff]
        %v1876 = vld [vmem:[#allocation6 + $0x6c8] sm:$0xff]
        %v1877 = vld [vmem:[#allocation6 + $0x6d0] sm:$0xff]
        %v1878 = vld [vmem:[#allocation6 + $0x6d8] sm:$0xff]
        %v1879 = vld [vmem:[#allocation6 + $0x6e0] sm:$0xff]
        %v1880 = vld [vmem:[#allocation6 + $0x6e8] sm:$0xff]
        %v1881 = vld [vmem:[#allocation6 + $0x6f0] sm:$0xff]
        %v1882 = vld [vmem:[#allocation6 + $0x6f8] sm:$0xff]
        %v1883 = vld [vmem:[#allocation6 + $0x700] sm:$0xff]
        %v1884 = vld [vmem:[#allocation6 + $0x708] sm:$0xff]
        %v1885 = vld [vmem:[#allocation6 + $0x710] sm:$0xff]
        %v1886 = vld [vmem:[#allocation6 + $0x718] sm:$0xff]
        %v1887 = vld [vmem:[#allocation6 + $0x720] sm:$0xff]
        %v1888 = vld [vmem:[#allocation6 + $0x728] sm:$0xff]
        %v1889 = vld [vmem:[#allocation6 + $0x730] sm:$0xff]
        %v1890 = vld [vmem:[#allocation6 + $0x738] sm:$0xff]
        %v1891 = vld [vmem:[#allocation6 + $0x740] sm:$0xff]
        %v1892 = vld [vmem:[#allocation6 + $0x748] sm:$0xff]
        %v1893 = vld [vmem:[#allocation6 + $0x750] sm:$0xff]
        %v1894 = vld [vmem:[#allocation6 + $0x758] sm:$0xff]
        %v1895 = vld [vmem:[#allocation6 + $0x760] sm:$0xff]
        %v1896 = vld [vmem:[#allocation6 + $0x768] sm:$0xff]
        %v1897 = vld [vmem:[#allocation6 + $0x770] sm:$0xff]
        %v1898 = vld [vmem:[#allocation6 + $0x778] sm:$0xff]
        %v1899 = vld [vmem:[#allocation6 + $0x780] sm:$0xff]
        %v1900 = vld [vmem:[#allocation6 + $0x788] sm:$0xff]
        %v1901 = vld [vmem:[#allocation6 + $0x790] sm:$0xff]
        %v1902 = vld [vmem:[#allocation6 + $0x798] sm:$0xff]
        %v1903 = vld [vmem:[#allocation6 + $0x7a0] sm:$0xff]
        %v1904 = vld [vmem:[#allocation6 + $0x7a8] sm:$0xff]
        %v1905 = vld [vmem:[#allocation6 + $0x7b0] sm:$0xff]
        %v1906 = vld [vmem:[#allocation6 + $0x7b8] sm:$0xff]
        %v1907 = vld [vmem:[#allocation6 + $0x7c0] sm:$0xff]
        %v1908 = vld [vmem:[#allocation6 + $0x7c8] sm:$0xff]
        %v1909 = vld [vmem:[#allocation6 + $0x7d0] sm:$0xff]
        %v1910 = vld [vmem:[#allocation6 + $0x7d8] sm:$0xff]
        %v1911 = vld [vmem:[#allocation6 + $0x7e0] sm:$0xff]
        %v1912 = vld [vmem:[#allocation6 + $0x7e8] sm:$0xff]
        %v1913 = vld [vmem:[#allocation6 + $0x7f0] sm:$0xff]
        %v1914 = vld [vmem:[#allocation6 + $0x7f8] sm:$0xff]
        %v2171 = vunpack.c.l.b16 %v1659
        %v2172 = vunpack.c.h.b16 %v1659
        %v2173 = vunpack.c.l.b16 %v1660
        %v2174 = vunpack.c.h.b16 %v1660
        %v2175 = vunpack.c.l.b16 %v1661
        %v2176 = vunpack.c.h.b16 %v1661
        %v2177 = vunpack.c.l.b16 %v1662
        %v2178 = vunpack.c.h.b16 %v1662
        %v2179 = vunpack.c.l.b16 %v1663
        %v2180 = vunpack.c.h.b16 %v1663
        %v2181 = vunpack.c.l.b16 %v1664
        %v2182 = vunpack.c.h.b16 %v1664
        %v2183 = vunpack.c.l.b16 %v1665
        %v2184 = vunpack.c.h.b16 %v1665
        %v2185 = vunpack.c.l.b16 %v1666
        %v2186 = vunpack.c.h.b16 %v1666
        %v2187 = vunpack.c.l.b16 %v1667
        %v2188 = vunpack.c.h.b16 %v1667
        %v2189 = vunpack.c.l.b16 %v1668
        %v2190 = vunpack.c.h.b16 %v1668
        %v2191 = vunpack.c.l.b16 %v1669
        %v2192 = vunpack.c.h.b16 %v1669
        %v2193 = vunpack.c.l.b16 %v1670
        %v2194 = vunpack.c.h.b16 %v1670
        %v2195 = vunpack.c.l.b16 %v1671
        %v2196 = vunpack.c.h.b16 %v1671
        %v2197 = vunpack.c.l.b16 %v1672
        %v2198 = vunpack.c.h.b16 %v1672
        %v2199 = vunpack.c.l.b16 %v1673
        %v2200 = vunpack.c.h.b16 %v1673
        %v2201 = vunpack.c.l.b16 %v1674
        %v2202 = vunpack.c.h.b16 %v1674
        %v2203 = vunpack.c.l.b16 %v1675
        %v2204 = vunpack.c.h.b16 %v1675
        %v2205 = vunpack.c.l.b16 %v1676
        %v2206 = vunpack.c.h.b16 %v1676
        %v2207 = vunpack.c.l.b16 %v1677
        %v2208 = vunpack.c.h.b16 %v1677
        %v2209 = vunpack.c.l.b16 %v1678
        %v2210 = vunpack.c.h.b16 %v1678
        %v2211 = vunpack.c.l.b16 %v1679
        %v2212 = vunpack.c.h.b16 %v1679
        %v2213 = vunpack.c.l.b16 %v1680
        %v2214 = vunpack.c.h.b16 %v1680
        %v2215 = vunpack.c.l.b16 %v1681
        %v2216 = vunpack.c.h.b16 %v1681
        %v2217 = vunpack.c.l.b16 %v1682
        %v2218 = vunpack.c.h.b16 %v1682
        %v2219 = vunpack.c.l.b16 %v1683
        %v2220 = vunpack.c.h.b16 %v1683
        %v2221 = vunpack.c.l.b16 %v1684
        %v2222 = vunpack.c.h.b16 %v1684
        %v2223 = vunpack.c.l.b16 %v1685
        %v2224 = vunpack.c.h.b16 %v1685
        %v2225 = vunpack.c.l.b16 %v1686
        %v2226 = vunpack.c.h.b16 %v1686
        %v2227 = vunpack.c.l.b16 %v1687
        %v2228 = vunpack.c.h.b16 %v1687
        %v2229 = vunpack.c.l.b16 %v1688
        %v2230 = vunpack.c.h.b16 %v1688
        %v2231 = vunpack.c.l.b16 %v1689
        %v2232 = vunpack.c.h.b16 %v1689
        %v2233 = vunpack.c.l.b16 %v1690
        %v2234 = vunpack.c.h.b16 %v1690
        %v2235 = vunpack.c.l.b16 %v1691
        %v2236 = vunpack.c.h.b16 %v1691
        %v2237 = vunpack.c.l.b16 %v1692
        %v2238 = vunpack.c.h.b16 %v1692
        %v2239 = vunpack.c.l.b16 %v1693
        %v2240 = vunpack.c.h.b16 %v1693
        %v2241 = vunpack.c.l.b16 %v1694
        %v2242 = vunpack.c.h.b16 %v1694
        %v2243 = vunpack.c.l.b16 %v1695
        %v2244 = vunpack.c.h.b16 %v1695
        %v2245 = vunpack.c.l.b16 %v1696
        %v2246 = vunpack.c.h.b16 %v1696
        %v2247 = vunpack.c.l.b16 %v1697
        %v2248 = vunpack.c.h.b16 %v1697
        %v2249 = vunpack.c.l.b16 %v1698
        %v2250 = vunpack.c.h.b16 %v1698
        %v2251 = vunpack.c.l.b16 %v1699
        %v2252 = vunpack.c.h.b16 %v1699
        %v2253 = vunpack.c.l.b16 %v1700
        %v2254 = vunpack.c.h.b16 %v1700
        %v2255 = vunpack.c.l.b16 %v1701
        %v2256 = vunpack.c.h.b16 %v1701
        %v2257 = vunpack.c.l.b16 %v1702
        %v2258 = vunpack.c.h.b16 %v1702
        %v2259 = vunpack.c.l.b16 %v1703
        %v2260 = vunpack.c.h.b16 %v1703
        %v2261 = vunpack.c.l.b16 %v1704
        %v2262 = vunpack.c.h.b16 %v1704
        %v2263 = vunpack.c.l.b16 %v1705
        %v2264 = vunpack.c.h.b16 %v1705
        %v2265 = vunpack.c.l.b16 %v1706
        %v2266 = vunpack.c.h.b16 %v1706
        %v2267 = vunpack.c.l.b16 %v1707
        %v2268 = vunpack.c.h.b16 %v1707
        %v2269 = vunpack.c.l.b16 %v1708
        %v2270 = vunpack.c.h.b16 %v1708
        %v2271 = vunpack.c.l.b16 %v1709
        %v2272 = vunpack.c.h.b16 %v1709
        %v2273 = vunpack.c.l.b16 %v1710
        %v2274 = vunpack.c.h.b16 %v1710
        %v2275 = vunpack.c.l.b16 %v1711
        %v2276 = vunpack.c.h.b16 %v1711
        %v2277 = vunpack.c.l.b16 %v1712
        %v2278 = vunpack.c.h.b16 %v1712
        %v2279 = vunpack.c.l.b16 %v1713
        %v2280 = vunpack.c.h.b16 %v1713
        %v2281 = vunpack.c.l.b16 %v1714
        %v2282 = vunpack.c.h.b16 %v1714
        %v2283 = vunpack.c.l.b16 %v1715
        %v2284 = vunpack.c.h.b16 %v1715
        %v2285 = vunpack.c.l.b16 %v1716
        %v2286 = vunpack.c.h.b16 %v1716
        %v2287 = vunpack.c.l.b16 %v1717
        %v2288 = vunpack.c.h.b16 %v1717
        %v2289 = vunpack.c.l.b16 %v1718
        %v2290 = vunpack.c.h.b16 %v1718
        %v2291 = vunpack.c.l.b16 %v1719
        %v2292 = vunpack.c.h.b16 %v1719
        %v2293 = vunpack.c.l.b16 %v1720
        %v2294 = vunpack.c.h.b16 %v1720
        %v2295 = vunpack.c.l.b16 %v1721
        %v2296 = vunpack.c.h.b16 %v1721
        %v2297 = vunpack.c.l.b16 %v1722
        %v2298 = vunpack.c.h.b16 %v1722
        %v2299 = vunpack.c.l.b16 %v1723
        %v2300 = vunpack.c.h.b16 %v1723
        %v2301 = vunpack.c.l.b16 %v1724
        %v2302 = vunpack.c.h.b16 %v1724
        %v2303 = vunpack.c.l.b16 %v1725
        %v2304 = vunpack.c.h.b16 %v1725
        %v2305 = vunpack.c.l.b16 %v1726
        %v2306 = vunpack.c.h.b16 %v1726
        %v2307 = vunpack.c.l.b16 %v1727
        %v2308 = vunpack.c.h.b16 %v1727
        %v2309 = vunpack.c.l.b16 %v1728
        %v2310 = vunpack.c.h.b16 %v1728
        %v2311 = vunpack.c.l.b16 %v1729
        %v2312 = vunpack.c.h.b16 %v1729
        %v2313 = vunpack.c.l.b16 %v1730
        %v2314 = vunpack.c.h.b16 %v1730
        %v2315 = vunpack.c.l.b16 %v1731
        %v2316 = vunpack.c.h.b16 %v1731
        %v2317 = vunpack.c.l.b16 %v1732
        %v2318 = vunpack.c.h.b16 %v1732
        %v2319 = vunpack.c.l.b16 %v1733
        %v2320 = vunpack.c.h.b16 %v1733
        %v2321 = vunpack.c.l.b16 %v1734
        %v2322 = vunpack.c.h.b16 %v1734
        %v2323 = vunpack.c.l.b16 %v1735
        %v2324 = vunpack.c.h.b16 %v1735
        %v2325 = vunpack.c.l.b16 %v1736
        %v2326 = vunpack.c.h.b16 %v1736
        %v2327 = vunpack.c.l.b16 %v1737
        %v2328 = vunpack.c.h.b16 %v1737
        %v2329 = vunpack.c.l.b16 %v1738
        %v2330 = vunpack.c.h.b16 %v1738
        %v2331 = vunpack.c.l.b16 %v1739
        %v2332 = vunpack.c.h.b16 %v1739
        %v2333 = vunpack.c.l.b16 %v1740
        %v2334 = vunpack.c.h.b16 %v1740
        %v2335 = vunpack.c.l.b16 %v1741
        %v2336 = vunpack.c.h.b16 %v1741
        %v2337 = vunpack.c.l.b16 %v1742
        %v2338 = vunpack.c.h.b16 %v1742
        %v2339 = vunpack.c.l.b16 %v1743
        %v2340 = vunpack.c.h.b16 %v1743
        %v2341 = vunpack.c.l.b16 %v1744
        %v2342 = vunpack.c.h.b16 %v1744
        %v2343 = vunpack.c.l.b16 %v1745
        %v2344 = vunpack.c.h.b16 %v1745
        %v2345 = vunpack.c.l.b16 %v1746
        %v2346 = vunpack.c.h.b16 %v1746
        %v2347 = vunpack.c.l.b16 %v1747
        %v2348 = vunpack.c.h.b16 %v1747
        %v2349 = vunpack.c.l.b16 %v1748
        %v2350 = vunpack.c.h.b16 %v1748
        %v2351 = vunpack.c.l.b16 %v1749
        %v2352 = vunpack.c.h.b16 %v1749
        %v2353 = vunpack.c.l.b16 %v1750
        %v2354 = vunpack.c.h.b16 %v1750
        %v2355 = vunpack.c.l.b16 %v1751
        %v2356 = vunpack.c.h.b16 %v1751
        %v2357 = vunpack.c.l.b16 %v1752
        %v2358 = vunpack.c.h.b16 %v1752
        %v2359 = vunpack.c.l.b16 %v1753
        %v2360 = vunpack.c.h.b16 %v1753
        %v2361 = vunpack.c.l.b16 %v1754
        %v2362 = vunpack.c.h.b16 %v1754
        %v2363 = vunpack.c.l.b16 %v1755
        %v2364 = vunpack.c.h.b16 %v1755
        %v2365 = vunpack.c.l.b16 %v1756
        %v2366 = vunpack.c.h.b16 %v1756
        %v2367 = vunpack.c.l.b16 %v1757
        %v2368 = vunpack.c.h.b16 %v1757
        %v2369 = vunpack.c.l.b16 %v1758
        %v2370 = vunpack.c.h.b16 %v1758
        %v2371 = vunpack.c.l.b16 %v1759
        %v2372 = vunpack.c.h.b16 %v1759
        %v2373 = vunpack.c.l.b16 %v1760
        %v2374 = vunpack.c.h.b16 %v1760
        %v2375 = vunpack.c.l.b16 %v1761
        %v2376 = vunpack.c.h.b16 %v1761
        %v2377 = vunpack.c.l.b16 %v1762
        %v2378 = vunpack.c.h.b16 %v1762
        %v2379 = vunpack.c.l.b16 %v1763
        %v2380 = vunpack.c.h.b16 %v1763
        %v2381 = vunpack.c.l.b16 %v1764
        %v2382 = vunpack.c.h.b16 %v1764
        %v2383 = vunpack.c.l.b16 %v1765
        %v2384 = vunpack.c.h.b16 %v1765
        %v2385 = vunpack.c.l.b16 %v1766
        %v2386 = vunpack.c.h.b16 %v1766
        %v2387 = vunpack.c.l.b16 %v1767
        %v2388 = vunpack.c.h.b16 %v1767
        %v2389 = vunpack.c.l.b16 %v1768
        %v2390 = vunpack.c.h.b16 %v1768
        %v2391 = vunpack.c.l.b16 %v1769
        %v2392 = vunpack.c.h.b16 %v1769
        %v2393 = vunpack.c.l.b16 %v1770
        %v2394 = vunpack.c.h.b16 %v1770
        %v2395 = vunpack.c.l.b16 %v1771
        %v2396 = vunpack.c.h.b16 %v1771
        %v2397 = vunpack.c.l.b16 %v1772
        %v2398 = vunpack.c.h.b16 %v1772
        %v2399 = vunpack.c.l.b16 %v1773
        %v2400 = vunpack.c.h.b16 %v1773
        %v2401 = vunpack.c.l.b16 %v1774
        %v2402 = vunpack.c.h.b16 %v1774
        %v2403 = vunpack.c.l.b16 %v1775
        %v2404 = vunpack.c.h.b16 %v1775
        %v2405 = vunpack.c.l.b16 %v1776
        %v2406 = vunpack.c.h.b16 %v1776
        %v2407 = vunpack.c.l.b16 %v1777
        %v2408 = vunpack.c.h.b16 %v1777
        %v2409 = vunpack.c.l.b16 %v1778
        %v2410 = vunpack.c.h.b16 %v1778
        %v2411 = vunpack.c.l.b16 %v1779
        %v2412 = vunpack.c.h.b16 %v1779
        %v2413 = vunpack.c.l.b16 %v1780
        %v2414 = vunpack.c.h.b16 %v1780
        %v2415 = vunpack.c.l.b16 %v1781
        %v2416 = vunpack.c.h.b16 %v1781
        %v2417 = vunpack.c.l.b16 %v1782
        %v2418 = vunpack.c.h.b16 %v1782
        %v2419 = vunpack.c.l.b16 %v1783
        %v2420 = vunpack.c.h.b16 %v1783
        %v2421 = vunpack.c.l.b16 %v1784
        %v2422 = vunpack.c.h.b16 %v1784
        %v2423 = vunpack.c.l.b16 %v1785
        %v2424 = vunpack.c.h.b16 %v1785
        %v2425 = vunpack.c.l.b16 %v1786
        %v2426 = vunpack.c.h.b16 %v1786
        %v2427 = vunpack.c.l.b16 %v1787
        %v2428 = vunpack.c.h.b16 %v1787
        %v2429 = vunpack.c.l.b16 %v1788
        %v2430 = vunpack.c.h.b16 %v1788
        %v2431 = vunpack.c.l.b16 %v1789
        %v2432 = vunpack.c.h.b16 %v1789
        %v2433 = vunpack.c.l.b16 %v1790
        %v2434 = vunpack.c.h.b16 %v1790
        %v2435 = vunpack.c.l.b16 %v1791
        %v2436 = vunpack.c.h.b16 %v1791
        %v2437 = vunpack.c.l.b16 %v1792
        %v2438 = vunpack.c.h.b16 %v1792
        %v2439 = vunpack.c.l.b16 %v1793
        %v2440 = vunpack.c.h.b16 %v1793
        %v2441 = vunpack.c.l.b16 %v1794
        %v2442 = vunpack.c.h.b16 %v1794
        %v2443 = vunpack.c.l.b16 %v1795
        %v2444 = vunpack.c.h.b16 %v1795
        %v2445 = vunpack.c.l.b16 %v1796
        %v2446 = vunpack.c.h.b16 %v1796
        %v2447 = vunpack.c.l.b16 %v1797
        %v2448 = vunpack.c.h.b16 %v1797
        %v2449 = vunpack.c.l.b16 %v1798
        %v2450 = vunpack.c.h.b16 %v1798
        %v2451 = vunpack.c.l.b16 %v1799
        %v2452 = vunpack.c.h.b16 %v1799
        %v2453 = vunpack.c.l.b16 %v1800
        %v2454 = vunpack.c.h.b16 %v1800
        %v2455 = vunpack.c.l.b16 %v1801
        %v2456 = vunpack.c.h.b16 %v1801
        %v2457 = vunpack.c.l.b16 %v1802
        %v2458 = vunpack.c.h.b16 %v1802
        %v2459 = vunpack.c.l.b16 %v1803
        %v2460 = vunpack.c.h.b16 %v1803
        %v2461 = vunpack.c.l.b16 %v1804
        %v2462 = vunpack.c.h.b16 %v1804
        %v2463 = vunpack.c.l.b16 %v1805
        %v2464 = vunpack.c.h.b16 %v1805
        %v2465 = vunpack.c.l.b16 %v1806
        %v2466 = vunpack.c.h.b16 %v1806
        %v2467 = vunpack.c.l.b16 %v1807
        %v2468 = vunpack.c.h.b16 %v1807
        %v2469 = vunpack.c.l.b16 %v1808
        %v2470 = vunpack.c.h.b16 %v1808
        %v2471 = vunpack.c.l.b16 %v1809
        %v2472 = vunpack.c.h.b16 %v1809
        %v2473 = vunpack.c.l.b16 %v1810
        %v2474 = vunpack.c.h.b16 %v1810
        %v2475 = vunpack.c.l.b16 %v1811
        %v2476 = vunpack.c.h.b16 %v1811
        %v2477 = vunpack.c.l.b16 %v1812
        %v2478 = vunpack.c.h.b16 %v1812
        %v2479 = vunpack.c.l.b16 %v1813
        %v2480 = vunpack.c.h.b16 %v1813
        %v2481 = vunpack.c.l.b16 %v1814
        %v2482 = vunpack.c.h.b16 %v1814
        %v2483 = vunpack.c.l.b16 %v1815
        %v2484 = vunpack.c.h.b16 %v1815
        %v2485 = vunpack.c.l.b16 %v1816
        %v2486 = vunpack.c.h.b16 %v1816
        %v2487 = vunpack.c.l.b16 %v1817
        %v2488 = vunpack.c.h.b16 %v1817
        %v2489 = vunpack.c.l.b16 %v1818
        %v2490 = vunpack.c.h.b16 %v1818
        %v2491 = vunpack.c.l.b16 %v1819
        %v2492 = vunpack.c.h.b16 %v1819
        %v2493 = vunpack.c.l.b16 %v1820
        %v2494 = vunpack.c.h.b16 %v1820
        %v2495 = vunpack.c.l.b16 %v1821
        %v2496 = vunpack.c.h.b16 %v1821
        %v2497 = vunpack.c.l.b16 %v1822
        %v2498 = vunpack.c.h.b16 %v1822
        %v2499 = vunpack.c.l.b16 %v1823
        %v2500 = vunpack.c.h.b16 %v1823
        %v2501 = vunpack.c.l.b16 %v1824
        %v2502 = vunpack.c.h.b16 %v1824
        %v2503 = vunpack.c.l.b16 %v1825
        %v2504 = vunpack.c.h.b16 %v1825
        %v2505 = vunpack.c.l.b16 %v1826
        %v2506 = vunpack.c.h.b16 %v1826
        %v2507 = vunpack.c.l.b16 %v1827
        %v2508 = vunpack.c.h.b16 %v1827
        %v2509 = vunpack.c.l.b16 %v1828
        %v2510 = vunpack.c.h.b16 %v1828
        %v2511 = vunpack.c.l.b16 %v1829
        %v2512 = vunpack.c.h.b16 %v1829
        %v2513 = vunpack.c.l.b16 %v1830
        %v2514 = vunpack.c.h.b16 %v1830
        %v2515 = vunpack.c.l.b16 %v1831
        %v2516 = vunpack.c.h.b16 %v1831
        %v2517 = vunpack.c.l.b16 %v1832
        %v2518 = vunpack.c.h.b16 %v1832
        %v2519 = vunpack.c.l.b16 %v1833
        %v2520 = vunpack.c.h.b16 %v1833
        %v2521 = vunpack.c.l.b16 %v1834
        %v2522 = vunpack.c.h.b16 %v1834
        %v2523 = vunpack.c.l.b16 %v1835
        %v2524 = vunpack.c.h.b16 %v1835
        %v2525 = vunpack.c.l.b16 %v1836
        %v2526 = vunpack.c.h.b16 %v1836
        %v2527 = vunpack.c.l.b16 %v1837
        %v2528 = vunpack.c.h.b16 %v1837
        %v2529 = vunpack.c.l.b16 %v1838
        %v2530 = vunpack.c.h.b16 %v1838
        %v2531 = vunpack.c.l.b16 %v1839
        %v2532 = vunpack.c.h.b16 %v1839
        %v2533 = vunpack.c.l.b16 %v1840
        %v2534 = vunpack.c.h.b16 %v1840
        %v2535 = vunpack.c.l.b16 %v1841
        %v2536 = vunpack.c.h.b16 %v1841
        %v2537 = vunpack.c.l.b16 %v1842
        %v2538 = vunpack.c.h.b16 %v1842
        %v2539 = vunpack.c.l.b16 %v1843
        %v2540 = vunpack.c.h.b16 %v1843
        %v2541 = vunpack.c.l.b16 %v1844
        %v2542 = vunpack.c.h.b16 %v1844
        %v2543 = vunpack.c.l.b16 %v1845
        %v2544 = vunpack.c.h.b16 %v1845
        %v2545 = vunpack.c.l.b16 %v1846
        %v2546 = vunpack.c.h.b16 %v1846
        %v2547 = vunpack.c.l.b16 %v1847
        %v2548 = vunpack.c.h.b16 %v1847
        %v2549 = vunpack.c.l.b16 %v1848
        %v2550 = vunpack.c.h.b16 %v1848
        %v2551 = vunpack.c.l.b16 %v1849
        %v2552 = vunpack.c.h.b16 %v1849
        %v2553 = vunpack.c.l.b16 %v1850
        %v2554 = vunpack.c.h.b16 %v1850
        %v2555 = vunpack.c.l.b16 %v1851
        %v2556 = vunpack.c.h.b16 %v1851
        %v2557 = vunpack.c.l.b16 %v1852
        %v2558 = vunpack.c.h.b16 %v1852
        %v2559 = vunpack.c.l.b16 %v1853
        %v2560 = vunpack.c.h.b16 %v1853
        %v2561 = vunpack.c.l.b16 %v1854
        %v2562 = vunpack.c.h.b16 %v1854
        %v2563 = vunpack.c.l.b16 %v1855
        %v2564 = vunpack.c.h.b16 %v1855
        %v2565 = vunpack.c.l.b16 %v1856
        %v2566 = vunpack.c.h.b16 %v1856
        %v2567 = vunpack.c.l.b16 %v1857
        %v2568 = vunpack.c.h.b16 %v1857
        %v2569 = vunpack.c.l.b16 %v1858
        %v2570 = vunpack.c.h.b16 %v1858
        %v2571 = vunpack.c.l.b16 %v1859
        %v2572 = vunpack.c.h.b16 %v1859
        %v2573 = vunpack.c.l.b16 %v1860
        %v2574 = vunpack.c.h.b16 %v1860
        %v2575 = vunpack.c.l.b16 %v1861
        %v2576 = vunpack.c.h.b16 %v1861
        %v2577 = vunpack.c.l.b16 %v1862
        %v2578 = vunpack.c.h.b16 %v1862
        %v2579 = vunpack.c.l.b16 %v1863
        %v2580 = vunpack.c.h.b16 %v1863
        %v2581 = vunpack.c.l.b16 %v1864
        %v2582 = vunpack.c.h.b16 %v1864
        %v2583 = vunpack.c.l.b16 %v1865
        %v2584 = vunpack.c.h.b16 %v1865
        %v2585 = vunpack.c.l.b16 %v1866
        %v2586 = vunpack.c.h.b16 %v1866
        %v2587 = vunpack.c.l.b16 %v1867
        %v2588 = vunpack.c.h.b16 %v1867
        %v2589 = vunpack.c.l.b16 %v1868
        %v2590 = vunpack.c.h.b16 %v1868
        %v2591 = vunpack.c.l.b16 %v1869
        %v2592 = vunpack.c.h.b16 %v1869
        %v2593 = vunpack.c.l.b16 %v1870
        %v2594 = vunpack.c.h.b16 %v1870
        %v2595 = vunpack.c.l.b16 %v1871
        %v2596 = vunpack.c.h.b16 %v1871
        %v2597 = vunpack.c.l.b16 %v1872
        %v2598 = vunpack.c.h.b16 %v1872
        %v2599 = vunpack.c.l.b16 %v1873
        %v2600 = vunpack.c.h.b16 %v1873
        %v2601 = vunpack.c.l.b16 %v1874
        %v2602 = vunpack.c.h.b16 %v1874
        %v2603 = vunpack.c.l.b16 %v1875
        %v2604 = vunpack.c.h.b16 %v1875
        %v2605 = vunpack.c.l.b16 %v1876
        %v2606 = vunpack.c.h.b16 %v1876
        %v2607 = vunpack.c.l.b16 %v1877
        %v2608 = vunpack.c.h.b16 %v1877
        %v2609 = vunpack.c.l.b16 %v1878
        %v2610 = vunpack.c.h.b16 %v1878
        %v2611 = vunpack.c.l.b16 %v1879
        %v2612 = vunpack.c.h.b16 %v1879
        %v2613 = vunpack.c.l.b16 %v1880
        %v2614 = vunpack.c.h.b16 %v1880
        %v2615 = vunpack.c.l.b16 %v1881
        %v2616 = vunpack.c.h.b16 %v1881
        %v2617 = vunpack.c.l.b16 %v1882
        %v2618 = vunpack.c.h.b16 %v1882
        %v2619 = vunpack.c.l.b16 %v1883
        %v2620 = vunpack.c.h.b16 %v1883
        %v2621 = vunpack.c.l.b16 %v1884
        %v2622 = vunpack.c.h.b16 %v1884
        %v2623 = vunpack.c.l.b16 %v1885
        %v2624 = vunpack.c.h.b16 %v1885
        %v2625 = vunpack.c.l.b16 %v1886
        %v2626 = vunpack.c.h.b16 %v1886
        %v2627 = vunpack.c.l.b16 %v1887
        %v2628 = vunpack.c.h.b16 %v1887
        %v2629 = vunpack.c.l.b16 %v1888
        %v2630 = vunpack.c.h.b16 %v1888
        %v2631 = vunpack.c.l.b16 %v1889
        %v2632 = vunpack.c.h.b16 %v1889
        %v2633 = vunpack.c.l.b16 %v1890
        %v2634 = vunpack.c.h.b16 %v1890
        %v2635 = vunpack.c.l.b16 %v1891
        %v2636 = vunpack.c.h.b16 %v1891
        %v2637 = vunpack.c.l.b16 %v1892
        %v2638 = vunpack.c.h.b16 %v1892
        %v2639 = vunpack.c.l.b16 %v1893
        %v2640 = vunpack.c.h.b16 %v1893
        %v2641 = vunpack.c.l.b16 %v1894
        %v2642 = vunpack.c.h.b16 %v1894
        %v2643 = vunpack.c.l.b16 %v1895
        %v2644 = vunpack.c.h.b16 %v1895
        %v2645 = vunpack.c.l.b16 %v1896
        %v2646 = vunpack.c.h.b16 %v1896
        %v2647 = vunpack.c.l.b16 %v1897
        %v2648 = vunpack.c.h.b16 %v1897
        %v2649 = vunpack.c.l.b16 %v1898
        %v2650 = vunpack.c.h.b16 %v1898
        %v2651 = vunpack.c.l.b16 %v1899
        %v2652 = vunpack.c.h.b16 %v1899
        %v2653 = vunpack.c.l.b16 %v1900
        %v2654 = vunpack.c.h.b16 %v1900
        %v2655 = vunpack.c.l.b16 %v1901
        %v2656 = vunpack.c.h.b16 %v1901
        %v2657 = vunpack.c.l.b16 %v1902
        %v2658 = vunpack.c.h.b16 %v1902
        %v2659 = vunpack.c.l.b16 %v1903
        %v2660 = vunpack.c.h.b16 %v1903
        %v2661 = vunpack.c.l.b16 %v1904
        %v2662 = vunpack.c.h.b16 %v1904
        %v2663 = vunpack.c.l.b16 %v1905
        %v2664 = vunpack.c.h.b16 %v1905
        %v2665 = vunpack.c.l.b16 %v1906
        %v2666 = vunpack.c.h.b16 %v1906
        %v2667 = vunpack.c.l.b16 %v1907
        %v2668 = vunpack.c.h.b16 %v1907
        %v2669 = vunpack.c.l.b16 %v1908
        %v2670 = vunpack.c.h.b16 %v1908
        %v2671 = vunpack.c.l.b16 %v1909
        %v2672 = vunpack.c.h.b16 %v1909
        %v2673 = vunpack.c.l.b16 %v1910
        %v2674 = vunpack.c.h.b16 %v1910
        %v2675 = vunpack.c.l.b16 %v1911
        %v2676 = vunpack.c.h.b16 %v1911
        %v2677 = vunpack.c.l.b16 %v1912
        %v2678 = vunpack.c.h.b16 %v1912
        %v2679 = vunpack.c.l.b16 %v1913
        %v2680 = vunpack.c.h.b16 %v1913
        %v2681 = vunpack.c.l.b16 %v1914
        %v2682 = vunpack.c.h.b16 %v1914
        %v2683 = vpack.c.b16 %v2179, %v2171
        %v2684 = vpack.c.b16 %v2180, %v2172
        %v2685 = vpack.c.b16 %v2181, %v2173
        %v2686 = vpack.c.b16 %v2182, %v2174
        %v2687 = vpack.c.b16 %v2183, %v2175
        %v2688 = vpack.c.b16 %v2184, %v2176
        %v2689 = vpack.c.b16 %v2185, %v2177
        %v2690 = vpack.c.b16 %v2186, %v2178
        %v2691 = vpack.c.b16 %v2195, %v2187
        %v2692 = vpack.c.b16 %v2196, %v2188
        %v2693 = vpack.c.b16 %v2197, %v2189
        %v2694 = vpack.c.b16 %v2198, %v2190
        %v2695 = vpack.c.b16 %v2199, %v2191
        %v2696 = vpack.c.b16 %v2200, %v2192
        %v2697 = vpack.c.b16 %v2201, %v2193
        %v2698 = vpack.c.b16 %v2202, %v2194
        %v2699 = vpack.c.b16 %v2211, %v2203
        %v2700 = vpack.c.b16 %v2212, %v2204
        %v2701 = vpack.c.b16 %v2213, %v2205
        %v2702 = vpack.c.b16 %v2214, %v2206
        %v2703 = vpack.c.b16 %v2215, %v2207
        %v2704 = vpack.c.b16 %v2216, %v2208
        %v2705 = vpack.c.b16 %v2217, %v2209
        %v2706 = vpack.c.b16 %v2218, %v2210
        %v2707 = vpack.c.b16 %v2227, %v2219
        %v2708 = vpack.c.b16 %v2228, %v2220
        %v2709 = vpack.c.b16 %v2229, %v2221
        %v2710 = vpack.c.b16 %v2230, %v2222
        %v2711 = vpack.c.b16 %v2231, %v2223
        %v2712 = vpack.c.b16 %v2232, %v2224
        %v2713 = vpack.c.b16 %v2233, %v2225
        %v2714 = vpack.c.b16 %v2234, %v2226
        %v2715 = vpack.c.b16 %v2243, %v2235
        %v2716 = vpack.c.b16 %v2244, %v2236
        %v2717 = vpack.c.b16 %v2245, %v2237
        %v2718 = vpack.c.b16 %v2246, %v2238
        %v2719 = vpack.c.b16 %v2247, %v2239
        %v2720 = vpack.c.b16 %v2248, %v2240
        %v2721 = vpack.c.b16 %v2249, %v2241
        %v2722 = vpack.c.b16 %v2250, %v2242
        %v2723 = vpack.c.b16 %v2259, %v2251
        %v2724 = vpack.c.b16 %v2260, %v2252
        %v2725 = vpack.c.b16 %v2261, %v2253
        %v2726 = vpack.c.b16 %v2262, %v2254
        %v2727 = vpack.c.b16 %v2263, %v2255
        %v2728 = vpack.c.b16 %v2264, %v2256
        %v2729 = vpack.c.b16 %v2265, %v2257
        %v2730 = vpack.c.b16 %v2266, %v2258
        %v2731 = vpack.c.b16 %v2275, %v2267
        %v2732 = vpack.c.b16 %v2276, %v2268
        %v2733 = vpack.c.b16 %v2277, %v2269
        %v2734 = vpack.c.b16 %v2278, %v2270
        %v2735 = vpack.c.b16 %v2279, %v2271
        %v2736 = vpack.c.b16 %v2280, %v2272
        %v2737 = vpack.c.b16 %v2281, %v2273
        %v2738 = vpack.c.b16 %v2282, %v2274
        %v2739 = vpack.c.b16 %v2291, %v2283
        %v2740 = vpack.c.b16 %v2292, %v2284
        %v2741 = vpack.c.b16 %v2293, %v2285
        %v2742 = vpack.c.b16 %v2294, %v2286
        %v2743 = vpack.c.b16 %v2295, %v2287
        %v2744 = vpack.c.b16 %v2296, %v2288
        %v2745 = vpack.c.b16 %v2297, %v2289
        %v2746 = vpack.c.b16 %v2298, %v2290
        %v2747 = vpack.c.b16 %v2307, %v2299
        %v2748 = vpack.c.b16 %v2308, %v2300
        %v2749 = vpack.c.b16 %v2309, %v2301
        %v2750 = vpack.c.b16 %v2310, %v2302
        %v2751 = vpack.c.b16 %v2311, %v2303
        %v2752 = vpack.c.b16 %v2312, %v2304
        %v2753 = vpack.c.b16 %v2313, %v2305
        %v2754 = vpack.c.b16 %v2314, %v2306
        %v2755 = vpack.c.b16 %v2323, %v2315
        %v2756 = vpack.c.b16 %v2324, %v2316
        %v2757 = vpack.c.b16 %v2325, %v2317
        %v2758 = vpack.c.b16 %v2326, %v2318
        %v2759 = vpack.c.b16 %v2327, %v2319
        %v2760 = vpack.c.b16 %v2328, %v2320
        %v2761 = vpack.c.b16 %v2329, %v2321
        %v2762 = vpack.c.b16 %v2330, %v2322
        %v2763 = vpack.c.b16 %v2339, %v2331
        %v2764 = vpack.c.b16 %v2340, %v2332
        %v2765 = vpack.c.b16 %v2341, %v2333
        %v2766 = vpack.c.b16 %v2342, %v2334
        %v2767 = vpack.c.b16 %v2343, %v2335
        %v2768 = vpack.c.b16 %v2344, %v2336
        %v2769 = vpack.c.b16 %v2345, %v2337
        %v2770 = vpack.c.b16 %v2346, %v2338
        %v2771 = vpack.c.b16 %v2355, %v2347
        %v2772 = vpack.c.b16 %v2356, %v2348
        %v2773 = vpack.c.b16 %v2357, %v2349
        %v2774 = vpack.c.b16 %v2358, %v2350
        %v2775 = vpack.c.b16 %v2359, %v2351
        %v2776 = vpack.c.b16 %v2360, %v2352
        %v2777 = vpack.c.b16 %v2361, %v2353
        %v2778 = vpack.c.b16 %v2362, %v2354
        %v2779 = vpack.c.b16 %v2371, %v2363
        %v2780 = vpack.c.b16 %v2372, %v2364
        %v2781 = vpack.c.b16 %v2373, %v2365
        %v2782 = vpack.c.b16 %v2374, %v2366
        %v2783 = vpack.c.b16 %v2375, %v2367
        %v2784 = vpack.c.b16 %v2376, %v2368
        %v2785 = vpack.c.b16 %v2377, %v2369
        %v2786 = vpack.c.b16 %v2378, %v2370
        %v2787 = vpack.c.b16 %v2387, %v2379
        %v2788 = vpack.c.b16 %v2388, %v2380
        %v2789 = vpack.c.b16 %v2389, %v2381
        %v2790 = vpack.c.b16 %v2390, %v2382
        %v2791 = vpack.c.b16 %v2391, %v2383
        %v2792 = vpack.c.b16 %v2392, %v2384
        %v2793 = vpack.c.b16 %v2393, %v2385
        %v2794 = vpack.c.b16 %v2394, %v2386
        %v2795 = vpack.c.b16 %v2403, %v2395
        %v2796 = vpack.c.b16 %v2404, %v2396
        %v2797 = vpack.c.b16 %v2405, %v2397
        %v2798 = vpack.c.b16 %v2406, %v2398
        %v2799 = vpack.c.b16 %v2407, %v2399
        %v2800 = vpack.c.b16 %v2408, %v2400
        %v2801 = vpack.c.b16 %v2409, %v2401
        %v2802 = vpack.c.b16 %v2410, %v2402
        %v2803 = vpack.c.b16 %v2419, %v2411
        %v2804 = vpack.c.b16 %v2420, %v2412
        %v2805 = vpack.c.b16 %v2421, %v2413
        %v2806 = vpack.c.b16 %v2422, %v2414
        %v2807 = vpack.c.b16 %v2423, %v2415
        %v2808 = vpack.c.b16 %v2424, %v2416
        %v2809 = vpack.c.b16 %v2425, %v2417
        %v2810 = vpack.c.b16 %v2426, %v2418
        %v2811 = vpack.c.b16 %v2435, %v2427
        %v2812 = vpack.c.b16 %v2436, %v2428
        %v2813 = vpack.c.b16 %v2437, %v2429
        %v2814 = vpack.c.b16 %v2438, %v2430
        %v2815 = vpack.c.b16 %v2439, %v2431
        %v2816 = vpack.c.b16 %v2440, %v2432
        %v2817 = vpack.c.b16 %v2441, %v2433
        %v2818 = vpack.c.b16 %v2442, %v2434
        %v2819 = vpack.c.b16 %v2451, %v2443
        %v2820 = vpack.c.b16 %v2452, %v2444
        %v2821 = vpack.c.b16 %v2453, %v2445
        %v2822 = vpack.c.b16 %v2454, %v2446
        %v2823 = vpack.c.b16 %v2455, %v2447
        %v2824 = vpack.c.b16 %v2456, %v2448
        %v2825 = vpack.c.b16 %v2457, %v2449
        %v2826 = vpack.c.b16 %v2458, %v2450
        %v2827 = vpack.c.b16 %v2467, %v2459
        %v2828 = vpack.c.b16 %v2468, %v2460
        %v2829 = vpack.c.b16 %v2469, %v2461
        %v2830 = vpack.c.b16 %v2470, %v2462
        %v2831 = vpack.c.b16 %v2471, %v2463
        %v2832 = vpack.c.b16 %v2472, %v2464
        %v2833 = vpack.c.b16 %v2473, %v2465
        %v2834 = vpack.c.b16 %v2474, %v2466
        %v2835 = vpack.c.b16 %v2483, %v2475
        %v2836 = vpack.c.b16 %v2484, %v2476
        %v2837 = vpack.c.b16 %v2485, %v2477
        %v2838 = vpack.c.b16 %v2486, %v2478
        %v2839 = vpack.c.b16 %v2487, %v2479
        %v2840 = vpack.c.b16 %v2488, %v2480
        %v2841 = vpack.c.b16 %v2489, %v2481
        %v2842 = vpack.c.b16 %v2490, %v2482
        %v2843 = vpack.c.b16 %v2499, %v2491
        %v2844 = vpack.c.b16 %v2500, %v2492
        %v2845 = vpack.c.b16 %v2501, %v2493
        %v2846 = vpack.c.b16 %v2502, %v2494
        %v2847 = vpack.c.b16 %v2503, %v2495
        %v2848 = vpack.c.b16 %v2504, %v2496
        %v2849 = vpack.c.b16 %v2505, %v2497
        %v2850 = vpack.c.b16 %v2506, %v2498
        %v2851 = vpack.c.b16 %v2515, %v2507
        %v2852 = vpack.c.b16 %v2516, %v2508
        %v2853 = vpack.c.b16 %v2517, %v2509
        %v2854 = vpack.c.b16 %v2518, %v2510
        %v2855 = vpack.c.b16 %v2519, %v2511
        %v2856 = vpack.c.b16 %v2520, %v2512
        %v2857 = vpack.c.b16 %v2521, %v2513
        %v2858 = vpack.c.b16 %v2522, %v2514
        %v2859 = vpack.c.b16 %v2531, %v2523
        %v2860 = vpack.c.b16 %v2532, %v2524
        %v2861 = vpack.c.b16 %v2533, %v2525
        %v2862 = vpack.c.b16 %v2534, %v2526
        %v2863 = vpack.c.b16 %v2535, %v2527
        %v2864 = vpack.c.b16 %v2536, %v2528
        %v2865 = vpack.c.b16 %v2537, %v2529
        %v2866 = vpack.c.b16 %v2538, %v2530
        %v2867 = vpack.c.b16 %v2547, %v2539
        %v2868 = vpack.c.b16 %v2548, %v2540
        %v2869 = vpack.c.b16 %v2549, %v2541
        %v2870 = vpack.c.b16 %v2550, %v2542
        %v2871 = vpack.c.b16 %v2551, %v2543
        %v2872 = vpack.c.b16 %v2552, %v2544
        %v2873 = vpack.c.b16 %v2553, %v2545
        %v2874 = vpack.c.b16 %v2554, %v2546
        %v2875 = vpack.c.b16 %v2563, %v2555
        %v2876 = vpack.c.b16 %v2564, %v2556
        %v2877 = vpack.c.b16 %v2565, %v2557
        %v2878 = vpack.c.b16 %v2566, %v2558
        %v2879 = vpack.c.b16 %v2567, %v2559
        %v2880 = vpack.c.b16 %v2568, %v2560
        %v2881 = vpack.c.b16 %v2569, %v2561
        %v2882 = vpack.c.b16 %v2570, %v2562
        %v2883 = vpack.c.b16 %v2579, %v2571
        %v2884 = vpack.c.b16 %v2580, %v2572
        %v2885 = vpack.c.b16 %v2581, %v2573
        %v2886 = vpack.c.b16 %v2582, %v2574
        %v2887 = vpack.c.b16 %v2583, %v2575
        %v2888 = vpack.c.b16 %v2584, %v2576
        %v2889 = vpack.c.b16 %v2585, %v2577
        %v2890 = vpack.c.b16 %v2586, %v2578
        %v2891 = vpack.c.b16 %v2595, %v2587
        %v2892 = vpack.c.b16 %v2596, %v2588
        %v2893 = vpack.c.b16 %v2597, %v2589
        %v2894 = vpack.c.b16 %v2598, %v2590
        %v2895 = vpack.c.b16 %v2599, %v2591
        %v2896 = vpack.c.b16 %v2600, %v2592
        %v2897 = vpack.c.b16 %v2601, %v2593
        %v2898 = vpack.c.b16 %v2602, %v2594
        %v2899 = vpack.c.b16 %v2611, %v2603
        %v2900 = vpack.c.b16 %v2612, %v2604
        %v2901 = vpack.c.b16 %v2613, %v2605
        %v2902 = vpack.c.b16 %v2614, %v2606
        %v2903 = vpack.c.b16 %v2615, %v2607
        %v2904 = vpack.c.b16 %v2616, %v2608
        %v2905 = vpack.c.b16 %v2617, %v2609
        %v2906 = vpack.c.b16 %v2618, %v2610
        %v2907 = vpack.c.b16 %v2627, %v2619
        %v2908 = vpack.c.b16 %v2628, %v2620
        %v2909 = vpack.c.b16 %v2629, %v2621
        %v2910 = vpack.c.b16 %v2630, %v2622
        %v2911 = vpack.c.b16 %v2631, %v2623
        %v2912 = vpack.c.b16 %v2632, %v2624
        %v2913 = vpack.c.b16 %v2633, %v2625
        %v2914 = vpack.c.b16 %v2634, %v2626
        %v2915 = vpack.c.b16 %v2643, %v2635
        %v2916 = vpack.c.b16 %v2644, %v2636
        %v2917 = vpack.c.b16 %v2645, %v2637
        %v2918 = vpack.c.b16 %v2646, %v2638
        %v2919 = vpack.c.b16 %v2647, %v2639
        %v2920 = vpack.c.b16 %v2648, %v2640
        %v2921 = vpack.c.b16 %v2649, %v2641
        %v2922 = vpack.c.b16 %v2650, %v2642
        %v2923 = vpack.c.b16 %v2659, %v2651
        %v2924 = vpack.c.b16 %v2660, %v2652
        %v2925 = vpack.c.b16 %v2661, %v2653
        %v2926 = vpack.c.b16 %v2662, %v2654
        %v2927 = vpack.c.b16 %v2663, %v2655
        %v2928 = vpack.c.b16 %v2664, %v2656
        %v2929 = vpack.c.b16 %v2665, %v2657
        %v2930 = vpack.c.b16 %v2666, %v2658
        %v2931 = vpack.c.b16 %v2675, %v2667
        %v2932 = vpack.c.b16 %v2676, %v2668
        %v2933 = vpack.c.b16 %v2677, %v2669
        %v2934 = vpack.c.b16 %v2678, %v2670
        %v2935 = vpack.c.b16 %v2679, %v2671
        %v2936 = vpack.c.b16 %v2680, %v2672
        %v2937 = vpack.c.b16 %v2681, %v2673
        %v2938 = vpack.c.b16 %v2682, %v2674
        %3195 = vmatprep.subr.bf16.mxu0 %v2684
        %3196 = vmatpush1.bf16.msra.mxu0 %v2683
        %3197 = vmatprep.subr.bf16.mxu0 %v2692
        %3198 = vmatpush1.bf16.msra.mxu0 %v2691
        %3199 = vmatprep.subr.bf16.mxu0 %v2700
        %3200 = vmatpush1.bf16.msra.mxu0 %v2699
        %3201 = vmatprep.subr.bf16.mxu0 %v2708
        %3202 = vmatpush1.bf16.msra.mxu0 %v2707
        %3203 = vmatprep.subr.bf16.mxu0 %v2716
        %3204 = vmatpush1.bf16.msra.mxu0 %v2715
        %3205 = vmatprep.subr.bf16.mxu0 %v2724
        %3206 = vmatpush1.bf16.msra.mxu0 %v2723
        %3207 = vmatprep.subr.bf16.mxu0 %v2732
        %3208 = vmatpush1.bf16.msra.mxu0 %v2731
        %3209 = vmatprep.subr.bf16.mxu0 %v2740
        %3210 = vmatpush1.bf16.msra.mxu0 %v2739
        %3211 = vmatprep.subr.bf16.mxu0 %v2748
        %3212 = vmatpush1.bf16.msra.mxu0 %v2747
        %3213 = vmatprep.subr.bf16.mxu0 %v2756
        %3214 = vmatpush1.bf16.msra.mxu0 %v2755
        %3215 = vmatprep.subr.bf16.mxu0 %v2764
        %3216 = vmatpush1.bf16.msra.mxu0 %v2763
        %3217 = vmatprep.subr.bf16.mxu0 %v2772
        %3218 = vmatpush1.bf16.msra.mxu0 %v2771
        %3219 = vmatprep.subr.bf16.mxu0 %v2780
        %3220 = vmatpush1.bf16.msra.mxu0 %v2779
        %3221 = vmatprep.subr.bf16.mxu0 %v2788
        %3222 = vmatpush1.bf16.msra.mxu0 %v2787
        %3223 = vmatprep.subr.bf16.mxu0 %v2796
        %3224 = vmatpush1.bf16.msra.mxu0 %v2795
        %3225 = vmatprep.subr.bf16.mxu0 %v2804
        %3226 = vmatpush1.bf16.msra.mxu0 %v2803
        %3227 = vmatprep.mubr.bf16.mxu0 %v1620
        %3228 = vmatmul.mubr.bf16.gmra.mrb[0].mxu0 %v1619
        %v3229 = vpop.f32.mrb[0].mxu0
        %v3230 = vadd.f32 0.0, %v3229
        %v3231 = vpop.f32.mrb[0].mxu0
        %v3232 = vadd.f32 0.0, %v3231
        %v3233 = vpop.f32.mrb[0].mxu0
        %v3234 = vadd.f32 0.0, %v3233
        %v3235 = vpop.f32.mrb[0].mxu0
        %v3236 = vadd.f32 0.0, %v3235
        %3237 = vmatprep.mubr.bf16.mxu0 %v1624
        %3238 = vmatmul.mubr.bf16.gmra.mrb[0].mxu0 %v1623
        %v3239 = vpop.f32.mrb[0].mxu0
        %v3240 = vadd.f32 0.0, %v3239
        %v3241 = vpop.f32.mrb[0].mxu0
        %v3242 = vadd.f32 0.0, %v3241
        %v3243 = vpop.f32.mrb[0].mxu0
        %v3244 = vadd.f32 0.0, %v3243
        %v3245 = vpop.f32.mrb[0].mxu0
        %v3246 = vadd.f32 0.0, %v3245
        %3247 = vmatprep.mubr.bf16.mxu0 %v1628
        %3248 = vmatmul.mubr.bf16.gmra.mrb[0].mxu0 %v1627
        %v3249 = vpop.f32.mrb[0].mxu0
        %v3250 = vadd.f32 0.0, %v3249
        %v3251 = vpop.f32.mrb[0].mxu0
        %v3252 = vadd.f32 0.0, %v3251
        %v3253 = vpop.f32.mrb[0].mxu0
        %v3254 = vadd.f32 0.0, %v3253
        %v3255 = vpop.f32.mrb[0].mxu0
        %v3256 = vadd.f32 0.0, %v3255
        %3257 = vmatprep.mubr.bf16.mxu0 %v1632
        %3258 = vmatmul.mubr.bf16.gmra.mrb[0].mxu0 %v1631
        %v3259 = vpop.f32.mrb[0].mxu0
        %v3260 = vadd.f32 0.0, %v3259
        %v3261 = vpop.f32.mrb[0].mxu0
        %v3262 = vadd.f32 0.0, %v3261
        %v3263 = vpop.f32.mrb[0].mxu0
        %v3264 = vadd.f32 0.0, %v3263
        %v3265 = vpop.f32.mrb[0].mxu0
        %v3266 = vadd.f32 0.0, %v3265
        %3267 = vmatprep.mubr.bf16.mxu0 %v1636
        %3268 = vmatmul.mubr.bf16.gmra.mrb[0].mxu0 %v1635
        %v3269 = vpop.f32.mrb[0].mxu0
        %v3270 = vadd.f32 0.0, %v3269
        %v3271 = vpop.f32.mrb[0].mxu0
        %v3272 = vadd.f32 0.0, %v3271
        %v3273 = vpop.f32.mrb[0].mxu0
        %v3274 = vadd.f32 0.0, %v3273
        %v3275 = vpop.f32.mrb[0].mxu0
        %v3276 = vadd.f32 0.0, %v3275
        %3277 = vmatprep.mubr.bf16.mxu0 %v1640
        %3278 = vmatmul.mubr.bf16.gmra.mrb[0].mxu0 %v1639
        %v3279 = vpop.f32.mrb[0].mxu0
        %v3280 = vadd.f32 0.0, %v3279
        %v3281 = vpop.f32.mrb[0].mxu0
        %v3282 = vadd.f32 0.0, %v3281
        %v3283 = vpop.f32.mrb[0].mxu0
        %v3284 = vadd.f32 0.0, %v3283
        %v3285 = vpop.f32.mrb[0].mxu0
        %v3286 = vadd.f32 0.0, %v3285
        %3287 = vmatprep.mubr.bf16.mxu0 %v1644
        %3288 = vmatmul.mubr.bf16.gmra.mrb[0].mxu0 %v1643
        %v3289 = vpop.f32.mrb[0].mxu0
        %v3290 = vadd.f32 0.0, %v3289
        %v3291 = vpop.f32.mrb[0].mxu0
        %v3292 = vadd.f32 0.0, %v3291
        %v3293 = vpop.f32.mrb[0].mxu0
        %v3294 = vadd.f32 0.0, %v3293
        %v3295 = vpop.f32.mrb[0].mxu0
        %v3296 = vadd.f32 0.0, %v3295
        %3297 = vmatprep.mubr.bf16.mxu0 %v1648
        %3298 = vmatmul.mubr.bf16.gmra.mrb[0].mxu0 %v1647
        %v3299 = vpop.f32.mrb[0].mxu0
        %v3300 = vadd.f32 0.0, %v3299
        %v3301 = vpop.f32.mrb[0].mxu0
        %v3302 = vadd.f32 0.0, %v3301
        %v3303 = vpop.f32.mrb[0].mxu0
        %v3304 = vadd.f32 0.0, %v3303
        %v3305 = vpop.f32.mrb[0].mxu0
        %v3306 = vadd.f32 0.0, %v3305
        %3307 = vmatprep.mubr.bf16.mxu0 %v1652
        %3308 = vmatmul.mubr.bf16.gmra.mrb[0].mxu0 %v1651
        %v3309 = vpop.f32.mrb[0].mxu0
        %v3310 = vadd.f32 0.0, %v3309
        %v3311 = vpop.f32.mrb[0].mxu0
        %v3312 = vadd.f32 0.0, %v3311
        %v3313 = vpop.f32.mrb[0].mxu0
        %v3314 = vadd.f32 0.0, %v3313
        %v3315 = vpop.f32.mrb[0].mxu0
        %v3316 = vadd.f32 0.0, %v3315
        %3317 = vmatprep.mubr.bf16.mxu0 %v1656
        %3318 = vmatmul.mubr.bf16.gmra.mrb[0].mxu0 %v1655
        %v3319 = vpop.f32.mrb[0].mxu0
        %v3320 = vadd.f32 0.0, %v3319
        %v3321 = vpop.f32.mrb[0].mxu0
        %v3322 = vadd.f32 0.0, %v3321
        %v3323 = vpop.f32.mrb[0].mxu0
        %v3324 = vadd.f32 0.0, %v3323
        %v3325 = vpop.f32.mrb[0].mxu0
        %v3326 = vadd.f32 0.0, %v3325
        %3327 = vdwg.mxu0
        %3328 = vmatprep.subr.bf16.mxu0 %v2812
        %3329 = vmatpush1.bf16.msra.mxu0 %v2811
        %3330 = vmatprep.subr.bf16.mxu0 %v2820
        %3331 = vmatpush1.bf16.msra.mxu0 %v2819
        %3332 = vmatprep.subr.bf16.mxu0 %v2828
        %3333 = vmatpush1.bf16.msra.mxu0 %v2827
        %3334 = vmatprep.subr.bf16.mxu0 %v2836
        %3335 = vmatpush1.bf16.msra.mxu0 %v2835
        %3336 = vmatprep.subr.bf16.mxu0 %v2844
        %3337 = vmatpush1.bf16.msra.mxu0 %v2843
        %3338 = vmatprep.subr.bf16.mxu0 %v2852
        %3339 = vmatpush1.bf16.msra.mxu0 %v2851
        %3340 = vmatprep.subr.bf16.mxu0 %v2860
        %3341 = vmatpush1.bf16.msra.mxu0 %v2859
        %3342 = vmatprep.subr.bf16.mxu0 %v2868
        %3343 = vmatpush1.bf16.msra.mxu0 %v2867
        %3344 = vmatprep.subr.bf16.mxu0 %v2876
        %3345 = vmatpush1.bf16.msra.mxu0 %v2875
        %3346 = vmatprep.subr.bf16.mxu0 %v2884
        %3347 = vmatpush1.bf16.msra.mxu0 %v2883
        %3348 = vmatprep.subr.bf16.mxu0 %v2892
        %3349 = vmatpush1.bf16.msra.mxu0 %v2891
        %3350 = vmatprep.subr.bf16.mxu0 %v2900
        %3351 = vmatpush1.bf16.msra.mxu0 %v2899
        %3352 = vmatprep.subr.bf16.mxu0 %v2908
        %3353 = vmatpush1.bf16.msra.mxu0 %v2907
        %3354 = vmatprep.subr.bf16.mxu0 %v2916
        %3355 = vmatpush1.bf16.msra.mxu0 %v2915
        %3356 = vmatprep.subr.bf16.mxu0 %v2924
        %3357 = vmatpush1.bf16.msra.mxu0 %v2923
        %3358 = vmatprep.subr.bf16.mxu0 %v2932
        %3359 = vmatpush1.bf16.msra.mxu0 %v2931
        %3360 = vmatprep.mubr.bf16.mxu0 %v1622
        %3361 = vmatmul.mubr.bf16.gmra.mrb[0].mxu0 %v1621
        %v3362 = vpop.f32.mrb[0].mxu0
        %v3363 = vadd.f32 %v3230, %v3362
        %v3364 = vpop.f32.mrb[0].mxu0
        %v3365 = vadd.f32 %v3232, %v3364
        %v3366 = vpop.f32.mrb[0].mxu0
        %v3367 = vadd.f32 %v3234, %v3366
        %v3368 = vpop.f32.mrb[0].mxu0
        %v3369 = vadd.f32 %v3236, %v3368
        %3370 = vmatprep.mubr.bf16.mxu0 %v1626
        %3371 = vmatmul.mubr.bf16.gmra.mrb[0].mxu0 %v1625
        %v3372 = vpop.f32.mrb[0].mxu0
        %v3373 = vadd.f32 %v3240, %v3372
        %v3374 = vpop.f32.mrb[0].mxu0
        %v3375 = vadd.f32 %v3242, %v3374
        %v3376 = vpop.f32.mrb[0].mxu0
        %v3377 = vadd.f32 %v3244, %v3376
        %v3378 = vpop.f32.mrb[0].mxu0
        %v3379 = vadd.f32 %v3246, %v3378
        %3380 = vmatprep.mubr.bf16.mxu0 %v1630
        %3381 = vmatmul.mubr.bf16.gmra.mrb[0].mxu0 %v1629
        %v3382 = vpop.f32.mrb[0].mxu0
        %v3383 = vadd.f32 %v3250, %v3382
        %v3384 = vpop.f32.mrb[0].mxu0
        %v3385 = vadd.f32 %v3252, %v3384
        %v3386 = vpop.f32.mrb[0].mxu0
        %v3387 = vadd.f32 %v3254, %v3386
        %v3388 = vpop.f32.mrb[0].mxu0
        %v3389 = vadd.f32 %v3256, %v3388
        %3390 = vmatprep.mubr.bf16.mxu0 %v1634
        %3391 = vmatmul.mubr.bf16.gmra.mrb[0].mxu0 %v1633
        %v3392 = vpop.f32.mrb[0].mxu0
        %v3393 = vadd.f32 %v3260, %v3392
        %v3394 = vpop.f32.mrb[0].mxu0
        %v3395 = vadd.f32 %v3262, %v3394
        %v3396 = vpop.f32.mrb[0].mxu0
        %v3397 = vadd.f32 %v3264, %v3396
        %v3398 = vpop.f32.mrb[0].mxu0
        %v3399 = vadd.f32 %v3266, %v3398
        %3400 = vmatprep.mubr.bf16.mxu0 %v1638
        %3401 = vmatmul.mubr.bf16.gmra.mrb[0].mxu0 %v1637
        %v3402 = vpop.f32.mrb[0].mxu0
        %v3403 = vadd.f32 %v3270, %v3402
        %v3404 = vpop.f32.mrb[0].mxu0
        %v3405 = vadd.f32 %v3272, %v3404
        %v3406 = vpop.f32.mrb[0].mxu0
        %v3407 = vadd.f32 %v3274, %v3406
        %v3408 = vpop.f32.mrb[0].mxu0
        %v3409 = vadd.f32 %v3276, %v3408
        %3410 = vmatprep.mubr.bf16.mxu0 %v1642
        %3411 = vmatmul.mubr.bf16.gmra.mrb[0].mxu0 %v1641
        %v3412 = vpop.f32.mrb[0].mxu0
        %v3413 = vadd.f32 %v3280, %v3412
        %v3414 = vpop.f32.mrb[0].mxu0
        %v3415 = vadd.f32 %v3282, %v3414
        %v3416 = vpop.f32.mrb[0].mxu0
        %v3417 = vadd.f32 %v3284, %v3416
        %v3418 = vpop.f32.mrb[0].mxu0
        %v3419 = vadd.f32 %v3286, %v3418
        %3420 = vmatprep.mubr.bf16.mxu0 %v1646
        %3421 = vmatmul.mubr.bf16.gmra.mrb[0].mxu0 %v1645
        %v3422 = vpop.f32.mrb[0].mxu0
        %v3423 = vadd.f32 %v3290, %v3422
        %v3424 = vpop.f32.mrb[0].mxu0
        %v3425 = vadd.f32 %v3292, %v3424
        %v3426 = vpop.f32.mrb[0].mxu0
        %v3427 = vadd.f32 %v3294, %v3426
        %v3428 = vpop.f32.mrb[0].mxu0
        %v3429 = vadd.f32 %v3296, %v3428
        %3430 = vmatprep.mubr.bf16.mxu0 %v1650
        %3431 = vmatmul.mubr.bf16.gmra.mrb[0].mxu0 %v1649
        %v3432 = vpop.f32.mrb[0].mxu0
        %v3433 = vadd.f32 %v3300, %v3432
        %v3434 = vpop.f32.mrb[0].mxu0
        %v3435 = vadd.f32 %v3302, %v3434
        %v3436 = vpop.f32.mrb[0].mxu0
        %v3437 = vadd.f32 %v3304, %v3436
        %v3438 = vpop.f32.mrb[0].mxu0
        %v3439 = vadd.f32 %v3306, %v3438
        %3440 = vmatprep.mubr.bf16.mxu0 %v1654
        %3441 = vmatmul.mubr.bf16.gmra.mrb[0].mxu0 %v1653
        %v3442 = vpop.f32.mrb[0].mxu0
        %v3443 = vadd.f32 %v3310, %v3442
        %v3444 = vpop.f32.mrb[0].mxu0
        %v3445 = vadd.f32 %v3312, %v3444
        %v3446 = vpop.f32.mrb[0].mxu0
        %v3447 = vadd.f32 %v3314, %v3446
        %v3448 = vpop.f32.mrb[0].mxu0
        %v3449 = vadd.f32 %v3316, %v3448
        %3450 = vmatprep.mubr.bf16.mxu0 %v1658
        %3451 = vmatmul.mubr.bf16.gmra.mrb[0].mxu0 %v1657
        %v3452 = vpop.f32.mrb[0].mxu0
        %v3453 = vadd.f32 %v3320, %v3452
        %v3454 = vpop.f32.mrb[0].mxu0
        %v3455 = vadd.f32 %v3322, %v3454
        %v3456 = vpop.f32.mrb[0].mxu0
        %v3457 = vadd.f32 %v3324, %v3456
        %v3458 = vpop.f32.mrb[0].mxu0
        %v3459 = vadd.f32 %v3326, %v3458
        %3460 = vdwg.mxu0
        %3461 = vmatprep.subr.bf16.mxu0 %v2686
        %3462 = vmatpush1.bf16.msra.mxu0 %v2685
        %3463 = vmatprep.subr.bf16.mxu0 %v2694
        %3464 = vmatpush1.bf16.msra.mxu0 %v2693
        %3465 = vmatprep.subr.bf16.mxu0 %v2702
        %3466 = vmatpush1.bf16.msra.mxu0 %v2701
        %3467 = vmatprep.subr.bf16.mxu0 %v2710
        %3468 = vmatpush1.bf16.msra.mxu0 %v2709
        %3469 = vmatprep.subr.bf16.mxu0 %v2718
        %3470 = vmatpush1.bf16.msra.mxu0 %v2717
        %3471 = vmatprep.subr.bf16.mxu0 %v2726
        %3472 = vmatpush1.bf16.msra.mxu0 %v2725
        %3473 = vmatprep.subr.bf16.mxu0 %v2734
        %3474 = vmatpush1.bf16.msra.mxu0 %v2733
        %3475 = vmatprep.subr.bf16.mxu0 %v2742
        %3476 = vmatpush1.bf16.msra.mxu0 %v2741
        %3477 = vmatprep.subr.bf16.mxu0 %v2750
        %3478 = vmatpush1.bf16.msra.mxu0 %v2749
        %3479 = vmatprep.subr.bf16.mxu0 %v2758
        %3480 = vmatpush1.bf16.msra.mxu0 %v2757
        %3481 = vmatprep.subr.bf16.mxu0 %v2766
        %3482 = vmatpush1.bf16.msra.mxu0 %v2765
        %3483 = vmatprep.subr.bf16.mxu0 %v2774
        %3484 = vmatpush1.bf16.msra.mxu0 %v2773
        %3485 = vmatprep.subr.bf16.mxu0 %v2782
        %3486 = vmatpush1.bf16.msra.mxu0 %v2781
        %3487 = vmatprep.subr.bf16.mxu0 %v2790
        %3488 = vmatpush1.bf16.msra.mxu0 %v2789
        %3489 = vmatprep.subr.bf16.mxu0 %v2798
        %3490 = vmatpush1.bf16.msra.mxu0 %v2797
        %3491 = vmatprep.subr.bf16.mxu0 %v2806
        %3492 = vmatpush1.bf16.msra.mxu0 %v2805
        %3493 = vmatprep.mubr.bf16.mxu0 %v1620
        %3494 = vmatmul.mubr.bf16.gmra.mrb[0].mxu0 %v1619
        %v3495 = vpop.f32.mrb[0].mxu0
        %v3496 = vadd.f32 0.0, %v3495
        %v3497 = vpop.f32.mrb[0].mxu0
        %v3498 = vadd.f32 0.0, %v3497
        %v3499 = vpop.f32.mrb[0].mxu0
        %v3500 = vadd.f32 0.0, %v3499
        %v3501 = vpop.f32.mrb[0].mxu0
        %v3502 = vadd.f32 0.0, %v3501
        %3503 = vmatprep.mubr.bf16.mxu0 %v1624
        %3504 = vmatmul.mubr.bf16.gmra.mrb[0].mxu0 %v1623
        %v3505 = vpop.f32.mrb[0].mxu0
        %v3506 = vadd.f32 0.0, %v3505
        %v3507 = vpop.f32.mrb[0].mxu0
        %v3508 = vadd.f32 0.0, %v3507
        %v3509 = vpop.f32.mrb[0].mxu0
        %v3510 = vadd.f32 0.0, %v3509
        %v3511 = vpop.f32.mrb[0].mxu0
        %v3512 = vadd.f32 0.0, %v3511
        %3513 = vmatprep.mubr.bf16.mxu0 %v1628
        %3514 = vmatmul.mubr.bf16.gmra.mrb[0].mxu0 %v1627
        %v3515 = vpop.f32.mrb[0].mxu0
        %v3516 = vadd.f32 0.0, %v3515
        %v3517 = vpop.f32.mrb[0].mxu0
        %v3518 = vadd.f32 0.0, %v3517
        %v3519 = vpop.f32.mrb[0].mxu0
        %v3520 = vadd.f32 0.0, %v3519
        %v3521 = vpop.f32.mrb[0].mxu0
        %v3522 = vadd.f32 0.0, %v3521
        %3523 = vmatprep.mubr.bf16.mxu0 %v1632
        %3524 = vmatmul.mubr.bf16.gmra.mrb[0].mxu0 %v1631
        %v3525 = vpop.f32.mrb[0].mxu0
        %v3526 = vadd.f32 0.0, %v3525
        %v3527 = vpop.f32.mrb[0].mxu0
        %v3528 = vadd.f32 0.0, %v3527
        %v3529 = vpop.f32.mrb[0].mxu0
        %v3530 = vadd.f32 0.0, %v3529
        %v3531 = vpop.f32.mrb[0].mxu0
        %v3532 = vadd.f32 0.0, %v3531
        %3533 = vmatprep.mubr.bf16.mxu0 %v1636
        %3534 = vmatmul.mubr.bf16.gmra.mrb[0].mxu0 %v1635
        %v3535 = vpop.f32.mrb[0].mxu0
        %v3536 = vadd.f32 0.0, %v3535
        %v3537 = vpop.f32.mrb[0].mxu0
        %v3538 = vadd.f32 0.0, %v3537
        %v3539 = vpop.f32.mrb[0].mxu0
        %v3540 = vadd.f32 0.0, %v3539
        %v3541 = vpop.f32.mrb[0].mxu0
        %v3542 = vadd.f32 0.0, %v3541
        %3543 = vmatprep.mubr.bf16.mxu0 %v1640
        %3544 = vmatmul.mubr.bf16.gmra.mrb[0].mxu0 %v1639
        %v3545 = vpop.f32.mrb[0].mxu0
        %v3546 = vadd.f32 0.0, %v3545
        %v3547 = vpop.f32.mrb[0].mxu0
        %v3548 = vadd.f32 0.0, %v3547
        %v3549 = vpop.f32.mrb[0].mxu0
        %v3550 = vadd.f32 0.0, %v3549
        %v3551 = vpop.f32.mrb[0].mxu0
        %v3552 = vadd.f32 0.0, %v3551
        %3553 = vmatprep.mubr.bf16.mxu0 %v1644
        %3554 = vmatmul.mubr.bf16.gmra.mrb[0].mxu0 %v1643
        %v3555 = vpop.f32.mrb[0].mxu0
        %v3556 = vadd.f32 0.0, %v3555
        %v3557 = vpop.f32.mrb[0].mxu0
        %v3558 = vadd.f32 0.0, %v3557
        %v3559 = vpop.f32.mrb[0].mxu0
        %v3560 = vadd.f32 0.0, %v3559
        %v3561 = vpop.f32.mrb[0].mxu0
        %v3562 = vadd.f32 0.0, %v3561
        %3563 = vmatprep.mubr.bf16.mxu0 %v1648
        %3564 = vmatmul.mubr.bf16.gmra.mrb[0].mxu0 %v1647
        %v3565 = vpop.f32.mrb[0].mxu0
        %v3566 = vadd.f32 0.0, %v3565
        %v3567 = vpop.f32.mrb[0].mxu0
        %v3568 = vadd.f32 0.0, %v3567
        %v3569 = vpop.f32.mrb[0].mxu0
        %v3570 = vadd.f32 0.0, %v3569
        %v3571 = vpop.f32.mrb[0].mxu0
        %v3572 = vadd.f32 0.0, %v3571
        %3573 = vmatprep.mubr.bf16.mxu0 %v1652
        %3574 = vmatmul.mubr.bf16.gmra.mrb[0].mxu0 %v1651
        %v3575 = vpop.f32.mrb[0].mxu0
        %v3576 = vadd.f32 0.0, %v3575
        %v3577 = vpop.f32.mrb[0].mxu0
        %v3578 = vadd.f32 0.0, %v3577
        %v3579 = vpop.f32.mrb[0].mxu0
        %v3580 = vadd.f32 0.0, %v3579
        %v3581 = vpop.f32.mrb[0].mxu0
        %v3582 = vadd.f32 0.0, %v3581
        %3583 = vmatprep.mubr.bf16.mxu0 %v1656
        %3584 = vmatmul.mubr.bf16.gmra.mrb[0].mxu0 %v1655
        %v3585 = vpop.f32.mrb[0].mxu0
        %v3586 = vadd.f32 0.0, %v3585
        %v3587 = vpop.f32.mrb[0].mxu0
        %v3588 = vadd.f32 0.0, %v3587
        %v3589 = vpop.f32.mrb[0].mxu0
        %v3590 = vadd.f32 0.0, %v3589
        %v3591 = vpop.f32.mrb[0].mxu0
        %v3592 = vadd.f32 0.0, %v3591
        %3593 = vdwg.mxu0
        %3594 = vmatprep.subr.bf16.mxu0 %v2814
        %3595 = vmatpush1.bf16.msra.mxu0 %v2813
        %3596 = vmatprep.subr.bf16.mxu0 %v2822
        %3597 = vmatpush1.bf16.msra.mxu0 %v2821
        %3598 = vmatprep.subr.bf16.mxu0 %v2830
        %3599 = vmatpush1.bf16.msra.mxu0 %v2829
        %3600 = vmatprep.subr.bf16.mxu0 %v2838
        %3601 = vmatpush1.bf16.msra.mxu0 %v2837
        %3602 = vmatprep.subr.bf16.mxu0 %v2846
        %3603 = vmatpush1.bf16.msra.mxu0 %v2845
        %3604 = vmatprep.subr.bf16.mxu0 %v2854
        %3605 = vmatpush1.bf16.msra.mxu0 %v2853
        %3606 = vmatprep.subr.bf16.mxu0 %v2862
        %3607 = vmatpush1.bf16.msra.mxu0 %v2861
        %3608 = vmatprep.subr.bf16.mxu0 %v2870
        %3609 = vmatpush1.bf16.msra.mxu0 %v2869
        %3610 = vmatprep.subr.bf16.mxu0 %v2878
        %3611 = vmatpush1.bf16.msra.mxu0 %v2877
        %3612 = vmatprep.subr.bf16.mxu0 %v2886
        %3613 = vmatpush1.bf16.msra.mxu0 %v2885
        %3614 = vmatprep.subr.bf16.mxu0 %v2894
        %3615 = vmatpush1.bf16.msra.mxu0 %v2893
        %3616 = vmatprep.subr.bf16.mxu0 %v2902
        %3617 = vmatpush1.bf16.msra.mxu0 %v2901
        %3618 = vmatprep.subr.bf16.mxu0 %v2910
        %3619 = vmatpush1.bf16.msra.mxu0 %v2909
        %3620 = vmatprep.subr.bf16.mxu0 %v2918
        %3621 = vmatpush1.bf16.msra.mxu0 %v2917
        %3622 = vmatprep.subr.bf16.mxu0 %v2926
        %3623 = vmatpush1.bf16.msra.mxu0 %v2925
        %3624 = vmatprep.subr.bf16.mxu0 %v2934
        %3625 = vmatpush1.bf16.msra.mxu0 %v2933
        %3626 = vmatprep.mubr.bf16.mxu0 %v1622
        %3627 = vmatmul.mubr.bf16.gmra.mrb[0].mxu0 %v1621
        %v3628 = vpop.f32.mrb[0].mxu0
        %v3629 = vadd.f32 %v3496, %v3628
        %v3630 = vpop.f32.mrb[0].mxu0
        %v3631 = vadd.f32 %v3498, %v3630
        %v3632 = vpop.f32.mrb[0].mxu0
        %v3633 = vadd.f32 %v3500, %v3632
        %v3634 = vpop.f32.mrb[0].mxu0
        %v3635 = vadd.f32 %v3502, %v3634
        %3636 = vmatprep.mubr.bf16.mxu0 %v1626
        %3637 = vmatmul.mubr.bf16.gmra.mrb[0].mxu0 %v1625
        %v3638 = vpop.f32.mrb[0].mxu0
        %v3639 = vadd.f32 %v3506, %v3638
        %v3640 = vpop.f32.mrb[0].mxu0
        %v3641 = vadd.f32 %v3508, %v3640
        %v3642 = vpop.f32.mrb[0].mxu0
        %v3643 = vadd.f32 %v3510, %v3642
        %v3644 = vpop.f32.mrb[0].mxu0
        %v3645 = vadd.f32 %v3512, %v3644
        %3646 = vmatprep.mubr.bf16.mxu0 %v1630
        %3647 = vmatmul.mubr.bf16.gmra.mrb[0].mxu0 %v1629
        %v3648 = vpop.f32.mrb[0].mxu0
        %v3649 = vadd.f32 %v3516, %v3648
        %v3650 = vpop.f32.mrb[0].mxu0
        %v3651 = vadd.f32 %v3518, %v3650
        %v3652 = vpop.f32.mrb[0].mxu0
        %v3653 = vadd.f32 %v3520, %v3652
        %v3654 = vpop.f32.mrb[0].mxu0
        %v3655 = vadd.f32 %v3522, %v3654
        %3656 = vmatprep.mubr.bf16.mxu0 %v1634
        %3657 = vmatmul.mubr.bf16.gmra.mrb[0].mxu0 %v1633
        %v3658 = vpop.f32.mrb[0].mxu0
        %v3659 = vadd.f32 %v3526, %v3658
        %v3660 = vpop.f32.mrb[0].mxu0
        %v3661 = vadd.f32 %v3528, %v3660
        %v3662 = vpop.f32.mrb[0].mxu0
        %v3663 = vadd.f32 %v3530, %v3662
        %v3664 = vpop.f32.mrb[0].mxu0
        %v3665 = vadd.f32 %v3532, %v3664
        %3666 = vmatprep.mubr.bf16.mxu0 %v1638
        %3667 = vmatmul.mubr.bf16.gmra.mrb[0].mxu0 %v1637
        %v3668 = vpop.f32.mrb[0].mxu0
        %v3669 = vadd.f32 %v3536, %v3668
        %v3670 = vpop.f32.mrb[0].mxu0
        %v3671 = vadd.f32 %v3538, %v3670
        %v3672 = vpop.f32.mrb[0].mxu0
        %v3673 = vadd.f32 %v3540, %v3672
        %v3674 = vpop.f32.mrb[0].mxu0
        %v3675 = vadd.f32 %v3542, %v3674
        %3676 = vmatprep.mubr.bf16.mxu0 %v1642
        %3677 = vmatmul.mubr.bf16.gmra.mrb[0].mxu0 %v1641
        %v3678 = vpop.f32.mrb[0].mxu0
        %v3679 = vadd.f32 %v3546, %v3678
        %v3680 = vpop.f32.mrb[0].mxu0
        %v3681 = vadd.f32 %v3548, %v3680
        %v3682 = vpop.f32.mrb[0].mxu0
        %v3683 = vadd.f32 %v3550, %v3682
        %v3684 = vpop.f32.mrb[0].mxu0
        %v3685 = vadd.f32 %v3552, %v3684
        %3686 = vmatprep.mubr.bf16.mxu0 %v1646
        %3687 = vmatmul.mubr.bf16.gmra.mrb[0].mxu0 %v1645
        %v3688 = vpop.f32.mrb[0].mxu0
        %v3689 = vadd.f32 %v3556, %v3688
        %v3690 = vpop.f32.mrb[0].mxu0
        %v3691 = vadd.f32 %v3558, %v3690
        %v3692 = vpop.f32.mrb[0].mxu0
        %v3693 = vadd.f32 %v3560, %v3692
        %v3694 = vpop.f32.mrb[0].mxu0
        %v3695 = vadd.f32 %v3562, %v3694
        %3696 = vmatprep.mubr.bf16.mxu0 %v1650
        %3697 = vmatmul.mubr.bf16.gmra.mrb[0].mxu0 %v1649
        %v3698 = vpop.f32.mrb[0].mxu0
        %v3699 = vadd.f32 %v3566, %v3698
        %v3700 = vpop.f32.mrb[0].mxu0
        %v3701 = vadd.f32 %v3568, %v3700
        %v3702 = vpop.f32.mrb[0].mxu0
        %v3703 = vadd.f32 %v3570, %v3702
        %v3704 = vpop.f32.mrb[0].mxu0
        %v3705 = vadd.f32 %v3572, %v3704
        %3706 = vmatprep.mubr.bf16.mxu0 %v1654
        %3707 = vmatmul.mubr.bf16.gmra.mrb[0].mxu0 %v1653
        %v3708 = vpop.f32.mrb[0].mxu0
        %v3709 = vadd.f32 %v3576, %v3708
        %v3710 = vpop.f32.mrb[0].mxu0
        %v3711 = vadd.f32 %v3578, %v3710
        %v3712 = vpop.f32.mrb[0].mxu0
        %v3713 = vadd.f32 %v3580, %v3712
        %v3714 = vpop.f32.mrb[0].mxu0
        %v3715 = vadd.f32 %v3582, %v3714
        %3716 = vmatprep.mubr.bf16.mxu0 %v1658
        %3717 = vmatmul.mubr.bf16.gmra.mrb[0].mxu0 %v1657
        %v3718 = vpop.f32.mrb[0].mxu0
        %v3719 = vadd.f32 %v3586, %v3718
        %v3720 = vpop.f32.mrb[0].mxu0
        %v3721 = vadd.f32 %v3588, %v3720
        %v3722 = vpop.f32.mrb[0].mxu0
        %v3723 = vadd.f32 %v3590, %v3722
        %v3724 = vpop.f32.mrb[0].mxu0
        %v3725 = vadd.f32 %v3592, %v3724
        %3726 = vdwg.mxu0
        %3727 = vmatprep.subr.bf16.mxu0 %v2688
        %3728 = vmatpush1.bf16.msra.mxu0 %v2687
        %3729 = vmatprep.subr.bf16.mxu0 %v2696
        %3730 = vmatpush1.bf16.msra.mxu0 %v2695
        %3731 = vmatprep.subr.bf16.mxu0 %v2704
        %3732 = vmatpush1.bf16.msra.mxu0 %v2703
        %3733 = vmatprep.subr.bf16.mxu0 %v2712
        %3734 = vmatpush1.bf16.msra.mxu0 %v2711
        %3735 = vmatprep.subr.bf16.mxu0 %v2720
        %3736 = vmatpush1.bf16.msra.mxu0 %v2719
        %3737 = vmatprep.subr.bf16.mxu0 %v2728
        %3738 = vmatpush1.bf16.msra.mxu0 %v2727
        %3739 = vmatprep.subr.bf16.mxu0 %v2736
        %3740 = vmatpush1.bf16.msra.mxu0 %v2735
        %3741 = vmatprep.subr.bf16.mxu0 %v2744
        %3742 = vmatpush1.bf16.msra.mxu0 %v2743
        %3743 = vmatprep.subr.bf16.mxu0 %v2752
        %3744 = vmatpush1.bf16.msra.mxu0 %v2751
        %3745 = vmatprep.subr.bf16.mxu0 %v2760
        %3746 = vmatpush1.bf16.msra.mxu0 %v2759
        %3747 = vmatprep.subr.bf16.mxu0 %v2768
        %3748 = vmatpush1.bf16.msra.mxu0 %v2767
        %3749 = vmatprep.subr.bf16.mxu0 %v2776
        %3750 = vmatpush1.bf16.msra.mxu0 %v2775
        %3751 = vmatprep.subr.bf16.mxu0 %v2784
        %3752 = vmatpush1.bf16.msra.mxu0 %v2783
        %3753 = vmatprep.subr.bf16.mxu0 %v2792
        %3754 = vmatpush1.bf16.msra.mxu0 %v2791
        %3755 = vmatprep.subr.bf16.mxu0 %v2800
        %3756 = vmatpush1.bf16.msra.mxu0 %v2799
        %3757 = vmatprep.subr.bf16.mxu0 %v2808
        %3758 = vmatpush1.bf16.msra.mxu0 %v2807
        %3759 = vmatprep.mubr.bf16.mxu0 %v1620
        %3760 = vmatmul.mubr.bf16.gmra.mrb[0].mxu0 %v1619
        %v3761 = vpop.f32.mrb[0].mxu0
        %v3762 = vadd.f32 0.0, %v3761
        %v3763 = vpop.f32.mrb[0].mxu0
        %v3764 = vadd.f32 0.0, %v3763
        %v3765 = vpop.f32.mrb[0].mxu0
        %v3766 = vadd.f32 0.0, %v3765
        %v3767 = vpop.f32.mrb[0].mxu0
        %v3768 = vadd.f32 0.0, %v3767
        %3769 = vmatprep.mubr.bf16.mxu0 %v1624
        %3770 = vmatmul.mubr.bf16.gmra.mrb[0].mxu0 %v1623
        %v3771 = vpop.f32.mrb[0].mxu0
        %v3772 = vadd.f32 0.0, %v3771
        %v3773 = vpop.f32.mrb[0].mxu0
        %v3774 = vadd.f32 0.0, %v3773
        %v3775 = vpop.f32.mrb[0].mxu0
        %v3776 = vadd.f32 0.0, %v3775
        %v3777 = vpop.f32.mrb[0].mxu0
        %v3778 = vadd.f32 0.0, %v3777
        %3779 = vmatprep.mubr.bf16.mxu0 %v1628
        %3780 = vmatmul.mubr.bf16.gmra.mrb[0].mxu0 %v1627
        %v3781 = vpop.f32.mrb[0].mxu0
        %v3782 = vadd.f32 0.0, %v3781
        %v3783 = vpop.f32.mrb[0].mxu0
        %v3784 = vadd.f32 0.0, %v3783
        %v3785 = vpop.f32.mrb[0].mxu0
        %v3786 = vadd.f32 0.0, %v3785
        %v3787 = vpop.f32.mrb[0].mxu0
        %v3788 = vadd.f32 0.0, %v3787
        %3789 = vmatprep.mubr.bf16.mxu0 %v1632
        %3790 = vmatmul.mubr.bf16.gmra.mrb[0].mxu0 %v1631
        %v3791 = vpop.f32.mrb[0].mxu0
        %v3792 = vadd.f32 0.0, %v3791
        %v3793 = vpop.f32.mrb[0].mxu0
        %v3794 = vadd.f32 0.0, %v3793
        %v3795 = vpop.f32.mrb[0].mxu0
        %v3796 = vadd.f32 0.0, %v3795
        %v3797 = vpop.f32.mrb[0].mxu0
        %v3798 = vadd.f32 0.0, %v3797
        %3799 = vmatprep.mubr.bf16.mxu0 %v1636
        %3800 = vmatmul.mubr.bf16.gmra.mrb[0].mxu0 %v1635
        %v3801 = vpop.f32.mrb[0].mxu0
        %v3802 = vadd.f32 0.0, %v3801
        %v3803 = vpop.f32.mrb[0].mxu0
        %v3804 = vadd.f32 0.0, %v3803
        %v3805 = vpop.f32.mrb[0].mxu0
        %v3806 = vadd.f32 0.0, %v3805
        %v3807 = vpop.f32.mrb[0].mxu0
        %v3808 = vadd.f32 0.0, %v3807
        %3809 = vmatprep.mubr.bf16.mxu0 %v1640
        %3810 = vmatmul.mubr.bf16.gmra.mrb[0].mxu0 %v1639
        %v3811 = vpop.f32.mrb[0].mxu0
        %v3812 = vadd.f32 0.0, %v3811
        %v3813 = vpop.f32.mrb[0].mxu0
        %v3814 = vadd.f32 0.0, %v3813
        %v3815 = vpop.f32.mrb[0].mxu0
        %v3816 = vadd.f32 0.0, %v3815
        %v3817 = vpop.f32.mrb[0].mxu0
        %v3818 = vadd.f32 0.0, %v3817
        %3819 = vmatprep.mubr.bf16.mxu0 %v1644
        %3820 = vmatmul.mubr.bf16.gmra.mrb[0].mxu0 %v1643
        %v3821 = vpop.f32.mrb[0].mxu0
        %v3822 = vadd.f32 0.0, %v3821
        %v3823 = vpop.f32.mrb[0].mxu0
        %v3824 = vadd.f32 0.0, %v3823
        %v3825 = vpop.f32.mrb[0].mxu0
        %v3826 = vadd.f32 0.0, %v3825
        %v3827 = vpop.f32.mrb[0].mxu0
        %v3828 = vadd.f32 0.0, %v3827
        %3829 = vmatprep.mubr.bf16.mxu0 %v1648
        %3830 = vmatmul.mubr.bf16.gmra.mrb[0].mxu0 %v1647
        %v3831 = vpop.f32.mrb[0].mxu0
        %v3832 = vadd.f32 0.0, %v3831
        %v3833 = vpop.f32.mrb[0].mxu0
        %v3834 = vadd.f32 0.0, %v3833
        %v3835 = vpop.f32.mrb[0].mxu0
        %v3836 = vadd.f32 0.0, %v3835
        %v3837 = vpop.f32.mrb[0].mxu0
        %v3838 = vadd.f32 0.0, %v3837
        %3839 = vmatprep.mubr.bf16.mxu0 %v1652
        %3840 = vmatmul.mubr.bf16.gmra.mrb[0].mxu0 %v1651
        %v3841 = vpop.f32.mrb[0].mxu0
        %v3842 = vadd.f32 0.0, %v3841
        %v3843 = vpop.f32.mrb[0].mxu0
        %v3844 = vadd.f32 0.0, %v3843
        %v3845 = vpop.f32.mrb[0].mxu0
        %v3846 = vadd.f32 0.0, %v3845
        %v3847 = vpop.f32.mrb[0].mxu0
        %v3848 = vadd.f32 0.0, %v3847
        %3849 = vmatprep.mubr.bf16.mxu0 %v1656
        %3850 = vmatmul.mubr.bf16.gmra.mrb[0].mxu0 %v1655
        %v3851 = vpop.f32.mrb[0].mxu0
        %v3852 = vadd.f32 0.0, %v3851
        %v3853 = vpop.f32.mrb[0].mxu0
        %v3854 = vadd.f32 0.0, %v3853
        %v3855 = vpop.f32.mrb[0].mxu0
        %v3856 = vadd.f32 0.0, %v3855
        %v3857 = vpop.f32.mrb[0].mxu0
        %v3858 = vadd.f32 0.0, %v3857
        %3859 = vdwg.mxu0
        %3860 = vmatprep.subr.bf16.mxu0 %v2816
        %3861 = vmatpush1.bf16.msra.mxu0 %v2815
        %3862 = vmatprep.subr.bf16.mxu0 %v2824
        %3863 = vmatpush1.bf16.msra.mxu0 %v2823
        %3864 = vmatprep.subr.bf16.mxu0 %v2832
        %3865 = vmatpush1.bf16.msra.mxu0 %v2831
        %3866 = vmatprep.subr.bf16.mxu0 %v2840
        %3867 = vmatpush1.bf16.msra.mxu0 %v2839
        %3868 = vmatprep.subr.bf16.mxu0 %v2848
        %3869 = vmatpush1.bf16.msra.mxu0 %v2847
        %3870 = vmatprep.subr.bf16.mxu0 %v2856
        %3871 = vmatpush1.bf16.msra.mxu0 %v2855
        %3872 = vmatprep.subr.bf16.mxu0 %v2864
        %3873 = vmatpush1.bf16.msra.mxu0 %v2863
        %3874 = vmatprep.subr.bf16.mxu0 %v2872
        %3875 = vmatpush1.bf16.msra.mxu0 %v2871
        %3876 = vmatprep.subr.bf16.mxu0 %v2880
        %3877 = vmatpush1.bf16.msra.mxu0 %v2879
        %3878 = vmatprep.subr.bf16.mxu0 %v2888
        %3879 = vmatpush1.bf16.msra.mxu0 %v2887
        %3880 = vmatprep.subr.bf16.mxu0 %v2896
        %3881 = vmatpush1.bf16.msra.mxu0 %v2895
        %3882 = vmatprep.subr.bf16.mxu0 %v2904
        %3883 = vmatpush1.bf16.msra.mxu0 %v2903
        %3884 = vmatprep.subr.bf16.mxu0 %v2912
        %3885 = vmatpush1.bf16.msra.mxu0 %v2911
        %3886 = vmatprep.subr.bf16.mxu0 %v2920
        %3887 = vmatpush1.bf16.msra.mxu0 %v2919
        %3888 = vmatprep.subr.bf16.mxu0 %v2928
        %3889 = vmatpush1.bf16.msra.mxu0 %v2927
        %3890 = vmatprep.subr.bf16.mxu0 %v2936
        %3891 = vmatpush1.bf16.msra.mxu0 %v2935
        %3892 = vmatprep.mubr.bf16.mxu0 %v1622
        %3893 = vmatmul.mubr.bf16.gmra.mrb[0].mxu0 %v1621
        %v3894 = vpop.f32.mrb[0].mxu0
        %v3895 = vadd.f32 %v3762, %v3894
        %v3896 = vpop.f32.mrb[0].mxu0
        %v3897 = vadd.f32 %v3764, %v3896
        %v3898 = vpop.f32.mrb[0].mxu0
        %v3899 = vadd.f32 %v3766, %v3898
        %v3900 = vpop.f32.mrb[0].mxu0
        %v3901 = vadd.f32 %v3768, %v3900
        %3902 = vmatprep.mubr.bf16.mxu0 %v1626
        %3903 = vmatmul.mubr.bf16.gmra.mrb[0].mxu0 %v1625
        %v3904 = vpop.f32.mrb[0].mxu0
        %v3905 = vadd.f32 %v3772, %v3904
        %v3906 = vpop.f32.mrb[0].mxu0
        %v3907 = vadd.f32 %v3774, %v3906
        %v3908 = vpop.f32.mrb[0].mxu0
        %v3909 = vadd.f32 %v3776, %v3908
        %v3910 = vpop.f32.mrb[0].mxu0
        %v3911 = vadd.f32 %v3778, %v3910
        %3912 = vmatprep.mubr.bf16.mxu0 %v1630
        %3913 = vmatmul.mubr.bf16.gmra.mrb[0].mxu0 %v1629
        %v3914 = vpop.f32.mrb[0].mxu0
        %v3915 = vadd.f32 %v3782, %v3914
        %v3916 = vpop.f32.mrb[0].mxu0
        %v3917 = vadd.f32 %v3784, %v3916
        %v3918 = vpop.f32.mrb[0].mxu0
        %v3919 = vadd.f32 %v3786, %v3918
        %v3920 = vpop.f32.mrb[0].mxu0
        %v3921 = vadd.f32 %v3788, %v3920
        %3922 = vmatprep.mubr.bf16.mxu0 %v1634
        %3923 = vmatmul.mubr.bf16.gmra.mrb[0].mxu0 %v1633
        %v3924 = vpop.f32.mrb[0].mxu0
        %v3925 = vadd.f32 %v3792, %v3924
        %v3926 = vpop.f32.mrb[0].mxu0
        %v3927 = vadd.f32 %v3794, %v3926
        %v3928 = vpop.f32.mrb[0].mxu0
        %v3929 = vadd.f32 %v3796, %v3928
        %v3930 = vpop.f32.mrb[0].mxu0
        %v3931 = vadd.f32 %v3798, %v3930
        %3932 = vmatprep.mubr.bf16.mxu0 %v1638
        %3933 = vmatmul.mubr.bf16.gmra.mrb[0].mxu0 %v1637
        %v3934 = vpop.f32.mrb[0].mxu0
        %v3935 = vadd.f32 %v3802, %v3934
        %v3936 = vpop.f32.mrb[0].mxu0
        %v3937 = vadd.f32 %v3804, %v3936
        %v3938 = vpop.f32.mrb[0].mxu0
        %v3939 = vadd.f32 %v3806, %v3938
        %v3940 = vpop.f32.mrb[0].mxu0
        %v3941 = vadd.f32 %v3808, %v3940
        %3942 = vmatprep.mubr.bf16.mxu0 %v1642
        %3943 = vmatmul.mubr.bf16.gmra.mrb[0].mxu0 %v1641
        %v3944 = vpop.f32.mrb[0].mxu0
        %v3945 = vadd.f32 %v3812, %v3944
        %v3946 = vpop.f32.mrb[0].mxu0
        %v3947 = vadd.f32 %v3814, %v3946
        %v3948 = vpop.f32.mrb[0].mxu0
        %v3949 = vadd.f32 %v3816, %v3948
        %v3950 = vpop.f32.mrb[0].mxu0
        %v3951 = vadd.f32 %v3818, %v3950
        %3952 = vmatprep.mubr.bf16.mxu0 %v1646
        %3953 = vmatmul.mubr.bf16.gmra.mrb[0].mxu0 %v1645
        %v3954 = vpop.f32.mrb[0].mxu0
        %v3955 = vadd.f32 %v3822, %v3954
        %v3956 = vpop.f32.mrb[0].mxu0
        %v3957 = vadd.f32 %v3824, %v3956
        %v3958 = vpop.f32.mrb[0].mxu0
        %v3959 = vadd.f32 %v3826, %v3958
        %v3960 = vpop.f32.mrb[0].mxu0
        %v3961 = vadd.f32 %v3828, %v3960
        %3962 = vmatprep.mubr.bf16.mxu0 %v1650
        %3963 = vmatmul.mubr.bf16.gmra.mrb[0].mxu0 %v1649
        %v3964 = vpop.f32.mrb[0].mxu0
        %v3965 = vadd.f32 %v3832, %v3964
        %v3966 = vpop.f32.mrb[0].mxu0
        %v3967 = vadd.f32 %v3834, %v3966
        %v3968 = vpop.f32.mrb[0].mxu0
        %v3969 = vadd.f32 %v3836, %v3968
        %v3970 = vpop.f32.mrb[0].mxu0
        %v3971 = vadd.f32 %v3838, %v3970
        %3972 = vmatprep.mubr.bf16.mxu0 %v1654
        %3973 = vmatmul.mubr.bf16.gmra.mrb[0].mxu0 %v1653
        %v3974 = vpop.f32.mrb[0].mxu0
        %v3975 = vadd.f32 %v3842, %v3974
        %v3976 = vpop.f32.mrb[0].mxu0
        %v3977 = vadd.f32 %v3844, %v3976
        %v3978 = vpop.f32.mrb[0].mxu0
        %v3979 = vadd.f32 %v3846, %v3978
        %v3980 = vpop.f32.mrb[0].mxu0
        %v3981 = vadd.f32 %v3848, %v3980
        %3982 = vmatprep.mubr.bf16.mxu0 %v1658
        %3983 = vmatmul.mubr.bf16.gmra.mrb[0].mxu0 %v1657
        %v3984 = vpop.f32.mrb[0].mxu0
        %v3985 = vadd.f32 %v3852, %v3984
        %v3986 = vpop.f32.mrb[0].mxu0
        %v3987 = vadd.f32 %v3854, %v3986
        %v3988 = vpop.f32.mrb[0].mxu0
        %v3989 = vadd.f32 %v3856, %v3988
        %v3990 = vpop.f32.mrb[0].mxu0
        %v3991 = vadd.f32 %v3858, %v3990
        %3992 = vdwg.mxu0
        %3993 = vmatprep.subr.bf16.mxu0 %v2690
        %3994 = vmatpush1.bf16.msra.mxu0 %v2689
        %3995 = vmatprep.subr.bf16.mxu0 %v2698
        %3996 = vmatpush1.bf16.msra.mxu0 %v2697
        %3997 = vmatprep.subr.bf16.mxu0 %v2706
        %3998 = vmatpush1.bf16.msra.mxu0 %v2705
        %3999 = vmatprep.subr.bf16.mxu0 %v2714
        %4000 = vmatpush1.bf16.msra.mxu0 %v2713
        %4001 = vmatprep.subr.bf16.mxu0 %v2722
        %4002 = vmatpush1.bf16.msra.mxu0 %v2721
        %4003 = vmatprep.subr.bf16.mxu0 %v2730
        %4004 = vmatpush1.bf16.msra.mxu0 %v2729
        %4005 = vmatprep.subr.bf16.mxu0 %v2738
        %4006 = vmatpush1.bf16.msra.mxu0 %v2737
        %4007 = vmatprep.subr.bf16.mxu0 %v2746
        %4008 = vmatpush1.bf16.msra.mxu0 %v2745
        %4009 = vmatprep.subr.bf16.mxu0 %v2754
        %4010 = vmatpush1.bf16.msra.mxu0 %v2753
        %4011 = vmatprep.subr.bf16.mxu0 %v2762
        %4012 = vmatpush1.bf16.msra.mxu0 %v2761
        %4013 = vmatprep.subr.bf16.mxu0 %v2770
        %4014 = vmatpush1.bf16.msra.mxu0 %v2769
        %4015 = vmatprep.subr.bf16.mxu0 %v2778
        %4016 = vmatpush1.bf16.msra.mxu0 %v2777
        %4017 = vmatprep.subr.bf16.mxu0 %v2786
        %4018 = vmatpush1.bf16.msra.mxu0 %v2785
        %4019 = vmatprep.subr.bf16.mxu0 %v2794
        %4020 = vmatpush1.bf16.msra.mxu0 %v2793
        %4021 = vmatprep.subr.bf16.mxu0 %v2802
        %4022 = vmatpush1.bf16.msra.mxu0 %v2801
        %4023 = vmatprep.subr.bf16.mxu0 %v2810
        %4024 = vmatpush1.bf16.msra.mxu0 %v2809
        %4025 = vmatprep.mubr.bf16.mxu0 %v1620
        %4026 = vmatmul.mubr.bf16.gmra.mrb[0].mxu0 %v1619
        %v4027 = vpop.f32.mrb[0].mxu0
        %v4028 = vadd.f32 0.0, %v4027
        %v4029 = vpop.f32.mrb[0].mxu0
        %v4030 = vadd.f32 0.0, %v4029
        %v4031 = vpop.f32.mrb[0].mxu0
        %v4032 = vadd.f32 0.0, %v4031
        %v4033 = vpop.f32.mrb[0].mxu0
        %v4034 = vadd.f32 0.0, %v4033
        %4035 = vmatprep.mubr.bf16.mxu0 %v1624
        %4036 = vmatmul.mubr.bf16.gmra.mrb[0].mxu0 %v1623
        %v4037 = vpop.f32.mrb[0].mxu0
        %v4038 = vadd.f32 0.0, %v4037
        %v4039 = vpop.f32.mrb[0].mxu0
        %v4040 = vadd.f32 0.0, %v4039
        %v4041 = vpop.f32.mrb[0].mxu0
        %v4042 = vadd.f32 0.0, %v4041
        %v4043 = vpop.f32.mrb[0].mxu0
        %v4044 = vadd.f32 0.0, %v4043
        %4045 = vmatprep.mubr.bf16.mxu0 %v1628
        %4046 = vmatmul.mubr.bf16.gmra.mrb[0].mxu0 %v1627
        %v4047 = vpop.f32.mrb[0].mxu0
        %v4048 = vadd.f32 0.0, %v4047
        %v4049 = vpop.f32.mrb[0].mxu0
        %v4050 = vadd.f32 0.0, %v4049
        %v4051 = vpop.f32.mrb[0].mxu0
        %v4052 = vadd.f32 0.0, %v4051
        %v4053 = vpop.f32.mrb[0].mxu0
        %v4054 = vadd.f32 0.0, %v4053
        %4055 = vmatprep.mubr.bf16.mxu0 %v1632
        %4056 = vmatmul.mubr.bf16.gmra.mrb[0].mxu0 %v1631
        %v4057 = vpop.f32.mrb[0].mxu0
        %v4058 = vadd.f32 0.0, %v4057
        %v4059 = vpop.f32.mrb[0].mxu0
        %v4060 = vadd.f32 0.0, %v4059
        %v4061 = vpop.f32.mrb[0].mxu0
        %v4062 = vadd.f32 0.0, %v4061
        %v4063 = vpop.f32.mrb[0].mxu0
        %v4064 = vadd.f32 0.0, %v4063
        %4065 = vmatprep.mubr.bf16.mxu0 %v1636
        %4066 = vmatmul.mubr.bf16.gmra.mrb[0].mxu0 %v1635
        %v4067 = vpop.f32.mrb[0].mxu0
        %v4068 = vadd.f32 0.0, %v4067
        %v4069 = vpop.f32.mrb[0].mxu0
        %v4070 = vadd.f32 0.0, %v4069
        %v4071 = vpop.f32.mrb[0].mxu0
        %v4072 = vadd.f32 0.0, %v4071
        %v4073 = vpop.f32.mrb[0].mxu0
        %v4074 = vadd.f32 0.0, %v4073
        %4075 = vmatprep.mubr.bf16.mxu0 %v1640
        %4076 = vmatmul.mubr.bf16.gmra.mrb[0].mxu0 %v1639
        %v4077 = vpop.f32.mrb[0].mxu0
        %v4078 = vadd.f32 0.0, %v4077
        %v4079 = vpop.f32.mrb[0].mxu0
        %v4080 = vadd.f32 0.0, %v4079
        %v4081 = vpop.f32.mrb[0].mxu0
        %v4082 = vadd.f32 0.0, %v4081
        %v4083 = vpop.f32.mrb[0].mxu0
        %v4084 = vadd.f32 0.0, %v4083
        %4085 = vmatprep.mubr.bf16.mxu0 %v1644
        %4086 = vmatmul.mubr.bf16.gmra.mrb[0].mxu0 %v1643
        %v4087 = vpop.f32.mrb[0].mxu0
        %v4088 = vadd.f32 0.0, %v4087
        %v4089 = vpop.f32.mrb[0].mxu0
        %v4090 = vadd.f32 0.0, %v4089
        %v4091 = vpop.f32.mrb[0].mxu0
        %v4092 = vadd.f32 0.0, %v4091
        %v4093 = vpop.f32.mrb[0].mxu0
        %v4094 = vadd.f32 0.0, %v4093
        %4095 = vmatprep.mubr.bf16.mxu0 %v1648
        %4096 = vmatmul.mubr.bf16.gmra.mrb[0].mxu0 %v1647
        %v4097 = vpop.f32.mrb[0].mxu0
        %v4098 = vadd.f32 0.0, %v4097
        %v4099 = vpop.f32.mrb[0].mxu0
        %v4100 = vadd.f32 0.0, %v4099
        %v4101 = vpop.f32.mrb[0].mxu0
        %v4102 = vadd.f32 0.0, %v4101
        %v4103 = vpop.f32.mrb[0].mxu0
        %v4104 = vadd.f32 0.0, %v4103
        %4105 = vmatprep.mubr.bf16.mxu0 %v1652
        %4106 = vmatmul.mubr.bf16.gmra.mrb[0].mxu0 %v1651
        %v4107 = vpop.f32.mrb[0].mxu0
        %v4108 = vadd.f32 0.0, %v4107
        %v4109 = vpop.f32.mrb[0].mxu0
        %v4110 = vadd.f32 0.0, %v4109
        %v4111 = vpop.f32.mrb[0].mxu0
        %v4112 = vadd.f32 0.0, %v4111
        %v4113 = vpop.f32.mrb[0].mxu0
        %v4114 = vadd.f32 0.0, %v4113
        %4115 = vmatprep.mubr.bf16.mxu0 %v1656
        %4116 = vmatmul.mubr.bf16.gmra.mrb[0].mxu0 %v1655
        %v4117 = vpop.f32.mrb[0].mxu0
        %v4118 = vadd.f32 0.0, %v4117
        %v4119 = vpop.f32.mrb[0].mxu0
        %v4120 = vadd.f32 0.0, %v4119
        %v4121 = vpop.f32.mrb[0].mxu0
        %v4122 = vadd.f32 0.0, %v4121
        %v4123 = vpop.f32.mrb[0].mxu0
        %v4124 = vadd.f32 0.0, %v4123
        %4125 = vdwg.mxu0
        %4126 = vmatprep.subr.bf16.mxu0 %v2818
        %4127 = vmatpush1.bf16.msra.mxu0 %v2817
        %4128 = vmatprep.subr.bf16.mxu0 %v2826
        %4129 = vmatpush1.bf16.msra.mxu0 %v2825
        %4130 = vmatprep.subr.bf16.mxu0 %v2834
        %4131 = vmatpush1.bf16.msra.mxu0 %v2833
        %4132 = vmatprep.subr.bf16.mxu0 %v2842
        %4133 = vmatpush1.bf16.msra.mxu0 %v2841
        %4134 = vmatprep.subr.bf16.mxu0 %v2850
        %4135 = vmatpush1.bf16.msra.mxu0 %v2849
        %4136 = vmatprep.subr.bf16.mxu0 %v2858
        %4137 = vmatpush1.bf16.msra.mxu0 %v2857
        %4138 = vmatprep.subr.bf16.mxu0 %v2866
        %4139 = vmatpush1.bf16.msra.mxu0 %v2865
        %4140 = vmatprep.subr.bf16.mxu0 %v2874
        %4141 = vmatpush1.bf16.msra.mxu0 %v2873
        %4142 = vmatprep.subr.bf16.mxu0 %v2882
        %4143 = vmatpush1.bf16.msra.mxu0 %v2881
        %4144 = vmatprep.subr.bf16.mxu0 %v2890
        %4145 = vmatpush1.bf16.msra.mxu0 %v2889
        %4146 = vmatprep.subr.bf16.mxu0 %v2898
        %4147 = vmatpush1.bf16.msra.mxu0 %v2897
        %4148 = vmatprep.subr.bf16.mxu0 %v2906
        %4149 = vmatpush1.bf16.msra.mxu0 %v2905
        %4150 = vmatprep.subr.bf16.mxu0 %v2914
        %4151 = vmatpush1.bf16.msra.mxu0 %v2913
        %4152 = vmatprep.subr.bf16.mxu0 %v2922
        %4153 = vmatpush1.bf16.msra.mxu0 %v2921
        %4154 = vmatprep.subr.bf16.mxu0 %v2930
        %4155 = vmatpush1.bf16.msra.mxu0 %v2929
        %4156 = vmatprep.subr.bf16.mxu0 %v2938
        %4157 = vmatpush1.bf16.msra.mxu0 %v2937
        %4158 = vmatprep.mubr.bf16.mxu0 %v1622
        %4159 = vmatmul.mubr.bf16.gmra.mrb[0].mxu0 %v1621
        %v4160 = vpop.f32.mrb[0].mxu0
        %v4161 = vadd.f32 %v4028, %v4160
        %v4162 = vpop.f32.mrb[0].mxu0
        %v4163 = vadd.f32 %v4030, %v4162
        %v4164 = vpop.f32.mrb[0].mxu0
        %v4165 = vadd.f32 %v4032, %v4164
        %v4166 = vpop.f32.mrb[0].mxu0
        %v4167 = vadd.f32 %v4034, %v4166
        %4168 = vmatprep.mubr.bf16.mxu0 %v1626
        %4169 = vmatmul.mubr.bf16.gmra.mrb[0].mxu0 %v1625
        %v4170 = vpop.f32.mrb[0].mxu0
        %v4171 = vadd.f32 %v4038, %v4170
        %v4172 = vpop.f32.mrb[0].mxu0
        %v4173 = vadd.f32 %v4040, %v4172
        %v4174 = vpop.f32.mrb[0].mxu0
        %v4175 = vadd.f32 %v4042, %v4174
        %v4176 = vpop.f32.mrb[0].mxu0
        %v4177 = vadd.f32 %v4044, %v4176
        %4178 = vmatprep.mubr.bf16.mxu0 %v1630
        %4179 = vmatmul.mubr.bf16.gmra.mrb[0].mxu0 %v1629
        %v4180 = vpop.f32.mrb[0].mxu0
        %v4181 = vadd.f32 %v4048, %v4180
        %v4182 = vpop.f32.mrb[0].mxu0
        %v4183 = vadd.f32 %v4050, %v4182
        %v4184 = vpop.f32.mrb[0].mxu0
        %v4185 = vadd.f32 %v4052, %v4184
        %v4186 = vpop.f32.mrb[0].mxu0
        %v4187 = vadd.f32 %v4054, %v4186
        %4188 = vmatprep.mubr.bf16.mxu0 %v1634
        %4189 = vmatmul.mubr.bf16.gmra.mrb[0].mxu0 %v1633
        %v4190 = vpop.f32.mrb[0].mxu0
        %v4191 = vadd.f32 %v4058, %v4190
        %v4192 = vpop.f32.mrb[0].mxu0
        %v4193 = vadd.f32 %v4060, %v4192
        %v4194 = vpop.f32.mrb[0].mxu0
        %v4195 = vadd.f32 %v4062, %v4194
        %v4196 = vpop.f32.mrb[0].mxu0
        %v4197 = vadd.f32 %v4064, %v4196
        %4198 = vmatprep.mubr.bf16.mxu0 %v1638
        %4199 = vmatmul.mubr.bf16.gmra.mrb[0].mxu0 %v1637
        %v4200 = vpop.f32.mrb[0].mxu0
        %v4201 = vadd.f32 %v4068, %v4200
        %v4202 = vpop.f32.mrb[0].mxu0
        %v4203 = vadd.f32 %v4070, %v4202
        %v4204 = vpop.f32.mrb[0].mxu0
        %v4205 = vadd.f32 %v4072, %v4204
        %v4206 = vpop.f32.mrb[0].mxu0
        %v4207 = vadd.f32 %v4074, %v4206
        %4208 = vmatprep.mubr.bf16.mxu0 %v1642
        %4209 = vmatmul.mubr.bf16.gmra.mrb[0].mxu0 %v1641
        %v4210 = vpop.f32.mrb[0].mxu0
        %v4211 = vadd.f32 %v4078, %v4210
        %v4212 = vpop.f32.mrb[0].mxu0
        %v4213 = vadd.f32 %v4080, %v4212
        %v4214 = vpop.f32.mrb[0].mxu0
        %v4215 = vadd.f32 %v4082, %v4214
        %v4216 = vpop.f32.mrb[0].mxu0
        %v4217 = vadd.f32 %v4084, %v4216
        %4218 = vmatprep.mubr.bf16.mxu0 %v1646
        %4219 = vmatmul.mubr.bf16.gmra.mrb[0].mxu0 %v1645
        %v4220 = vpop.f32.mrb[0].mxu0
        %v4221 = vadd.f32 %v4088, %v4220
        %v4222 = vpop.f32.mrb[0].mxu0
        %v4223 = vadd.f32 %v4090, %v4222
        %v4224 = vpop.f32.mrb[0].mxu0
        %v4225 = vadd.f32 %v4092, %v4224
        %v4226 = vpop.f32.mrb[0].mxu0
        %v4227 = vadd.f32 %v4094, %v4226
        %4228 = vmatprep.mubr.bf16.mxu0 %v1650
        %4229 = vmatmul.mubr.bf16.gmra.mrb[0].mxu0 %v1649
        %v4230 = vpop.f32.mrb[0].mxu0
        %v4231 = vadd.f32 %v4098, %v4230
        %v4232 = vpop.f32.mrb[0].mxu0
        %v4233 = vadd.f32 %v4100, %v4232
        %v4234 = vpop.f32.mrb[0].mxu0
        %v4235 = vadd.f32 %v4102, %v4234
        %v4236 = vpop.f32.mrb[0].mxu0
        %v4237 = vadd.f32 %v4104, %v4236
        %4238 = vmatprep.mubr.bf16.mxu0 %v1654
        %4239 = vmatmul.mubr.bf16.gmra.mrb[0].mxu0 %v1653
        %v4240 = vpop.f32.mrb[0].mxu0
        %v4241 = vadd.f32 %v4108, %v4240
        %v4242 = vpop.f32.mrb[0].mxu0
        %v4243 = vadd.f32 %v4110, %v4242
        %v4244 = vpop.f32.mrb[0].mxu0
        %v4245 = vadd.f32 %v4112, %v4244
        %v4246 = vpop.f32.mrb[0].mxu0
        %v4247 = vadd.f32 %v4114, %v4246
        %4248 = vmatprep.mubr.bf16.mxu0 %v1658
        %4249 = vmatmul.mubr.bf16.gmra.mrb[0].mxu0 %v1657
        %v4250 = vpop.f32.mrb[0].mxu0
        %v4251 = vadd.f32 %v4118, %v4250
        %v4252 = vpop.f32.mrb[0].mxu0
        %v4253 = vadd.f32 %v4120, %v4252
        %v4254 = vpop.f32.mrb[0].mxu0
        %v4255 = vadd.f32 %v4122, %v4254
        %v4256 = vpop.f32.mrb[0].mxu0
        %v4257 = vadd.f32 %v4124, %v4256
        %4258 = vdwg.mxu0
        %vm4259 = vcmp.gt.f32.partialorder %v3363, 0.0
        %vm4260 = vcmp.gt.f32.partialorder %v3365, 0.0
        %vm4261 = vcmp.gt.f32.partialorder %v3629, 0.0
        %vm4262 = vcmp.gt.f32.partialorder %v3631, 0.0
        %vm4263 = vcmp.gt.f32.partialorder %v3895, 0.0
        %vm4264 = vcmp.gt.f32.partialorder %v3897, 0.0
        %vm4265 = vcmp.gt.f32.partialorder %v4161, 0.0
        %vm4266 = vcmp.gt.f32.partialorder %v4163, 0.0
        %vm4267 = vcmp.gt.f32.partialorder %v3367, 0.0
        %vm4268 = vcmp.gt.f32.partialorder %v3369, 0.0
        %vm4269 = vcmp.gt.f32.partialorder %v3633, 0.0
        %vm4270 = vcmp.gt.f32.partialorder %v3635, 0.0
        %vm4271 = vcmp.gt.f32.partialorder %v3899, 0.0
        %vm4272 = vcmp.gt.f32.partialorder %v3901, 0.0
        %vm4273 = vcmp.gt.f32.partialorder %v4165, 0.0
        %vm4274 = vcmp.gt.f32.partialorder %v4167, 0.0
        %vm4275 = vcmp.gt.f32.partialorder %v3373, 0.0
        %vm4276 = vcmp.gt.f32.partialorder %v3375, 0.0
        %vm4277 = vcmp.gt.f32.partialorder %v3639, 0.0
        %vm4278 = vcmp.gt.f32.partialorder %v3641, 0.0
        %vm4279 = vcmp.gt.f32.partialorder %v3905, 0.0
        %vm4280 = vcmp.gt.f32.partialorder %v3907, 0.0
        %vm4281 = vcmp.gt.f32.partialorder %v4171, 0.0
        %vm4282 = vcmp.gt.f32.partialorder %v4173, 0.0
        %vm4283 = vcmp.gt.f32.partialorder %v3377, 0.0
        %vm4284 = vcmp.gt.f32.partialorder %v3379, 0.0
        %vm4285 = vcmp.gt.f32.partialorder %v3643, 0.0
        %vm4286 = vcmp.gt.f32.partialorder %v3645, 0.0
        %vm4287 = vcmp.gt.f32.partialorder %v3909, 0.0
        %vm4288 = vcmp.gt.f32.partialorder %v3911, 0.0
        %vm4289 = vcmp.gt.f32.partialorder %v4175, 0.0
        %vm4290 = vcmp.gt.f32.partialorder %v4177, 0.0
        %vm4291 = vcmp.gt.f32.partialorder %v3383, 0.0
        %vm4292 = vcmp.gt.f32.partialorder %v3385, 0.0
        %vm4293 = vcmp.gt.f32.partialorder %v3649, 0.0
        %vm4294 = vcmp.gt.f32.partialorder %v3651, 0.0
        %vm4295 = vcmp.gt.f32.partialorder %v3915, 0.0
        %vm4296 = vcmp.gt.f32.partialorder %v3917, 0.0
        %vm4297 = vcmp.gt.f32.partialorder %v4181, 0.0
        %vm4298 = vcmp.gt.f32.partialorder %v4183, 0.0
        %vm4299 = vcmp.gt.f32.partialorder %v3387, 0.0
        %vm4300 = vcmp.gt.f32.partialorder %v3389, 0.0
        %vm4301 = vcmp.gt.f32.partialorder %v3653, 0.0
        %vm4302 = vcmp.gt.f32.partialorder %v3655, 0.0
        %vm4303 = vcmp.gt.f32.partialorder %v3919, 0.0
        %vm4304 = vcmp.gt.f32.partialorder %v3921, 0.0
        %vm4305 = vcmp.gt.f32.partialorder %v4185, 0.0
        %vm4306 = vcmp.gt.f32.partialorder %v4187, 0.0
        %vm4307 = vcmp.gt.f32.partialorder %v3393, 0.0
        %vm4308 = vcmp.gt.f32.partialorder %v3395, 0.0
        %vm4309 = vcmp.gt.f32.partialorder %v3659, 0.0
        %vm4310 = vcmp.gt.f32.partialorder %v3661, 0.0
        %vm4311 = vcmp.gt.f32.partialorder %v3925, 0.0
        %vm4312 = vcmp.gt.f32.partialorder %v3927, 0.0
        %vm4313 = vcmp.gt.f32.partialorder %v4191, 0.0
        %vm4314 = vcmp.gt.f32.partialorder %v4193, 0.0
        %vm4315 = vcmp.gt.f32.partialorder %v3397, 0.0
        %vm4316 = vcmp.gt.f32.partialorder %v3399, 0.0
        %vm4317 = vcmp.gt.f32.partialorder %v3663, 0.0
        %vm4318 = vcmp.gt.f32.partialorder %v3665, 0.0
        %vm4319 = vcmp.gt.f32.partialorder %v3929, 0.0
        %vm4320 = vcmp.gt.f32.partialorder %v3931, 0.0
        %vm4321 = vcmp.gt.f32.partialorder %v4195, 0.0
        %vm4322 = vcmp.gt.f32.partialorder %v4197, 0.0
        %vm4323 = vcmp.gt.f32.partialorder %v3403, 0.0
        %vm4324 = vcmp.gt.f32.partialorder %v3405, 0.0
        %vm4325 = vcmp.gt.f32.partialorder %v3669, 0.0
        %vm4326 = vcmp.gt.f32.partialorder %v3671, 0.0
        %vm4327 = vcmp.gt.f32.partialorder %v3935, 0.0
        %vm4328 = vcmp.gt.f32.partialorder %v3937, 0.0
        %vm4329 = vcmp.gt.f32.partialorder %v4201, 0.0
        %vm4330 = vcmp.gt.f32.partialorder %v4203, 0.0
        %vm4331 = vcmp.gt.f32.partialorder %v3407, 0.0
        %vm4332 = vcmp.gt.f32.partialorder %v3409, 0.0
        %vm4333 = vcmp.gt.f32.partialorder %v3673, 0.0
        %vm4334 = vcmp.gt.f32.partialorder %v3675, 0.0
        %vm4335 = vcmp.gt.f32.partialorder %v3939, 0.0
        %vm4336 = vcmp.gt.f32.partialorder %v3941, 0.0
        %vm4337 = vcmp.gt.f32.partialorder %v4205, 0.0
        %vm4338 = vcmp.gt.f32.partialorder %v4207, 0.0
        %vm4339 = vcmp.gt.f32.partialorder %v3413, 0.0
        %vm4340 = vcmp.gt.f32.partialorder %v3415, 0.0
        %vm4341 = vcmp.gt.f32.partialorder %v3679, 0.0
        %vm4342 = vcmp.gt.f32.partialorder %v3681, 0.0
        %vm4343 = vcmp.gt.f32.partialorder %v3945, 0.0
        %vm4344 = vcmp.gt.f32.partialorder %v3947, 0.0
        %vm4345 = vcmp.gt.f32.partialorder %v4211, 0.0
        %vm4346 = vcmp.gt.f32.partialorder %v4213, 0.0
        %vm4347 = vcmp.gt.f32.partialorder %v3417, 0.0
        %vm4348 = vcmp.gt.f32.partialorder %v3419, 0.0
        %vm4349 = vcmp.gt.f32.partialorder %v3683, 0.0
        %vm4350 = vcmp.gt.f32.partialorder %v3685, 0.0
        %vm4351 = vcmp.gt.f32.partialorder %v3949, 0.0
        %vm4352 = vcmp.gt.f32.partialorder %v3951, 0.0
        %vm4353 = vcmp.gt.f32.partialorder %v4215, 0.0
        %vm4354 = vcmp.gt.f32.partialorder %v4217, 0.0
        %vm4355 = vcmp.gt.f32.partialorder %v3423, 0.0
        %vm4356 = vcmp.gt.f32.partialorder %v3425, 0.0
        %vm4357 = vcmp.gt.f32.partialorder %v3689, 0.0
        %vm4358 = vcmp.gt.f32.partialorder %v3691, 0.0
        %vm4359 = vcmp.gt.f32.partialorder %v3955, 0.0
        %vm4360 = vcmp.gt.f32.partialorder %v3957, 0.0
        %vm4361 = vcmp.gt.f32.partialorder %v4221, 0.0
        %vm4362 = vcmp.gt.f32.partialorder %v4223, 0.0
        %vm4363 = vcmp.gt.f32.partialorder %v3427, 0.0
        %vm4364 = vcmp.gt.f32.partialorder %v3429, 0.0
        %vm4365 = vcmp.gt.f32.partialorder %v3693, 0.0
        %vm4366 = vcmp.gt.f32.partialorder %v3695, 0.0
        %vm4367 = vcmp.gt.f32.partialorder %v3959, 0.0
        %vm4368 = vcmp.gt.f32.partialorder %v3961, 0.0
        %vm4369 = vcmp.gt.f32.partialorder %v4225, 0.0
        %vm4370 = vcmp.gt.f32.partialorder %v4227, 0.0
        %vm4371 = vcmp.gt.f32.partialorder %v3433, 0.0
        %vm4372 = vcmp.gt.f32.partialorder %v3435, 0.0
        %vm4373 = vcmp.gt.f32.partialorder %v3699, 0.0
        %vm4374 = vcmp.gt.f32.partialorder %v3701, 0.0
        %vm4375 = vcmp.gt.f32.partialorder %v3965, 0.0
        %vm4376 = vcmp.gt.f32.partialorder %v3967, 0.0
        %vm4377 = vcmp.gt.f32.partialorder %v4231, 0.0
        %vm4378 = vcmp.gt.f32.partialorder %v4233, 0.0
        %vm4379 = vcmp.gt.f32.partialorder %v3437, 0.0
        %vm4380 = vcmp.gt.f32.partialorder %v3439, 0.0
        %vm4381 = vcmp.gt.f32.partialorder %v3703, 0.0
        %vm4382 = vcmp.gt.f32.partialorder %v3705, 0.0
        %vm4383 = vcmp.gt.f32.partialorder %v3969, 0.0
        %vm4384 = vcmp.gt.f32.partialorder %v3971, 0.0
        %vm4385 = vcmp.gt.f32.partialorder %v4235, 0.0
        %vm4386 = vcmp.gt.f32.partialorder %v4237, 0.0
        %vm4387 = vcmp.gt.f32.partialorder %v3443, 0.0
        %vm4388 = vcmp.gt.f32.partialorder %v3445, 0.0
        %vm4389 = vcmp.gt.f32.partialorder %v3709, 0.0
        %vm4390 = vcmp.gt.f32.partialorder %v3711, 0.0
        %vm4391 = vcmp.gt.f32.partialorder %v3975, 0.0
        %vm4392 = vcmp.gt.f32.partialorder %v3977, 0.0
        %vm4393 = vcmp.gt.f32.partialorder %v4241, 0.0
        %vm4394 = vcmp.gt.f32.partialorder %v4243, 0.0
        %vm4395 = vcmp.gt.f32.partialorder %v3447, 0.0
        %vm4396 = vcmp.gt.f32.partialorder %v3449, 0.0
        %vm4397 = vcmp.gt.f32.partialorder %v3713, 0.0
        %vm4398 = vcmp.gt.f32.partialorder %v3715, 0.0
        %vm4399 = vcmp.gt.f32.partialorder %v3979, 0.0
        %vm4400 = vcmp.gt.f32.partialorder %v3981, 0.0
        %vm4401 = vcmp.gt.f32.partialorder %v4245, 0.0
        %vm4402 = vcmp.gt.f32.partialorder %v4247, 0.0
        %vm4403 = vcmp.gt.f32.partialorder %v3453, 0.0
        %vm4404 = vcmp.gt.f32.partialorder %v3455, 0.0
        %vm4405 = vcmp.gt.f32.partialorder %v3719, 0.0
        %vm4406 = vcmp.gt.f32.partialorder %v3721, 0.0
        %vm4407 = vcmp.gt.f32.partialorder %v3985, 0.0
        %vm4408 = vcmp.gt.f32.partialorder %v3987, 0.0
        %vm4409 = vcmp.gt.f32.partialorder %v4251, 0.0
        %vm4410 = vcmp.gt.f32.partialorder %v4253, 0.0
        %vm4411 = vcmp.gt.f32.partialorder %v3457, 0.0
        %vm4412 = vcmp.gt.f32.partialorder %v3459, 0.0
        %vm4413 = vcmp.gt.f32.partialorder %v3723, 0.0
        %vm4414 = vcmp.gt.f32.partialorder %v3725, 0.0
        %vm4415 = vcmp.gt.f32.partialorder %v3989, 0.0
        %vm4416 = vcmp.gt.f32.partialorder %v3991, 0.0
        %vm4417 = vcmp.gt.f32.partialorder %v4255, 0.0
        %vm4418 = vcmp.gt.f32.partialorder %v4257, 0.0
        %v4419 = vmul.f32 %v3363, 0.2
        %v4420 = vmul.f32 %v3365, 0.2
        %v4421 = vmul.f32 %v3629, 0.2
        %v4422 = vmul.f32 %v3631, 0.2
        %v4423 = vmul.f32 %v3895, 0.2
        %v4424 = vmul.f32 %v3897, 0.2
        %v4425 = vmul.f32 %v4161, 0.2
        %v4426 = vmul.f32 %v4163, 0.2
        %v4427 = vmul.f32 %v3367, 0.2
        %v4428 = vmul.f32 %v3369, 0.2
        %v4429 = vmul.f32 %v3633, 0.2
        %v4430 = vmul.f32 %v3635, 0.2
        %v4431 = vmul.f32 %v3899, 0.2
        %v4432 = vmul.f32 %v3901, 0.2
        %v4433 = vmul.f32 %v4165, 0.2
        %v4434 = vmul.f32 %v4167, 0.2
        %v4435 = vmul.f32 %v3373, 0.2
        %v4436 = vmul.f32 %v3375, 0.2
        %v4437 = vmul.f32 %v3639, 0.2
        %v4438 = vmul.f32 %v3641, 0.2
        %v4439 = vmul.f32 %v3905, 0.2
        %v4440 = vmul.f32 %v3907, 0.2
        %v4441 = vmul.f32 %v4171, 0.2
        %v4442 = vmul.f32 %v4173, 0.2
        %v4443 = vmul.f32 %v3377, 0.2
        %v4444 = vmul.f32 %v3379, 0.2
        %v4445 = vmul.f32 %v3643, 0.2
        %v4446 = vmul.f32 %v3645, 0.2
        %v4447 = vmul.f32 %v3909, 0.2
        %v4448 = vmul.f32 %v3911, 0.2
        %v4449 = vmul.f32 %v4175, 0.2
        %v4450 = vmul.f32 %v4177, 0.2
        %v4451 = vmul.f32 %v3383, 0.2
        %v4452 = vmul.f32 %v3385, 0.2
        %v4453 = vmul.f32 %v3649, 0.2
        %v4454 = vmul.f32 %v3651, 0.2
        %v4455 = vmul.f32 %v3915, 0.2
        %v4456 = vmul.f32 %v3917, 0.2
        %v4457 = vmul.f32 %v4181, 0.2
        %v4458 = vmul.f32 %v4183, 0.2
        %v4459 = vmul.f32 %v3387, 0.2
        %v4460 = vmul.f32 %v3389, 0.2
        %v4461 = vmul.f32 %v3653, 0.2
        %v4462 = vmul.f32 %v3655, 0.2
        %v4463 = vmul.f32 %v3919, 0.2
        %v4464 = vmul.f32 %v3921, 0.2
        %v4465 = vmul.f32 %v4185, 0.2
        %v4466 = vmul.f32 %v4187, 0.2
        %v4467 = vmul.f32 %v3393, 0.2
        %v4468 = vmul.f32 %v3395, 0.2
        %v4469 = vmul.f32 %v3659, 0.2
        %v4470 = vmul.f32 %v3661, 0.2
        %v4471 = vmul.f32 %v3925, 0.2
        %v4472 = vmul.f32 %v3927, 0.2
        %v4473 = vmul.f32 %v4191, 0.2
        %v4474 = vmul.f32 %v4193, 0.2
        %v4475 = vmul.f32 %v3397, 0.2
        %v4476 = vmul.f32 %v3399, 0.2
        %v4477 = vmul.f32 %v3663, 0.2
        %v4478 = vmul.f32 %v3665, 0.2
        %v4479 = vmul.f32 %v3929, 0.2
        %v4480 = vmul.f32 %v3931, 0.2
        %v4481 = vmul.f32 %v4195, 0.2
        %v4482 = vmul.f32 %v4197, 0.2
        %v4483 = vmul.f32 %v3403, 0.2
        %v4484 = vmul.f32 %v3405, 0.2
        %v4485 = vmul.f32 %v3669, 0.2
        %v4486 = vmul.f32 %v3671, 0.2
        %v4487 = vmul.f32 %v3935, 0.2
        %v4488 = vmul.f32 %v3937, 0.2
        %v4489 = vmul.f32 %v4201, 0.2
        %v4490 = vmul.f32 %v4203, 0.2
        %v4491 = vmul.f32 %v3407, 0.2
        %v4492 = vmul.f32 %v3409, 0.2
        %v4493 = vmul.f32 %v3673, 0.2
        %v4494 = vmul.f32 %v3675, 0.2
        %v4495 = vmul.f32 %v3939, 0.2
        %v4496 = vmul.f32 %v3941, 0.2
        %v4497 = vmul.f32 %v4205, 0.2
        %v4498 = vmul.f32 %v4207, 0.2
        %v4499 = vmul.f32 %v3413, 0.2
        %v4500 = vmul.f32 %v3415, 0.2
        %v4501 = vmul.f32 %v3679, 0.2
        %v4502 = vmul.f32 %v3681, 0.2
        %v4503 = vmul.f32 %v3945, 0.2
        %v4504 = vmul.f32 %v3947, 0.2
        %v4505 = vmul.f32 %v4211, 0.2
        %v4506 = vmul.f32 %v4213, 0.2
        %v4507 = vmul.f32 %v3417, 0.2
        %v4508 = vmul.f32 %v3419, 0.2
        %v4509 = vmul.f32 %v3683, 0.2
        %v4510 = vmul.f32 %v3685, 0.2
        %v4511 = vmul.f32 %v3949, 0.2
        %v4512 = vmul.f32 %v3951, 0.2
        %v4513 = vmul.f32 %v4215, 0.2
        %v4514 = vmul.f32 %v4217, 0.2
        %v4515 = vmul.f32 %v3423, 0.2
        %v4516 = vmul.f32 %v3425, 0.2
        %v4517 = vmul.f32 %v3689, 0.2
        %v4518 = vmul.f32 %v3691, 0.2
        %v4519 = vmul.f32 %v3955, 0.2
        %v4520 = vmul.f32 %v3957, 0.2
        %v4521 = vmul.f32 %v4221, 0.2
        %v4522 = vmul.f32 %v4223, 0.2
        %v4523 = vmul.f32 %v3427, 0.2
        %v4524 = vmul.f32 %v3429, 0.2
        %v4525 = vmul.f32 %v3693, 0.2
        %v4526 = vmul.f32 %v3695, 0.2
        %v4527 = vmul.f32 %v3959, 0.2
        %v4528 = vmul.f32 %v3961, 0.2
        %v4529 = vmul.f32 %v4225, 0.2
        %v4530 = vmul.f32 %v4227, 0.2
        %v4531 = vmul.f32 %v3433, 0.2
        %v4532 = vmul.f32 %v3435, 0.2
        %v4533 = vmul.f32 %v3699, 0.2
        %v4534 = vmul.f32 %v3701, 0.2
        %v4535 = vmul.f32 %v3965, 0.2
        %v4536 = vmul.f32 %v3967, 0.2
        %v4537 = vmul.f32 %v4231, 0.2
        %v4538 = vmul.f32 %v4233, 0.2
        %v4539 = vmul.f32 %v3437, 0.2
        %v4540 = vmul.f32 %v3439, 0.2
        %v4541 = vmul.f32 %v3703, 0.2
        %v4542 = vmul.f32 %v3705, 0.2
        %v4543 = vmul.f32 %v3969, 0.2
        %v4544 = vmul.f32 %v3971, 0.2
        %v4545 = vmul.f32 %v4235, 0.2
        %v4546 = vmul.f32 %v4237, 0.2
        %v4547 = vmul.f32 %v3443, 0.2
        %v4548 = vmul.f32 %v3445, 0.2
        %v4549 = vmul.f32 %v3709, 0.2
        %v4550 = vmul.f32 %v3711, 0.2
        %v4551 = vmul.f32 %v3975, 0.2
        %v4552 = vmul.f32 %v3977, 0.2
        %v4553 = vmul.f32 %v4241, 0.2
        %v4554 = vmul.f32 %v4243, 0.2
        %v4555 = vmul.f32 %v3447, 0.2
        %v4556 = vmul.f32 %v3449, 0.2
        %v4557 = vmul.f32 %v3713, 0.2
        %v4558 = vmul.f32 %v3715, 0.2
        %v4559 = vmul.f32 %v3979, 0.2
        %v4560 = vmul.f32 %v3981, 0.2
        %v4561 = vmul.f32 %v4245, 0.2
        %v4562 = vmul.f32 %v4247, 0.2
        %v4563 = vmul.f32 %v3453, 0.2
        %v4564 = vmul.f32 %v3455, 0.2
        %v4565 = vmul.f32 %v3719, 0.2
        %v4566 = vmul.f32 %v3721, 0.2
        %v4567 = vmul.f32 %v3985, 0.2
        %v4568 = vmul.f32 %v3987, 0.2
        %v4569 = vmul.f32 %v4251, 0.2
        %v4570 = vmul.f32 %v4253, 0.2
        %v4571 = vmul.f32 %v3457, 0.2
        %v4572 = vmul.f32 %v3459, 0.2
        %v4573 = vmul.f32 %v3723, 0.2
        %v4574 = vmul.f32 %v3725, 0.2
        %v4575 = vmul.f32 %v3989, 0.2
        %v4576 = vmul.f32 %v3991, 0.2
        %v4577 = vmul.f32 %v4255, 0.2
        %v4578 = vmul.f32 %v4257, 0.2
        %v4579 = vsel %vm4259, %v3363, %v4419
        %v4580 = vsel %vm4260, %v3365, %v4420
        %v4581 = vsel %vm4261, %v3629, %v4421
        %v4582 = vsel %vm4262, %v3631, %v4422
        %v4583 = vsel %vm4263, %v3895, %v4423
        %v4584 = vsel %vm4264, %v3897, %v4424
        %v4585 = vsel %vm4265, %v4161, %v4425
        %v4586 = vsel %vm4266, %v4163, %v4426
        %v4587 = vsel %vm4267, %v3367, %v4427
        %v4588 = vsel %vm4268, %v3369, %v4428
        %v4589 = vsel %vm4269, %v3633, %v4429
        %v4590 = vsel %vm4270, %v3635, %v4430
        %v4591 = vsel %vm4271, %v3899, %v4431
        %v4592 = vsel %vm4272, %v3901, %v4432
        %v4593 = vsel %vm4273, %v4165, %v4433
        %v4594 = vsel %vm4274, %v4167, %v4434
        %v4595 = vsel %vm4275, %v3373, %v4435
        %v4596 = vsel %vm4276, %v3375, %v4436
        %v4597 = vsel %vm4277, %v3639, %v4437
        %v4598 = vsel %vm4278, %v3641, %v4438
        %v4599 = vsel %vm4279, %v3905, %v4439
        %v4600 = vsel %vm4280, %v3907, %v4440
        %v4601 = vsel %vm4281, %v4171, %v4441
        %v4602 = vsel %vm4282, %v4173, %v4442
        %v4603 = vsel %vm4283, %v3377, %v4443
        %v4604 = vsel %vm4284, %v3379, %v4444
        %v4605 = vsel %vm4285, %v3643, %v4445
        %v4606 = vsel %vm4286, %v3645, %v4446
        %v4607 = vsel %vm4287, %v3909, %v4447
        %v4608 = vsel %vm4288, %v3911, %v4448
        %v4609 = vsel %vm4289, %v4175, %v4449
        %v4610 = vsel %vm4290, %v4177, %v4450
        %v4611 = vsel %vm4291, %v3383, %v4451
        %v4612 = vsel %vm4292, %v3385, %v4452
        %v4613 = vsel %vm4293, %v3649, %v4453
        %v4614 = vsel %vm4294, %v3651, %v4454
        %v4615 = vsel %vm4295, %v3915, %v4455
        %v4616 = vsel %vm4296, %v3917, %v4456
        %v4617 = vsel %vm4297, %v4181, %v4457
        %v4618 = vsel %vm4298, %v4183, %v4458
        %v4619 = vsel %vm4299, %v3387, %v4459
        %v4620 = vsel %vm4300, %v3389, %v4460
        %v4621 = vsel %vm4301, %v3653, %v4461
        %v4622 = vsel %vm4302, %v3655, %v4462
        %v4623 = vsel %vm4303, %v3919, %v4463
        %v4624 = vsel %vm4304, %v3921, %v4464
        %v4625 = vsel %vm4305, %v4185, %v4465
        %v4626 = vsel %vm4306, %v4187, %v4466
        %v4627 = vsel %vm4307, %v3393, %v4467
        %v4628 = vsel %vm4308, %v3395, %v4468
        %v4629 = vsel %vm4309, %v3659, %v4469
        %v4630 = vsel %vm4310, %v3661, %v4470
        %v4631 = vsel %vm4311, %v3925, %v4471
        %v4632 = vsel %vm4312, %v3927, %v4472
        %v4633 = vsel %vm4313, %v4191, %v4473
        %v4634 = vsel %vm4314, %v4193, %v4474
        %v4635 = vsel %vm4315, %v3397, %v4475
        %v4636 = vsel %vm4316, %v3399, %v4476
        %v4637 = vsel %vm4317, %v3663, %v4477
        %v4638 = vsel %vm4318, %v3665, %v4478
        %v4639 = vsel %vm4319, %v3929, %v4479
        %v4640 = vsel %vm4320, %v3931, %v4480
        %v4641 = vsel %vm4321, %v4195, %v4481
        %v4642 = vsel %vm4322, %v4197, %v4482
        %v4643 = vsel %vm4323, %v3403, %v4483
        %v4644 = vsel %vm4324, %v3405, %v4484
        %v4645 = vsel %vm4325, %v3669, %v4485
        %v4646 = vsel %vm4326, %v3671, %v4486
        %v4647 = vsel %vm4327, %v3935, %v4487
        %v4648 = vsel %vm4328, %v3937, %v4488
        %v4649 = vsel %vm4329, %v4201, %v4489
        %v4650 = vsel %vm4330, %v4203, %v4490
        %v4651 = vsel %vm4331, %v3407, %v4491
        %v4652 = vsel %vm4332, %v3409, %v4492
        %v4653 = vsel %vm4333, %v3673, %v4493
        %v4654 = vsel %vm4334, %v3675, %v4494
        %v4655 = vsel %vm4335, %v3939, %v4495
        %v4656 = vsel %vm4336, %v3941, %v4496
        %v4657 = vsel %vm4337, %v4205, %v4497
        %v4658 = vsel %vm4338, %v4207, %v4498
        %v4659 = vsel %vm4339, %v3413, %v4499
        %v4660 = vsel %vm4340, %v3415, %v4500
        %v4661 = vsel %vm4341, %v3679, %v4501
        %v4662 = vsel %vm4342, %v3681, %v4502
        %v4663 = vsel %vm4343, %v3945, %v4503
        %v4664 = vsel %vm4344, %v3947, %v4504
        %v4665 = vsel %vm4345, %v4211, %v4505
        %v4666 = vsel %vm4346, %v4213, %v4506
        %v4667 = vsel %vm4347, %v3417, %v4507
        %v4668 = vsel %vm4348, %v3419, %v4508
        %v4669 = vsel %vm4349, %v3683, %v4509
        %v4670 = vsel %vm4350, %v3685, %v4510
        %v4671 = vsel %vm4351, %v3949, %v4511
        %v4672 = vsel %vm4352, %v3951, %v4512
        %v4673 = vsel %vm4353, %v4215, %v4513
        %v4674 = vsel %vm4354, %v4217, %v4514
        %v4675 = vsel %vm4355, %v3423, %v4515
        %v4676 = vsel %vm4356, %v3425, %v4516
        %v4677 = vsel %vm4357, %v3689, %v4517
        %v4678 = vsel %vm4358, %v3691, %v4518
        %v4679 = vsel %vm4359, %v3955, %v4519
        %v4680 = vsel %vm4360, %v3957, %v4520
        %v4681 = vsel %vm4361, %v4221, %v4521
        %v4682 = vsel %vm4362, %v4223, %v4522
        %v4683 = vsel %vm4363, %v3427, %v4523
        %v4684 = vsel %vm4364, %v3429, %v4524
        %v4685 = vsel %vm4365, %v3693, %v4525
        %v4686 = vsel %vm4366, %v3695, %v4526
        %v4687 = vsel %vm4367, %v3959, %v4527
        %v4688 = vsel %vm4368, %v3961, %v4528
        %v4689 = vsel %vm4369, %v4225, %v4529
        %v4690 = vsel %vm4370, %v4227, %v4530
        %v4691 = vsel %vm4371, %v3433, %v4531
        %v4692 = vsel %vm4372, %v3435, %v4532
        %v4693 = vsel %vm4373, %v3699, %v4533
        %v4694 = vsel %vm4374, %v3701, %v4534
        %v4695 = vsel %vm4375, %v3965, %v4535
        %v4696 = vsel %vm4376, %v3967, %v4536
        %v4697 = vsel %vm4377, %v4231, %v4537
        %v4698 = vsel %vm4378, %v4233, %v4538
        %v4699 = vsel %vm4379, %v3437, %v4539
        %v4700 = vsel %vm4380, %v3439, %v4540
        %v4701 = vsel %vm4381, %v3703, %v4541
        %v4702 = vsel %vm4382, %v3705, %v4542
        %v4703 = vsel %vm4383, %v3969, %v4543
        %v4704 = vsel %vm4384, %v3971, %v4544
        %v4705 = vsel %vm4385, %v4235, %v4545
        %v4706 = vsel %vm4386, %v4237, %v4546
        %v4707 = vsel %vm4387, %v3443, %v4547
        %v4708 = vsel %vm4388, %v3445, %v4548
        %v4709 = vsel %vm4389, %v3709, %v4549
        %v4710 = vsel %vm4390, %v3711, %v4550
        %v4711 = vsel %vm4391, %v3975, %v4551
        %v4712 = vsel %vm4392, %v3977, %v4552
        %v4713 = vsel %vm4393, %v4241, %v4553
        %v4714 = vsel %vm4394, %v4243, %v4554
        %v4715 = vsel %vm4395, %v3447, %v4555
        %v4716 = vsel %vm4396, %v3449, %v4556
        %v4717 = vsel %vm4397, %v3713, %v4557
        %v4718 = vsel %vm4398, %v3715, %v4558
        %v4719 = vsel %vm4399, %v3979, %v4559
        %v4720 = vsel %vm4400, %v3981, %v4560
        %v4721 = vsel %vm4401, %v4245, %v4561
        %v4722 = vsel %vm4402, %v4247, %v4562
        %v4723 = vsel %vm4403, %v3453, %v4563
        %v4724 = vsel %vm4404, %v3455, %v4564
        %v4725 = vsel %vm4405, %v3719, %v4565
        %v4726 = vsel %vm4406, %v3721, %v4566
        %v4727 = vsel %vm4407, %v3985, %v4567
        %v4728 = vsel %vm4408, %v3987, %v4568
        %v4729 = vsel %vm4409, %v4251, %v4569
        %v4730 = vsel %vm4410, %v4253, %v4570
        %v4731 = vsel %vm4411, %v3457, %v4571
        %v4732 = vsel %vm4412, %v3459, %v4572
        %v4733 = vsel %vm4413, %v3723, %v4573
        %v4734 = vsel %vm4414, %v3725, %v4574
        %v4735 = vsel %vm4415, %v3989, %v4575
        %v4736 = vsel %vm4416, %v3991, %v4576
        %v4737 = vsel %vm4417, %v4255, %v4577
        %v4738 = vsel %vm4418, %v4257, %v4578
        %v4739 = vpack.c.bf16 %v4587, %v4579
        %v4740 = vpack.c.bf16 %v4588, %v4580
        %v4741 = vpack.c.bf16 %v4589, %v4581
        %v4742 = vpack.c.bf16 %v4590, %v4582
        %v4743 = vpack.c.bf16 %v4591, %v4583
        %v4744 = vpack.c.bf16 %v4592, %v4584
        %v4745 = vpack.c.bf16 %v4593, %v4585
        %v4746 = vpack.c.bf16 %v4594, %v4586
        %v4747 = vpack.c.bf16 %v4603, %v4595
        %v4748 = vpack.c.bf16 %v4604, %v4596
        %v4749 = vpack.c.bf16 %v4605, %v4597
        %v4750 = vpack.c.bf16 %v4606, %v4598
        %v4751 = vpack.c.bf16 %v4607, %v4599
        %v4752 = vpack.c.bf16 %v4608, %v4600
        %v4753 = vpack.c.bf16 %v4609, %v4601
        %v4754 = vpack.c.bf16 %v4610, %v4602
        %v4755 = vpack.c.bf16 %v4619, %v4611
        %v4756 = vpack.c.bf16 %v4620, %v4612
        %v4757 = vpack.c.bf16 %v4621, %v4613
        %v4758 = vpack.c.bf16 %v4622, %v4614
        %v4759 = vpack.c.bf16 %v4623, %v4615
        %v4760 = vpack.c.bf16 %v4624, %v4616
        %v4761 = vpack.c.bf16 %v4625, %v4617
        %v4762 = vpack.c.bf16 %v4626, %v4618
        %v4763 = vpack.c.bf16 %v4635, %v4627
        %v4764 = vpack.c.bf16 %v4636, %v4628
        %v4765 = vpack.c.bf16 %v4637, %v4629
        %v4766 = vpack.c.bf16 %v4638, %v4630
        %v4767 = vpack.c.bf16 %v4639, %v4631
        %v4768 = vpack.c.bf16 %v4640, %v4632
        %v4769 = vpack.c.bf16 %v4641, %v4633
        %v4770 = vpack.c.bf16 %v4642, %v4634
        %v4771 = vpack.c.bf16 %v4651, %v4643
        %v4772 = vpack.c.bf16 %v4652, %v4644
        %v4773 = vpack.c.bf16 %v4653, %v4645
        %v4774 = vpack.c.bf16 %v4654, %v4646
        %v4775 = vpack.c.bf16 %v4655, %v4647
        %v4776 = vpack.c.bf16 %v4656, %v4648
        %v4777 = vpack.c.bf16 %v4657, %v4649
        %v4778 = vpack.c.bf16 %v4658, %v4650
        %v4779 = vpack.c.bf16 %v4667, %v4659
        %v4780 = vpack.c.bf16 %v4668, %v4660
        %v4781 = vpack.c.bf16 %v4669, %v4661
        %v4782 = vpack.c.bf16 %v4670, %v4662
        %v4783 = vpack.c.bf16 %v4671, %v4663
        %v4784 = vpack.c.bf16 %v4672, %v4664
        %v4785 = vpack.c.bf16 %v4673, %v4665
        %v4786 = vpack.c.bf16 %v4674, %v4666
        %v4787 = vpack.c.bf16 %v4683, %v4675
        %v4788 = vpack.c.bf16 %v4684, %v4676
        %v4789 = vpack.c.bf16 %v4685, %v4677
        %v4790 = vpack.c.bf16 %v4686, %v4678
        %v4791 = vpack.c.bf16 %v4687, %v4679
        %v4792 = vpack.c.bf16 %v4688, %v4680
        %v4793 = vpack.c.bf16 %v4689, %v4681
        %v4794 = vpack.c.bf16 %v4690, %v4682
        %v4795 = vpack.c.bf16 %v4699, %v4691
        %v4796 = vpack.c.bf16 %v4700, %v4692
        %v4797 = vpack.c.bf16 %v4701, %v4693
        %v4798 = vpack.c.bf16 %v4702, %v4694
        %v4799 = vpack.c.bf16 %v4703, %v4695
        %v4800 = vpack.c.bf16 %v4704, %v4696
        %v4801 = vpack.c.bf16 %v4705, %v4697
        %v4802 = vpack.c.bf16 %v4706, %v4698
        %v4803 = vpack.c.bf16 %v4715, %v4707
        %v4804 = vpack.c.bf16 %v4716, %v4708
        %v4805 = vpack.c.bf16 %v4717, %v4709
        %v4806 = vpack.c.bf16 %v4718, %v4710
        %v4807 = vpack.c.bf16 %v4719, %v4711
        %v4808 = vpack.c.bf16 %v4720, %v4712
        %v4809 = vpack.c.bf16 %v4721, %v4713
        %v4810 = vpack.c.bf16 %v4722, %v4714
        %v4811 = vpack.c.bf16 %v4731, %v4723
        %v4812 = vpack.c.bf16 %v4732, %v4724
        %v4813 = vpack.c.bf16 %v4733, %v4725
        %v4814 = vpack.c.bf16 %v4734, %v4726
        %v4815 = vpack.c.bf16 %v4735, %v4727
        %v4816 = vpack.c.bf16 %v4736, %v4728
        %v4817 = vpack.c.bf16 %v4737, %v4729
        %v4818 = vpack.c.bf16 %v4738, %v4730
        %v4819 = vld [vmem:[#allocation7] sm:$0xff]
        %v4820 = vld [vmem:[#allocation7 + $0x8] sm:$0xff]
        %v4821 = vld [vmem:[#allocation7 + $0x10] sm:$0xff]
        %v4822 = vld [vmem:[#allocation7 + $0x18] sm:$0xff]
        %v4823 = vld [vmem:[#allocation7 + $0x20] sm:$0xff]
        %v4824 = vld [vmem:[#allocation7 + $0x28] sm:$0xff]
        %v4825 = vld [vmem:[#allocation7 + $0x30] sm:$0xff]
        %v4826 = vld [vmem:[#allocation7 + $0x38] sm:$0xff]
        %v4827 = vld [vmem:[#allocation7 + $0x40] sm:$0xff]
        %v4828 = vld [vmem:[#allocation7 + $0x48] sm:$0xff]
        %v4829 = vld [vmem:[#allocation7 + $0x50] sm:$0xff]
        %v4830 = vld [vmem:[#allocation7 + $0x58] sm:$0xff]
        %v4831 = vld [vmem:[#allocation7 + $0x60] sm:$0xff]
        %v4832 = vld [vmem:[#allocation7 + $0x68] sm:$0xff]
        %v4833 = vld [vmem:[#allocation7 + $0x70] sm:$0xff]
        %v4834 = vld [vmem:[#allocation7 + $0x78] sm:$0xff]
        %v4835 = vld [vmem:[#allocation7 + $0x80] sm:$0xff]
        %v4836 = vld [vmem:[#allocation7 + $0x88] sm:$0xff]
        %v4837 = vld [vmem:[#allocation7 + $0x90] sm:$0xff]
        %v4838 = vld [vmem:[#allocation7 + $0x98] sm:$0xff]
        %v4839 = vld [vmem:[#allocation7 + $0xa0] sm:$0xff]
        %v4840 = vld [vmem:[#allocation7 + $0xa8] sm:$0xff]
        %v4841 = vld [vmem:[#allocation7 + $0xb0] sm:$0xff]
        %v4842 = vld [vmem:[#allocation7 + $0xb8] sm:$0xff]
        %v4843 = vld [vmem:[#allocation7 + $0xc0] sm:$0xff]
        %v4844 = vld [vmem:[#allocation7 + $0xc8] sm:$0xff]
        %v4845 = vld [vmem:[#allocation7 + $0xd0] sm:$0xff]
        %v4846 = vld [vmem:[#allocation7 + $0xd8] sm:$0xff]
        %v4847 = vld [vmem:[#allocation7 + $0xe0] sm:$0xff]
        %v4848 = vld [vmem:[#allocation7 + $0xe8] sm:$0xff]
        %v4849 = vld [vmem:[#allocation7 + $0xf0] sm:$0xff]
        %v4850 = vld [vmem:[#allocation7 + $0xf8] sm:$0xff]
        %v4851 = vld [vmem:[#allocation7 + $0x100] sm:$0xff]
        %v4852 = vld [vmem:[#allocation7 + $0x108] sm:$0xff]
        %v4853 = vld [vmem:[#allocation7 + $0x110] sm:$0xff]
        %v4854 = vld [vmem:[#allocation7 + $0x118] sm:$0xff]
        %v4855 = vld [vmem:[#allocation7 + $0x120] sm:$0xff]
        %v4856 = vld [vmem:[#allocation7 + $0x128] sm:$0xff]
        %v4857 = vld [vmem:[#allocation7 + $0x130] sm:$0xff]
        %v4858 = vld [vmem:[#allocation7 + $0x138] sm:$0xff]
        %v4859 = vld [vmem:[#allocation7 + $0x140] sm:$0xff]
        %v4860 = vld [vmem:[#allocation7 + $0x148] sm:$0xff]
        %v4861 = vld [vmem:[#allocation7 + $0x150] sm:$0xff]
        %v4862 = vld [vmem:[#allocation7 + $0x158] sm:$0xff]
        %v4863 = vld [vmem:[#allocation7 + $0x160] sm:$0xff]
        %v4864 = vld [vmem:[#allocation7 + $0x168] sm:$0xff]
        %v4865 = vld [vmem:[#allocation7 + $0x170] sm:$0xff]
        %v4866 = vld [vmem:[#allocation7 + $0x178] sm:$0xff]
        %v4867 = vld [vmem:[#allocation7 + $0x180] sm:$0xff]
        %v4868 = vld [vmem:[#allocation7 + $0x188] sm:$0xff]
        %v4869 = vld [vmem:[#allocation7 + $0x190] sm:$0xff]
        %v4870 = vld [vmem:[#allocation7 + $0x198] sm:$0xff]
        %v4871 = vld [vmem:[#allocation7 + $0x1a0] sm:$0xff]
        %v4872 = vld [vmem:[#allocation7 + $0x1a8] sm:$0xff]
        %v4873 = vld [vmem:[#allocation7 + $0x1b0] sm:$0xff]
        %v4874 = vld [vmem:[#allocation7 + $0x1b8] sm:$0xff]
        %v4875 = vld [vmem:[#allocation7 + $0x1c0] sm:$0xff]
        %v4876 = vld [vmem:[#allocation7 + $0x1c8] sm:$0xff]
        %v4877 = vld [vmem:[#allocation7 + $0x1d0] sm:$0xff]
        %v4878 = vld [vmem:[#allocation7 + $0x1d8] sm:$0xff]
        %v4879 = vld [vmem:[#allocation7 + $0x1e0] sm:$0xff]
        %v4880 = vld [vmem:[#allocation7 + $0x1e8] sm:$0xff]
        %v4881 = vld [vmem:[#allocation7 + $0x1f0] sm:$0xff]
        %v4882 = vld [vmem:[#allocation7 + $0x1f8] sm:$0xff]
        %v4883 = vld [vmem:[#allocation7 + $0x200] sm:$0xff]
        %v4884 = vld [vmem:[#allocation7 + $0x208] sm:$0xff]
        %v4885 = vld [vmem:[#allocation7 + $0x210] sm:$0xff]
        %v4886 = vld [vmem:[#allocation7 + $0x218] sm:$0xff]
        %v4887 = vld [vmem:[#allocation7 + $0x220] sm:$0xff]
        %v4888 = vld [vmem:[#allocation7 + $0x228] sm:$0xff]
        %v4889 = vld [vmem:[#allocation7 + $0x230] sm:$0xff]
        %v4890 = vld [vmem:[#allocation7 + $0x238] sm:$0xff]
        %v4891 = vld [vmem:[#allocation7 + $0x240] sm:$0xff]
        %v4892 = vld [vmem:[#allocation7 + $0x248] sm:$0xff]
        %v4893 = vld [vmem:[#allocation7 + $0x250] sm:$0xff]
        %v4894 = vld [vmem:[#allocation7 + $0x258] sm:$0xff]
        %v4895 = vld [vmem:[#allocation7 + $0x260] sm:$0xff]
        %v4896 = vld [vmem:[#allocation7 + $0x268] sm:$0xff]
        %v4897 = vld [vmem:[#allocation7 + $0x270] sm:$0xff]
        %v4898 = vld [vmem:[#allocation7 + $0x278] sm:$0xff]
        %v4899 = vld [vmem:[#allocation7 + $0x280] sm:$0xff]
        %v4900 = vld [vmem:[#allocation7 + $0x288] sm:$0xff]
        %v4901 = vld [vmem:[#allocation7 + $0x290] sm:$0xff]
        %v4902 = vld [vmem:[#allocation7 + $0x298] sm:$0xff]
        %v4903 = vld [vmem:[#allocation7 + $0x2a0] sm:$0xff]
        %v4904 = vld [vmem:[#allocation7 + $0x2a8] sm:$0xff]
        %v4905 = vld [vmem:[#allocation7 + $0x2b0] sm:$0xff]
        %v4906 = vld [vmem:[#allocation7 + $0x2b8] sm:$0xff]
        %v4907 = vld [vmem:[#allocation7 + $0x2c0] sm:$0xff]
        %v4908 = vld [vmem:[#allocation7 + $0x2c8] sm:$0xff]
        %v4909 = vld [vmem:[#allocation7 + $0x2d0] sm:$0xff]
        %v4910 = vld [vmem:[#allocation7 + $0x2d8] sm:$0xff]
        %v4911 = vld [vmem:[#allocation7 + $0x2e0] sm:$0xff]
        %v4912 = vld [vmem:[#allocation7 + $0x2e8] sm:$0xff]
        %v4913 = vld [vmem:[#allocation7 + $0x2f0] sm:$0xff]
        %v4914 = vld [vmem:[#allocation7 + $0x2f8] sm:$0xff]
        %v4915 = vld [vmem:[#allocation7 + $0x300] sm:$0xff]
        %v4916 = vld [vmem:[#allocation7 + $0x308] sm:$0xff]
        %v4917 = vld [vmem:[#allocation7 + $0x310] sm:$0xff]
        %v4918 = vld [vmem:[#allocation7 + $0x318] sm:$0xff]
        %v4919 = vld [vmem:[#allocation7 + $0x320] sm:$0xff]
        %v4920 = vld [vmem:[#allocation7 + $0x328] sm:$0xff]
        %v4921 = vld [vmem:[#allocation7 + $0x330] sm:$0xff]
        %v4922 = vld [vmem:[#allocation7 + $0x338] sm:$0xff]
        %v4923 = vld [vmem:[#allocation7 + $0x340] sm:$0xff]
        %v4924 = vld [vmem:[#allocation7 + $0x348] sm:$0xff]
        %v4925 = vld [vmem:[#allocation7 + $0x350] sm:$0xff]
        %v4926 = vld [vmem:[#allocation7 + $0x358] sm:$0xff]
        %v4927 = vld [vmem:[#allocation7 + $0x360] sm:$0xff]
        %v4928 = vld [vmem:[#allocation7 + $0x368] sm:$0xff]
        %v4929 = vld [vmem:[#allocation7 + $0x370] sm:$0xff]
        %v4930 = vld [vmem:[#allocation7 + $0x378] sm:$0xff]
        %v4931 = vld [vmem:[#allocation7 + $0x380] sm:$0xff]
        %v4932 = vld [vmem:[#allocation7 + $0x388] sm:$0xff]
        %v4933 = vld [vmem:[#allocation7 + $0x390] sm:$0xff]
        %v4934 = vld [vmem:[#allocation7 + $0x398] sm:$0xff]
        %v4935 = vld [vmem:[#allocation7 + $0x3a0] sm:$0xff]
        %v4936 = vld [vmem:[#allocation7 + $0x3a8] sm:$0xff]
        %v4937 = vld [vmem:[#allocation7 + $0x3b0] sm:$0xff]
        %v4938 = vld [vmem:[#allocation7 + $0x3b8] sm:$0xff]
        %v4939 = vld [vmem:[#allocation7 + $0x3c0] sm:$0xff]
        %v4940 = vld [vmem:[#allocation7 + $0x3c8] sm:$0xff]
        %v4941 = vld [vmem:[#allocation7 + $0x3d0] sm:$0xff]
        %v4942 = vld [vmem:[#allocation7 + $0x3d8] sm:$0xff]
        %v4943 = vld [vmem:[#allocation7 + $0x3e0] sm:$0xff]
        %v4944 = vld [vmem:[#allocation7 + $0x3e8] sm:$0xff]
        %v4945 = vld [vmem:[#allocation7 + $0x3f0] sm:$0xff]
        %v4946 = vld [vmem:[#allocation7 + $0x3f8] sm:$0xff]
        %v4947 = vld [vmem:[#allocation7 + $0x400] sm:$0xff]
        %v4948 = vld [vmem:[#allocation7 + $0x408] sm:$0xff]
        %v4949 = vld [vmem:[#allocation7 + $0x410] sm:$0xff]
        %v4950 = vld [vmem:[#allocation7 + $0x418] sm:$0xff]
        %v4951 = vld [vmem:[#allocation7 + $0x420] sm:$0xff]
        %v4952 = vld [vmem:[#allocation7 + $0x428] sm:$0xff]
        %v4953 = vld [vmem:[#allocation7 + $0x430] sm:$0xff]
        %v4954 = vld [vmem:[#allocation7 + $0x438] sm:$0xff]
        %v4955 = vld [vmem:[#allocation7 + $0x440] sm:$0xff]
        %v4956 = vld [vmem:[#allocation7 + $0x448] sm:$0xff]
        %v4957 = vld [vmem:[#allocation7 + $0x450] sm:$0xff]
        %v4958 = vld [vmem:[#allocation7 + $0x458] sm:$0xff]
        %v4959 = vld [vmem:[#allocation7 + $0x460] sm:$0xff]
        %v4960 = vld [vmem:[#allocation7 + $0x468] sm:$0xff]
        %v4961 = vld [vmem:[#allocation7 + $0x470] sm:$0xff]
        %v4962 = vld [vmem:[#allocation7 + $0x478] sm:$0xff]
        %v4963 = vld [vmem:[#allocation7 + $0x480] sm:$0xff]
        %v4964 = vld [vmem:[#allocation7 + $0x488] sm:$0xff]
        %v4965 = vld [vmem:[#allocation7 + $0x490] sm:$0xff]
        %v4966 = vld [vmem:[#allocation7 + $0x498] sm:$0xff]
        %v4967 = vld [vmem:[#allocation7 + $0x4a0] sm:$0xff]
        %v4968 = vld [vmem:[#allocation7 + $0x4a8] sm:$0xff]
        %v4969 = vld [vmem:[#allocation7 + $0x4b0] sm:$0xff]
        %v4970 = vld [vmem:[#allocation7 + $0x4b8] sm:$0xff]
        %v4971 = vld [vmem:[#allocation7 + $0x4c0] sm:$0xff]
        %v4972 = vld [vmem:[#allocation7 + $0x4c8] sm:$0xff]
        %v4973 = vld [vmem:[#allocation7 + $0x4d0] sm:$0xff]
        %v4974 = vld [vmem:[#allocation7 + $0x4d8] sm:$0xff]
        %v4975 = vld [vmem:[#allocation7 + $0x4e0] sm:$0xff]
        %v4976 = vld [vmem:[#allocation7 + $0x4e8] sm:$0xff]
        %v4977 = vld [vmem:[#allocation7 + $0x4f0] sm:$0xff]
        %v4978 = vld [vmem:[#allocation7 + $0x4f8] sm:$0xff]
        %v4979 = vld [vmem:[#allocation7 + $0x500] sm:$0xff]
        %v4980 = vld [vmem:[#allocation7 + $0x508] sm:$0xff]
        %v4981 = vld [vmem:[#allocation7 + $0x510] sm:$0xff]
        %v4982 = vld [vmem:[#allocation7 + $0x518] sm:$0xff]
        %v4983 = vld [vmem:[#allocation7 + $0x520] sm:$0xff]
        %v4984 = vld [vmem:[#allocation7 + $0x528] sm:$0xff]
        %v4985 = vld [vmem:[#allocation7 + $0x530] sm:$0xff]
        %v4986 = vld [vmem:[#allocation7 + $0x538] sm:$0xff]
        %v4987 = vld [vmem:[#allocation7 + $0x540] sm:$0xff]
        %v4988 = vld [vmem:[#allocation7 + $0x548] sm:$0xff]
        %v4989 = vld [vmem:[#allocation7 + $0x550] sm:$0xff]
        %v4990 = vld [vmem:[#allocation7 + $0x558] sm:$0xff]
        %v4991 = vld [vmem:[#allocation7 + $0x560] sm:$0xff]
        %v4992 = vld [vmem:[#allocation7 + $0x568] sm:$0xff]
        %v4993 = vld [vmem:[#allocation7 + $0x570] sm:$0xff]
        %v4994 = vld [vmem:[#allocation7 + $0x578] sm:$0xff]
        %v4995 = vld [vmem:[#allocation7 + $0x580] sm:$0xff]
        %v4996 = vld [vmem:[#allocation7 + $0x588] sm:$0xff]
        %v4997 = vld [vmem:[#allocation7 + $0x590] sm:$0xff]
        %v4998 = vld [vmem:[#allocation7 + $0x598] sm:$0xff]
        %v4999 = vld [vmem:[#allocation7 + $0x5a0] sm:$0xff]
        %v5000 = vld [vmem:[#allocation7 + $0x5a8] sm:$0xff]
        %v5001 = vld [vmem:[#allocation7 + $0x5b0] sm:$0xff]
        %v5002 = vld [vmem:[#allocation7 + $0x5b8] sm:$0xff]
        %v5003 = vld [vmem:[#allocation7 + $0x5c0] sm:$0xff]
        %v5004 = vld [vmem:[#allocation7 + $0x5c8] sm:$0xff]
        %v5005 = vld [vmem:[#allocation7 + $0x5d0] sm:$0xff]
        %v5006 = vld [vmem:[#allocation7 + $0x5d8] sm:$0xff]
        %v5007 = vld [vmem:[#allocation7 + $0x5e0] sm:$0xff]
        %v5008 = vld [vmem:[#allocation7 + $0x5e8] sm:$0xff]
        %v5009 = vld [vmem:[#allocation7 + $0x5f0] sm:$0xff]
        %v5010 = vld [vmem:[#allocation7 + $0x5f8] sm:$0xff]
        %v5011 = vld [vmem:[#allocation7 + $0x600] sm:$0xff]
        %v5012 = vld [vmem:[#allocation7 + $0x608] sm:$0xff]
        %v5013 = vld [vmem:[#allocation7 + $0x610] sm:$0xff]
        %v5014 = vld [vmem:[#allocation7 + $0x618] sm:$0xff]
        %v5015 = vld [vmem:[#allocation7 + $0x620] sm:$0xff]
        %v5016 = vld [vmem:[#allocation7 + $0x628] sm:$0xff]
        %v5017 = vld [vmem:[#allocation7 + $0x630] sm:$0xff]
        %v5018 = vld [vmem:[#allocation7 + $0x638] sm:$0xff]
        %v5019 = vld [vmem:[#allocation7 + $0x640] sm:$0xff]
        %v5020 = vld [vmem:[#allocation7 + $0x648] sm:$0xff]
        %v5021 = vld [vmem:[#allocation7 + $0x650] sm:$0xff]
        %v5022 = vld [vmem:[#allocation7 + $0x658] sm:$0xff]
        %v5023 = vld [vmem:[#allocation7 + $0x660] sm:$0xff]
        %v5024 = vld [vmem:[#allocation7 + $0x668] sm:$0xff]
        %v5025 = vld [vmem:[#allocation7 + $0x670] sm:$0xff]
        %v5026 = vld [vmem:[#allocation7 + $0x678] sm:$0xff]
        %v5027 = vld [vmem:[#allocation7 + $0x680] sm:$0xff]
        %v5028 = vld [vmem:[#allocation7 + $0x688] sm:$0xff]
        %v5029 = vld [vmem:[#allocation7 + $0x690] sm:$0xff]
        %v5030 = vld [vmem:[#allocation7 + $0x698] sm:$0xff]
        %v5031 = vld [vmem:[#allocation7 + $0x6a0] sm:$0xff]
        %v5032 = vld [vmem:[#allocation7 + $0x6a8] sm:$0xff]
        %v5033 = vld [vmem:[#allocation7 + $0x6b0] sm:$0xff]
        %v5034 = vld [vmem:[#allocation7 + $0x6b8] sm:$0xff]
        %v5035 = vld [vmem:[#allocation7 + $0x6c0] sm:$0xff]
        %v5036 = vld [vmem:[#allocation7 + $0x6c8] sm:$0xff]
        %v5037 = vld [vmem:[#allocation7 + $0x6d0] sm:$0xff]
        %v5038 = vld [vmem:[#allocation7 + $0x6d8] sm:$0xff]
        %v5039 = vld [vmem:[#allocation7 + $0x6e0] sm:$0xff]
        %v5040 = vld [vmem:[#allocation7 + $0x6e8] sm:$0xff]
        %v5041 = vld [vmem:[#allocation7 + $0x6f0] sm:$0xff]
        %v5042 = vld [vmem:[#allocation7 + $0x6f8] sm:$0xff]
        %v5043 = vld [vmem:[#allocation7 + $0x700] sm:$0xff]
        %v5044 = vld [vmem:[#allocation7 + $0x708] sm:$0xff]
        %v5045 = vld [vmem:[#allocation7 + $0x710] sm:$0xff]
        %v5046 = vld [vmem:[#allocation7 + $0x718] sm:$0xff]
        %v5047 = vld [vmem:[#allocation7 + $0x720] sm:$0xff]
        %v5048 = vld [vmem:[#allocation7 + $0x728] sm:$0xff]
        %v5049 = vld [vmem:[#allocation7 + $0x730] sm:$0xff]
        %v5050 = vld [vmem:[#allocation7 + $0x738] sm:$0xff]
        %v5051 = vld [vmem:[#allocation7 + $0x740] sm:$0xff]
        %v5052 = vld [vmem:[#allocation7 + $0x748] sm:$0xff]
        %v5053 = vld [vmem:[#allocation7 + $0x750] sm:$0xff]
        %v5054 = vld [vmem:[#allocation7 + $0x758] sm:$0xff]
        %v5055 = vld [vmem:[#allocation7 + $0x760] sm:$0xff]
        %v5056 = vld [vmem:[#allocation7 + $0x768] sm:$0xff]
        %v5057 = vld [vmem:[#allocation7 + $0x770] sm:$0xff]
        %v5058 = vld [vmem:[#allocation7 + $0x778] sm:$0xff]
        %v5059 = vld [vmem:[#allocation7 + $0x780] sm:$0xff]
        %v5060 = vld [vmem:[#allocation7 + $0x788] sm:$0xff]
        %v5061 = vld [vmem:[#allocation7 + $0x790] sm:$0xff]
        %v5062 = vld [vmem:[#allocation7 + $0x798] sm:$0xff]
        %v5063 = vld [vmem:[#allocation7 + $0x7a0] sm:$0xff]
        %v5064 = vld [vmem:[#allocation7 + $0x7a8] sm:$0xff]
        %v5065 = vld [vmem:[#allocation7 + $0x7b0] sm:$0xff]
        %v5066 = vld [vmem:[#allocation7 + $0x7b8] sm:$0xff]
        %v5067 = vld [vmem:[#allocation7 + $0x7c0] sm:$0xff]
        %v5068 = vld [vmem:[#allocation7 + $0x7c8] sm:$0xff]
        %v5069 = vld [vmem:[#allocation7 + $0x7d0] sm:$0xff]
        %v5070 = vld [vmem:[#allocation7 + $0x7d8] sm:$0xff]
        %v5071 = vld [vmem:[#allocation7 + $0x7e0] sm:$0xff]
        %v5072 = vld [vmem:[#allocation7 + $0x7e8] sm:$0xff]
        %v5073 = vld [vmem:[#allocation7 + $0x7f0] sm:$0xff]
        %v5074 = vld [vmem:[#allocation7 + $0x7f8] sm:$0xff]
        %v5075 = vld [vmem:[#allocation7 + $0x800] sm:$0xff]
        %v5076 = vld [vmem:[#allocation7 + $0x808] sm:$0xff]
        %v5077 = vld [vmem:[#allocation7 + $0x810] sm:$0xff]
        %v5078 = vld [vmem:[#allocation7 + $0x818] sm:$0xff]
        %v5079 = vld [vmem:[#allocation7 + $0x820] sm:$0xff]
        %v5080 = vld [vmem:[#allocation7 + $0x828] sm:$0xff]
        %v5081 = vld [vmem:[#allocation7 + $0x830] sm:$0xff]
        %v5082 = vld [vmem:[#allocation7 + $0x838] sm:$0xff]
        %v5083 = vld [vmem:[#allocation7 + $0x840] sm:$0xff]
        %v5084 = vld [vmem:[#allocation7 + $0x848] sm:$0xff]
        %v5085 = vld [vmem:[#allocation7 + $0x850] sm:$0xff]
        %v5086 = vld [vmem:[#allocation7 + $0x858] sm:$0xff]
        %v5087 = vld [vmem:[#allocation7 + $0x860] sm:$0xff]
        %v5088 = vld [vmem:[#allocation7 + $0x868] sm:$0xff]
        %v5089 = vld [vmem:[#allocation7 + $0x870] sm:$0xff]
        %v5090 = vld [vmem:[#allocation7 + $0x878] sm:$0xff]
        %v5091 = vld [vmem:[#allocation7 + $0x880] sm:$0xff]
        %v5092 = vld [vmem:[#allocation7 + $0x888] sm:$0xff]
        %v5093 = vld [vmem:[#allocation7 + $0x890] sm:$0xff]
        %v5094 = vld [vmem:[#allocation7 + $0x898] sm:$0xff]
        %v5095 = vld [vmem:[#allocation7 + $0x8a0] sm:$0xff]
        %v5096 = vld [vmem:[#allocation7 + $0x8a8] sm:$0xff]
        %v5097 = vld [vmem:[#allocation7 + $0x8b0] sm:$0xff]
        %v5098 = vld [vmem:[#allocation7 + $0x8b8] sm:$0xff]
        %v5099 = vld [vmem:[#allocation7 + $0x8c0] sm:$0xff]
        %v5100 = vld [vmem:[#allocation7 + $0x8c8] sm:$0xff]
        %v5101 = vld [vmem:[#allocation7 + $0x8d0] sm:$0xff]
        %v5102 = vld [vmem:[#allocation7 + $0x8d8] sm:$0xff]
        %v5103 = vld [vmem:[#allocation7 + $0x8e0] sm:$0xff]
        %v5104 = vld [vmem:[#allocation7 + $0x8e8] sm:$0xff]
        %v5105 = vld [vmem:[#allocation7 + $0x8f0] sm:$0xff]
        %v5106 = vld [vmem:[#allocation7 + $0x8f8] sm:$0xff]
        %v5107 = vld [vmem:[#allocation7 + $0x900] sm:$0xff]
        %v5108 = vld [vmem:[#allocation7 + $0x908] sm:$0xff]
        %v5109 = vld [vmem:[#allocation7 + $0x910] sm:$0xff]
        %v5110 = vld [vmem:[#allocation7 + $0x918] sm:$0xff]
        %v5111 = vld [vmem:[#allocation7 + $0x920] sm:$0xff]
        %v5112 = vld [vmem:[#allocation7 + $0x928] sm:$0xff]
        %v5113 = vld [vmem:[#allocation7 + $0x930] sm:$0xff]
        %v5114 = vld [vmem:[#allocation7 + $0x938] sm:$0xff]
        %v5115 = vld [vmem:[#allocation7 + $0x940] sm:$0xff]
        %v5116 = vld [vmem:[#allocation7 + $0x948] sm:$0xff]
        %v5117 = vld [vmem:[#allocation7 + $0x950] sm:$0xff]
        %v5118 = vld [vmem:[#allocation7 + $0x958] sm:$0xff]
        %v5119 = vld [vmem:[#allocation7 + $0x960] sm:$0xff]
        %v5120 = vld [vmem:[#allocation7 + $0x968] sm:$0xff]
        %v5121 = vld [vmem:[#allocation7 + $0x970] sm:$0xff]
        %v5122 = vld [vmem:[#allocation7 + $0x978] sm:$0xff]
        %v5123 = vld [vmem:[#allocation7 + $0x980] sm:$0xff]
        %v5124 = vld [vmem:[#allocation7 + $0x988] sm:$0xff]
        %v5125 = vld [vmem:[#allocation7 + $0x990] sm:$0xff]
        %v5126 = vld [vmem:[#allocation7 + $0x998] sm:$0xff]
        %v5127 = vld [vmem:[#allocation7 + $0x9a0] sm:$0xff]
        %v5128 = vld [vmem:[#allocation7 + $0x9a8] sm:$0xff]
        %v5129 = vld [vmem:[#allocation7 + $0x9b0] sm:$0xff]
        %v5130 = vld [vmem:[#allocation7 + $0x9b8] sm:$0xff]
        %v5131 = vld [vmem:[#allocation7 + $0x9c0] sm:$0xff]
        %v5132 = vld [vmem:[#allocation7 + $0x9c8] sm:$0xff]
        %v5133 = vld [vmem:[#allocation7 + $0x9d0] sm:$0xff]
        %v5134 = vld [vmem:[#allocation7 + $0x9d8] sm:$0xff]
        %v5135 = vld [vmem:[#allocation7 + $0x9e0] sm:$0xff]
        %v5136 = vld [vmem:[#allocation7 + $0x9e8] sm:$0xff]
        %v5137 = vld [vmem:[#allocation7 + $0x9f0] sm:$0xff]
        %v5138 = vld [vmem:[#allocation7 + $0x9f8] sm:$0xff]
        %v5139 = vld [vmem:[#allocation7 + $0xa00] sm:$0xff]
        %v5140 = vld [vmem:[#allocation7 + $0xa08] sm:$0xff]
        %v5141 = vld [vmem:[#allocation7 + $0xa10] sm:$0xff]
        %v5142 = vld [vmem:[#allocation7 + $0xa18] sm:$0xff]
        %v5143 = vld [vmem:[#allocation7 + $0xa20] sm:$0xff]
        %v5144 = vld [vmem:[#allocation7 + $0xa28] sm:$0xff]
        %v5145 = vld [vmem:[#allocation7 + $0xa30] sm:$0xff]
        %v5146 = vld [vmem:[#allocation7 + $0xa38] sm:$0xff]
        %v5147 = vld [vmem:[#allocation7 + $0xa40] sm:$0xff]
        %v5148 = vld [vmem:[#allocation7 + $0xa48] sm:$0xff]
        %v5149 = vld [vmem:[#allocation7 + $0xa50] sm:$0xff]
        %v5150 = vld [vmem:[#allocation7 + $0xa58] sm:$0xff]
        %v5151 = vld [vmem:[#allocation7 + $0xa60] sm:$0xff]
        %v5152 = vld [vmem:[#allocation7 + $0xa68] sm:$0xff]
        %v5153 = vld [vmem:[#allocation7 + $0xa70] sm:$0xff]
        %v5154 = vld [vmem:[#allocation7 + $0xa78] sm:$0xff]
        %v5155 = vld [vmem:[#allocation7 + $0xa80] sm:$0xff]
        %v5156 = vld [vmem:[#allocation7 + $0xa88] sm:$0xff]
        %v5157 = vld [vmem:[#allocation7 + $0xa90] sm:$0xff]
        %v5158 = vld [vmem:[#allocation7 + $0xa98] sm:$0xff]
        %v5159 = vld [vmem:[#allocation7 + $0xaa0] sm:$0xff]
        %v5160 = vld [vmem:[#allocation7 + $0xaa8] sm:$0xff]
        %v5161 = vld [vmem:[#allocation7 + $0xab0] sm:$0xff]
        %v5162 = vld [vmem:[#allocation7 + $0xab8] sm:$0xff]
        %v5163 = vld [vmem:[#allocation7 + $0xac0] sm:$0xff]
        %v5164 = vld [vmem:[#allocation7 + $0xac8] sm:$0xff]
        %v5165 = vld [vmem:[#allocation7 + $0xad0] sm:$0xff]
        %v5166 = vld [vmem:[#allocation7 + $0xad8] sm:$0xff]
        %v5167 = vld [vmem:[#allocation7 + $0xae0] sm:$0xff]
        %v5168 = vld [vmem:[#allocation7 + $0xae8] sm:$0xff]
        %v5169 = vld [vmem:[#allocation7 + $0xaf0] sm:$0xff]
        %v5170 = vld [vmem:[#allocation7 + $0xaf8] sm:$0xff]
        %v5171 = vld [vmem:[#allocation7 + $0xb00] sm:$0xff]
        %v5172 = vld [vmem:[#allocation7 + $0xb08] sm:$0xff]
        %v5173 = vld [vmem:[#allocation7 + $0xb10] sm:$0xff]
        %v5174 = vld [vmem:[#allocation7 + $0xb18] sm:$0xff]
        %v5175 = vld [vmem:[#allocation7 + $0xb20] sm:$0xff]
        %v5176 = vld [vmem:[#allocation7 + $0xb28] sm:$0xff]
        %v5177 = vld [vmem:[#allocation7 + $0xb30] sm:$0xff]
        %v5178 = vld [vmem:[#allocation7 + $0xb38] sm:$0xff]
        %v5179 = vld [vmem:[#allocation7 + $0xb40] sm:$0xff]
        %v5180 = vld [vmem:[#allocation7 + $0xb48] sm:$0xff]
        %v5181 = vld [vmem:[#allocation7 + $0xb50] sm:$0xff]
        %v5182 = vld [vmem:[#allocation7 + $0xb58] sm:$0xff]
        %v5183 = vld [vmem:[#allocation7 + $0xb60] sm:$0xff]
        %v5184 = vld [vmem:[#allocation7 + $0xb68] sm:$0xff]
        %v5185 = vld [vmem:[#allocation7 + $0xb70] sm:$0xff]
        %v5186 = vld [vmem:[#allocation7 + $0xb78] sm:$0xff]
        %v5187 = vld [vmem:[#allocation7 + $0xb80] sm:$0xff]
        %v5188 = vld [vmem:[#allocation7 + $0xb88] sm:$0xff]
        %v5189 = vld [vmem:[#allocation7 + $0xb90] sm:$0xff]
        %v5190 = vld [vmem:[#allocation7 + $0xb98] sm:$0xff]
        %v5191 = vld [vmem:[#allocation7 + $0xba0] sm:$0xff]
        %v5192 = vld [vmem:[#allocation7 + $0xba8] sm:$0xff]
        %v5193 = vld [vmem:[#allocation7 + $0xbb0] sm:$0xff]
        %v5194 = vld [vmem:[#allocation7 + $0xbb8] sm:$0xff]
        %v5195 = vld [vmem:[#allocation7 + $0xbc0] sm:$0xff]
        %v5196 = vld [vmem:[#allocation7 + $0xbc8] sm:$0xff]
        %v5197 = vld [vmem:[#allocation7 + $0xbd0] sm:$0xff]
        %v5198 = vld [vmem:[#allocation7 + $0xbd8] sm:$0xff]
        %v5199 = vld [vmem:[#allocation7 + $0xbe0] sm:$0xff]
        %v5200 = vld [vmem:[#allocation7 + $0xbe8] sm:$0xff]
        %v5201 = vld [vmem:[#allocation7 + $0xbf0] sm:$0xff]
        %v5202 = vld [vmem:[#allocation7 + $0xbf8] sm:$0xff]
        %v5203 = vld [vmem:[#allocation7 + $0xc00] sm:$0xff]
        %v5204 = vld [vmem:[#allocation7 + $0xc08] sm:$0xff]
        %v5205 = vld [vmem:[#allocation7 + $0xc10] sm:$0xff]
        %v5206 = vld [vmem:[#allocation7 + $0xc18] sm:$0xff]
        %v5207 = vld [vmem:[#allocation7 + $0xc20] sm:$0xff]
        %v5208 = vld [vmem:[#allocation7 + $0xc28] sm:$0xff]
        %v5209 = vld [vmem:[#allocation7 + $0xc30] sm:$0xff]
        %v5210 = vld [vmem:[#allocation7 + $0xc38] sm:$0xff]
        %v5211 = vld [vmem:[#allocation7 + $0xc40] sm:$0xff]
        %v5212 = vld [vmem:[#allocation7 + $0xc48] sm:$0xff]
        %v5213 = vld [vmem:[#allocation7 + $0xc50] sm:$0xff]
        %v5214 = vld [vmem:[#allocation7 + $0xc58] sm:$0xff]
        %v5215 = vld [vmem:[#allocation7 + $0xc60] sm:$0xff]
        %v5216 = vld [vmem:[#allocation7 + $0xc68] sm:$0xff]
        %v5217 = vld [vmem:[#allocation7 + $0xc70] sm:$0xff]
        %v5218 = vld [vmem:[#allocation7 + $0xc78] sm:$0xff]
        %v5219 = vld [vmem:[#allocation7 + $0xc80] sm:$0xff]
        %v5220 = vld [vmem:[#allocation7 + $0xc88] sm:$0xff]
        %v5221 = vld [vmem:[#allocation7 + $0xc90] sm:$0xff]
        %v5222 = vld [vmem:[#allocation7 + $0xc98] sm:$0xff]
        %v5223 = vld [vmem:[#allocation7 + $0xca0] sm:$0xff]
        %v5224 = vld [vmem:[#allocation7 + $0xca8] sm:$0xff]
        %v5225 = vld [vmem:[#allocation7 + $0xcb0] sm:$0xff]
        %v5226 = vld [vmem:[#allocation7 + $0xcb8] sm:$0xff]
        %v5227 = vld [vmem:[#allocation7 + $0xcc0] sm:$0xff]
        %v5228 = vld [vmem:[#allocation7 + $0xcc8] sm:$0xff]
        %v5229 = vld [vmem:[#allocation7 + $0xcd0] sm:$0xff]
        %v5230 = vld [vmem:[#allocation7 + $0xcd8] sm:$0xff]
        %v5231 = vld [vmem:[#allocation7 + $0xce0] sm:$0xff]
        %v5232 = vld [vmem:[#allocation7 + $0xce8] sm:$0xff]
        %v5233 = vld [vmem:[#allocation7 + $0xcf0] sm:$0xff]
        %v5234 = vld [vmem:[#allocation7 + $0xcf8] sm:$0xff]
        %v5235 = vld [vmem:[#allocation7 + $0xd00] sm:$0xff]
        %v5236 = vld [vmem:[#allocation7 + $0xd08] sm:$0xff]
        %v5237 = vld [vmem:[#allocation7 + $0xd10] sm:$0xff]
        %v5238 = vld [vmem:[#allocation7 + $0xd18] sm:$0xff]
        %v5239 = vld [vmem:[#allocation7 + $0xd20] sm:$0xff]
        %v5240 = vld [vmem:[#allocation7 + $0xd28] sm:$0xff]
        %v5241 = vld [vmem:[#allocation7 + $0xd30] sm:$0xff]
        %v5242 = vld [vmem:[#allocation7 + $0xd38] sm:$0xff]
        %v5243 = vld [vmem:[#allocation7 + $0xd40] sm:$0xff]
        %v5244 = vld [vmem:[#allocation7 + $0xd48] sm:$0xff]
        %v5245 = vld [vmem:[#allocation7 + $0xd50] sm:$0xff]
        %v5246 = vld [vmem:[#allocation7 + $0xd58] sm:$0xff]
        %v5247 = vld [vmem:[#allocation7 + $0xd60] sm:$0xff]
        %v5248 = vld [vmem:[#allocation7 + $0xd68] sm:$0xff]
        %v5249 = vld [vmem:[#allocation7 + $0xd70] sm:$0xff]
        %v5250 = vld [vmem:[#allocation7 + $0xd78] sm:$0xff]
        %v5251 = vld [vmem:[#allocation7 + $0xd80] sm:$0xff]
        %v5252 = vld [vmem:[#allocation7 + $0xd88] sm:$0xff]
        %v5253 = vld [vmem:[#allocation7 + $0xd90] sm:$0xff]
        %v5254 = vld [vmem:[#allocation7 + $0xd98] sm:$0xff]
        %v5255 = vld [vmem:[#allocation7 + $0xda0] sm:$0xff]
        %v5256 = vld [vmem:[#allocation7 + $0xda8] sm:$0xff]
        %v5257 = vld [vmem:[#allocation7 + $0xdb0] sm:$0xff]
        %v5258 = vld [vmem:[#allocation7 + $0xdb8] sm:$0xff]
        %v5259 = vld [vmem:[#allocation7 + $0xdc0] sm:$0xff]
        %v5260 = vld [vmem:[#allocation7 + $0xdc8] sm:$0xff]
        %v5261 = vld [vmem:[#allocation7 + $0xdd0] sm:$0xff]
        %v5262 = vld [vmem:[#allocation7 + $0xdd8] sm:$0xff]
        %v5263 = vld [vmem:[#allocation7 + $0xde0] sm:$0xff]
        %v5264 = vld [vmem:[#allocation7 + $0xde8] sm:$0xff]
        %v5265 = vld [vmem:[#allocation7 + $0xdf0] sm:$0xff]
        %v5266 = vld [vmem:[#allocation7 + $0xdf8] sm:$0xff]
        %v5267 = vld [vmem:[#allocation7 + $0xe00] sm:$0xff]
        %v5268 = vld [vmem:[#allocation7 + $0xe08] sm:$0xff]
        %v5269 = vld [vmem:[#allocation7 + $0xe10] sm:$0xff]
        %v5270 = vld [vmem:[#allocation7 + $0xe18] sm:$0xff]
        %v5271 = vld [vmem:[#allocation7 + $0xe20] sm:$0xff]
        %v5272 = vld [vmem:[#allocation7 + $0xe28] sm:$0xff]
        %v5273 = vld [vmem:[#allocation7 + $0xe30] sm:$0xff]
        %v5274 = vld [vmem:[#allocation7 + $0xe38] sm:$0xff]
        %v5275 = vld [vmem:[#allocation7 + $0xe40] sm:$0xff]
        %v5276 = vld [vmem:[#allocation7 + $0xe48] sm:$0xff]
        %v5277 = vld [vmem:[#allocation7 + $0xe50] sm:$0xff]
        %v5278 = vld [vmem:[#allocation7 + $0xe58] sm:$0xff]
        %v5279 = vld [vmem:[#allocation7 + $0xe60] sm:$0xff]
        %v5280 = vld [vmem:[#allocation7 + $0xe68] sm:$0xff]
        %v5281 = vld [vmem:[#allocation7 + $0xe70] sm:$0xff]
        %v5282 = vld [vmem:[#allocation7 + $0xe78] sm:$0xff]
        %v5283 = vld [vmem:[#allocation7 + $0xe80] sm:$0xff]
        %v5284 = vld [vmem:[#allocation7 + $0xe88] sm:$0xff]
        %v5285 = vld [vmem:[#allocation7 + $0xe90] sm:$0xff]
        %v5286 = vld [vmem:[#allocation7 + $0xe98] sm:$0xff]
        %v5287 = vld [vmem:[#allocation7 + $0xea0] sm:$0xff]
        %v5288 = vld [vmem:[#allocation7 + $0xea8] sm:$0xff]
        %v5289 = vld [vmem:[#allocation7 + $0xeb0] sm:$0xff]
        %v5290 = vld [vmem:[#allocation7 + $0xeb8] sm:$0xff]
        %v5291 = vld [vmem:[#allocation7 + $0xec0] sm:$0xff]
        %v5292 = vld [vmem:[#allocation7 + $0xec8] sm:$0xff]
        %v5293 = vld [vmem:[#allocation7 + $0xed0] sm:$0xff]
        %v5294 = vld [vmem:[#allocation7 + $0xed8] sm:$0xff]
        %v5295 = vld [vmem:[#allocation7 + $0xee0] sm:$0xff]
        %v5296 = vld [vmem:[#allocation7 + $0xee8] sm:$0xff]
        %v5297 = vld [vmem:[#allocation7 + $0xef0] sm:$0xff]
        %v5298 = vld [vmem:[#allocation7 + $0xef8] sm:$0xff]
        %v5299 = vld [vmem:[#allocation7 + $0xf00] sm:$0xff]
        %v5300 = vld [vmem:[#allocation7 + $0xf08] sm:$0xff]
        %v5301 = vld [vmem:[#allocation7 + $0xf10] sm:$0xff]
        %v5302 = vld [vmem:[#allocation7 + $0xf18] sm:$0xff]
        %v5303 = vld [vmem:[#allocation7 + $0xf20] sm:$0xff]
        %v5304 = vld [vmem:[#allocation7 + $0xf28] sm:$0xff]
        %v5305 = vld [vmem:[#allocation7 + $0xf30] sm:$0xff]
        %v5306 = vld [vmem:[#allocation7 + $0xf38] sm:$0xff]
        %v5307 = vld [vmem:[#allocation7 + $0xf40] sm:$0xff]
        %v5308 = vld [vmem:[#allocation7 + $0xf48] sm:$0xff]
        %v5309 = vld [vmem:[#allocation7 + $0xf50] sm:$0xff]
        %v5310 = vld [vmem:[#allocation7 + $0xf58] sm:$0xff]
        %v5311 = vld [vmem:[#allocation7 + $0xf60] sm:$0xff]
        %v5312 = vld [vmem:[#allocation7 + $0xf68] sm:$0xff]
        %v5313 = vld [vmem:[#allocation7 + $0xf70] sm:$0xff]
        %v5314 = vld [vmem:[#allocation7 + $0xf78] sm:$0xff]
        %v5315 = vld [vmem:[#allocation7 + $0xf80] sm:$0xff]
        %v5316 = vld [vmem:[#allocation7 + $0xf88] sm:$0xff]
        %v5317 = vld [vmem:[#allocation7 + $0xf90] sm:$0xff]
        %v5318 = vld [vmem:[#allocation7 + $0xf98] sm:$0xff]
        %v5319 = vld [vmem:[#allocation7 + $0xfa0] sm:$0xff]
        %v5320 = vld [vmem:[#allocation7 + $0xfa8] sm:$0xff]
        %v5321 = vld [vmem:[#allocation7 + $0xfb0] sm:$0xff]
        %v5322 = vld [vmem:[#allocation7 + $0xfb8] sm:$0xff]
        %v5323 = vld [vmem:[#allocation7 + $0xfc0] sm:$0xff]
        %v5324 = vld [vmem:[#allocation7 + $0xfc8] sm:$0xff]
        %v5325 = vld [vmem:[#allocation7 + $0xfd0] sm:$0xff]
        %v5326 = vld [vmem:[#allocation7 + $0xfd8] sm:$0xff]
        %v5327 = vld [vmem:[#allocation7 + $0xfe0] sm:$0xff]
        %v5328 = vld [vmem:[#allocation7 + $0xfe8] sm:$0xff]
        %v5329 = vld [vmem:[#allocation7 + $0xff0] sm:$0xff]
        %v5330 = vld [vmem:[#allocation7 + $0xff8] sm:$0xff]
        %v5843 = vunpack.c.l.b16 %v4819
        %v5844 = vunpack.c.h.b16 %v4819
        %v5845 = vunpack.c.l.b16 %v4820
        %v5846 = vunpack.c.h.b16 %v4820
        %v5847 = vunpack.c.l.b16 %v4821
        %v5848 = vunpack.c.h.b16 %v4821
        %v5849 = vunpack.c.l.b16 %v4822
        %v5850 = vunpack.c.h.b16 %v4822
        %v5851 = vunpack.c.l.b16 %v4823
        %v5852 = vunpack.c.h.b16 %v4823
        %v5853 = vunpack.c.l.b16 %v4824
        %v5854 = vunpack.c.h.b16 %v4824
        %v5855 = vunpack.c.l.b16 %v4825
        %v5856 = vunpack.c.h.b16 %v4825
        %v5857 = vunpack.c.l.b16 %v4826
        %v5858 = vunpack.c.h.b16 %v4826
        %v5859 = vunpack.c.l.b16 %v4827
        %v5860 = vunpack.c.h.b16 %v4827
        %v5861 = vunpack.c.l.b16 %v4828
        %v5862 = vunpack.c.h.b16 %v4828
        %v5863 = vunpack.c.l.b16 %v4829
        %v5864 = vunpack.c.h.b16 %v4829
        %v5865 = vunpack.c.l.b16 %v4830
        %v5866 = vunpack.c.h.b16 %v4830
        %v5867 = vunpack.c.l.b16 %v4831
        %v5868 = vunpack.c.h.b16 %v4831
        %v5869 = vunpack.c.l.b16 %v4832
        %v5870 = vunpack.c.h.b16 %v4832
        %v5871 = vunpack.c.l.b16 %v4833
        %v5872 = vunpack.c.h.b16 %v4833
        %v5873 = vunpack.c.l.b16 %v4834
        %v5874 = vunpack.c.h.b16 %v4834
        %v5875 = vunpack.c.l.b16 %v4835
        %v5876 = vunpack.c.h.b16 %v4835
        %v5877 = vunpack.c.l.b16 %v4836
        %v5878 = vunpack.c.h.b16 %v4836
        %v5879 = vunpack.c.l.b16 %v4837
        %v5880 = vunpack.c.h.b16 %v4837
        %v5881 = vunpack.c.l.b16 %v4838
        %v5882 = vunpack.c.h.b16 %v4838
        %v5883 = vunpack.c.l.b16 %v4839
        %v5884 = vunpack.c.h.b16 %v4839
        %v5885 = vunpack.c.l.b16 %v4840
        %v5886 = vunpack.c.h.b16 %v4840
        %v5887 = vunpack.c.l.b16 %v4841
        %v5888 = vunpack.c.h.b16 %v4841
        %v5889 = vunpack.c.l.b16 %v4842
        %v5890 = vunpack.c.h.b16 %v4842
        %v5891 = vunpack.c.l.b16 %v4843
        %v5892 = vunpack.c.h.b16 %v4843
        %v5893 = vunpack.c.l.b16 %v4844
        %v5894 = vunpack.c.h.b16 %v4844
        %v5895 = vunpack.c.l.b16 %v4845
        %v5896 = vunpack.c.h.b16 %v4845
        %v5897 = vunpack.c.l.b16 %v4846
        %v5898 = vunpack.c.h.b16 %v4846
        %v5899 = vunpack.c.l.b16 %v4847
        %v5900 = vunpack.c.h.b16 %v4847
        %v5901 = vunpack.c.l.b16 %v4848
        %v5902 = vunpack.c.h.b16 %v4848
        %v5903 = vunpack.c.l.b16 %v4849
        %v5904 = vunpack.c.h.b16 %v4849
        %v5905 = vunpack.c.l.b16 %v4850
        %v5906 = vunpack.c.h.b16 %v4850
        %v5907 = vunpack.c.l.b16 %v4851
        %v5908 = vunpack.c.h.b16 %v4851
        %v5909 = vunpack.c.l.b16 %v4852
        %v5910 = vunpack.c.h.b16 %v4852
        %v5911 = vunpack.c.l.b16 %v4853
        %v5912 = vunpack.c.h.b16 %v4853
        %v5913 = vunpack.c.l.b16 %v4854
        %v5914 = vunpack.c.h.b16 %v4854
        %v5915 = vunpack.c.l.b16 %v4855
        %v5916 = vunpack.c.h.b16 %v4855
        %v5917 = vunpack.c.l.b16 %v4856
        %v5918 = vunpack.c.h.b16 %v4856
        %v5919 = vunpack.c.l.b16 %v4857
        %v5920 = vunpack.c.h.b16 %v4857
        %v5921 = vunpack.c.l.b16 %v4858
        %v5922 = vunpack.c.h.b16 %v4858
        %v5923 = vunpack.c.l.b16 %v4859
        %v5924 = vunpack.c.h.b16 %v4859
        %v5925 = vunpack.c.l.b16 %v4860
        %v5926 = vunpack.c.h.b16 %v4860
        %v5927 = vunpack.c.l.b16 %v4861
        %v5928 = vunpack.c.h.b16 %v4861
        %v5929 = vunpack.c.l.b16 %v4862
        %v5930 = vunpack.c.h.b16 %v4862
        %v5931 = vunpack.c.l.b16 %v4863
        %v5932 = vunpack.c.h.b16 %v4863
        %v5933 = vunpack.c.l.b16 %v4864
        %v5934 = vunpack.c.h.b16 %v4864
        %v5935 = vunpack.c.l.b16 %v4865
        %v5936 = vunpack.c.h.b16 %v4865
        %v5937 = vunpack.c.l.b16 %v4866
        %v5938 = vunpack.c.h.b16 %v4866
        %v5939 = vunpack.c.l.b16 %v4867
        %v5940 = vunpack.c.h.b16 %v4867
        %v5941 = vunpack.c.l.b16 %v4868
        %v5942 = vunpack.c.h.b16 %v4868
        %v5943 = vunpack.c.l.b16 %v4869
        %v5944 = vunpack.c.h.b16 %v4869
        %v5945 = vunpack.c.l.b16 %v4870
        %v5946 = vunpack.c.h.b16 %v4870
        %v5947 = vunpack.c.l.b16 %v4871
        %v5948 = vunpack.c.h.b16 %v4871
        %v5949 = vunpack.c.l.b16 %v4872
        %v5950 = vunpack.c.h.b16 %v4872
        %v5951 = vunpack.c.l.b16 %v4873
        %v5952 = vunpack.c.h.b16 %v4873
        %v5953 = vunpack.c.l.b16 %v4874
        %v5954 = vunpack.c.h.b16 %v4874
        %v5955 = vunpack.c.l.b16 %v4875
        %v5956 = vunpack.c.h.b16 %v4875
        %v5957 = vunpack.c.l.b16 %v4876
        %v5958 = vunpack.c.h.b16 %v4876
        %v5959 = vunpack.c.l.b16 %v4877
        %v5960 = vunpack.c.h.b16 %v4877
        %v5961 = vunpack.c.l.b16 %v4878
        %v5962 = vunpack.c.h.b16 %v4878
        %v5963 = vunpack.c.l.b16 %v4879
        %v5964 = vunpack.c.h.b16 %v4879
        %v5965 = vunpack.c.l.b16 %v4880
        %v5966 = vunpack.c.h.b16 %v4880
        %v5967 = vunpack.c.l.b16 %v4881
        %v5968 = vunpack.c.h.b16 %v4881
        %v5969 = vunpack.c.l.b16 %v4882
        %v5970 = vunpack.c.h.b16 %v4882
        %v5971 = vunpack.c.l.b16 %v4883
        %v5972 = vunpack.c.h.b16 %v4883
        %v5973 = vunpack.c.l.b16 %v4884
        %v5974 = vunpack.c.h.b16 %v4884
        %v5975 = vunpack.c.l.b16 %v4885
        %v5976 = vunpack.c.h.b16 %v4885
        %v5977 = vunpack.c.l.b16 %v4886
        %v5978 = vunpack.c.h.b16 %v4886
        %v5979 = vunpack.c.l.b16 %v4887
        %v5980 = vunpack.c.h.b16 %v4887
        %v5981 = vunpack.c.l.b16 %v4888
        %v5982 = vunpack.c.h.b16 %v4888
        %v5983 = vunpack.c.l.b16 %v4889
        %v5984 = vunpack.c.h.b16 %v4889
        %v5985 = vunpack.c.l.b16 %v4890
        %v5986 = vunpack.c.h.b16 %v4890
        %v5987 = vunpack.c.l.b16 %v4891
        %v5988 = vunpack.c.h.b16 %v4891
        %v5989 = vunpack.c.l.b16 %v4892
        %v5990 = vunpack.c.h.b16 %v4892
        %v5991 = vunpack.c.l.b16 %v4893
        %v5992 = vunpack.c.h.b16 %v4893
        %v5993 = vunpack.c.l.b16 %v4894
        %v5994 = vunpack.c.h.b16 %v4894
        %v5995 = vunpack.c.l.b16 %v4895
        %v5996 = vunpack.c.h.b16 %v4895
        %v5997 = vunpack.c.l.b16 %v4896
        %v5998 = vunpack.c.h.b16 %v4896
        %v5999 = vunpack.c.l.b16 %v4897
        %v6000 = vunpack.c.h.b16 %v4897
        %v6001 = vunpack.c.l.b16 %v4898
        %v6002 = vunpack.c.h.b16 %v4898
        %v6003 = vunpack.c.l.b16 %v4899
        %v6004 = vunpack.c.h.b16 %v4899
        %v6005 = vunpack.c.l.b16 %v4900
        %v6006 = vunpack.c.h.b16 %v4900
        %v6007 = vunpack.c.l.b16 %v4901
        %v6008 = vunpack.c.h.b16 %v4901
        %v6009 = vunpack.c.l.b16 %v4902
        %v6010 = vunpack.c.h.b16 %v4902
        %v6011 = vunpack.c.l.b16 %v4903
        %v6012 = vunpack.c.h.b16 %v4903
        %v6013 = vunpack.c.l.b16 %v4904
        %v6014 = vunpack.c.h.b16 %v4904
        %v6015 = vunpack.c.l.b16 %v4905
        %v6016 = vunpack.c.h.b16 %v4905
        %v6017 = vunpack.c.l.b16 %v4906
        %v6018 = vunpack.c.h.b16 %v4906
        %v6019 = vunpack.c.l.b16 %v4907
        %v6020 = vunpack.c.h.b16 %v4907
        %v6021 = vunpack.c.l.b16 %v4908
        %v6022 = vunpack.c.h.b16 %v4908
        %v6023 = vunpack.c.l.b16 %v4909
        %v6024 = vunpack.c.h.b16 %v4909
        %v6025 = vunpack.c.l.b16 %v4910
        %v6026 = vunpack.c.h.b16 %v4910
        %v6027 = vunpack.c.l.b16 %v4911
        %v6028 = vunpack.c.h.b16 %v4911
        %v6029 = vunpack.c.l.b16 %v4912
        %v6030 = vunpack.c.h.b16 %v4912
        %v6031 = vunpack.c.l.b16 %v4913
        %v6032 = vunpack.c.h.b16 %v4913
        %v6033 = vunpack.c.l.b16 %v4914
        %v6034 = vunpack.c.h.b16 %v4914
        %v6035 = vunpack.c.l.b16 %v4915
        %v6036 = vunpack.c.h.b16 %v4915
        %v6037 = vunpack.c.l.b16 %v4916
        %v6038 = vunpack.c.h.b16 %v4916
        %v6039 = vunpack.c.l.b16 %v4917
        %v6040 = vunpack.c.h.b16 %v4917
        %v6041 = vunpack.c.l.b16 %v4918
        %v6042 = vunpack.c.h.b16 %v4918
        %v6043 = vunpack.c.l.b16 %v4919
        %v6044 = vunpack.c.h.b16 %v4919
        %v6045 = vunpack.c.l.b16 %v4920
        %v6046 = vunpack.c.h.b16 %v4920
        %v6047 = vunpack.c.l.b16 %v4921
        %v6048 = vunpack.c.h.b16 %v4921
        %v6049 = vunpack.c.l.b16 %v4922
        %v6050 = vunpack.c.h.b16 %v4922
        %v6051 = vunpack.c.l.b16 %v4923
        %v6052 = vunpack.c.h.b16 %v4923
        %v6053 = vunpack.c.l.b16 %v4924
        %v6054 = vunpack.c.h.b16 %v4924
        %v6055 = vunpack.c.l.b16 %v4925
        %v6056 = vunpack.c.h.b16 %v4925
        %v6057 = vunpack.c.l.b16 %v4926
        %v6058 = vunpack.c.h.b16 %v4926
        %v6059 = vunpack.c.l.b16 %v4927
        %v6060 = vunpack.c.h.b16 %v4927
        %v6061 = vunpack.c.l.b16 %v4928
        %v6062 = vunpack.c.h.b16 %v4928
        %v6063 = vunpack.c.l.b16 %v4929
        %v6064 = vunpack.c.h.b16 %v4929
        %v6065 = vunpack.c.l.b16 %v4930
        %v6066 = vunpack.c.h.b16 %v4930
        %v6067 = vunpack.c.l.b16 %v4931
        %v6068 = vunpack.c.h.b16 %v4931
        %v6069 = vunpack.c.l.b16 %v4932
        %v6070 = vunpack.c.h.b16 %v4932
        %v6071 = vunpack.c.l.b16 %v4933
        %v6072 = vunpack.c.h.b16 %v4933
        %v6073 = vunpack.c.l.b16 %v4934
        %v6074 = vunpack.c.h.b16 %v4934
        %v6075 = vunpack.c.l.b16 %v4935
        %v6076 = vunpack.c.h.b16 %v4935
        %v6077 = vunpack.c.l.b16 %v4936
        %v6078 = vunpack.c.h.b16 %v4936
        %v6079 = vunpack.c.l.b16 %v4937
        %v6080 = vunpack.c.h.b16 %v4937
        %v6081 = vunpack.c.l.b16 %v4938
        %v6082 = vunpack.c.h.b16 %v4938
        %v6083 = vunpack.c.l.b16 %v4939
        %v6084 = vunpack.c.h.b16 %v4939
        %v6085 = vunpack.c.l.b16 %v4940
        %v6086 = vunpack.c.h.b16 %v4940
        %v6087 = vunpack.c.l.b16 %v4941
        %v6088 = vunpack.c.h.b16 %v4941
        %v6089 = vunpack.c.l.b16 %v4942
        %v6090 = vunpack.c.h.b16 %v4942
        %v6091 = vunpack.c.l.b16 %v4943
        %v6092 = vunpack.c.h.b16 %v4943
        %v6093 = vunpack.c.l.b16 %v4944
        %v6094 = vunpack.c.h.b16 %v4944
        %v6095 = vunpack.c.l.b16 %v4945
        %v6096 = vunpack.c.h.b16 %v4945
        %v6097 = vunpack.c.l.b16 %v4946
        %v6098 = vunpack.c.h.b16 %v4946
        %v6099 = vunpack.c.l.b16 %v4947
        %v6100 = vunpack.c.h.b16 %v4947
        %v6101 = vunpack.c.l.b16 %v4948
        %v6102 = vunpack.c.h.b16 %v4948
        %v6103 = vunpack.c.l.b16 %v4949
        %v6104 = vunpack.c.h.b16 %v4949
        %v6105 = vunpack.c.l.b16 %v4950
        %v6106 = vunpack.c.h.b16 %v4950
        %v6107 = vunpack.c.l.b16 %v4951
        %v6108 = vunpack.c.h.b16 %v4951
        %v6109 = vunpack.c.l.b16 %v4952
        %v6110 = vunpack.c.h.b16 %v4952
        %v6111 = vunpack.c.l.b16 %v4953
        %v6112 = vunpack.c.h.b16 %v4953
        %v6113 = vunpack.c.l.b16 %v4954
        %v6114 = vunpack.c.h.b16 %v4954
        %v6115 = vunpack.c.l.b16 %v4955
        %v6116 = vunpack.c.h.b16 %v4955
        %v6117 = vunpack.c.l.b16 %v4956
        %v6118 = vunpack.c.h.b16 %v4956
        %v6119 = vunpack.c.l.b16 %v4957
        %v6120 = vunpack.c.h.b16 %v4957
        %v6121 = vunpack.c.l.b16 %v4958
        %v6122 = vunpack.c.h.b16 %v4958
        %v6123 = vunpack.c.l.b16 %v4959
        %v6124 = vunpack.c.h.b16 %v4959
        %v6125 = vunpack.c.l.b16 %v4960
        %v6126 = vunpack.c.h.b16 %v4960
        %v6127 = vunpack.c.l.b16 %v4961
        %v6128 = vunpack.c.h.b16 %v4961
        %v6129 = vunpack.c.l.b16 %v4962
        %v6130 = vunpack.c.h.b16 %v4962
        %v6131 = vunpack.c.l.b16 %v4963
        %v6132 = vunpack.c.h.b16 %v4963
        %v6133 = vunpack.c.l.b16 %v4964
        %v6134 = vunpack.c.h.b16 %v4964
        %v6135 = vunpack.c.l.b16 %v4965
        %v6136 = vunpack.c.h.b16 %v4965
        %v6137 = vunpack.c.l.b16 %v4966
        %v6138 = vunpack.c.h.b16 %v4966
        %v6139 = vunpack.c.l.b16 %v4967
        %v6140 = vunpack.c.h.b16 %v4967
        %v6141 = vunpack.c.l.b16 %v4968
        %v6142 = vunpack.c.h.b16 %v4968
        %v6143 = vunpack.c.l.b16 %v4969
        %v6144 = vunpack.c.h.b16 %v4969
        %v6145 = vunpack.c.l.b16 %v4970
        %v6146 = vunpack.c.h.b16 %v4970
        %v6147 = vunpack.c.l.b16 %v4971
        %v6148 = vunpack.c.h.b16 %v4971
        %v6149 = vunpack.c.l.b16 %v4972
        %v6150 = vunpack.c.h.b16 %v4972
        %v6151 = vunpack.c.l.b16 %v4973
        %v6152 = vunpack.c.h.b16 %v4973
        %v6153 = vunpack.c.l.b16 %v4974
        %v6154 = vunpack.c.h.b16 %v4974
        %v6155 = vunpack.c.l.b16 %v4975
        %v6156 = vunpack.c.h.b16 %v4975
        %v6157 = vunpack.c.l.b16 %v4976
        %v6158 = vunpack.c.h.b16 %v4976
        %v6159 = vunpack.c.l.b16 %v4977
        %v6160 = vunpack.c.h.b16 %v4977
        %v6161 = vunpack.c.l.b16 %v4978
        %v6162 = vunpack.c.h.b16 %v4978
        %v6163 = vunpack.c.l.b16 %v4979
        %v6164 = vunpack.c.h.b16 %v4979
        %v6165 = vunpack.c.l.b16 %v4980
        %v6166 = vunpack.c.h.b16 %v4980
        %v6167 = vunpack.c.l.b16 %v4981
        %v6168 = vunpack.c.h.b16 %v4981
        %v6169 = vunpack.c.l.b16 %v4982
        %v6170 = vunpack.c.h.b16 %v4982
        %v6171 = vunpack.c.l.b16 %v4983
        %v6172 = vunpack.c.h.b16 %v4983
        %v6173 = vunpack.c.l.b16 %v4984
        %v6174 = vunpack.c.h.b16 %v4984
        %v6175 = vunpack.c.l.b16 %v4985
        %v6176 = vunpack.c.h.b16 %v4985
        %v6177 = vunpack.c.l.b16 %v4986
        %v6178 = vunpack.c.h.b16 %v4986
        %v6179 = vunpack.c.l.b16 %v4987
        %v6180 = vunpack.c.h.b16 %v4987
        %v6181 = vunpack.c.l.b16 %v4988
        %v6182 = vunpack.c.h.b16 %v4988
        %v6183 = vunpack.c.l.b16 %v4989
        %v6184 = vunpack.c.h.b16 %v4989
        %v6185 = vunpack.c.l.b16 %v4990
        %v6186 = vunpack.c.h.b16 %v4990
        %v6187 = vunpack.c.l.b16 %v4991
        %v6188 = vunpack.c.h.b16 %v4991
        %v6189 = vunpack.c.l.b16 %v4992
        %v6190 = vunpack.c.h.b16 %v4992
        %v6191 = vunpack.c.l.b16 %v4993
        %v6192 = vunpack.c.h.b16 %v4993
        %v6193 = vunpack.c.l.b16 %v4994
        %v6194 = vunpack.c.h.b16 %v4994
        %v6195 = vunpack.c.l.b16 %v4995
        %v6196 = vunpack.c.h.b16 %v4995
        %v6197 = vunpack.c.l.b16 %v4996
        %v6198 = vunpack.c.h.b16 %v4996
        %v6199 = vunpack.c.l.b16 %v4997
        %v6200 = vunpack.c.h.b16 %v4997
        %v6201 = vunpack.c.l.b16 %v4998
        %v6202 = vunpack.c.h.b16 %v4998
        %v6203 = vunpack.c.l.b16 %v4999
        %v6204 = vunpack.c.h.b16 %v4999
        %v6205 = vunpack.c.l.b16 %v5000
        %v6206 = vunpack.c.h.b16 %v5000
        %v6207 = vunpack.c.l.b16 %v5001
        %v6208 = vunpack.c.h.b16 %v5001
        %v6209 = vunpack.c.l.b16 %v5002
        %v6210 = vunpack.c.h.b16 %v5002
        %v6211 = vunpack.c.l.b16 %v5003
        %v6212 = vunpack.c.h.b16 %v5003
        %v6213 = vunpack.c.l.b16 %v5004
        %v6214 = vunpack.c.h.b16 %v5004
        %v6215 = vunpack.c.l.b16 %v5005
        %v6216 = vunpack.c.h.b16 %v5005
        %v6217 = vunpack.c.l.b16 %v5006
        %v6218 = vunpack.c.h.b16 %v5006
        %v6219 = vunpack.c.l.b16 %v5007
        %v6220 = vunpack.c.h.b16 %v5007
        %v6221 = vunpack.c.l.b16 %v5008
        %v6222 = vunpack.c.h.b16 %v5008
        %v6223 = vunpack.c.l.b16 %v5009
        %v6224 = vunpack.c.h.b16 %v5009
        %v6225 = vunpack.c.l.b16 %v5010
        %v6226 = vunpack.c.h.b16 %v5010
        %v6227 = vunpack.c.l.b16 %v5011
        %v6228 = vunpack.c.h.b16 %v5011
        %v6229 = vunpack.c.l.b16 %v5012
        %v6230 = vunpack.c.h.b16 %v5012
        %v6231 = vunpack.c.l.b16 %v5013
        %v6232 = vunpack.c.h.b16 %v5013
        %v6233 = vunpack.c.l.b16 %v5014
        %v6234 = vunpack.c.h.b16 %v5014
        %v6235 = vunpack.c.l.b16 %v5015
        %v6236 = vunpack.c.h.b16 %v5015
        %v6237 = vunpack.c.l.b16 %v5016
        %v6238 = vunpack.c.h.b16 %v5016
        %v6239 = vunpack.c.l.b16 %v5017
        %v6240 = vunpack.c.h.b16 %v5017
        %v6241 = vunpack.c.l.b16 %v5018
        %v6242 = vunpack.c.h.b16 %v5018
        %v6243 = vunpack.c.l.b16 %v5019
        %v6244 = vunpack.c.h.b16 %v5019
        %v6245 = vunpack.c.l.b16 %v5020
        %v6246 = vunpack.c.h.b16 %v5020
        %v6247 = vunpack.c.l.b16 %v5021
        %v6248 = vunpack.c.h.b16 %v5021
        %v6249 = vunpack.c.l.b16 %v5022
        %v6250 = vunpack.c.h.b16 %v5022
        %v6251 = vunpack.c.l.b16 %v5023
        %v6252 = vunpack.c.h.b16 %v5023
        %v6253 = vunpack.c.l.b16 %v5024
        %v6254 = vunpack.c.h.b16 %v5024
        %v6255 = vunpack.c.l.b16 %v5025
        %v6256 = vunpack.c.h.b16 %v5025
        %v6257 = vunpack.c.l.b16 %v5026
        %v6258 = vunpack.c.h.b16 %v5026
        %v6259 = vunpack.c.l.b16 %v5027
        %v6260 = vunpack.c.h.b16 %v5027
        %v6261 = vunpack.c.l.b16 %v5028
        %v6262 = vunpack.c.h.b16 %v5028
        %v6263 = vunpack.c.l.b16 %v5029
        %v6264 = vunpack.c.h.b16 %v5029
        %v6265 = vunpack.c.l.b16 %v5030
        %v6266 = vunpack.c.h.b16 %v5030
        %v6267 = vunpack.c.l.b16 %v5031
        %v6268 = vunpack.c.h.b16 %v5031
        %v6269 = vunpack.c.l.b16 %v5032
        %v6270 = vunpack.c.h.b16 %v5032
        %v6271 = vunpack.c.l.b16 %v5033
        %v6272 = vunpack.c.h.b16 %v5033
        %v6273 = vunpack.c.l.b16 %v5034
        %v6274 = vunpack.c.h.b16 %v5034
        %v6275 = vunpack.c.l.b16 %v5035
        %v6276 = vunpack.c.h.b16 %v5035
        %v6277 = vunpack.c.l.b16 %v5036
        %v6278 = vunpack.c.h.b16 %v5036
        %v6279 = vunpack.c.l.b16 %v5037
        %v6280 = vunpack.c.h.b16 %v5037
        %v6281 = vunpack.c.l.b16 %v5038
        %v6282 = vunpack.c.h.b16 %v5038
        %v6283 = vunpack.c.l.b16 %v5039
        %v6284 = vunpack.c.h.b16 %v5039
        %v6285 = vunpack.c.l.b16 %v5040
        %v6286 = vunpack.c.h.b16 %v5040
        %v6287 = vunpack.c.l.b16 %v5041
        %v6288 = vunpack.c.h.b16 %v5041
        %v6289 = vunpack.c.l.b16 %v5042
        %v6290 = vunpack.c.h.b16 %v5042
        %v6291 = vunpack.c.l.b16 %v5043
        %v6292 = vunpack.c.h.b16 %v5043
        %v6293 = vunpack.c.l.b16 %v5044
        %v6294 = vunpack.c.h.b16 %v5044
        %v6295 = vunpack.c.l.b16 %v5045
        %v6296 = vunpack.c.h.b16 %v5045
        %v6297 = vunpack.c.l.b16 %v5046
        %v6298 = vunpack.c.h.b16 %v5046
        %v6299 = vunpack.c.l.b16 %v5047
        %v6300 = vunpack.c.h.b16 %v5047
        %v6301 = vunpack.c.l.b16 %v5048
        %v6302 = vunpack.c.h.b16 %v5048
        %v6303 = vunpack.c.l.b16 %v5049
        %v6304 = vunpack.c.h.b16 %v5049
        %v6305 = vunpack.c.l.b16 %v5050
        %v6306 = vunpack.c.h.b16 %v5050
        %v6307 = vunpack.c.l.b16 %v5051
        %v6308 = vunpack.c.h.b16 %v5051
        %v6309 = vunpack.c.l.b16 %v5052
        %v6310 = vunpack.c.h.b16 %v5052
        %v6311 = vunpack.c.l.b16 %v5053
        %v6312 = vunpack.c.h.b16 %v5053
        %v6313 = vunpack.c.l.b16 %v5054
        %v6314 = vunpack.c.h.b16 %v5054
        %v6315 = vunpack.c.l.b16 %v5055
        %v6316 = vunpack.c.h.b16 %v5055
        %v6317 = vunpack.c.l.b16 %v5056
        %v6318 = vunpack.c.h.b16 %v5056
        %v6319 = vunpack.c.l.b16 %v5057
        %v6320 = vunpack.c.h.b16 %v5057
        %v6321 = vunpack.c.l.b16 %v5058
        %v6322 = vunpack.c.h.b16 %v5058
        %v6323 = vunpack.c.l.b16 %v5059
        %v6324 = vunpack.c.h.b16 %v5059
        %v6325 = vunpack.c.l.b16 %v5060
        %v6326 = vunpack.c.h.b16 %v5060
        %v6327 = vunpack.c.l.b16 %v5061
        %v6328 = vunpack.c.h.b16 %v5061
        %v6329 = vunpack.c.l.b16 %v5062
        %v6330 = vunpack.c.h.b16 %v5062
        %v6331 = vunpack.c.l.b16 %v5063
        %v6332 = vunpack.c.h.b16 %v5063
        %v6333 = vunpack.c.l.b16 %v5064
        %v6334 = vunpack.c.h.b16 %v5064
        %v6335 = vunpack.c.l.b16 %v5065
        %v6336 = vunpack.c.h.b16 %v5065
        %v6337 = vunpack.c.l.b16 %v5066
        %v6338 = vunpack.c.h.b16 %v5066
        %v6339 = vunpack.c.l.b16 %v5067
        %v6340 = vunpack.c.h.b16 %v5067
        %v6341 = vunpack.c.l.b16 %v5068
        %v6342 = vunpack.c.h.b16 %v5068
        %v6343 = vunpack.c.l.b16 %v5069
        %v6344 = vunpack.c.h.b16 %v5069
        %v6345 = vunpack.c.l.b16 %v5070
        %v6346 = vunpack.c.h.b16 %v5070
        %v6347 = vunpack.c.l.b16 %v5071
        %v6348 = vunpack.c.h.b16 %v5071
        %v6349 = vunpack.c.l.b16 %v5072
        %v6350 = vunpack.c.h.b16 %v5072
        %v6351 = vunpack.c.l.b16 %v5073
        %v6352 = vunpack.c.h.b16 %v5073
        %v6353 = vunpack.c.l.b16 %v5074
        %v6354 = vunpack.c.h.b16 %v5074
        %v6355 = vunpack.c.l.b16 %v5075
        %v6356 = vunpack.c.h.b16 %v5075
        %v6357 = vunpack.c.l.b16 %v5076
        %v6358 = vunpack.c.h.b16 %v5076
        %v6359 = vunpack.c.l.b16 %v5077
        %v6360 = vunpack.c.h.b16 %v5077
        %v6361 = vunpack.c.l.b16 %v5078
        %v6362 = vunpack.c.h.b16 %v5078
        %v6363 = vunpack.c.l.b16 %v5079
        %v6364 = vunpack.c.h.b16 %v5079
        %v6365 = vunpack.c.l.b16 %v5080
        %v6366 = vunpack.c.h.b16 %v5080
        %v6367 = vunpack.c.l.b16 %v5081
        %v6368 = vunpack.c.h.b16 %v5081
        %v6369 = vunpack.c.l.b16 %v5082
        %v6370 = vunpack.c.h.b16 %v5082
        %v6371 = vunpack.c.l.b16 %v5083
        %v6372 = vunpack.c.h.b16 %v5083
        %v6373 = vunpack.c.l.b16 %v5084
        %v6374 = vunpack.c.h.b16 %v5084
        %v6375 = vunpack.c.l.b16 %v5085
        %v6376 = vunpack.c.h.b16 %v5085
        %v6377 = vunpack.c.l.b16 %v5086
        %v6378 = vunpack.c.h.b16 %v5086
        %v6379 = vunpack.c.l.b16 %v5087
        %v6380 = vunpack.c.h.b16 %v5087
        %v6381 = vunpack.c.l.b16 %v5088
        %v6382 = vunpack.c.h.b16 %v5088
        %v6383 = vunpack.c.l.b16 %v5089
        %v6384 = vunpack.c.h.b16 %v5089
        %v6385 = vunpack.c.l.b16 %v5090
        %v6386 = vunpack.c.h.b16 %v5090
        %v6387 = vunpack.c.l.b16 %v5091
        %v6388 = vunpack.c.h.b16 %v5091
        %v6389 = vunpack.c.l.b16 %v5092
        %v6390 = vunpack.c.h.b16 %v5092
        %v6391 = vunpack.c.l.b16 %v5093
        %v6392 = vunpack.c.h.b16 %v5093
        %v6393 = vunpack.c.l.b16 %v5094
        %v6394 = vunpack.c.h.b16 %v5094
        %v6395 = vunpack.c.l.b16 %v5095
        %v6396 = vunpack.c.h.b16 %v5095
        %v6397 = vunpack.c.l.b16 %v5096
        %v6398 = vunpack.c.h.b16 %v5096
        %v6399 = vunpack.c.l.b16 %v5097
        %v6400 = vunpack.c.h.b16 %v5097
        %v6401 = vunpack.c.l.b16 %v5098
        %v6402 = vunpack.c.h.b16 %v5098
        %v6403 = vunpack.c.l.b16 %v5099
        %v6404 = vunpack.c.h.b16 %v5099
        %v6405 = vunpack.c.l.b16 %v5100
        %v6406 = vunpack.c.h.b16 %v5100
        %v6407 = vunpack.c.l.b16 %v5101
        %v6408 = vunpack.c.h.b16 %v5101
        %v6409 = vunpack.c.l.b16 %v5102
        %v6410 = vunpack.c.h.b16 %v5102
        %v6411 = vunpack.c.l.b16 %v5103
        %v6412 = vunpack.c.h.b16 %v5103
        %v6413 = vunpack.c.l.b16 %v5104
        %v6414 = vunpack.c.h.b16 %v5104
        %v6415 = vunpack.c.l.b16 %v5105
        %v6416 = vunpack.c.h.b16 %v5105
        %v6417 = vunpack.c.l.b16 %v5106
        %v6418 = vunpack.c.h.b16 %v5106
        %v6419 = vunpack.c.l.b16 %v5107
        %v6420 = vunpack.c.h.b16 %v5107
        %v6421 = vunpack.c.l.b16 %v5108
        %v6422 = vunpack.c.h.b16 %v5108
        %v6423 = vunpack.c.l.b16 %v5109
        %v6424 = vunpack.c.h.b16 %v5109
        %v6425 = vunpack.c.l.b16 %v5110
        %v6426 = vunpack.c.h.b16 %v5110
        %v6427 = vunpack.c.l.b16 %v5111
        %v6428 = vunpack.c.h.b16 %v5111
        %v6429 = vunpack.c.l.b16 %v5112
        %v6430 = vunpack.c.h.b16 %v5112
        %v6431 = vunpack.c.l.b16 %v5113
        %v6432 = vunpack.c.h.b16 %v5113
        %v6433 = vunpack.c.l.b16 %v5114
        %v6434 = vunpack.c.h.b16 %v5114
        %v6435 = vunpack.c.l.b16 %v5115
        %v6436 = vunpack.c.h.b16 %v5115
        %v6437 = vunpack.c.l.b16 %v5116
        %v6438 = vunpack.c.h.b16 %v5116
        %v6439 = vunpack.c.l.b16 %v5117
        %v6440 = vunpack.c.h.b16 %v5117
        %v6441 = vunpack.c.l.b16 %v5118
        %v6442 = vunpack.c.h.b16 %v5118
        %v6443 = vunpack.c.l.b16 %v5119
        %v6444 = vunpack.c.h.b16 %v5119
        %v6445 = vunpack.c.l.b16 %v5120
        %v6446 = vunpack.c.h.b16 %v5120
        %v6447 = vunpack.c.l.b16 %v5121
        %v6448 = vunpack.c.h.b16 %v5121
        %v6449 = vunpack.c.l.b16 %v5122
        %v6450 = vunpack.c.h.b16 %v5122
        %v6451 = vunpack.c.l.b16 %v5123
        %v6452 = vunpack.c.h.b16 %v5123
        %v6453 = vunpack.c.l.b16 %v5124
        %v6454 = vunpack.c.h.b16 %v5124
        %v6455 = vunpack.c.l.b16 %v5125
        %v6456 = vunpack.c.h.b16 %v5125
        %v6457 = vunpack.c.l.b16 %v5126
        %v6458 = vunpack.c.h.b16 %v5126
        %v6459 = vunpack.c.l.b16 %v5127
        %v6460 = vunpack.c.h.b16 %v5127
        %v6461 = vunpack.c.l.b16 %v5128
        %v6462 = vunpack.c.h.b16 %v5128
        %v6463 = vunpack.c.l.b16 %v5129
        %v6464 = vunpack.c.h.b16 %v5129
        %v6465 = vunpack.c.l.b16 %v5130
        %v6466 = vunpack.c.h.b16 %v5130
        %v6467 = vunpack.c.l.b16 %v5131
        %v6468 = vunpack.c.h.b16 %v5131
        %v6469 = vunpack.c.l.b16 %v5132
        %v6470 = vunpack.c.h.b16 %v5132
        %v6471 = vunpack.c.l.b16 %v5133
        %v6472 = vunpack.c.h.b16 %v5133
        %v6473 = vunpack.c.l.b16 %v5134
        %v6474 = vunpack.c.h.b16 %v5134
        %v6475 = vunpack.c.l.b16 %v5135
        %v6476 = vunpack.c.h.b16 %v5135
        %v6477 = vunpack.c.l.b16 %v5136
        %v6478 = vunpack.c.h.b16 %v5136
        %v6479 = vunpack.c.l.b16 %v5137
        %v6480 = vunpack.c.h.b16 %v5137
        %v6481 = vunpack.c.l.b16 %v5138
        %v6482 = vunpack.c.h.b16 %v5138
        %v6483 = vunpack.c.l.b16 %v5139
        %v6484 = vunpack.c.h.b16 %v5139
        %v6485 = vunpack.c.l.b16 %v5140
        %v6486 = vunpack.c.h.b16 %v5140
        %v6487 = vunpack.c.l.b16 %v5141
        %v6488 = vunpack.c.h.b16 %v5141
        %v6489 = vunpack.c.l.b16 %v5142
        %v6490 = vunpack.c.h.b16 %v5142
        %v6491 = vunpack.c.l.b16 %v5143
        %v6492 = vunpack.c.h.b16 %v5143
        %v6493 = vunpack.c.l.b16 %v5144
        %v6494 = vunpack.c.h.b16 %v5144
        %v6495 = vunpack.c.l.b16 %v5145
        %v6496 = vunpack.c.h.b16 %v5145
        %v6497 = vunpack.c.l.b16 %v5146
        %v6498 = vunpack.c.h.b16 %v5146
        %v6499 = vunpack.c.l.b16 %v5147
        %v6500 = vunpack.c.h.b16 %v5147
        %v6501 = vunpack.c.l.b16 %v5148
        %v6502 = vunpack.c.h.b16 %v5148
        %v6503 = vunpack.c.l.b16 %v5149
        %v6504 = vunpack.c.h.b16 %v5149
        %v6505 = vunpack.c.l.b16 %v5150
        %v6506 = vunpack.c.h.b16 %v5150
        %v6507 = vunpack.c.l.b16 %v5151
        %v6508 = vunpack.c.h.b16 %v5151
        %v6509 = vunpack.c.l.b16 %v5152
        %v6510 = vunpack.c.h.b16 %v5152
        %v6511 = vunpack.c.l.b16 %v5153
        %v6512 = vunpack.c.h.b16 %v5153
        %v6513 = vunpack.c.l.b16 %v5154
        %v6514 = vunpack.c.h.b16 %v5154
        %v6515 = vunpack.c.l.b16 %v5155
        %v6516 = vunpack.c.h.b16 %v5155
        %v6517 = vunpack.c.l.b16 %v5156
        %v6518 = vunpack.c.h.b16 %v5156
        %v6519 = vunpack.c.l.b16 %v5157
        %v6520 = vunpack.c.h.b16 %v5157
        %v6521 = vunpack.c.l.b16 %v5158
        %v6522 = vunpack.c.h.b16 %v5158
        %v6523 = vunpack.c.l.b16 %v5159
        %v6524 = vunpack.c.h.b16 %v5159
        %v6525 = vunpack.c.l.b16 %v5160
        %v6526 = vunpack.c.h.b16 %v5160
        %v6527 = vunpack.c.l.b16 %v5161
        %v6528 = vunpack.c.h.b16 %v5161
        %v6529 = vunpack.c.l.b16 %v5162
        %v6530 = vunpack.c.h.b16 %v5162
        %v6531 = vunpack.c.l.b16 %v5163
        %v6532 = vunpack.c.h.b16 %v5163
        %v6533 = vunpack.c.l.b16 %v5164
        %v6534 = vunpack.c.h.b16 %v5164
        %v6535 = vunpack.c.l.b16 %v5165
        %v6536 = vunpack.c.h.b16 %v5165
        %v6537 = vunpack.c.l.b16 %v5166
        %v6538 = vunpack.c.h.b16 %v5166
        %v6539 = vunpack.c.l.b16 %v5167
        %v6540 = vunpack.c.h.b16 %v5167
        %v6541 = vunpack.c.l.b16 %v5168
        %v6542 = vunpack.c.h.b16 %v5168
        %v6543 = vunpack.c.l.b16 %v5169
        %v6544 = vunpack.c.h.b16 %v5169
        %v6545 = vunpack.c.l.b16 %v5170
        %v6546 = vunpack.c.h.b16 %v5170
        %v6547 = vunpack.c.l.b16 %v5171
        %v6548 = vunpack.c.h.b16 %v5171
        %v6549 = vunpack.c.l.b16 %v5172
        %v6550 = vunpack.c.h.b16 %v5172
        %v6551 = vunpack.c.l.b16 %v5173
        %v6552 = vunpack.c.h.b16 %v5173
        %v6553 = vunpack.c.l.b16 %v5174
        %v6554 = vunpack.c.h.b16 %v5174
        %v6555 = vunpack.c.l.b16 %v5175
        %v6556 = vunpack.c.h.b16 %v5175
        %v6557 = vunpack.c.l.b16 %v5176
        %v6558 = vunpack.c.h.b16 %v5176
        %v6559 = vunpack.c.l.b16 %v5177
        %v6560 = vunpack.c.h.b16 %v5177
        %v6561 = vunpack.c.l.b16 %v5178
        %v6562 = vunpack.c.h.b16 %v5178
        %v6563 = vunpack.c.l.b16 %v5179
        %v6564 = vunpack.c.h.b16 %v5179
        %v6565 = vunpack.c.l.b16 %v5180
        %v6566 = vunpack.c.h.b16 %v5180
        %v6567 = vunpack.c.l.b16 %v5181
        %v6568 = vunpack.c.h.b16 %v5181
        %v6569 = vunpack.c.l.b16 %v5182
        %v6570 = vunpack.c.h.b16 %v5182
        %v6571 = vunpack.c.l.b16 %v5183
        %v6572 = vunpack.c.h.b16 %v5183
        %v6573 = vunpack.c.l.b16 %v5184
        %v6574 = vunpack.c.h.b16 %v5184
        %v6575 = vunpack.c.l.b16 %v5185
        %v6576 = vunpack.c.h.b16 %v5185
        %v6577 = vunpack.c.l.b16 %v5186
        %v6578 = vunpack.c.h.b16 %v5186
        %v6579 = vunpack.c.l.b16 %v5187
        %v6580 = vunpack.c.h.b16 %v5187
        %v6581 = vunpack.c.l.b16 %v5188
        %v6582 = vunpack.c.h.b16 %v5188
        %v6583 = vunpack.c.l.b16 %v5189
        %v6584 = vunpack.c.h.b16 %v5189
        %v6585 = vunpack.c.l.b16 %v5190
        %v6586 = vunpack.c.h.b16 %v5190
        %v6587 = vunpack.c.l.b16 %v5191
        %v6588 = vunpack.c.h.b16 %v5191
        %v6589 = vunpack.c.l.b16 %v5192
        %v6590 = vunpack.c.h.b16 %v5192
        %v6591 = vunpack.c.l.b16 %v5193
        %v6592 = vunpack.c.h.b16 %v5193
        %v6593 = vunpack.c.l.b16 %v5194
        %v6594 = vunpack.c.h.b16 %v5194
        %v6595 = vunpack.c.l.b16 %v5195
        %v6596 = vunpack.c.h.b16 %v5195
        %v6597 = vunpack.c.l.b16 %v5196
        %v6598 = vunpack.c.h.b16 %v5196
        %v6599 = vunpack.c.l.b16 %v5197
        %v6600 = vunpack.c.h.b16 %v5197
        %v6601 = vunpack.c.l.b16 %v5198
        %v6602 = vunpack.c.h.b16 %v5198
        %v6603 = vunpack.c.l.b16 %v5199
        %v6604 = vunpack.c.h.b16 %v5199
        %v6605 = vunpack.c.l.b16 %v5200
        %v6606 = vunpack.c.h.b16 %v5200
        %v6607 = vunpack.c.l.b16 %v5201
        %v6608 = vunpack.c.h.b16 %v5201
        %v6609 = vunpack.c.l.b16 %v5202
        %v6610 = vunpack.c.h.b16 %v5202
        %v6611 = vunpack.c.l.b16 %v5203
        %v6612 = vunpack.c.h.b16 %v5203
        %v6613 = vunpack.c.l.b16 %v5204
        %v6614 = vunpack.c.h.b16 %v5204
        %v6615 = vunpack.c.l.b16 %v5205
        %v6616 = vunpack.c.h.b16 %v5205
        %v6617 = vunpack.c.l.b16 %v5206
        %v6618 = vunpack.c.h.b16 %v5206
        %v6619 = vunpack.c.l.b16 %v5207
        %v6620 = vunpack.c.h.b16 %v5207
        %v6621 = vunpack.c.l.b16 %v5208
        %v6622 = vunpack.c.h.b16 %v5208
        %v6623 = vunpack.c.l.b16 %v5209
        %v6624 = vunpack.c.h.b16 %v5209
        %v6625 = vunpack.c.l.b16 %v5210
        %v6626 = vunpack.c.h.b16 %v5210
        %v6627 = vunpack.c.l.b16 %v5211
        %v6628 = vunpack.c.h.b16 %v5211
        %v6629 = vunpack.c.l.b16 %v5212
        %v6630 = vunpack.c.h.b16 %v5212
        %v6631 = vunpack.c.l.b16 %v5213
        %v6632 = vunpack.c.h.b16 %v5213
        %v6633 = vunpack.c.l.b16 %v5214
        %v6634 = vunpack.c.h.b16 %v5214
        %v6635 = vunpack.c.l.b16 %v5215
        %v6636 = vunpack.c.h.b16 %v5215
        %v6637 = vunpack.c.l.b16 %v5216
        %v6638 = vunpack.c.h.b16 %v5216
        %v6639 = vunpack.c.l.b16 %v5217
        %v6640 = vunpack.c.h.b16 %v5217
        %v6641 = vunpack.c.l.b16 %v5218
        %v6642 = vunpack.c.h.b16 %v5218
        %v6643 = vunpack.c.l.b16 %v5219
        %v6644 = vunpack.c.h.b16 %v5219
        %v6645 = vunpack.c.l.b16 %v5220
        %v6646 = vunpack.c.h.b16 %v5220
        %v6647 = vunpack.c.l.b16 %v5221
        %v6648 = vunpack.c.h.b16 %v5221
        %v6649 = vunpack.c.l.b16 %v5222
        %v6650 = vunpack.c.h.b16 %v5222
        %v6651 = vunpack.c.l.b16 %v5223
        %v6652 = vunpack.c.h.b16 %v5223
        %v6653 = vunpack.c.l.b16 %v5224
        %v6654 = vunpack.c.h.b16 %v5224
        %v6655 = vunpack.c.l.b16 %v5225
        %v6656 = vunpack.c.h.b16 %v5225
        %v6657 = vunpack.c.l.b16 %v5226
        %v6658 = vunpack.c.h.b16 %v5226
        %v6659 = vunpack.c.l.b16 %v5227
        %v6660 = vunpack.c.h.b16 %v5227
        %v6661 = vunpack.c.l.b16 %v5228
        %v6662 = vunpack.c.h.b16 %v5228
        %v6663 = vunpack.c.l.b16 %v5229
        %v6664 = vunpack.c.h.b16 %v5229
        %v6665 = vunpack.c.l.b16 %v5230
        %v6666 = vunpack.c.h.b16 %v5230
        %v6667 = vunpack.c.l.b16 %v5231
        %v6668 = vunpack.c.h.b16 %v5231
        %v6669 = vunpack.c.l.b16 %v5232
        %v6670 = vunpack.c.h.b16 %v5232
        %v6671 = vunpack.c.l.b16 %v5233
        %v6672 = vunpack.c.h.b16 %v5233
        %v6673 = vunpack.c.l.b16 %v5234
        %v6674 = vunpack.c.h.b16 %v5234
        %v6675 = vunpack.c.l.b16 %v5235
        %v6676 = vunpack.c.h.b16 %v5235
        %v6677 = vunpack.c.l.b16 %v5236
        %v6678 = vunpack.c.h.b16 %v5236
        %v6679 = vunpack.c.l.b16 %v5237
        %v6680 = vunpack.c.h.b16 %v5237
        %v6681 = vunpack.c.l.b16 %v5238
        %v6682 = vunpack.c.h.b16 %v5238
        %v6683 = vunpack.c.l.b16 %v5239
        %v6684 = vunpack.c.h.b16 %v5239
        %v6685 = vunpack.c.l.b16 %v5240
        %v6686 = vunpack.c.h.b16 %v5240
        %v6687 = vunpack.c.l.b16 %v5241
        %v6688 = vunpack.c.h.b16 %v5241
        %v6689 = vunpack.c.l.b16 %v5242
        %v6690 = vunpack.c.h.b16 %v5242
        %v6691 = vunpack.c.l.b16 %v5243
        %v6692 = vunpack.c.h.b16 %v5243
        %v6693 = vunpack.c.l.b16 %v5244
        %v6694 = vunpack.c.h.b16 %v5244
        %v6695 = vunpack.c.l.b16 %v5245
        %v6696 = vunpack.c.h.b16 %v5245
        %v6697 = vunpack.c.l.b16 %v5246
        %v6698 = vunpack.c.h.b16 %v5246
        %v6699 = vunpack.c.l.b16 %v5247
        %v6700 = vunpack.c.h.b16 %v5247
        %v6701 = vunpack.c.l.b16 %v5248
        %v6702 = vunpack.c.h.b16 %v5248
        %v6703 = vunpack.c.l.b16 %v5249
        %v6704 = vunpack.c.h.b16 %v5249
        %v6705 = vunpack.c.l.b16 %v5250
        %v6706 = vunpack.c.h.b16 %v5250
        %v6707 = vunpack.c.l.b16 %v5251
        %v6708 = vunpack.c.h.b16 %v5251
        %v6709 = vunpack.c.l.b16 %v5252
        %v6710 = vunpack.c.h.b16 %v5252
        %v6711 = vunpack.c.l.b16 %v5253
        %v6712 = vunpack.c.h.b16 %v5253
        %v6713 = vunpack.c.l.b16 %v5254
        %v6714 = vunpack.c.h.b16 %v5254
        %v6715 = vunpack.c.l.b16 %v5255
        %v6716 = vunpack.c.h.b16 %v5255
        %v6717 = vunpack.c.l.b16 %v5256
        %v6718 = vunpack.c.h.b16 %v5256
        %v6719 = vunpack.c.l.b16 %v5257
        %v6720 = vunpack.c.h.b16 %v5257
        %v6721 = vunpack.c.l.b16 %v5258
        %v6722 = vunpack.c.h.b16 %v5258
        %v6723 = vunpack.c.l.b16 %v5259
        %v6724 = vunpack.c.h.b16 %v5259
        %v6725 = vunpack.c.l.b16 %v5260
        %v6726 = vunpack.c.h.b16 %v5260
        %v6727 = vunpack.c.l.b16 %v5261
        %v6728 = vunpack.c.h.b16 %v5261
        %v6729 = vunpack.c.l.b16 %v5262
        %v6730 = vunpack.c.h.b16 %v5262
        %v6731 = vunpack.c.l.b16 %v5263
        %v6732 = vunpack.c.h.b16 %v5263
        %v6733 = vunpack.c.l.b16 %v5264
        %v6734 = vunpack.c.h.b16 %v5264
        %v6735 = vunpack.c.l.b16 %v5265
        %v6736 = vunpack.c.h.b16 %v5265
        %v6737 = vunpack.c.l.b16 %v5266
        %v6738 = vunpack.c.h.b16 %v5266
        %v6739 = vunpack.c.l.b16 %v5267
        %v6740 = vunpack.c.h.b16 %v5267
        %v6741 = vunpack.c.l.b16 %v5268
        %v6742 = vunpack.c.h.b16 %v5268
        %v6743 = vunpack.c.l.b16 %v5269
        %v6744 = vunpack.c.h.b16 %v5269
        %v6745 = vunpack.c.l.b16 %v5270
        %v6746 = vunpack.c.h.b16 %v5270
        %v6747 = vunpack.c.l.b16 %v5271
        %v6748 = vunpack.c.h.b16 %v5271
        %v6749 = vunpack.c.l.b16 %v5272
        %v6750 = vunpack.c.h.b16 %v5272
        %v6751 = vunpack.c.l.b16 %v5273
        %v6752 = vunpack.c.h.b16 %v5273
        %v6753 = vunpack.c.l.b16 %v5274
        %v6754 = vunpack.c.h.b16 %v5274
        %v6755 = vunpack.c.l.b16 %v5275
        %v6756 = vunpack.c.h.b16 %v5275
        %v6757 = vunpack.c.l.b16 %v5276
        %v6758 = vunpack.c.h.b16 %v5276
        %v6759 = vunpack.c.l.b16 %v5277
        %v6760 = vunpack.c.h.b16 %v5277
        %v6761 = vunpack.c.l.b16 %v5278
        %v6762 = vunpack.c.h.b16 %v5278
        %v6763 = vunpack.c.l.b16 %v5279
        %v6764 = vunpack.c.h.b16 %v5279
        %v6765 = vunpack.c.l.b16 %v5280
        %v6766 = vunpack.c.h.b16 %v5280
        %v6767 = vunpack.c.l.b16 %v5281
        %v6768 = vunpack.c.h.b16 %v5281
        %v6769 = vunpack.c.l.b16 %v5282
        %v6770 = vunpack.c.h.b16 %v5282
        %v6771 = vunpack.c.l.b16 %v5283
        %v6772 = vunpack.c.h.b16 %v5283
        %v6773 = vunpack.c.l.b16 %v5284
        %v6774 = vunpack.c.h.b16 %v5284
        %v6775 = vunpack.c.l.b16 %v5285
        %v6776 = vunpack.c.h.b16 %v5285
        %v6777 = vunpack.c.l.b16 %v5286
        %v6778 = vunpack.c.h.b16 %v5286
        %v6779 = vunpack.c.l.b16 %v5287
        %v6780 = vunpack.c.h.b16 %v5287
        %v6781 = vunpack.c.l.b16 %v5288
        %v6782 = vunpack.c.h.b16 %v5288
        %v6783 = vunpack.c.l.b16 %v5289
        %v6784 = vunpack.c.h.b16 %v5289
        %v6785 = vunpack.c.l.b16 %v5290
        %v6786 = vunpack.c.h.b16 %v5290
        %v6787 = vunpack.c.l.b16 %v5291
        %v6788 = vunpack.c.h.b16 %v5291
        %v6789 = vunpack.c.l.b16 %v5292
        %v6790 = vunpack.c.h.b16 %v5292
        %v6791 = vunpack.c.l.b16 %v5293
        %v6792 = vunpack.c.h.b16 %v5293
        %v6793 = vunpack.c.l.b16 %v5294
        %v6794 = vunpack.c.h.b16 %v5294
        %v6795 = vunpack.c.l.b16 %v5295
        %v6796 = vunpack.c.h.b16 %v5295
        %v6797 = vunpack.c.l.b16 %v5296
        %v6798 = vunpack.c.h.b16 %v5296
        %v6799 = vunpack.c.l.b16 %v5297
        %v6800 = vunpack.c.h.b16 %v5297
        %v6801 = vunpack.c.l.b16 %v5298
        %v6802 = vunpack.c.h.b16 %v5298
        %v6803 = vunpack.c.l.b16 %v5299
        %v6804 = vunpack.c.h.b16 %v5299
        %v6805 = vunpack.c.l.b16 %v5300
        %v6806 = vunpack.c.h.b16 %v5300
        %v6807 = vunpack.c.l.b16 %v5301
        %v6808 = vunpack.c.h.b16 %v5301
        %v6809 = vunpack.c.l.b16 %v5302
        %v6810 = vunpack.c.h.b16 %v5302
        %v6811 = vunpack.c.l.b16 %v5303
        %v6812 = vunpack.c.h.b16 %v5303
        %v6813 = vunpack.c.l.b16 %v5304
        %v6814 = vunpack.c.h.b16 %v5304
        %v6815 = vunpack.c.l.b16 %v5305
        %v6816 = vunpack.c.h.b16 %v5305
        %v6817 = vunpack.c.l.b16 %v5306
        %v6818 = vunpack.c.h.b16 %v5306
        %v6819 = vunpack.c.l.b16 %v5307
        %v6820 = vunpack.c.h.b16 %v5307
        %v6821 = vunpack.c.l.b16 %v5308
        %v6822 = vunpack.c.h.b16 %v5308
        %v6823 = vunpack.c.l.b16 %v5309
        %v6824 = vunpack.c.h.b16 %v5309
        %v6825 = vunpack.c.l.b16 %v5310
        %v6826 = vunpack.c.h.b16 %v5310
        %v6827 = vunpack.c.l.b16 %v5311
        %v6828 = vunpack.c.h.b16 %v5311
        %v6829 = vunpack.c.l.b16 %v5312
        %v6830 = vunpack.c.h.b16 %v5312
        %v6831 = vunpack.c.l.b16 %v5313
        %v6832 = vunpack.c.h.b16 %v5313
        %v6833 = vunpack.c.l.b16 %v5314
        %v6834 = vunpack.c.h.b16 %v5314
        %v6835 = vunpack.c.l.b16 %v5315
        %v6836 = vunpack.c.h.b16 %v5315
        %v6837 = vunpack.c.l.b16 %v5316
        %v6838 = vunpack.c.h.b16 %v5316
        %v6839 = vunpack.c.l.b16 %v5317
        %v6840 = vunpack.c.h.b16 %v5317
        %v6841 = vunpack.c.l.b16 %v5318
        %v6842 = vunpack.c.h.b16 %v5318
        %v6843 = vunpack.c.l.b16 %v5319
        %v6844 = vunpack.c.h.b16 %v5319
        %v6845 = vunpack.c.l.b16 %v5320
        %v6846 = vunpack.c.h.b16 %v5320
        %v6847 = vunpack.c.l.b16 %v5321
        %v6848 = vunpack.c.h.b16 %v5321
        %v6849 = vunpack.c.l.b16 %v5322
        %v6850 = vunpack.c.h.b16 %v5322
        %v6851 = vunpack.c.l.b16 %v5323
        %v6852 = vunpack.c.h.b16 %v5323
        %v6853 = vunpack.c.l.b16 %v5324
        %v6854 = vunpack.c.h.b16 %v5324
        %v6855 = vunpack.c.l.b16 %v5325
        %v6856 = vunpack.c.h.b16 %v5325
        %v6857 = vunpack.c.l.b16 %v5326
        %v6858 = vunpack.c.h.b16 %v5326
        %v6859 = vunpack.c.l.b16 %v5327
        %v6860 = vunpack.c.h.b16 %v5327
        %v6861 = vunpack.c.l.b16 %v5328
        %v6862 = vunpack.c.h.b16 %v5328
        %v6863 = vunpack.c.l.b16 %v5329
        %v6864 = vunpack.c.h.b16 %v5329
        %v6865 = vunpack.c.l.b16 %v5330
        %v6866 = vunpack.c.h.b16 %v5330
        %v6867 = vpack.c.b16 %v5851, %v5843
        %v6868 = vpack.c.b16 %v5852, %v5844
        %v6869 = vpack.c.b16 %v5853, %v5845
        %v6870 = vpack.c.b16 %v5854, %v5846
        %v6871 = vpack.c.b16 %v5855, %v5847
        %v6872 = vpack.c.b16 %v5856, %v5848
        %v6873 = vpack.c.b16 %v5857, %v5849
        %v6874 = vpack.c.b16 %v5858, %v5850
        %v6875 = vpack.c.b16 %v5867, %v5859
        %v6876 = vpack.c.b16 %v5868, %v5860
        %v6877 = vpack.c.b16 %v5869, %v5861
        %v6878 = vpack.c.b16 %v5870, %v5862
        %v6879 = vpack.c.b16 %v5871, %v5863
        %v6880 = vpack.c.b16 %v5872, %v5864
        %v6881 = vpack.c.b16 %v5873, %v5865
        %v6882 = vpack.c.b16 %v5874, %v5866
        %v6883 = vpack.c.b16 %v5883, %v5875
        %v6884 = vpack.c.b16 %v5884, %v5876
        %v6885 = vpack.c.b16 %v5885, %v5877
        %v6886 = vpack.c.b16 %v5886, %v5878
        %v6887 = vpack.c.b16 %v5887, %v5879
        %v6888 = vpack.c.b16 %v5888, %v5880
        %v6889 = vpack.c.b16 %v5889, %v5881
        %v6890 = vpack.c.b16 %v5890, %v5882
        %v6891 = vpack.c.b16 %v5899, %v5891
        %v6892 = vpack.c.b16 %v5900, %v5892
        %v6893 = vpack.c.b16 %v5901, %v5893
        %v6894 = vpack.c.b16 %v5902, %v5894
        %v6895 = vpack.c.b16 %v5903, %v5895
        %v6896 = vpack.c.b16 %v5904, %v5896
        %v6897 = vpack.c.b16 %v5905, %v5897
        %v6898 = vpack.c.b16 %v5906, %v5898
        %v6899 = vpack.c.b16 %v5915, %v5907
        %v6900 = vpack.c.b16 %v5916, %v5908
        %v6901 = vpack.c.b16 %v5917, %v5909
        %v6902 = vpack.c.b16 %v5918, %v5910
        %v6903 = vpack.c.b16 %v5919, %v5911
        %v6904 = vpack.c.b16 %v5920, %v5912
        %v6905 = vpack.c.b16 %v5921, %v5913
        %v6906 = vpack.c.b16 %v5922, %v5914
        %v6907 = vpack.c.b16 %v5931, %v5923
        %v6908 = vpack.c.b16 %v5932, %v5924
        %v6909 = vpack.c.b16 %v5933, %v5925
        %v6910 = vpack.c.b16 %v5934, %v5926
        %v6911 = vpack.c.b16 %v5935, %v5927
        %v6912 = vpack.c.b16 %v5936, %v5928
        %v6913 = vpack.c.b16 %v5937, %v5929
        %v6914 = vpack.c.b16 %v5938, %v5930
        %v6915 = vpack.c.b16 %v5947, %v5939
        %v6916 = vpack.c.b16 %v5948, %v5940
        %v6917 = vpack.c.b16 %v5949, %v5941
        %v6918 = vpack.c.b16 %v5950, %v5942
        %v6919 = vpack.c.b16 %v5951, %v5943
        %v6920 = vpack.c.b16 %v5952, %v5944
        %v6921 = vpack.c.b16 %v5953, %v5945
        %v6922 = vpack.c.b16 %v5954, %v5946
        %v6923 = vpack.c.b16 %v5963, %v5955
        %v6924 = vpack.c.b16 %v5964, %v5956
        %v6925 = vpack.c.b16 %v5965, %v5957
        %v6926 = vpack.c.b16 %v5966, %v5958
        %v6927 = vpack.c.b16 %v5967, %v5959
        %v6928 = vpack.c.b16 %v5968, %v5960
        %v6929 = vpack.c.b16 %v5969, %v5961
        %v6930 = vpack.c.b16 %v5970, %v5962
        %v6931 = vpack.c.b16 %v5979, %v5971
        %v6932 = vpack.c.b16 %v5980, %v5972
        %v6933 = vpack.c.b16 %v5981, %v5973
        %v6934 = vpack.c.b16 %v5982, %v5974
        %v6935 = vpack.c.b16 %v5983, %v5975
        %v6936 = vpack.c.b16 %v5984, %v5976
        %v6937 = vpack.c.b16 %v5985, %v5977
        %v6938 = vpack.c.b16 %v5986, %v5978
        %v6939 = vpack.c.b16 %v5995, %v5987
        %v6940 = vpack.c.b16 %v5996, %v5988
        %v6941 = vpack.c.b16 %v5997, %v5989
        %v6942 = vpack.c.b16 %v5998, %v5990
        %v6943 = vpack.c.b16 %v5999, %v5991
        %v6944 = vpack.c.b16 %v6000, %v5992
        %v6945 = vpack.c.b16 %v6001, %v5993
        %v6946 = vpack.c.b16 %v6002, %v5994
        %v6947 = vpack.c.b16 %v6011, %v6003
        %v6948 = vpack.c.b16 %v6012, %v6004
        %v6949 = vpack.c.b16 %v6013, %v6005
        %v6950 = vpack.c.b16 %v6014, %v6006
        %v6951 = vpack.c.b16 %v6015, %v6007
        %v6952 = vpack.c.b16 %v6016, %v6008
        %v6953 = vpack.c.b16 %v6017, %v6009
        %v6954 = vpack.c.b16 %v6018, %v6010
        %v6955 = vpack.c.b16 %v6027, %v6019
        %v6956 = vpack.c.b16 %v6028, %v6020
        %v6957 = vpack.c.b16 %v6029, %v6021
        %v6958 = vpack.c.b16 %v6030, %v6022
        %v6959 = vpack.c.b16 %v6031, %v6023
        %v6960 = vpack.c.b16 %v6032, %v6024
        %v6961 = vpack.c.b16 %v6033, %v6025
        %v6962 = vpack.c.b16 %v6034, %v6026
        %v6963 = vpack.c.b16 %v6043, %v6035
        %v6964 = vpack.c.b16 %v6044, %v6036
        %v6965 = vpack.c.b16 %v6045, %v6037
        %v6966 = vpack.c.b16 %v6046, %v6038
        %v6967 = vpack.c.b16 %v6047, %v6039
        %v6968 = vpack.c.b16 %v6048, %v6040
        %v6969 = vpack.c.b16 %v6049, %v6041
        %v6970 = vpack.c.b16 %v6050, %v6042
        %v6971 = vpack.c.b16 %v6059, %v6051
        %v6972 = vpack.c.b16 %v6060, %v6052
        %v6973 = vpack.c.b16 %v6061, %v6053
        %v6974 = vpack.c.b16 %v6062, %v6054
        %v6975 = vpack.c.b16 %v6063, %v6055
        %v6976 = vpack.c.b16 %v6064, %v6056
        %v6977 = vpack.c.b16 %v6065, %v6057
        %v6978 = vpack.c.b16 %v6066, %v6058
        %v6979 = vpack.c.b16 %v6075, %v6067
        %v6980 = vpack.c.b16 %v6076, %v6068
        %v6981 = vpack.c.b16 %v6077, %v6069
        %v6982 = vpack.c.b16 %v6078, %v6070
        %v6983 = vpack.c.b16 %v6079, %v6071
        %v6984 = vpack.c.b16 %v6080, %v6072
        %v6985 = vpack.c.b16 %v6081, %v6073
        %v6986 = vpack.c.b16 %v6082, %v6074
        %v6987 = vpack.c.b16 %v6091, %v6083
        %v6988 = vpack.c.b16 %v6092, %v6084
        %v6989 = vpack.c.b16 %v6093, %v6085
        %v6990 = vpack.c.b16 %v6094, %v6086
        %v6991 = vpack.c.b16 %v6095, %v6087
        %v6992 = vpack.c.b16 %v6096, %v6088
        %v6993 = vpack.c.b16 %v6097, %v6089
        %v6994 = vpack.c.b16 %v6098, %v6090
        %v6995 = vpack.c.b16 %v6107, %v6099
        %v6996 = vpack.c.b16 %v6108, %v6100
        %v6997 = vpack.c.b16 %v6109, %v6101
        %v6998 = vpack.c.b16 %v6110, %v6102
        %v6999 = vpack.c.b16 %v6111, %v6103
        %v7000 = vpack.c.b16 %v6112, %v6104
        %v7001 = vpack.c.b16 %v6113, %v6105
        %v7002 = vpack.c.b16 %v6114, %v6106
        %v7003 = vpack.c.b16 %v6123, %v6115
        %v7004 = vpack.c.b16 %v6124, %v6116
        %v7005 = vpack.c.b16 %v6125, %v6117
        %v7006 = vpack.c.b16 %v6126, %v6118
        %v7007 = vpack.c.b16 %v6127, %v6119
        %v7008 = vpack.c.b16 %v6128, %v6120
        %v7009 = vpack.c.b16 %v6129, %v6121
        %v7010 = vpack.c.b16 %v6130, %v6122
        %v7011 = vpack.c.b16 %v6139, %v6131
        %v7012 = vpack.c.b16 %v6140, %v6132
        %v7013 = vpack.c.b16 %v6141, %v6133
        %v7014 = vpack.c.b16 %v6142, %v6134
        %v7015 = vpack.c.b16 %v6143, %v6135
        %v7016 = vpack.c.b16 %v6144, %v6136
        %v7017 = vpack.c.b16 %v6145, %v6137
        %v7018 = vpack.c.b16 %v6146, %v6138
        %v7019 = vpack.c.b16 %v6155, %v6147
        %v7020 = vpack.c.b16 %v6156, %v6148
        %v7021 = vpack.c.b16 %v6157, %v6149
        %v7022 = vpack.c.b16 %v6158, %v6150
        %v7023 = vpack.c.b16 %v6159, %v6151
        %v7024 = vpack.c.b16 %v6160, %v6152
        %v7025 = vpack.c.b16 %v6161, %v6153
        %v7026 = vpack.c.b16 %v6162, %v6154
        %v7027 = vpack.c.b16 %v6171, %v6163
        %v7028 = vpack.c.b16 %v6172, %v6164
        %v7029 = vpack.c.b16 %v6173, %v6165
        %v7030 = vpack.c.b16 %v6174, %v6166
        %v7031 = vpack.c.b16 %v6175, %v6167
        %v7032 = vpack.c.b16 %v6176, %v6168
        %v7033 = vpack.c.b16 %v6177, %v6169
        %v7034 = vpack.c.b16 %v6178, %v6170
        %v7035 = vpack.c.b16 %v6187, %v6179
        %v7036 = vpack.c.b16 %v6188, %v6180
        %v7037 = vpack.c.b16 %v6189, %v6181
        %v7038 = vpack.c.b16 %v6190, %v6182
        %v7039 = vpack.c.b16 %v6191, %v6183
        %v7040 = vpack.c.b16 %v6192, %v6184
        %v7041 = vpack.c.b16 %v6193, %v6185
        %v7042 = vpack.c.b16 %v6194, %v6186
        %v7043 = vpack.c.b16 %v6203, %v6195
        %v7044 = vpack.c.b16 %v6204, %v6196
        %v7045 = vpack.c.b16 %v6205, %v6197
        %v7046 = vpack.c.b16 %v6206, %v6198
        %v7047 = vpack.c.b16 %v6207, %v6199
        %v7048 = vpack.c.b16 %v6208, %v6200
        %v7049 = vpack.c.b16 %v6209, %v6201
        %v7050 = vpack.c.b16 %v6210, %v6202
        %v7051 = vpack.c.b16 %v6219, %v6211
        %v7052 = vpack.c.b16 %v6220, %v6212
        %v7053 = vpack.c.b16 %v6221, %v6213
        %v7054 = vpack.c.b16 %v6222, %v6214
        %v7055 = vpack.c.b16 %v6223, %v6215
        %v7056 = vpack.c.b16 %v6224, %v6216
        %v7057 = vpack.c.b16 %v6225, %v6217
        %v7058 = vpack.c.b16 %v6226, %v6218
        %v7059 = vpack.c.b16 %v6235, %v6227
        %v7060 = vpack.c.b16 %v6236, %v6228
        %v7061 = vpack.c.b16 %v6237, %v6229
        %v7062 = vpack.c.b16 %v6238, %v6230
        %v7063 = vpack.c.b16 %v6239, %v6231
        %v7064 = vpack.c.b16 %v6240, %v6232
        %v7065 = vpack.c.b16 %v6241, %v6233
        %v7066 = vpack.c.b16 %v6242, %v6234
        %v7067 = vpack.c.b16 %v6251, %v6243
        %v7068 = vpack.c.b16 %v6252, %v6244
        %v7069 = vpack.c.b16 %v6253, %v6245
        %v7070 = vpack.c.b16 %v6254, %v6246
        %v7071 = vpack.c.b16 %v6255, %v6247
        %v7072 = vpack.c.b16 %v6256, %v6248
        %v7073 = vpack.c.b16 %v6257, %v6249
        %v7074 = vpack.c.b16 %v6258, %v6250
        %v7075 = vpack.c.b16 %v6267, %v6259
        %v7076 = vpack.c.b16 %v6268, %v6260
        %v7077 = vpack.c.b16 %v6269, %v6261
        %v7078 = vpack.c.b16 %v6270, %v6262
        %v7079 = vpack.c.b16 %v6271, %v6263
        %v7080 = vpack.c.b16 %v6272, %v6264
        %v7081 = vpack.c.b16 %v6273, %v6265
        %v7082 = vpack.c.b16 %v6274, %v6266
        %v7083 = vpack.c.b16 %v6283, %v6275
        %v7084 = vpack.c.b16 %v6284, %v6276
        %v7085 = vpack.c.b16 %v6285, %v6277
        %v7086 = vpack.c.b16 %v6286, %v6278
        %v7087 = vpack.c.b16 %v6287, %v6279
        %v7088 = vpack.c.b16 %v6288, %v6280
        %v7089 = vpack.c.b16 %v6289, %v6281
        %v7090 = vpack.c.b16 %v6290, %v6282
        %v7091 = vpack.c.b16 %v6299, %v6291
        %v7092 = vpack.c.b16 %v6300, %v6292
        %v7093 = vpack.c.b16 %v6301, %v6293
        %v7094 = vpack.c.b16 %v6302, %v6294
        %v7095 = vpack.c.b16 %v6303, %v6295
        %v7096 = vpack.c.b16 %v6304, %v6296
        %v7097 = vpack.c.b16 %v6305, %v6297
        %v7098 = vpack.c.b16 %v6306, %v6298
        %v7099 = vpack.c.b16 %v6315, %v6307
        %v7100 = vpack.c.b16 %v6316, %v6308
        %v7101 = vpack.c.b16 %v6317, %v6309
        %v7102 = vpack.c.b16 %v6318, %v6310
        %v7103 = vpack.c.b16 %v6319, %v6311
        %v7104 = vpack.c.b16 %v6320, %v6312
        %v7105 = vpack.c.b16 %v6321, %v6313
        %v7106 = vpack.c.b16 %v6322, %v6314
        %v7107 = vpack.c.b16 %v6331, %v6323
        %v7108 = vpack.c.b16 %v6332, %v6324
        %v7109 = vpack.c.b16 %v6333, %v6325
        %v7110 = vpack.c.b16 %v6334, %v6326
        %v7111 = vpack.c.b16 %v6335, %v6327
        %v7112 = vpack.c.b16 %v6336, %v6328
        %v7113 = vpack.c.b16 %v6337, %v6329
        %v7114 = vpack.c.b16 %v6338, %v6330
        %v7115 = vpack.c.b16 %v6347, %v6339
        %v7116 = vpack.c.b16 %v6348, %v6340
        %v7117 = vpack.c.b16 %v6349, %v6341
        %v7118 = vpack.c.b16 %v6350, %v6342
        %v7119 = vpack.c.b16 %v6351, %v6343
        %v7120 = vpack.c.b16 %v6352, %v6344
        %v7121 = vpack.c.b16 %v6353, %v6345
        %v7122 = vpack.c.b16 %v6354, %v6346
        %v7123 = vpack.c.b16 %v6363, %v6355
        %v7124 = vpack.c.b16 %v6364, %v6356
        %v7125 = vpack.c.b16 %v6365, %v6357
        %v7126 = vpack.c.b16 %v6366, %v6358
        %v7127 = vpack.c.b16 %v6367, %v6359
        %v7128 = vpack.c.b16 %v6368, %v6360
        %v7129 = vpack.c.b16 %v6369, %v6361
        %v7130 = vpack.c.b16 %v6370, %v6362
        %v7131 = vpack.c.b16 %v6379, %v6371
        %v7132 = vpack.c.b16 %v6380, %v6372
        %v7133 = vpack.c.b16 %v6381, %v6373
        %v7134 = vpack.c.b16 %v6382, %v6374
        %v7135 = vpack.c.b16 %v6383, %v6375
        %v7136 = vpack.c.b16 %v6384, %v6376
        %v7137 = vpack.c.b16 %v6385, %v6377
        %v7138 = vpack.c.b16 %v6386, %v6378
        %v7139 = vpack.c.b16 %v6395, %v6387
        %v7140 = vpack.c.b16 %v6396, %v6388
        %v7141 = vpack.c.b16 %v6397, %v6389
        %v7142 = vpack.c.b16 %v6398, %v6390
        %v7143 = vpack.c.b16 %v6399, %v6391
        %v7144 = vpack.c.b16 %v6400, %v6392
        %v7145 = vpack.c.b16 %v6401, %v6393
        %v7146 = vpack.c.b16 %v6402, %v6394
        %v7147 = vpack.c.b16 %v6411, %v6403
        %v7148 = vpack.c.b16 %v6412, %v6404
        %v7149 = vpack.c.b16 %v6413, %v6405
        %v7150 = vpack.c.b16 %v6414, %v6406
        %v7151 = vpack.c.b16 %v6415, %v6407
        %v7152 = vpack.c.b16 %v6416, %v6408
        %v7153 = vpack.c.b16 %v6417, %v6409
        %v7154 = vpack.c.b16 %v6418, %v6410
        %v7155 = vpack.c.b16 %v6427, %v6419
        %v7156 = vpack.c.b16 %v6428, %v6420
        %v7157 = vpack.c.b16 %v6429, %v6421
        %v7158 = vpack.c.b16 %v6430, %v6422
        %v7159 = vpack.c.b16 %v6431, %v6423
        %v7160 = vpack.c.b16 %v6432, %v6424
        %v7161 = vpack.c.b16 %v6433, %v6425
        %v7162 = vpack.c.b16 %v6434, %v6426
        %v7163 = vpack.c.b16 %v6443, %v6435
        %v7164 = vpack.c.b16 %v6444, %v6436
        %v7165 = vpack.c.b16 %v6445, %v6437
        %v7166 = vpack.c.b16 %v6446, %v6438
        %v7167 = vpack.c.b16 %v6447, %v6439
        %v7168 = vpack.c.b16 %v6448, %v6440
        %v7169 = vpack.c.b16 %v6449, %v6441
        %v7170 = vpack.c.b16 %v6450, %v6442
        %v7171 = vpack.c.b16 %v6459, %v6451
        %v7172 = vpack.c.b16 %v6460, %v6452
        %v7173 = vpack.c.b16 %v6461, %v6453
        %v7174 = vpack.c.b16 %v6462, %v6454
        %v7175 = vpack.c.b16 %v6463, %v6455
        %v7176 = vpack.c.b16 %v6464, %v6456
        %v7177 = vpack.c.b16 %v6465, %v6457
        %v7178 = vpack.c.b16 %v6466, %v6458
        %v7179 = vpack.c.b16 %v6475, %v6467
        %v7180 = vpack.c.b16 %v6476, %v6468
        %v7181 = vpack.c.b16 %v6477, %v6469
        %v7182 = vpack.c.b16 %v6478, %v6470
        %v7183 = vpack.c.b16 %v6479, %v6471
        %v7184 = vpack.c.b16 %v6480, %v6472
        %v7185 = vpack.c.b16 %v6481, %v6473
        %v7186 = vpack.c.b16 %v6482, %v6474
        %v7187 = vpack.c.b16 %v6491, %v6483
        %v7188 = vpack.c.b16 %v6492, %v6484
        %v7189 = vpack.c.b16 %v6493, %v6485
        %v7190 = vpack.c.b16 %v6494, %v6486
        %v7191 = vpack.c.b16 %v6495, %v6487
        %v7192 = vpack.c.b16 %v6496, %v6488
        %v7193 = vpack.c.b16 %v6497, %v6489
        %v7194 = vpack.c.b16 %v6498, %v6490
        %v7195 = vpack.c.b16 %v6507, %v6499
        %v7196 = vpack.c.b16 %v6508, %v6500
        %v7197 = vpack.c.b16 %v6509, %v6501
        %v7198 = vpack.c.b16 %v6510, %v6502
        %v7199 = vpack.c.b16 %v6511, %v6503
        %v7200 = vpack.c.b16 %v6512, %v6504
        %v7201 = vpack.c.b16 %v6513, %v6505
        %v7202 = vpack.c.b16 %v6514, %v6506
        %v7203 = vpack.c.b16 %v6523, %v6515
        %v7204 = vpack.c.b16 %v6524, %v6516
        %v7205 = vpack.c.b16 %v6525, %v6517
        %v7206 = vpack.c.b16 %v6526, %v6518
        %v7207 = vpack.c.b16 %v6527, %v6519
        %v7208 = vpack.c.b16 %v6528, %v6520
        %v7209 = vpack.c.b16 %v6529, %v6521
        %v7210 = vpack.c.b16 %v6530, %v6522
        %v7211 = vpack.c.b16 %v6539, %v6531
        %v7212 = vpack.c.b16 %v6540, %v6532
        %v7213 = vpack.c.b16 %v6541, %v6533
        %v7214 = vpack.c.b16 %v6542, %v6534
        %v7215 = vpack.c.b16 %v6543, %v6535
        %v7216 = vpack.c.b16 %v6544, %v6536
        %v7217 = vpack.c.b16 %v6545, %v6537
        %v7218 = vpack.c.b16 %v6546, %v6538
        %v7219 = vpack.c.b16 %v6555, %v6547
        %v7220 = vpack.c.b16 %v6556, %v6548
        %v7221 = vpack.c.b16 %v6557, %v6549
        %v7222 = vpack.c.b16 %v6558, %v6550
        %v7223 = vpack.c.b16 %v6559, %v6551
        %v7224 = vpack.c.b16 %v6560, %v6552
        %v7225 = vpack.c.b16 %v6561, %v6553
        %v7226 = vpack.c.b16 %v6562, %v6554
        %v7227 = vpack.c.b16 %v6571, %v6563
        %v7228 = vpack.c.b16 %v6572, %v6564
        %v7229 = vpack.c.b16 %v6573, %v6565
        %v7230 = vpack.c.b16 %v6574, %v6566
        %v7231 = vpack.c.b16 %v6575, %v6567
        %v7232 = vpack.c.b16 %v6576, %v6568
        %v7233 = vpack.c.b16 %v6577, %v6569
        %v7234 = vpack.c.b16 %v6578, %v6570
        %v7235 = vpack.c.b16 %v6587, %v6579
        %v7236 = vpack.c.b16 %v6588, %v6580
        %v7237 = vpack.c.b16 %v6589, %v6581
        %v7238 = vpack.c.b16 %v6590, %v6582
        %v7239 = vpack.c.b16 %v6591, %v6583
        %v7240 = vpack.c.b16 %v6592, %v6584
        %v7241 = vpack.c.b16 %v6593, %v6585
        %v7242 = vpack.c.b16 %v6594, %v6586
        %v7243 = vpack.c.b16 %v6603, %v6595
        %v7244 = vpack.c.b16 %v6604, %v6596
        %v7245 = vpack.c.b16 %v6605, %v6597
        %v7246 = vpack.c.b16 %v6606, %v6598
        %v7247 = vpack.c.b16 %v6607, %v6599
        %v7248 = vpack.c.b16 %v6608, %v6600
        %v7249 = vpack.c.b16 %v6609, %v6601
        %v7250 = vpack.c.b16 %v6610, %v6602
        %v7251 = vpack.c.b16 %v6619, %v6611
        %v7252 = vpack.c.b16 %v6620, %v6612
        %v7253 = vpack.c.b16 %v6621, %v6613
        %v7254 = vpack.c.b16 %v6622, %v6614
        %v7255 = vpack.c.b16 %v6623, %v6615
        %v7256 = vpack.c.b16 %v6624, %v6616
        %v7257 = vpack.c.b16 %v6625, %v6617
        %v7258 = vpack.c.b16 %v6626, %v6618
        %v7259 = vpack.c.b16 %v6635, %v6627
        %v7260 = vpack.c.b16 %v6636, %v6628
        %v7261 = vpack.c.b16 %v6637, %v6629
        %v7262 = vpack.c.b16 %v6638, %v6630
        %v7263 = vpack.c.b16 %v6639, %v6631
        %v7264 = vpack.c.b16 %v6640, %v6632
        %v7265 = vpack.c.b16 %v6641, %v6633
        %v7266 = vpack.c.b16 %v6642, %v6634
        %v7267 = vpack.c.b16 %v6651, %v6643
        %v7268 = vpack.c.b16 %v6652, %v6644
        %v7269 = vpack.c.b16 %v6653, %v6645
        %v7270 = vpack.c.b16 %v6654, %v6646
        %v7271 = vpack.c.b16 %v6655, %v6647
        %v7272 = vpack.c.b16 %v6656, %v6648
        %v7273 = vpack.c.b16 %v6657, %v6649
        %v7274 = vpack.c.b16 %v6658, %v6650
        %v7275 = vpack.c.b16 %v6667, %v6659
        %v7276 = vpack.c.b16 %v6668, %v6660
        %v7277 = vpack.c.b16 %v6669, %v6661
        %v7278 = vpack.c.b16 %v6670, %v6662
        %v7279 = vpack.c.b16 %v6671, %v6663
        %v7280 = vpack.c.b16 %v6672, %v6664
        %v7281 = vpack.c.b16 %v6673, %v6665
        %v7282 = vpack.c.b16 %v6674, %v6666
        %v7283 = vpack.c.b16 %v6683, %v6675
        %v7284 = vpack.c.b16 %v6684, %v6676
        %v7285 = vpack.c.b16 %v6685, %v6677
        %v7286 = vpack.c.b16 %v6686, %v6678
        %v7287 = vpack.c.b16 %v6687, %v6679
        %v7288 = vpack.c.b16 %v6688, %v6680
        %v7289 = vpack.c.b16 %v6689, %v6681
        %v7290 = vpack.c.b16 %v6690, %v6682
        %v7291 = vpack.c.b16 %v6699, %v6691
        %v7292 = vpack.c.b16 %v6700, %v6692
        %v7293 = vpack.c.b16 %v6701, %v6693
        %v7294 = vpack.c.b16 %v6702, %v6694
        %v7295 = vpack.c.b16 %v6703, %v6695
        %v7296 = vpack.c.b16 %v6704, %v6696
        %v7297 = vpack.c.b16 %v6705, %v6697
        %v7298 = vpack.c.b16 %v6706, %v6698
        %v7299 = vpack.c.b16 %v6715, %v6707
        %v7300 = vpack.c.b16 %v6716, %v6708
        %v7301 = vpack.c.b16 %v6717, %v6709
        %v7302 = vpack.c.b16 %v6718, %v6710
        %v7303 = vpack.c.b16 %v6719, %v6711
        %v7304 = vpack.c.b16 %v6720, %v6712
        %v7305 = vpack.c.b16 %v6721, %v6713
        %v7306 = vpack.c.b16 %v6722, %v6714
        %v7307 = vpack.c.b16 %v6731, %v6723
        %v7308 = vpack.c.b16 %v6732, %v6724
        %v7309 = vpack.c.b16 %v6733, %v6725
        %v7310 = vpack.c.b16 %v6734, %v6726
        %v7311 = vpack.c.b16 %v6735, %v6727
        %v7312 = vpack.c.b16 %v6736, %v6728
        %v7313 = vpack.c.b16 %v6737, %v6729
        %v7314 = vpack.c.b16 %v6738, %v6730
        %v7315 = vpack.c.b16 %v6747, %v6739
        %v7316 = vpack.c.b16 %v6748, %v6740
        %v7317 = vpack.c.b16 %v6749, %v6741
        %v7318 = vpack.c.b16 %v6750, %v6742
        %v7319 = vpack.c.b16 %v6751, %v6743
        %v7320 = vpack.c.b16 %v6752, %v6744
        %v7321 = vpack.c.b16 %v6753, %v6745
        %v7322 = vpack.c.b16 %v6754, %v6746
        %v7323 = vpack.c.b16 %v6763, %v6755
        %v7324 = vpack.c.b16 %v6764, %v6756
        %v7325 = vpack.c.b16 %v6765, %v6757
        %v7326 = vpack.c.b16 %v6766, %v6758
        %v7327 = vpack.c.b16 %v6767, %v6759
        %v7328 = vpack.c.b16 %v6768, %v6760
        %v7329 = vpack.c.b16 %v6769, %v6761
        %v7330 = vpack.c.b16 %v6770, %v6762
        %v7331 = vpack.c.b16 %v6779, %v6771
        %v7332 = vpack.c.b16 %v6780, %v6772
        %v7333 = vpack.c.b16 %v6781, %v6773
        %v7334 = vpack.c.b16 %v6782, %v6774
        %v7335 = vpack.c.b16 %v6783, %v6775
        %v7336 = vpack.c.b16 %v6784, %v6776
        %v7337 = vpack.c.b16 %v6785, %v6777
        %v7338 = vpack.c.b16 %v6786, %v6778
        %v7339 = vpack.c.b16 %v6795, %v6787
        %v7340 = vpack.c.b16 %v6796, %v6788
        %v7341 = vpack.c.b16 %v6797, %v6789
        %v7342 = vpack.c.b16 %v6798, %v6790
        %v7343 = vpack.c.b16 %v6799, %v6791
        %v7344 = vpack.c.b16 %v6800, %v6792
        %v7345 = vpack.c.b16 %v6801, %v6793
        %v7346 = vpack.c.b16 %v6802, %v6794
        %v7347 = vpack.c.b16 %v6811, %v6803
        %v7348 = vpack.c.b16 %v6812, %v6804
        %v7349 = vpack.c.b16 %v6813, %v6805
        %v7350 = vpack.c.b16 %v6814, %v6806
        %v7351 = vpack.c.b16 %v6815, %v6807
        %v7352 = vpack.c.b16 %v6816, %v6808
        %v7353 = vpack.c.b16 %v6817, %v6809
        %v7354 = vpack.c.b16 %v6818, %v6810
        %v7355 = vpack.c.b16 %v6827, %v6819
        %v7356 = vpack.c.b16 %v6828, %v6820
        %v7357 = vpack.c.b16 %v6829, %v6821
        %v7358 = vpack.c.b16 %v6830, %v6822
        %v7359 = vpack.c.b16 %v6831, %v6823
        %v7360 = vpack.c.b16 %v6832, %v6824
        %v7361 = vpack.c.b16 %v6833, %v6825
        %v7362 = vpack.c.b16 %v6834, %v6826
        %v7363 = vpack.c.b16 %v6843, %v6835
        %v7364 = vpack.c.b16 %v6844, %v6836
        %v7365 = vpack.c.b16 %v6845, %v6837
        %v7366 = vpack.c.b16 %v6846, %v6838
        %v7367 = vpack.c.b16 %v6847, %v6839
        %v7368 = vpack.c.b16 %v6848, %v6840
        %v7369 = vpack.c.b16 %v6849, %v6841
        %v7370 = vpack.c.b16 %v6850, %v6842
        %v7371 = vpack.c.b16 %v6859, %v6851
        %v7372 = vpack.c.b16 %v6860, %v6852
        %v7373 = vpack.c.b16 %v6861, %v6853
        %v7374 = vpack.c.b16 %v6862, %v6854
        %v7375 = vpack.c.b16 %v6863, %v6855
        %v7376 = vpack.c.b16 %v6864, %v6856
        %v7377 = vpack.c.b16 %v6865, %v6857
        %v7378 = vpack.c.b16 %v6866, %v6858
        %7891 = vmatprep.subr.bf16.mxu0 %v6868
        %7892 = vmatpush1.bf16.msra.mxu0 %v6867
        %7893 = vmatprep.subr.bf16.mxu0 %v6876
        %7894 = vmatpush1.bf16.msra.mxu0 %v6875
        %7895 = vmatprep.subr.bf16.mxu0 %v6884
        %7896 = vmatpush1.bf16.msra.mxu0 %v6883
        %7897 = vmatprep.subr.bf16.mxu0 %v6892
        %7898 = vmatpush1.bf16.msra.mxu0 %v6891
        %7899 = vmatprep.subr.bf16.mxu0 %v6900
        %7900 = vmatpush1.bf16.msra.mxu0 %v6899
        %7901 = vmatprep.subr.bf16.mxu0 %v6908
        %7902 = vmatpush1.bf16.msra.mxu0 %v6907
        %7903 = vmatprep.subr.bf16.mxu0 %v6916
        %7904 = vmatpush1.bf16.msra.mxu0 %v6915
        %7905 = vmatprep.subr.bf16.mxu0 %v6924
        %7906 = vmatpush1.bf16.msra.mxu0 %v6923
        %7907 = vmatprep.subr.bf16.mxu0 %v6932
        %7908 = vmatpush1.bf16.msra.mxu0 %v6931
        %7909 = vmatprep.subr.bf16.mxu0 %v6940
        %7910 = vmatpush1.bf16.msra.mxu0 %v6939
        %7911 = vmatprep.subr.bf16.mxu0 %v6948
        %7912 = vmatpush1.bf16.msra.mxu0 %v6947
        %7913 = vmatprep.subr.bf16.mxu0 %v6956
        %7914 = vmatpush1.bf16.msra.mxu0 %v6955
        %7915 = vmatprep.subr.bf16.mxu0 %v6964
        %7916 = vmatpush1.bf16.msra.mxu0 %v6963
        %7917 = vmatprep.subr.bf16.mxu0 %v6972
        %7918 = vmatpush1.bf16.msra.mxu0 %v6971
        %7919 = vmatprep.subr.bf16.mxu0 %v6980
        %7920 = vmatpush1.bf16.msra.mxu0 %v6979
        %7921 = vmatprep.subr.bf16.mxu0 %v6988
        %7922 = vmatpush1.bf16.msra.mxu0 %v6987
        %7923 = vmatprep.mubr.bf16.mxu0 %v4740
        %7924 = vmatmul.mubr.bf16.gmra.mrb[0].mxu0 %v4739
        %v7925 = vpop.f32.mrb[0].mxu0
        %v7926 = vadd.f32 0.0, %v7925
        %v7927 = vpop.f32.mrb[0].mxu0
        %v7928 = vadd.f32 0.0, %v7927
        %v7929 = vpop.f32.mrb[0].mxu0
        %v7930 = vadd.f32 0.0, %v7929
        %v7931 = vpop.f32.mrb[0].mxu0
        %v7932 = vadd.f32 0.0, %v7931
        %7933 = vmatprep.mubr.bf16.mxu0 %v4748
        %7934 = vmatmul.mubr.bf16.gmra.mrb[0].mxu0 %v4747
        %v7935 = vpop.f32.mrb[0].mxu0
        %v7936 = vadd.f32 0.0, %v7935
        %v7937 = vpop.f32.mrb[0].mxu0
        %v7938 = vadd.f32 0.0, %v7937
        %v7939 = vpop.f32.mrb[0].mxu0
        %v7940 = vadd.f32 0.0, %v7939
        %v7941 = vpop.f32.mrb[0].mxu0
        %v7942 = vadd.f32 0.0, %v7941
        %7943 = vmatprep.mubr.bf16.mxu0 %v4756
        %7944 = vmatmul.mubr.bf16.gmra.mrb[0].mxu0 %v4755
        %v7945 = vpop.f32.mrb[0].mxu0
        %v7946 = vadd.f32 0.0, %v7945
        %v7947 = vpop.f32.mrb[0].mxu0
        %v7948 = vadd.f32 0.0, %v7947
        %v7949 = vpop.f32.mrb[0].mxu0
        %v7950 = vadd.f32 0.0, %v7949
        %v7951 = vpop.f32.mrb[0].mxu0
        %v7952 = vadd.f32 0.0, %v7951
        %7953 = vmatprep.mubr.bf16.mxu0 %v4764
        %7954 = vmatmul.mubr.bf16.gmra.mrb[0].mxu0 %v4763
        %v7955 = vpop.f32.mrb[0].mxu0
        %v7956 = vadd.f32 0.0, %v7955
        %v7957 = vpop.f32.mrb[0].mxu0
        %v7958 = vadd.f32 0.0, %v7957
        %v7959 = vpop.f32.mrb[0].mxu0
        %v7960 = vadd.f32 0.0, %v7959
        %v7961 = vpop.f32.mrb[0].mxu0
        %v7962 = vadd.f32 0.0, %v7961
        %7963 = vmatprep.mubr.bf16.mxu0 %v4772
        %7964 = vmatmul.mubr.bf16.gmra.mrb[0].mxu0 %v4771
        %v7965 = vpop.f32.mrb[0].mxu0
        %v7966 = vadd.f32 0.0, %v7965
        %v7967 = vpop.f32.mrb[0].mxu0
        %v7968 = vadd.f32 0.0, %v7967
        %v7969 = vpop.f32.mrb[0].mxu0
        %v7970 = vadd.f32 0.0, %v7969
        %v7971 = vpop.f32.mrb[0].mxu0
        %v7972 = vadd.f32 0.0, %v7971
        %7973 = vmatprep.mubr.bf16.mxu0 %v4780
        %7974 = vmatmul.mubr.bf16.gmra.mrb[0].mxu0 %v4779
        %v7975 = vpop.f32.mrb[0].mxu0
        %v7976 = vadd.f32 0.0, %v7975
        %v7977 = vpop.f32.mrb[0].mxu0
        %v7978 = vadd.f32 0.0, %v7977
        %v7979 = vpop.f32.mrb[0].mxu0
        %v7980 = vadd.f32 0.0, %v7979
        %v7981 = vpop.f32.mrb[0].mxu0
        %v7982 = vadd.f32 0.0, %v7981
        %7983 = vmatprep.mubr.bf16.mxu0 %v4788
        %7984 = vmatmul.mubr.bf16.gmra.mrb[0].mxu0 %v4787
        %v7985 = vpop.f32.mrb[0].mxu0
        %v7986 = vadd.f32 0.0, %v7985
        %v7987 = vpop.f32.mrb[0].mxu0
        %v7988 = vadd.f32 0.0, %v7987
        %v7989 = vpop.f32.mrb[0].mxu0
        %v7990 = vadd.f32 0.0, %v7989
        %v7991 = vpop.f32.mrb[0].mxu0
        %v7992 = vadd.f32 0.0, %v7991
        %7993 = vmatprep.mubr.bf16.mxu0 %v4796
        %7994 = vmatmul.mubr.bf16.gmra.mrb[0].mxu0 %v4795
        %v7995 = vpop.f32.mrb[0].mxu0
        %v7996 = vadd.f32 0.0, %v7995
        %v7997 = vpop.f32.mrb[0].mxu0
        %v7998 = vadd.f32 0.0, %v7997
        %v7999 = vpop.f32.mrb[0].mxu0
        %v8000 = vadd.f32 0.0, %v7999
        %v8001 = vpop.f32.mrb[0].mxu0
        %v8002 = vadd.f32 0.0, %v8001
        %8003 = vmatprep.mubr.bf16.mxu0 %v4804
        %8004 = vmatmul.mubr.bf16.gmra.mrb[0].mxu0 %v4803
        %v8005 = vpop.f32.mrb[0].mxu0
        %v8006 = vadd.f32 0.0, %v8005
        %v8007 = vpop.f32.mrb[0].mxu0
        %v8008 = vadd.f32 0.0, %v8007
        %v8009 = vpop.f32.mrb[0].mxu0
        %v8010 = vadd.f32 0.0, %v8009
        %v8011 = vpop.f32.mrb[0].mxu0
        %v8012 = vadd.f32 0.0, %v8011
        %8013 = vmatprep.mubr.bf16.mxu0 %v4812
        %8014 = vmatmul.mubr.bf16.gmra.mrb[0].mxu0 %v4811
        %v8015 = vpop.f32.mrb[0].mxu0
        %v8016 = vadd.f32 0.0, %v8015
        %v8017 = vpop.f32.mrb[0].mxu0
        %v8018 = vadd.f32 0.0, %v8017
        %v8019 = vpop.f32.mrb[0].mxu0
        %v8020 = vadd.f32 0.0, %v8019
        %v8021 = vpop.f32.mrb[0].mxu0
        %v8022 = vadd.f32 0.0, %v8021
        %8023 = vdwg.mxu0
        %8024 = vmatprep.subr.bf16.mxu0 %v6996
        %8025 = vmatpush1.bf16.msra.mxu0 %v6995
        %8026 = vmatprep.subr.bf16.mxu0 %v7004
        %8027 = vmatpush1.bf16.msra.mxu0 %v7003
        %8028 = vmatprep.subr.bf16.mxu0 %v7012
        %8029 = vmatpush1.bf16.msra.mxu0 %v7011
        %8030 = vmatprep.subr.bf16.mxu0 %v7020
        %8031 = vmatpush1.bf16.msra.mxu0 %v7019
        %8032 = vmatprep.subr.bf16.mxu0 %v7028
        %8033 = vmatpush1.bf16.msra.mxu0 %v7027
        %8034 = vmatprep.subr.bf16.mxu0 %v7036
        %8035 = vmatpush1.bf16.msra.mxu0 %v7035
        %8036 = vmatprep.subr.bf16.mxu0 %v7044
        %8037 = vmatpush1.bf16.msra.mxu0 %v7043
        %8038 = vmatprep.subr.bf16.mxu0 %v7052
        %8039 = vmatpush1.bf16.msra.mxu0 %v7051
        %8040 = vmatprep.subr.bf16.mxu0 %v7060
        %8041 = vmatpush1.bf16.msra.mxu0 %v7059
        %8042 = vmatprep.subr.bf16.mxu0 %v7068
        %8043 = vmatpush1.bf16.msra.mxu0 %v7067
        %8044 = vmatprep.subr.bf16.mxu0 %v7076
        %8045 = vmatpush1.bf16.msra.mxu0 %v7075
        %8046 = vmatprep.subr.bf16.mxu0 %v7084
        %8047 = vmatpush1.bf16.msra.mxu0 %v7083
        %8048 = vmatprep.subr.bf16.mxu0 %v7092
        %8049 = vmatpush1.bf16.msra.mxu0 %v7091
        %8050 = vmatprep.subr.bf16.mxu0 %v7100
        %8051 = vmatpush1.bf16.msra.mxu0 %v7099
        %8052 = vmatprep.subr.bf16.mxu0 %v7108
        %8053 = vmatpush1.bf16.msra.mxu0 %v7107
        %8054 = vmatprep.subr.bf16.mxu0 %v7116
        %8055 = vmatpush1.bf16.msra.mxu0 %v7115
        %8056 = vmatprep.mubr.bf16.mxu0 %v4742
        %8057 = vmatmul.mubr.bf16.gmra.mrb[0].mxu0 %v4741
        %v8058 = vpop.f32.mrb[0].mxu0
        %v8059 = vadd.f32 %v7926, %v8058
        %v8060 = vpop.f32.mrb[0].mxu0
        %v8061 = vadd.f32 %v7928, %v8060
        %v8062 = vpop.f32.mrb[0].mxu0
        %v8063 = vadd.f32 %v7930, %v8062
        %v8064 = vpop.f32.mrb[0].mxu0
        %v8065 = vadd.f32 %v7932, %v8064
        %8066 = vmatprep.mubr.bf16.mxu0 %v4750
        %8067 = vmatmul.mubr.bf16.gmra.mrb[0].mxu0 %v4749
        %v8068 = vpop.f32.mrb[0].mxu0
        %v8069 = vadd.f32 %v7936, %v8068
        %v8070 = vpop.f32.mrb[0].mxu0
        %v8071 = vadd.f32 %v7938, %v8070
        %v8072 = vpop.f32.mrb[0].mxu0
        %v8073 = vadd.f32 %v7940, %v8072
        %v8074 = vpop.f32.mrb[0].mxu0
        %v8075 = vadd.f32 %v7942, %v8074
        %8076 = vmatprep.mubr.bf16.mxu0 %v4758
        %8077 = vmatmul.mubr.bf16.gmra.mrb[0].mxu0 %v4757
        %v8078 = vpop.f32.mrb[0].mxu0
        %v8079 = vadd.f32 %v7946, %v8078
        %v8080 = vpop.f32.mrb[0].mxu0
        %v8081 = vadd.f32 %v7948, %v8080
        %v8082 = vpop.f32.mrb[0].mxu0
        %v8083 = vadd.f32 %v7950, %v8082
        %v8084 = vpop.f32.mrb[0].mxu0
        %v8085 = vadd.f32 %v7952, %v8084
        %8086 = vmatprep.mubr.bf16.mxu0 %v4766
        %8087 = vmatmul.mubr.bf16.gmra.mrb[0].mxu0 %v4765
        %v8088 = vpop.f32.mrb[0].mxu0
        %v8089 = vadd.f32 %v7956, %v8088
        %v8090 = vpop.f32.mrb[0].mxu0
        %v8091 = vadd.f32 %v7958, %v8090
        %v8092 = vpop.f32.mrb[0].mxu0
        %v8093 = vadd.f32 %v7960, %v8092
        %v8094 = vpop.f32.mrb[0].mxu0
        %v8095 = vadd.f32 %v7962, %v8094
        %8096 = vmatprep.mubr.bf16.mxu0 %v4774
        %8097 = vmatmul.mubr.bf16.gmra.mrb[0].mxu0 %v4773
        %v8098 = vpop.f32.mrb[0].mxu0
        %v8099 = vadd.f32 %v7966, %v8098
        %v8100 = vpop.f32.mrb[0].mxu0
        %v8101 = vadd.f32 %v7968, %v8100
        %v8102 = vpop.f32.mrb[0].mxu0
        %v8103 = vadd.f32 %v7970, %v8102
        %v8104 = vpop.f32.mrb[0].mxu0
        %v8105 = vadd.f32 %v7972, %v8104
        %8106 = vmatprep.mubr.bf16.mxu0 %v4782
        %8107 = vmatmul.mubr.bf16.gmra.mrb[0].mxu0 %v4781
        %v8108 = vpop.f32.mrb[0].mxu0
        %v8109 = vadd.f32 %v7976, %v8108
        %v8110 = vpop.f32.mrb[0].mxu0
        %v8111 = vadd.f32 %v7978, %v8110
        %v8112 = vpop.f32.mrb[0].mxu0
        %v8113 = vadd.f32 %v7980, %v8112
        %v8114 = vpop.f32.mrb[0].mxu0
        %v8115 = vadd.f32 %v7982, %v8114
        %8116 = vmatprep.mubr.bf16.mxu0 %v4790
        %8117 = vmatmul.mubr.bf16.gmra.mrb[0].mxu0 %v4789
        %v8118 = vpop.f32.mrb[0].mxu0
        %v8119 = vadd.f32 %v7986, %v8118
        %v8120 = vpop.f32.mrb[0].mxu0
        %v8121 = vadd.f32 %v7988, %v8120
        %v8122 = vpop.f32.mrb[0].mxu0
        %v8123 = vadd.f32 %v7990, %v8122
        %v8124 = vpop.f32.mrb[0].mxu0
        %v8125 = vadd.f32 %v7992, %v8124
        %8126 = vmatprep.mubr.bf16.mxu0 %v4798
        %8127 = vmatmul.mubr.bf16.gmra.mrb[0].mxu0 %v4797
        %v8128 = vpop.f32.mrb[0].mxu0
        %v8129 = vadd.f32 %v7996, %v8128
        %v8130 = vpop.f32.mrb[0].mxu0
        %v8131 = vadd.f32 %v7998, %v8130
        %v8132 = vpop.f32.mrb[0].mxu0
        %v8133 = vadd.f32 %v8000, %v8132
        %v8134 = vpop.f32.mrb[0].mxu0
        %v8135 = vadd.f32 %v8002, %v8134
        %8136 = vmatprep.mubr.bf16.mxu0 %v4806
        %8137 = vmatmul.mubr.bf16.gmra.mrb[0].mxu0 %v4805
        %v8138 = vpop.f32.mrb[0].mxu0
        %v8139 = vadd.f32 %v8006, %v8138
        %v8140 = vpop.f32.mrb[0].mxu0
        %v8141 = vadd.f32 %v8008, %v8140
        %v8142 = vpop.f32.mrb[0].mxu0
        %v8143 = vadd.f32 %v8010, %v8142
        %v8144 = vpop.f32.mrb[0].mxu0
        %v8145 = vadd.f32 %v8012, %v8144
        %8146 = vmatprep.mubr.bf16.mxu0 %v4814
        %8147 = vmatmul.mubr.bf16.gmra.mrb[0].mxu0 %v4813
        %v8148 = vpop.f32.mrb[0].mxu0
        %v8149 = vadd.f32 %v8016, %v8148
        %v8150 = vpop.f32.mrb[0].mxu0
        %v8151 = vadd.f32 %v8018, %v8150
        %v8152 = vpop.f32.mrb[0].mxu0
        %v8153 = vadd.f32 %v8020, %v8152
        %v8154 = vpop.f32.mrb[0].mxu0
        %v8155 = vadd.f32 %v8022, %v8154
        %8156 = vdwg.mxu0
        %8157 = vmatprep.subr.bf16.mxu0 %v7124
        %8158 = vmatpush1.bf16.msra.mxu0 %v7123
        %8159 = vmatprep.subr.bf16.mxu0 %v7132
        %8160 = vmatpush1.bf16.msra.mxu0 %v7131
        %8161 = vmatprep.subr.bf16.mxu0 %v7140
        %8162 = vmatpush1.bf16.msra.mxu0 %v7139
        %8163 = vmatprep.subr.bf16.mxu0 %v7148
        %8164 = vmatpush1.bf16.msra.mxu0 %v7147
        %8165 = vmatprep.subr.bf16.mxu0 %v7156
        %8166 = vmatpush1.bf16.msra.mxu0 %v7155
        %8167 = vmatprep.subr.bf16.mxu0 %v7164
        %8168 = vmatpush1.bf16.msra.mxu0 %v7163
        %8169 = vmatprep.subr.bf16.mxu0 %v7172
        %8170 = vmatpush1.bf16.msra.mxu0 %v7171
        %8171 = vmatprep.subr.bf16.mxu0 %v7180
        %8172 = vmatpush1.bf16.msra.mxu0 %v7179
        %8173 = vmatprep.subr.bf16.mxu0 %v7188
        %8174 = vmatpush1.bf16.msra.mxu0 %v7187
        %8175 = vmatprep.subr.bf16.mxu0 %v7196
        %8176 = vmatpush1.bf16.msra.mxu0 %v7195
        %8177 = vmatprep.subr.bf16.mxu0 %v7204
        %8178 = vmatpush1.bf16.msra.mxu0 %v7203
        %8179 = vmatprep.subr.bf16.mxu0 %v7212
        %8180 = vmatpush1.bf16.msra.mxu0 %v7211
        %8181 = vmatprep.subr.bf16.mxu0 %v7220
        %8182 = vmatpush1.bf16.msra.mxu0 %v7219
        %8183 = vmatprep.subr.bf16.mxu0 %v7228
        %8184 = vmatpush1.bf16.msra.mxu0 %v7227
        %8185 = vmatprep.subr.bf16.mxu0 %v7236
        %8186 = vmatpush1.bf16.msra.mxu0 %v7235
        %8187 = vmatprep.subr.bf16.mxu0 %v7244
        %8188 = vmatpush1.bf16.msra.mxu0 %v7243
        %8189 = vmatprep.mubr.bf16.mxu0 %v4744
        %8190 = vmatmul.mubr.bf16.gmra.mrb[0].mxu0 %v4743
        %v8191 = vpop.f32.mrb[0].mxu0
        %v8192 = vadd.f32 %v8059, %v8191
        %v8193 = vpop.f32.mrb[0].mxu0
        %v8194 = vadd.f32 %v8061, %v8193
        %v8195 = vpop.f32.mrb[0].mxu0
        %v8196 = vadd.f32 %v8063, %v8195
        %v8197 = vpop.f32.mrb[0].mxu0
        %v8198 = vadd.f32 %v8065, %v8197
        %8199 = vmatprep.mubr.bf16.mxu0 %v4752
        %8200 = vmatmul.mubr.bf16.gmra.mrb[0].mxu0 %v4751
        %v8201 = vpop.f32.mrb[0].mxu0
        %v8202 = vadd.f32 %v8069, %v8201
        %v8203 = vpop.f32.mrb[0].mxu0
        %v8204 = vadd.f32 %v8071, %v8203
        %v8205 = vpop.f32.mrb[0].mxu0
        %v8206 = vadd.f32 %v8073, %v8205
        %v8207 = vpop.f32.mrb[0].mxu0
        %v8208 = vadd.f32 %v8075, %v8207
        %8209 = vmatprep.mubr.bf16.mxu0 %v4760
        %8210 = vmatmul.mubr.bf16.gmra.mrb[0].mxu0 %v4759
        %v8211 = vpop.f32.mrb[0].mxu0
        %v8212 = vadd.f32 %v8079, %v8211
        %v8213 = vpop.f32.mrb[0].mxu0
        %v8214 = vadd.f32 %v8081, %v8213
        %v8215 = vpop.f32.mrb[0].mxu0
        %v8216 = vadd.f32 %v8083, %v8215
        %v8217 = vpop.f32.mrb[0].mxu0
        %v8218 = vadd.f32 %v8085, %v8217
        %8219 = vmatprep.mubr.bf16.mxu0 %v4768
        %8220 = vmatmul.mubr.bf16.gmra.mrb[0].mxu0 %v4767
        %v8221 = vpop.f32.mrb[0].mxu0
        %v8222 = vadd.f32 %v8089, %v8221
        %v8223 = vpop.f32.mrb[0].mxu0
        %v8224 = vadd.f32 %v8091, %v8223
        %v8225 = vpop.f32.mrb[0].mxu0
        %v8226 = vadd.f32 %v8093, %v8225
        %v8227 = vpop.f32.mrb[0].mxu0
        %v8228 = vadd.f32 %v8095, %v8227
        %8229 = vmatprep.mubr.bf16.mxu0 %v4776
        %8230 = vmatmul.mubr.bf16.gmra.mrb[0].mxu0 %v4775
        %v8231 = vpop.f32.mrb[0].mxu0
        %v8232 = vadd.f32 %v8099, %v8231
        %v8233 = vpop.f32.mrb[0].mxu0
        %v8234 = vadd.f32 %v8101, %v8233
        %v8235 = vpop.f32.mrb[0].mxu0
        %v8236 = vadd.f32 %v8103, %v8235
        %v8237 = vpop.f32.mrb[0].mxu0
        %v8238 = vadd.f32 %v8105, %v8237
        %8239 = vmatprep.mubr.bf16.mxu0 %v4784
        %8240 = vmatmul.mubr.bf16.gmra.mrb[0].mxu0 %v4783
        %v8241 = vpop.f32.mrb[0].mxu0
        %v8242 = vadd.f32 %v8109, %v8241
        %v8243 = vpop.f32.mrb[0].mxu0
        %v8244 = vadd.f32 %v8111, %v8243
        %v8245 = vpop.f32.mrb[0].mxu0
        %v8246 = vadd.f32 %v8113, %v8245
        %v8247 = vpop.f32.mrb[0].mxu0
        %v8248 = vadd.f32 %v8115, %v8247
        %8249 = vmatprep.mubr.bf16.mxu0 %v4792
        %8250 = vmatmul.mubr.bf16.gmra.mrb[0].mxu0 %v4791
        %v8251 = vpop.f32.mrb[0].mxu0
        %v8252 = vadd.f32 %v8119, %v8251
        %v8253 = vpop.f32.mrb[0].mxu0
        %v8254 = vadd.f32 %v8121, %v8253
        %v8255 = vpop.f32.mrb[0].mxu0
        %v8256 = vadd.f32 %v8123, %v8255
        %v8257 = vpop.f32.mrb[0].mxu0
        %v8258 = vadd.f32 %v8125, %v8257
        %8259 = vmatprep.mubr.bf16.mxu0 %v4800
        %8260 = vmatmul.mubr.bf16.gmra.mrb[0].mxu0 %v4799
        %v8261 = vpop.f32.mrb[0].mxu0
        %v8262 = vadd.f32 %v8129, %v8261
        %v8263 = vpop.f32.mrb[0].mxu0
        %v8264 = vadd.f32 %v8131, %v8263
        %v8265 = vpop.f32.mrb[0].mxu0
        %v8266 = vadd.f32 %v8133, %v8265
        %v8267 = vpop.f32.mrb[0].mxu0
        %v8268 = vadd.f32 %v8135, %v8267
        %8269 = vmatprep.mubr.bf16.mxu0 %v4808
        %8270 = vmatmul.mubr.bf16.gmra.mrb[0].mxu0 %v4807
        %v8271 = vpop.f32.mrb[0].mxu0
        %v8272 = vadd.f32 %v8139, %v8271
        %v8273 = vpop.f32.mrb[0].mxu0
        %v8274 = vadd.f32 %v8141, %v8273
        %v8275 = vpop.f32.mrb[0].mxu0
        %v8276 = vadd.f32 %v8143, %v8275
        %v8277 = vpop.f32.mrb[0].mxu0
        %v8278 = vadd.f32 %v8145, %v8277
        %8279 = vmatprep.mubr.bf16.mxu0 %v4816
        %8280 = vmatmul.mubr.bf16.gmra.mrb[0].mxu0 %v4815
        %v8281 = vpop.f32.mrb[0].mxu0
        %v8282 = vadd.f32 %v8149, %v8281
        %v8283 = vpop.f32.mrb[0].mxu0
        %v8284 = vadd.f32 %v8151, %v8283
        %v8285 = vpop.f32.mrb[0].mxu0
        %v8286 = vadd.f32 %v8153, %v8285
        %v8287 = vpop.f32.mrb[0].mxu0
        %v8288 = vadd.f32 %v8155, %v8287
        %8289 = vdwg.mxu0
        %8290 = vmatprep.subr.bf16.mxu0 %v7252
        %8291 = vmatpush1.bf16.msra.mxu0 %v7251
        %8292 = vmatprep.subr.bf16.mxu0 %v7260
        %8293 = vmatpush1.bf16.msra.mxu0 %v7259
        %8294 = vmatprep.subr.bf16.mxu0 %v7268
        %8295 = vmatpush1.bf16.msra.mxu0 %v7267
        %8296 = vmatprep.subr.bf16.mxu0 %v7276
        %8297 = vmatpush1.bf16.msra.mxu0 %v7275
        %8298 = vmatprep.subr.bf16.mxu0 %v7284
        %8299 = vmatpush1.bf16.msra.mxu0 %v7283
        %8300 = vmatprep.subr.bf16.mxu0 %v7292
        %8301 = vmatpush1.bf16.msra.mxu0 %v7291
        %8302 = vmatprep.subr.bf16.mxu0 %v7300
        %8303 = vmatpush1.bf16.msra.mxu0 %v7299
        %8304 = vmatprep.subr.bf16.mxu0 %v7308
        %8305 = vmatpush1.bf16.msra.mxu0 %v7307
        %8306 = vmatprep.subr.bf16.mxu0 %v7316
        %8307 = vmatpush1.bf16.msra.mxu0 %v7315
        %8308 = vmatprep.subr.bf16.mxu0 %v7324
        %8309 = vmatpush1.bf16.msra.mxu0 %v7323
        %8310 = vmatprep.subr.bf16.mxu0 %v7332
        %8311 = vmatpush1.bf16.msra.mxu0 %v7331
        %8312 = vmatprep.subr.bf16.mxu0 %v7340
        %8313 = vmatpush1.bf16.msra.mxu0 %v7339
        %8314 = vmatprep.subr.bf16.mxu0 %v7348
        %8315 = vmatpush1.bf16.msra.mxu0 %v7347
        %8316 = vmatprep.subr.bf16.mxu0 %v7356
        %8317 = vmatpush1.bf16.msra.mxu0 %v7355
        %8318 = vmatprep.subr.bf16.mxu0 %v7364
        %8319 = vmatpush1.bf16.msra.mxu0 %v7363
        %8320 = vmatprep.subr.bf16.mxu0 %v7372
        %8321 = vmatpush1.bf16.msra.mxu0 %v7371
        %8322 = vmatprep.mubr.bf16.mxu0 %v4746
        %8323 = vmatmul.mubr.bf16.gmra.mrb[0].mxu0 %v4745
        %v8324 = vpop.f32.mrb[0].mxu0
        %v8325 = vadd.f32 %v8192, %v8324
        %v8326 = vpop.f32.mrb[0].mxu0
        %v8327 = vadd.f32 %v8194, %v8326
        %v8328 = vpop.f32.mrb[0].mxu0
        %v8329 = vadd.f32 %v8196, %v8328
        %v8330 = vpop.f32.mrb[0].mxu0
        %v8331 = vadd.f32 %v8198, %v8330
        %8332 = vmatprep.mubr.bf16.mxu0 %v4754
        %8333 = vmatmul.mubr.bf16.gmra.mrb[0].mxu0 %v4753
        %v8334 = vpop.f32.mrb[0].mxu0
        %v8335 = vadd.f32 %v8202, %v8334
        %v8336 = vpop.f32.mrb[0].mxu0
        %v8337 = vadd.f32 %v8204, %v8336
        %v8338 = vpop.f32.mrb[0].mxu0
        %v8339 = vadd.f32 %v8206, %v8338
        %v8340 = vpop.f32.mrb[0].mxu0
        %v8341 = vadd.f32 %v8208, %v8340
        %8342 = vmatprep.mubr.bf16.mxu0 %v4762
        %8343 = vmatmul.mubr.bf16.gmra.mrb[0].mxu0 %v4761
        %v8344 = vpop.f32.mrb[0].mxu0
        %v8345 = vadd.f32 %v8212, %v8344
        %v8346 = vpop.f32.mrb[0].mxu0
        %v8347 = vadd.f32 %v8214, %v8346
        %v8348 = vpop.f32.mrb[0].mxu0
        %v8349 = vadd.f32 %v8216, %v8348
        %v8350 = vpop.f32.mrb[0].mxu0
        %v8351 = vadd.f32 %v8218, %v8350
        %8352 = vmatprep.mubr.bf16.mxu0 %v4770
        %8353 = vmatmul.mubr.bf16.gmra.mrb[0].mxu0 %v4769
        %v8354 = vpop.f32.mrb[0].mxu0
        %v8355 = vadd.f32 %v8222, %v8354
        %v8356 = vpop.f32.mrb[0].mxu0
        %v8357 = vadd.f32 %v8224, %v8356
        %v8358 = vpop.f32.mrb[0].mxu0
        %v8359 = vadd.f32 %v8226, %v8358
        %v8360 = vpop.f32.mrb[0].mxu0
        %v8361 = vadd.f32 %v8228, %v8360
        %8362 = vmatprep.mubr.bf16.mxu0 %v4778
        %8363 = vmatmul.mubr.bf16.gmra.mrb[0].mxu0 %v4777
        %v8364 = vpop.f32.mrb[0].mxu0
        %v8365 = vadd.f32 %v8232, %v8364
        %v8366 = vpop.f32.mrb[0].mxu0
        %v8367 = vadd.f32 %v8234, %v8366
        %v8368 = vpop.f32.mrb[0].mxu0
        %v8369 = vadd.f32 %v8236, %v8368
        %v8370 = vpop.f32.mrb[0].mxu0
        %v8371 = vadd.f32 %v8238, %v8370
        %8372 = vmatprep.mubr.bf16.mxu0 %v4786
        %8373 = vmatmul.mubr.bf16.gmra.mrb[0].mxu0 %v4785
        %v8374 = vpop.f32.mrb[0].mxu0
        %v8375 = vadd.f32 %v8242, %v8374
        %v8376 = vpop.f32.mrb[0].mxu0
        %v8377 = vadd.f32 %v8244, %v8376
        %v8378 = vpop.f32.mrb[0].mxu0
        %v8379 = vadd.f32 %v8246, %v8378
        %v8380 = vpop.f32.mrb[0].mxu0
        %v8381 = vadd.f32 %v8248, %v8380
        %8382 = vmatprep.mubr.bf16.mxu0 %v4794
        %8383 = vmatmul.mubr.bf16.gmra.mrb[0].mxu0 %v4793
        %v8384 = vpop.f32.mrb[0].mxu0
        %v8385 = vadd.f32 %v8252, %v8384
        %v8386 = vpop.f32.mrb[0].mxu0
        %v8387 = vadd.f32 %v8254, %v8386
        %v8388 = vpop.f32.mrb[0].mxu0
        %v8389 = vadd.f32 %v8256, %v8388
        %v8390 = vpop.f32.mrb[0].mxu0
        %v8391 = vadd.f32 %v8258, %v8390
        %8392 = vmatprep.mubr.bf16.mxu0 %v4802
        %8393 = vmatmul.mubr.bf16.gmra.mrb[0].mxu0 %v4801
        %v8394 = vpop.f32.mrb[0].mxu0
        %v8395 = vadd.f32 %v8262, %v8394
        %v8396 = vpop.f32.mrb[0].mxu0
        %v8397 = vadd.f32 %v8264, %v8396
        %v8398 = vpop.f32.mrb[0].mxu0
        %v8399 = vadd.f32 %v8266, %v8398
        %v8400 = vpop.f32.mrb[0].mxu0
        %v8401 = vadd.f32 %v8268, %v8400
        %8402 = vmatprep.mubr.bf16.mxu0 %v4810
        %8403 = vmatmul.mubr.bf16.gmra.mrb[0].mxu0 %v4809
        %v8404 = vpop.f32.mrb[0].mxu0
        %v8405 = vadd.f32 %v8272, %v8404
        %v8406 = vpop.f32.mrb[0].mxu0
        %v8407 = vadd.f32 %v8274, %v8406
        %v8408 = vpop.f32.mrb[0].mxu0
        %v8409 = vadd.f32 %v8276, %v8408
        %v8410 = vpop.f32.mrb[0].mxu0
        %v8411 = vadd.f32 %v8278, %v8410
        %8412 = vmatprep.mubr.bf16.mxu0 %v4818
        %8413 = vmatmul.mubr.bf16.gmra.mrb[0].mxu0 %v4817
        %v8414 = vpop.f32.mrb[0].mxu0
        %v8415 = vadd.f32 %v8282, %v8414
        %v8416 = vpop.f32.mrb[0].mxu0
        %v8417 = vadd.f32 %v8284, %v8416
        %v8418 = vpop.f32.mrb[0].mxu0
        %v8419 = vadd.f32 %v8286, %v8418
        %v8420 = vpop.f32.mrb[0].mxu0
        %v8421 = vadd.f32 %v8288, %v8420
        %8422 = vdwg.mxu0
        %8423 = vmatprep.subr.bf16.mxu0 %v6870
        %8424 = vmatpush1.bf16.msra.mxu0 %v6869
        %8425 = vmatprep.subr.bf16.mxu0 %v6878
        %8426 = vmatpush1.bf16.msra.mxu0 %v6877
        %8427 = vmatprep.subr.bf16.mxu0 %v6886
        %8428 = vmatpush1.bf16.msra.mxu0 %v6885
        %8429 = vmatprep.subr.bf16.mxu0 %v6894
        %8430 = vmatpush1.bf16.msra.mxu0 %v6893
        %8431 = vmatprep.subr.bf16.mxu0 %v6902
        %8432 = vmatpush1.bf16.msra.mxu0 %v6901
        %8433 = vmatprep.subr.bf16.mxu0 %v6910
        %8434 = vmatpush1.bf16.msra.mxu0 %v6909
        %8435 = vmatprep.subr.bf16.mxu0 %v6918
        %8436 = vmatpush1.bf16.msra.mxu0 %v6917
        %8437 = vmatprep.subr.bf16.mxu0 %v6926
        %8438 = vmatpush1.bf16.msra.mxu0 %v6925
        %8439 = vmatprep.subr.bf16.mxu0 %v6934
        %8440 = vmatpush1.bf16.msra.mxu0 %v6933
        %8441 = vmatprep.subr.bf16.mxu0 %v6942
        %8442 = vmatpush1.bf16.msra.mxu0 %v6941
        %8443 = vmatprep.subr.bf16.mxu0 %v6950
        %8444 = vmatpush1.bf16.msra.mxu0 %v6949
        %8445 = vmatprep.subr.bf16.mxu0 %v6958
        %8446 = vmatpush1.bf16.msra.mxu0 %v6957
        %8447 = vmatprep.subr.bf16.mxu0 %v6966
        %8448 = vmatpush1.bf16.msra.mxu0 %v6965
        %8449 = vmatprep.subr.bf16.mxu0 %v6974
        %8450 = vmatpush1.bf16.msra.mxu0 %v6973
        %8451 = vmatprep.subr.bf16.mxu0 %v6982
        %8452 = vmatpush1.bf16.msra.mxu0 %v6981
        %8453 = vmatprep.subr.bf16.mxu0 %v6990
        %8454 = vmatpush1.bf16.msra.mxu0 %v6989
        %8455 = vmatprep.mubr.bf16.mxu0 %v4740
        %8456 = vmatmul.mubr.bf16.gmra.mrb[0].mxu0 %v4739
        %v8457 = vpop.f32.mrb[0].mxu0
        %v8458 = vadd.f32 0.0, %v8457
        %v8459 = vpop.f32.mrb[0].mxu0
        %v8460 = vadd.f32 0.0, %v8459
        %v8461 = vpop.f32.mrb[0].mxu0
        %v8462 = vadd.f32 0.0, %v8461
        %v8463 = vpop.f32.mrb[0].mxu0
        %v8464 = vadd.f32 0.0, %v8463
        %8465 = vmatprep.mubr.bf16.mxu0 %v4748
        %8466 = vmatmul.mubr.bf16.gmra.mrb[0].mxu0 %v4747
        %v8467 = vpop.f32.mrb[0].mxu0
        %v8468 = vadd.f32 0.0, %v8467
        %v8469 = vpop.f32.mrb[0].mxu0
        %v8470 = vadd.f32 0.0, %v8469
        %v8471 = vpop.f32.mrb[0].mxu0
        %v8472 = vadd.f32 0.0, %v8471
        %v8473 = vpop.f32.mrb[0].mxu0
        %v8474 = vadd.f32 0.0, %v8473
        %8475 = vmatprep.mubr.bf16.mxu0 %v4756
        %8476 = vmatmul.mubr.bf16.gmra.mrb[0].mxu0 %v4755
        %v8477 = vpop.f32.mrb[0].mxu0
        %v8478 = vadd.f32 0.0, %v8477
        %v8479 = vpop.f32.mrb[0].mxu0
        %v8480 = vadd.f32 0.0, %v8479
        %v8481 = vpop.f32.mrb[0].mxu0
        %v8482 = vadd.f32 0.0, %v8481
        %v8483 = vpop.f32.mrb[0].mxu0
        %v8484 = vadd.f32 0.0, %v8483
        %8485 = vmatprep.mubr.bf16.mxu0 %v4764
        %8486 = vmatmul.mubr.bf16.gmra.mrb[0].mxu0 %v4763
        %v8487 = vpop.f32.mrb[0].mxu0
        %v8488 = vadd.f32 0.0, %v8487
        %v8489 = vpop.f32.mrb[0].mxu0
        %v8490 = vadd.f32 0.0, %v8489
        %v8491 = vpop.f32.mrb[0].mxu0
        %v8492 = vadd.f32 0.0, %v8491
        %v8493 = vpop.f32.mrb[0].mxu0
        %v8494 = vadd.f32 0.0, %v8493
        %8495 = vmatprep.mubr.bf16.mxu0 %v4772
        %8496 = vmatmul.mubr.bf16.gmra.mrb[0].mxu0 %v4771
        %v8497 = vpop.f32.mrb[0].mxu0
        %v8498 = vadd.f32 0.0, %v8497
        %v8499 = vpop.f32.mrb[0].mxu0
        %v8500 = vadd.f32 0.0, %v8499
        %v8501 = vpop.f32.mrb[0].mxu0
        %v8502 = vadd.f32 0.0, %v8501
        %v8503 = vpop.f32.mrb[0].mxu0
        %v8504 = vadd.f32 0.0, %v8503
        %8505 = vmatprep.mubr.bf16.mxu0 %v4780
        %8506 = vmatmul.mubr.bf16.gmra.mrb[0].mxu0 %v4779
        %v8507 = vpop.f32.mrb[0].mxu0
        %v8508 = vadd.f32 0.0, %v8507
        %v8509 = vpop.f32.mrb[0].mxu0
        %v8510 = vadd.f32 0.0, %v8509
        %v8511 = vpop.f32.mrb[0].mxu0
        %v8512 = vadd.f32 0.0, %v8511
        %v8513 = vpop.f32.mrb[0].mxu0
        %v8514 = vadd.f32 0.0, %v8513
        %8515 = vmatprep.mubr.bf16.mxu0 %v4788
        %8516 = vmatmul.mubr.bf16.gmra.mrb[0].mxu0 %v4787
        %v8517 = vpop.f32.mrb[0].mxu0
        %v8518 = vadd.f32 0.0, %v8517
        %v8519 = vpop.f32.mrb[0].mxu0
        %v8520 = vadd.f32 0.0, %v8519
        %v8521 = vpop.f32.mrb[0].mxu0
        %v8522 = vadd.f32 0.0, %v8521
        %v8523 = vpop.f32.mrb[0].mxu0
        %v8524 = vadd.f32 0.0, %v8523
        %8525 = vmatprep.mubr.bf16.mxu0 %v4796
        %8526 = vmatmul.mubr.bf16.gmra.mrb[0].mxu0 %v4795
        %v8527 = vpop.f32.mrb[0].mxu0
        %v8528 = vadd.f32 0.0, %v8527
        %v8529 = vpop.f32.mrb[0].mxu0
        %v8530 = vadd.f32 0.0, %v8529
        %v8531 = vpop.f32.mrb[0].mxu0
        %v8532 = vadd.f32 0.0, %v8531
        %v8533 = vpop.f32.mrb[0].mxu0
        %v8534 = vadd.f32 0.0, %v8533
        %8535 = vmatprep.mubr.bf16.mxu0 %v4804
        %8536 = vmatmul.mubr.bf16.gmra.mrb[0].mxu0 %v4803
        %v8537 = vpop.f32.mrb[0].mxu0
        %v8538 = vadd.f32 0.0, %v8537
        %v8539 = vpop.f32.mrb[0].mxu0
        %v8540 = vadd.f32 0.0, %v8539
        %v8541 = vpop.f32.mrb[0].mxu0
        %v8542 = vadd.f32 0.0, %v8541
        %v8543 = vpop.f32.mrb[0].mxu0
        %v8544 = vadd.f32 0.0, %v8543
        %8545 = vmatprep.mubr.bf16.mxu0 %v4812
        %8546 = vmatmul.mubr.bf16.gmra.mrb[0].mxu0 %v4811
        %v8547 = vpop.f32.mrb[0].mxu0
        %v8548 = vadd.f32 0.0, %v8547
        %v8549 = vpop.f32.mrb[0].mxu0
        %v8550 = vadd.f32 0.0, %v8549
        %v8551 = vpop.f32.mrb[0].mxu0
        %v8552 = vadd.f32 0.0, %v8551
        %v8553 = vpop.f32.mrb[0].mxu0
        %v8554 = vadd.f32 0.0, %v8553
        %8555 = vdwg.mxu0
        %8556 = vmatprep.subr.bf16.mxu0 %v6998
        %8557 = vmatpush1.bf16.msra.mxu0 %v6997
        %8558 = vmatprep.subr.bf16.mxu0 %v7006
        %8559 = vmatpush1.bf16.msra.mxu0 %v7005
        %8560 = vmatprep.subr.bf16.mxu0 %v7014
        %8561 = vmatpush1.bf16.msra.mxu0 %v7013
        %8562 = vmatprep.subr.bf16.mxu0 %v7022
        %8563 = vmatpush1.bf16.msra.mxu0 %v7021
        %8564 = vmatprep.subr.bf16.mxu0 %v7030
        %8565 = vmatpush1.bf16.msra.mxu0 %v7029
        %8566 = vmatprep.subr.bf16.mxu0 %v7038
        %8567 = vmatpush1.bf16.msra.mxu0 %v7037
        %8568 = vmatprep.subr.bf16.mxu0 %v7046
        %8569 = vmatpush1.bf16.msra.mxu0 %v7045
        %8570 = vmatprep.subr.bf16.mxu0 %v7054
        %8571 = vmatpush1.bf16.msra.mxu0 %v7053
        %8572 = vmatprep.subr.bf16.mxu0 %v7062
        %8573 = vmatpush1.bf16.msra.mxu0 %v7061
        %8574 = vmatprep.subr.bf16.mxu0 %v7070
        %8575 = vmatpush1.bf16.msra.mxu0 %v7069
        %8576 = vmatprep.subr.bf16.mxu0 %v7078
        %8577 = vmatpush1.bf16.msra.mxu0 %v7077
        %8578 = vmatprep.subr.bf16.mxu0 %v7086
        %8579 = vmatpush1.bf16.msra.mxu0 %v7085
        %8580 = vmatprep.subr.bf16.mxu0 %v7094
        %8581 = vmatpush1.bf16.msra.mxu0 %v7093
        %8582 = vmatprep.subr.bf16.mxu0 %v7102
        %8583 = vmatpush1.bf16.msra.mxu0 %v7101
        %8584 = vmatprep.subr.bf16.mxu0 %v7110
        %8585 = vmatpush1.bf16.msra.mxu0 %v7109
        %8586 = vmatprep.subr.bf16.mxu0 %v7118
        %8587 = vmatpush1.bf16.msra.mxu0 %v7117
        %8588 = vmatprep.mubr.bf16.mxu0 %v4742
        %8589 = vmatmul.mubr.bf16.gmra.mrb[0].mxu0 %v4741
        %v8590 = vpop.f32.mrb[0].mxu0
        %v8591 = vadd.f32 %v8458, %v8590
        %v8592 = vpop.f32.mrb[0].mxu0
        %v8593 = vadd.f32 %v8460, %v8592
        %v8594 = vpop.f32.mrb[0].mxu0
        %v8595 = vadd.f32 %v8462, %v8594
        %v8596 = vpop.f32.mrb[0].mxu0
        %v8597 = vadd.f32 %v8464, %v8596
        %8598 = vmatprep.mubr.bf16.mxu0 %v4750
        %8599 = vmatmul.mubr.bf16.gmra.mrb[0].mxu0 %v4749
        %v8600 = vpop.f32.mrb[0].mxu0
        %v8601 = vadd.f32 %v8468, %v8600
        %v8602 = vpop.f32.mrb[0].mxu0
        %v8603 = vadd.f32 %v8470, %v8602
        %v8604 = vpop.f32.mrb[0].mxu0
        %v8605 = vadd.f32 %v8472, %v8604
        %v8606 = vpop.f32.mrb[0].mxu0
        %v8607 = vadd.f32 %v8474, %v8606
        %8608 = vmatprep.mubr.bf16.mxu0 %v4758
        %8609 = vmatmul.mubr.bf16.gmra.mrb[0].mxu0 %v4757
        %v8610 = vpop.f32.mrb[0].mxu0
        %v8611 = vadd.f32 %v8478, %v8610
        %v8612 = vpop.f32.mrb[0].mxu0
        %v8613 = vadd.f32 %v8480, %v8612
        %v8614 = vpop.f32.mrb[0].mxu0
        %v8615 = vadd.f32 %v8482, %v8614
        %v8616 = vpop.f32.mrb[0].mxu0
        %v8617 = vadd.f32 %v8484, %v8616
        %8618 = vmatprep.mubr.bf16.mxu0 %v4766
        %8619 = vmatmul.mubr.bf16.gmra.mrb[0].mxu0 %v4765
        %v8620 = vpop.f32.mrb[0].mxu0
        %v8621 = vadd.f32 %v8488, %v8620
        %v8622 = vpop.f32.mrb[0].mxu0
        %v8623 = vadd.f32 %v8490, %v8622
        %v8624 = vpop.f32.mrb[0].mxu0
        %v8625 = vadd.f32 %v8492, %v8624
        %v8626 = vpop.f32.mrb[0].mxu0
        %v8627 = vadd.f32 %v8494, %v8626
        %8628 = vmatprep.mubr.bf16.mxu0 %v4774
        %8629 = vmatmul.mubr.bf16.gmra.mrb[0].mxu0 %v4773
        %v8630 = vpop.f32.mrb[0].mxu0
        %v8631 = vadd.f32 %v8498, %v8630
        %v8632 = vpop.f32.mrb[0].mxu0
        %v8633 = vadd.f32 %v8500, %v8632
        %v8634 = vpop.f32.mrb[0].mxu0
        %v8635 = vadd.f32 %v8502, %v8634
        %v8636 = vpop.f32.mrb[0].mxu0
        %v8637 = vadd.f32 %v8504, %v8636
        %8638 = vmatprep.mubr.bf16.mxu0 %v4782
        %8639 = vmatmul.mubr.bf16.gmra.mrb[0].mxu0 %v4781
        %v8640 = vpop.f32.mrb[0].mxu0
        %v8641 = vadd.f32 %v8508, %v8640
        %v8642 = vpop.f32.mrb[0].mxu0
        %v8643 = vadd.f32 %v8510, %v8642
        %v8644 = vpop.f32.mrb[0].mxu0
        %v8645 = vadd.f32 %v8512, %v8644
        %v8646 = vpop.f32.mrb[0].mxu0
        %v8647 = vadd.f32 %v8514, %v8646
        %8648 = vmatprep.mubr.bf16.mxu0 %v4790
        %8649 = vmatmul.mubr.bf16.gmra.mrb[0].mxu0 %v4789
        %v8650 = vpop.f32.mrb[0].mxu0
        %v8651 = vadd.f32 %v8518, %v8650
        %v8652 = vpop.f32.mrb[0].mxu0
        %v8653 = vadd.f32 %v8520, %v8652
        %v8654 = vpop.f32.mrb[0].mxu0
        %v8655 = vadd.f32 %v8522, %v8654
        %v8656 = vpop.f32.mrb[0].mxu0
        %v8657 = vadd.f32 %v8524, %v8656
        %8658 = vmatprep.mubr.bf16.mxu0 %v4798
        %8659 = vmatmul.mubr.bf16.gmra.mrb[0].mxu0 %v4797
        %v8660 = vpop.f32.mrb[0].mxu0
        %v8661 = vadd.f32 %v8528, %v8660
        %v8662 = vpop.f32.mrb[0].mxu0
        %v8663 = vadd.f32 %v8530, %v8662
        %v8664 = vpop.f32.mrb[0].mxu0
        %v8665 = vadd.f32 %v8532, %v8664
        %v8666 = vpop.f32.mrb[0].mxu0
        %v8667 = vadd.f32 %v8534, %v8666
        %8668 = vmatprep.mubr.bf16.mxu0 %v4806
        %8669 = vmatmul.mubr.bf16.gmra.mrb[0].mxu0 %v4805
        %v8670 = vpop.f32.mrb[0].mxu0
        %v8671 = vadd.f32 %v8538, %v8670
        %v8672 = vpop.f32.mrb[0].mxu0
        %v8673 = vadd.f32 %v8540, %v8672
        %v8674 = vpop.f32.mrb[0].mxu0
        %v8675 = vadd.f32 %v8542, %v8674
        %v8676 = vpop.f32.mrb[0].mxu0
        %v8677 = vadd.f32 %v8544, %v8676
        %8678 = vmatprep.mubr.bf16.mxu0 %v4814
        %8679 = vmatmul.mubr.bf16.gmra.mrb[0].mxu0 %v4813
        %v8680 = vpop.f32.mrb[0].mxu0
        %v8681 = vadd.f32 %v8548, %v8680
        %v8682 = vpop.f32.mrb[0].mxu0
        %v8683 = vadd.f32 %v8550, %v8682
        %v8684 = vpop.f32.mrb[0].mxu0
        %v8685 = vadd.f32 %v8552, %v8684
        %v8686 = vpop.f32.mrb[0].mxu0
        %v8687 = vadd.f32 %v8554, %v8686
        %8688 = vdwg.mxu0
        %8689 = vmatprep.subr.bf16.mxu0 %v7126
        %8690 = vmatpush1.bf16.msra.mxu0 %v7125
        %8691 = vmatprep.subr.bf16.mxu0 %v7134
        %8692 = vmatpush1.bf16.msra.mxu0 %v7133
        %8693 = vmatprep.subr.bf16.mxu0 %v7142
        %8694 = vmatpush1.bf16.msra.mxu0 %v7141
        %8695 = vmatprep.subr.bf16.mxu0 %v7150
        %8696 = vmatpush1.bf16.msra.mxu0 %v7149
        %8697 = vmatprep.subr.bf16.mxu0 %v7158
        %8698 = vmatpush1.bf16.msra.mxu0 %v7157
        %8699 = vmatprep.subr.bf16.mxu0 %v7166
        %8700 = vmatpush1.bf16.msra.mxu0 %v7165
        %8701 = vmatprep.subr.bf16.mxu0 %v7174
        %8702 = vmatpush1.bf16.msra.mxu0 %v7173
        %8703 = vmatprep.subr.bf16.mxu0 %v7182
        %8704 = vmatpush1.bf16.msra.mxu0 %v7181
        %8705 = vmatprep.subr.bf16.mxu0 %v7190
        %8706 = vmatpush1.bf16.msra.mxu0 %v7189
        %8707 = vmatprep.subr.bf16.mxu0 %v7198
        %8708 = vmatpush1.bf16.msra.mxu0 %v7197
        %8709 = vmatprep.subr.bf16.mxu0 %v7206
        %8710 = vmatpush1.bf16.msra.mxu0 %v7205
        %8711 = vmatprep.subr.bf16.mxu0 %v7214
        %8712 = vmatpush1.bf16.msra.mxu0 %v7213
        %8713 = vmatprep.subr.bf16.mxu0 %v7222
        %8714 = vmatpush1.bf16.msra.mxu0 %v7221
        %8715 = vmatprep.subr.bf16.mxu0 %v7230
        %8716 = vmatpush1.bf16.msra.mxu0 %v7229
        %8717 = vmatprep.subr.bf16.mxu0 %v7238
        %8718 = vmatpush1.bf16.msra.mxu0 %v7237
        %8719 = vmatprep.subr.bf16.mxu0 %v7246
        %8720 = vmatpush1.bf16.msra.mxu0 %v7245
        %8721 = vmatprep.mubr.bf16.mxu0 %v4744
        %8722 = vmatmul.mubr.bf16.gmra.mrb[0].mxu0 %v4743
        %v8723 = vpop.f32.mrb[0].mxu0
        %v8724 = vadd.f32 %v8591, %v8723
        %v8725 = vpop.f32.mrb[0].mxu0
        %v8726 = vadd.f32 %v8593, %v8725
        %v8727 = vpop.f32.mrb[0].mxu0
        %v8728 = vadd.f32 %v8595, %v8727
        %v8729 = vpop.f32.mrb[0].mxu0
        %v8730 = vadd.f32 %v8597, %v8729
        %8731 = vmatprep.mubr.bf16.mxu0 %v4752
        %8732 = vmatmul.mubr.bf16.gmra.mrb[0].mxu0 %v4751
        %v8733 = vpop.f32.mrb[0].mxu0
        %v8734 = vadd.f32 %v8601, %v8733
        %v8735 = vpop.f32.mrb[0].mxu0
        %v8736 = vadd.f32 %v8603, %v8735
        %v8737 = vpop.f32.mrb[0].mxu0
        %v8738 = vadd.f32 %v8605, %v8737
        %v8739 = vpop.f32.mrb[0].mxu0
        %v8740 = vadd.f32 %v8607, %v8739
        %8741 = vmatprep.mubr.bf16.mxu0 %v4760
        %8742 = vmatmul.mubr.bf16.gmra.mrb[0].mxu0 %v4759
        %v8743 = vpop.f32.mrb[0].mxu0
        %v8744 = vadd.f32 %v8611, %v8743
        %v8745 = vpop.f32.mrb[0].mxu0
        %v8746 = vadd.f32 %v8613, %v8745
        %v8747 = vpop.f32.mrb[0].mxu0
        %v8748 = vadd.f32 %v8615, %v8747
        %v8749 = vpop.f32.mrb[0].mxu0
        %v8750 = vadd.f32 %v8617, %v8749
        %8751 = vmatprep.mubr.bf16.mxu0 %v4768
        %8752 = vmatmul.mubr.bf16.gmra.mrb[0].mxu0 %v4767
        %v8753 = vpop.f32.mrb[0].mxu0
        %v8754 = vadd.f32 %v8621, %v8753
        %v8755 = vpop.f32.mrb[0].mxu0
        %v8756 = vadd.f32 %v8623, %v8755
        %v8757 = vpop.f32.mrb[0].mxu0
        %v8758 = vadd.f32 %v8625, %v8757
        %v8759 = vpop.f32.mrb[0].mxu0
        %v8760 = vadd.f32 %v8627, %v8759
        %8761 = vmatprep.mubr.bf16.mxu0 %v4776
        %8762 = vmatmul.mubr.bf16.gmra.mrb[0].mxu0 %v4775
        %v8763 = vpop.f32.mrb[0].mxu0
        %v8764 = vadd.f32 %v8631, %v8763
        %v8765 = vpop.f32.mrb[0].mxu0
        %v8766 = vadd.f32 %v8633, %v8765
        %v8767 = vpop.f32.mrb[0].mxu0
        %v8768 = vadd.f32 %v8635, %v8767
        %v8769 = vpop.f32.mrb[0].mxu0
        %v8770 = vadd.f32 %v8637, %v8769
        %8771 = vmatprep.mubr.bf16.mxu0 %v4784
        %8772 = vmatmul.mubr.bf16.gmra.mrb[0].mxu0 %v4783
        %v8773 = vpop.f32.mrb[0].mxu0
        %v8774 = vadd.f32 %v8641, %v8773
        %v8775 = vpop.f32.mrb[0].mxu0
        %v8776 = vadd.f32 %v8643, %v8775
        %v8777 = vpop.f32.mrb[0].mxu0
        %v8778 = vadd.f32 %v8645, %v8777
        %v8779 = vpop.f32.mrb[0].mxu0
        %v8780 = vadd.f32 %v8647, %v8779
        %8781 = vmatprep.mubr.bf16.mxu0 %v4792
        %8782 = vmatmul.mubr.bf16.gmra.mrb[0].mxu0 %v4791
        %v8783 = vpop.f32.mrb[0].mxu0
        %v8784 = vadd.f32 %v8651, %v8783
        %v8785 = vpop.f32.mrb[0].mxu0
        %v8786 = vadd.f32 %v8653, %v8785
        %v8787 = vpop.f32.mrb[0].mxu0
        %v8788 = vadd.f32 %v8655, %v8787
        %v8789 = vpop.f32.mrb[0].mxu0
        %v8790 = vadd.f32 %v8657, %v8789
        %8791 = vmatprep.mubr.bf16.mxu0 %v4800
        %8792 = vmatmul.mubr.bf16.gmra.mrb[0].mxu0 %v4799
        %v8793 = vpop.f32.mrb[0].mxu0
        %v8794 = vadd.f32 %v8661, %v8793
        %v8795 = vpop.f32.mrb[0].mxu0
        %v8796 = vadd.f32 %v8663, %v8795
        %v8797 = vpop.f32.mrb[0].mxu0
        %v8798 = vadd.f32 %v8665, %v8797
        %v8799 = vpop.f32.mrb[0].mxu0
        %v8800 = vadd.f32 %v8667, %v8799
        %8801 = vmatprep.mubr.bf16.mxu0 %v4808
        %8802 = vmatmul.mubr.bf16.gmra.mrb[0].mxu0 %v4807
        %v8803 = vpop.f32.mrb[0].mxu0
        %v8804 = vadd.f32 %v8671, %v8803
        %v8805 = vpop.f32.mrb[0].mxu0
        %v8806 = vadd.f32 %v8673, %v8805
        %v8807 = vpop.f32.mrb[0].mxu0
        %v8808 = vadd.f32 %v8675, %v8807
        %v8809 = vpop.f32.mrb[0].mxu0
        %v8810 = vadd.f32 %v8677, %v8809
        %8811 = vmatprep.mubr.bf16.mxu0 %v4816
        %8812 = vmatmul.mubr.bf16.gmra.mrb[0].mxu0 %v4815
        %v8813 = vpop.f32.mrb[0].mxu0
        %v8814 = vadd.f32 %v8681, %v8813
        %v8815 = vpop.f32.mrb[0].mxu0
        %v8816 = vadd.f32 %v8683, %v8815
        %v8817 = vpop.f32.mrb[0].mxu0
        %v8818 = vadd.f32 %v8685, %v8817
        %v8819 = vpop.f32.mrb[0].mxu0
        %v8820 = vadd.f32 %v8687, %v8819
        %8821 = vdwg.mxu0
        %8822 = vmatprep.subr.bf16.mxu0 %v7254
        %8823 = vmatpush1.bf16.msra.mxu0 %v7253
        %8824 = vmatprep.subr.bf16.mxu0 %v7262
        %8825 = vmatpush1.bf16.msra.mxu0 %v7261
        %8826 = vmatprep.subr.bf16.mxu0 %v7270
        %8827 = vmatpush1.bf16.msra.mxu0 %v7269
        %8828 = vmatprep.subr.bf16.mxu0 %v7278
        %8829 = vmatpush1.bf16.msra.mxu0 %v7277
        %8830 = vmatprep.subr.bf16.mxu0 %v7286
        %8831 = vmatpush1.bf16.msra.mxu0 %v7285
        %8832 = vmatprep.subr.bf16.mxu0 %v7294
        %8833 = vmatpush1.bf16.msra.mxu0 %v7293
        %8834 = vmatprep.subr.bf16.mxu0 %v7302
        %8835 = vmatpush1.bf16.msra.mxu0 %v7301
        %8836 = vmatprep.subr.bf16.mxu0 %v7310
        %8837 = vmatpush1.bf16.msra.mxu0 %v7309
        %8838 = vmatprep.subr.bf16.mxu0 %v7318
        %8839 = vmatpush1.bf16.msra.mxu0 %v7317
        %8840 = vmatprep.subr.bf16.mxu0 %v7326
        %8841 = vmatpush1.bf16.msra.mxu0 %v7325
        %8842 = vmatprep.subr.bf16.mxu0 %v7334
        %8843 = vmatpush1.bf16.msra.mxu0 %v7333
        %8844 = vmatprep.subr.bf16.mxu0 %v7342
        %8845 = vmatpush1.bf16.msra.mxu0 %v7341
        %8846 = vmatprep.subr.bf16.mxu0 %v7350
        %8847 = vmatpush1.bf16.msra.mxu0 %v7349
        %8848 = vmatprep.subr.bf16.mxu0 %v7358
        %8849 = vmatpush1.bf16.msra.mxu0 %v7357
        %8850 = vmatprep.subr.bf16.mxu0 %v7366
        %8851 = vmatpush1.bf16.msra.mxu0 %v7365
        %8852 = vmatprep.subr.bf16.mxu0 %v7374
        %8853 = vmatpush1.bf16.msra.mxu0 %v7373
        %8854 = vmatprep.mubr.bf16.mxu0 %v4746
        %8855 = vmatmul.mubr.bf16.gmra.mrb[0].mxu0 %v4745
        %v8856 = vpop.f32.mrb[0].mxu0
        %v8857 = vadd.f32 %v8724, %v8856
        %v8858 = vpop.f32.mrb[0].mxu0
        %v8859 = vadd.f32 %v8726, %v8858
        %v8860 = vpop.f32.mrb[0].mxu0
        %v8861 = vadd.f32 %v8728, %v8860
        %v8862 = vpop.f32.mrb[0].mxu0
        %v8863 = vadd.f32 %v8730, %v8862
        %8864 = vmatprep.mubr.bf16.mxu0 %v4754
        %8865 = vmatmul.mubr.bf16.gmra.mrb[0].mxu0 %v4753
        %v8866 = vpop.f32.mrb[0].mxu0
        %v8867 = vadd.f32 %v8734, %v8866
        %v8868 = vpop.f32.mrb[0].mxu0
        %v8869 = vadd.f32 %v8736, %v8868
        %v8870 = vpop.f32.mrb[0].mxu0
        %v8871 = vadd.f32 %v8738, %v8870
        %v8872 = vpop.f32.mrb[0].mxu0
        %v8873 = vadd.f32 %v8740, %v8872
        %8874 = vmatprep.mubr.bf16.mxu0 %v4762
        %8875 = vmatmul.mubr.bf16.gmra.mrb[0].mxu0 %v4761
        %v8876 = vpop.f32.mrb[0].mxu0
        %v8877 = vadd.f32 %v8744, %v8876
        %v8878 = vpop.f32.mrb[0].mxu0
        %v8879 = vadd.f32 %v8746, %v8878
        %v8880 = vpop.f32.mrb[0].mxu0
        %v8881 = vadd.f32 %v8748, %v8880
        %v8882 = vpop.f32.mrb[0].mxu0
        %v8883 = vadd.f32 %v8750, %v8882
        %8884 = vmatprep.mubr.bf16.mxu0 %v4770
        %8885 = vmatmul.mubr.bf16.gmra.mrb[0].mxu0 %v4769
        %v8886 = vpop.f32.mrb[0].mxu0
        %v8887 = vadd.f32 %v8754, %v8886
        %v8888 = vpop.f32.mrb[0].mxu0
        %v8889 = vadd.f32 %v8756, %v8888
        %v8890 = vpop.f32.mrb[0].mxu0
        %v8891 = vadd.f32 %v8758, %v8890
        %v8892 = vpop.f32.mrb[0].mxu0
        %v8893 = vadd.f32 %v8760, %v8892
        %8894 = vmatprep.mubr.bf16.mxu0 %v4778
        %8895 = vmatmul.mubr.bf16.gmra.mrb[0].mxu0 %v4777
        %v8896 = vpop.f32.mrb[0].mxu0
        %v8897 = vadd.f32 %v8764, %v8896
        %v8898 = vpop.f32.mrb[0].mxu0
        %v8899 = vadd.f32 %v8766, %v8898
        %v8900 = vpop.f32.mrb[0].mxu0
        %v8901 = vadd.f32 %v8768, %v8900
        %v8902 = vpop.f32.mrb[0].mxu0
        %v8903 = vadd.f32 %v8770, %v8902
        %8904 = vmatprep.mubr.bf16.mxu0 %v4786
        %8905 = vmatmul.mubr.bf16.gmra.mrb[0].mxu0 %v4785
        %v8906 = vpop.f32.mrb[0].mxu0
        %v8907 = vadd.f32 %v8774, %v8906
        %v8908 = vpop.f32.mrb[0].mxu0
        %v8909 = vadd.f32 %v8776, %v8908
        %v8910 = vpop.f32.mrb[0].mxu0
        %v8911 = vadd.f32 %v8778, %v8910
        %v8912 = vpop.f32.mrb[0].mxu0
        %v8913 = vadd.f32 %v8780, %v8912
        %8914 = vmatprep.mubr.bf16.mxu0 %v4794
        %8915 = vmatmul.mubr.bf16.gmra.mrb[0].mxu0 %v4793
        %v8916 = vpop.f32.mrb[0].mxu0
        %v8917 = vadd.f32 %v8784, %v8916
        %v8918 = vpop.f32.mrb[0].mxu0
        %v8919 = vadd.f32 %v8786, %v8918
        %v8920 = vpop.f32.mrb[0].mxu0
        %v8921 = vadd.f32 %v8788, %v8920
        %v8922 = vpop.f32.mrb[0].mxu0
        %v8923 = vadd.f32 %v8790, %v8922
        %8924 = vmatprep.mubr.bf16.mxu0 %v4802
        %8925 = vmatmul.mubr.bf16.gmra.mrb[0].mxu0 %v4801
        %v8926 = vpop.f32.mrb[0].mxu0
        %v8927 = vadd.f32 %v8794, %v8926
        %v8928 = vpop.f32.mrb[0].mxu0
        %v8929 = vadd.f32 %v8796, %v8928
        %v8930 = vpop.f32.mrb[0].mxu0
        %v8931 = vadd.f32 %v8798, %v8930
        %v8932 = vpop.f32.mrb[0].mxu0
        %v8933 = vadd.f32 %v8800, %v8932
        %8934 = vmatprep.mubr.bf16.mxu0 %v4810
        %8935 = vmatmul.mubr.bf16.gmra.mrb[0].mxu0 %v4809
        %v8936 = vpop.f32.mrb[0].mxu0
        %v8937 = vadd.f32 %v8804, %v8936
        %v8938 = vpop.f32.mrb[0].mxu0
        %v8939 = vadd.f32 %v8806, %v8938
        %v8940 = vpop.f32.mrb[0].mxu0
        %v8941 = vadd.f32 %v8808, %v8940
        %v8942 = vpop.f32.mrb[0].mxu0
        %v8943 = vadd.f32 %v8810, %v8942
        %8944 = vmatprep.mubr.bf16.mxu0 %v4818
        %8945 = vmatmul.mubr.bf16.gmra.mrb[0].mxu0 %v4817
        %v8946 = vpop.f32.mrb[0].mxu0
        %v8947 = vadd.f32 %v8814, %v8946
        %v8948 = vpop.f32.mrb[0].mxu0
        %v8949 = vadd.f32 %v8816, %v8948
        %v8950 = vpop.f32.mrb[0].mxu0
        %v8951 = vadd.f32 %v8818, %v8950
        %v8952 = vpop.f32.mrb[0].mxu0
        %v8953 = vadd.f32 %v8820, %v8952
        %8954 = vdwg.mxu0
        %8955 = vmatprep.subr.bf16.mxu0 %v6872
        %8956 = vmatpush1.bf16.msra.mxu0 %v6871
        %8957 = vmatprep.subr.bf16.mxu0 %v6880
        %8958 = vmatpush1.bf16.msra.mxu0 %v6879
        %8959 = vmatprep.subr.bf16.mxu0 %v6888
        %8960 = vmatpush1.bf16.msra.mxu0 %v6887
        %8961 = vmatprep.subr.bf16.mxu0 %v6896
        %8962 = vmatpush1.bf16.msra.mxu0 %v6895
        %8963 = vmatprep.subr.bf16.mxu0 %v6904
        %8964 = vmatpush1.bf16.msra.mxu0 %v6903
        %8965 = vmatprep.subr.bf16.mxu0 %v6912
        %8966 = vmatpush1.bf16.msra.mxu0 %v6911
        %8967 = vmatprep.subr.bf16.mxu0 %v6920
        %8968 = vmatpush1.bf16.msra.mxu0 %v6919
        %8969 = vmatprep.subr.bf16.mxu0 %v6928
        %8970 = vmatpush1.bf16.msra.mxu0 %v6927
        %8971 = vmatprep.subr.bf16.mxu0 %v6936
        %8972 = vmatpush1.bf16.msra.mxu0 %v6935
        %8973 = vmatprep.subr.bf16.mxu0 %v6944
        %8974 = vmatpush1.bf16.msra.mxu0 %v6943
        %8975 = vmatprep.subr.bf16.mxu0 %v6952
        %8976 = vmatpush1.bf16.msra.mxu0 %v6951
        %8977 = vmatprep.subr.bf16.mxu0 %v6960
        %8978 = vmatpush1.bf16.msra.mxu0 %v6959
        %8979 = vmatprep.subr.bf16.mxu0 %v6968
        %8980 = vmatpush1.bf16.msra.mxu0 %v6967
        %8981 = vmatprep.subr.bf16.mxu0 %v6976
        %8982 = vmatpush1.bf16.msra.mxu0 %v6975
        %8983 = vmatprep.subr.bf16.mxu0 %v6984
        %8984 = vmatpush1.bf16.msra.mxu0 %v6983
        %8985 = vmatprep.subr.bf16.mxu0 %v6992
        %8986 = vmatpush1.bf16.msra.mxu0 %v6991
        %8987 = vmatprep.mubr.bf16.mxu0 %v4740
        %8988 = vmatmul.mubr.bf16.gmra.mrb[0].mxu0 %v4739
        %v8989 = vpop.f32.mrb[0].mxu0
        %v8990 = vadd.f32 0.0, %v8989
        %v8991 = vpop.f32.mrb[0].mxu0
        %v8992 = vadd.f32 0.0, %v8991
        %v8993 = vpop.f32.mrb[0].mxu0
        %v8994 = vadd.f32 0.0, %v8993
        %v8995 = vpop.f32.mrb[0].mxu0
        %v8996 = vadd.f32 0.0, %v8995
        %8997 = vmatprep.mubr.bf16.mxu0 %v4748
        %8998 = vmatmul.mubr.bf16.gmra.mrb[0].mxu0 %v4747
        %v8999 = vpop.f32.mrb[0].mxu0
        %v9000 = vadd.f32 0.0, %v8999
        %v9001 = vpop.f32.mrb[0].mxu0
        %v9002 = vadd.f32 0.0, %v9001
        %v9003 = vpop.f32.mrb[0].mxu0
        %v9004 = vadd.f32 0.0, %v9003
        %v9005 = vpop.f32.mrb[0].mxu0
        %v9006 = vadd.f32 0.0, %v9005
        %9007 = vmatprep.mubr.bf16.mxu0 %v4756
        %9008 = vmatmul.mubr.bf16.gmra.mrb[0].mxu0 %v4755
        %v9009 = vpop.f32.mrb[0].mxu0
        %v9010 = vadd.f32 0.0, %v9009
        %v9011 = vpop.f32.mrb[0].mxu0
        %v9012 = vadd.f32 0.0, %v9011
        %v9013 = vpop.f32.mrb[0].mxu0
        %v9014 = vadd.f32 0.0, %v9013
        %v9015 = vpop.f32.mrb[0].mxu0
        %v9016 = vadd.f32 0.0, %v9015
        %9017 = vmatprep.mubr.bf16.mxu0 %v4764
        %9018 = vmatmul.mubr.bf16.gmra.mrb[0].mxu0 %v4763
        %v9019 = vpop.f32.mrb[0].mxu0
        %v9020 = vadd.f32 0.0, %v9019
        %v9021 = vpop.f32.mrb[0].mxu0
        %v9022 = vadd.f32 0.0, %v9021
        %v9023 = vpop.f32.mrb[0].mxu0
        %v9024 = vadd.f32 0.0, %v9023
        %v9025 = vpop.f32.mrb[0].mxu0
        %v9026 = vadd.f32 0.0, %v9025
        %9027 = vmatprep.mubr.bf16.mxu0 %v4772
        %9028 = vmatmul.mubr.bf16.gmra.mrb[0].mxu0 %v4771
        %v9029 = vpop.f32.mrb[0].mxu0
        %v9030 = vadd.f32 0.0, %v9029
        %v9031 = vpop.f32.mrb[0].mxu0
        %v9032 = vadd.f32 0.0, %v9031
        %v9033 = vpop.f32.mrb[0].mxu0
        %v9034 = vadd.f32 0.0, %v9033
        %v9035 = vpop.f32.mrb[0].mxu0
        %v9036 = vadd.f32 0.0, %v9035
        %9037 = vmatprep.mubr.bf16.mxu0 %v4780
        %9038 = vmatmul.mubr.bf16.gmra.mrb[0].mxu0 %v4779
        %v9039 = vpop.f32.mrb[0].mxu0
        %v9040 = vadd.f32 0.0, %v9039
        %v9041 = vpop.f32.mrb[0].mxu0
        %v9042 = vadd.f32 0.0, %v9041
        %v9043 = vpop.f32.mrb[0].mxu0
        %v9044 = vadd.f32 0.0, %v9043
        %v9045 = vpop.f32.mrb[0].mxu0
        %v9046 = vadd.f32 0.0, %v9045
        %9047 = vmatprep.mubr.bf16.mxu0 %v4788
        %9048 = vmatmul.mubr.bf16.gmra.mrb[0].mxu0 %v4787
        %v9049 = vpop.f32.mrb[0].mxu0
        %v9050 = vadd.f32 0.0, %v9049
        %v9051 = vpop.f32.mrb[0].mxu0
        %v9052 = vadd.f32 0.0, %v9051
        %v9053 = vpop.f32.mrb[0].mxu0
        %v9054 = vadd.f32 0.0, %v9053
        %v9055 = vpop.f32.mrb[0].mxu0
        %v9056 = vadd.f32 0.0, %v9055
        %9057 = vmatprep.mubr.bf16.mxu0 %v4796
        %9058 = vmatmul.mubr.bf16.gmra.mrb[0].mxu0 %v4795
        %v9059 = vpop.f32.mrb[0].mxu0
        %v9060 = vadd.f32 0.0, %v9059
        %v9061 = vpop.f32.mrb[0].mxu0
        %v9062 = vadd.f32 0.0, %v9061
        %v9063 = vpop.f32.mrb[0].mxu0
        %v9064 = vadd.f32 0.0, %v9063
        %v9065 = vpop.f32.mrb[0].mxu0
        %v9066 = vadd.f32 0.0, %v9065
        %9067 = vmatprep.mubr.bf16.mxu0 %v4804
        %9068 = vmatmul.mubr.bf16.gmra.mrb[0].mxu0 %v4803
        %v9069 = vpop.f32.mrb[0].mxu0
        %v9070 = vadd.f32 0.0, %v9069
        %v9071 = vpop.f32.mrb[0].mxu0
        %v9072 = vadd.f32 0.0, %v9071
        %v9073 = vpop.f32.mrb[0].mxu0
        %v9074 = vadd.f32 0.0, %v9073
        %v9075 = vpop.f32.mrb[0].mxu0
        %v9076 = vadd.f32 0.0, %v9075
        %9077 = vmatprep.mubr.bf16.mxu0 %v4812
        %9078 = vmatmul.mubr.bf16.gmra.mrb[0].mxu0 %v4811
        %v9079 = vpop.f32.mrb[0].mxu0
        %v9080 = vadd.f32 0.0, %v9079
        %v9081 = vpop.f32.mrb[0].mxu0
        %v9082 = vadd.f32 0.0, %v9081
        %v9083 = vpop.f32.mrb[0].mxu0
        %v9084 = vadd.f32 0.0, %v9083
        %v9085 = vpop.f32.mrb[0].mxu0
        %v9086 = vadd.f32 0.0, %v9085
        %9087 = vdwg.mxu0
        %9088 = vmatprep.subr.bf16.mxu0 %v7000
        %9089 = vmatpush1.bf16.msra.mxu0 %v6999
        %9090 = vmatprep.subr.bf16.mxu0 %v7008
        %9091 = vmatpush1.bf16.msra.mxu0 %v7007
        %9092 = vmatprep.subr.bf16.mxu0 %v7016
        %9093 = vmatpush1.bf16.msra.mxu0 %v7015
        %9094 = vmatprep.subr.bf16.mxu0 %v7024
        %9095 = vmatpush1.bf16.msra.mxu0 %v7023
        %9096 = vmatprep.subr.bf16.mxu0 %v7032
        %9097 = vmatpush1.bf16.msra.mxu0 %v7031
        %9098 = vmatprep.subr.bf16.mxu0 %v7040
        %9099 = vmatpush1.bf16.msra.mxu0 %v7039
        %9100 = vmatprep.subr.bf16.mxu0 %v7048
        %9101 = vmatpush1.bf16.msra.mxu0 %v7047
        %9102 = vmatprep.subr.bf16.mxu0 %v7056
        %9103 = vmatpush1.bf16.msra.mxu0 %v7055
        %9104 = vmatprep.subr.bf16.mxu0 %v7064
        %9105 = vmatpush1.bf16.msra.mxu0 %v7063
        %9106 = vmatprep.subr.bf16.mxu0 %v7072
        %9107 = vmatpush1.bf16.msra.mxu0 %v7071
        %9108 = vmatprep.subr.bf16.mxu0 %v7080
        %9109 = vmatpush1.bf16.msra.mxu0 %v7079
        %9110 = vmatprep.subr.bf16.mxu0 %v7088
        %9111 = vmatpush1.bf16.msra.mxu0 %v7087
        %9112 = vmatprep.subr.bf16.mxu0 %v7096
        %9113 = vmatpush1.bf16.msra.mxu0 %v7095
        %9114 = vmatprep.subr.bf16.mxu0 %v7104
        %9115 = vmatpush1.bf16.msra.mxu0 %v7103
        %9116 = vmatprep.subr.bf16.mxu0 %v7112
        %9117 = vmatpush1.bf16.msra.mxu0 %v7111
        %9118 = vmatprep.subr.bf16.mxu0 %v7120
        %9119 = vmatpush1.bf16.msra.mxu0 %v7119
        %9120 = vmatprep.mubr.bf16.mxu0 %v4742
        %9121 = vmatmul.mubr.bf16.gmra.mrb[0].mxu0 %v4741
        %v9122 = vpop.f32.mrb[0].mxu0
        %v9123 = vadd.f32 %v8990, %v9122
        %v9124 = vpop.f32.mrb[0].mxu0
        %v9125 = vadd.f32 %v8992, %v9124
        %v9126 = vpop.f32.mrb[0].mxu0
        %v9127 = vadd.f32 %v8994, %v9126
        %v9128 = vpop.f32.mrb[0].mxu0
        %v9129 = vadd.f32 %v8996, %v9128
        %9130 = vmatprep.mubr.bf16.mxu0 %v4750
        %9131 = vmatmul.mubr.bf16.gmra.mrb[0].mxu0 %v4749
        %v9132 = vpop.f32.mrb[0].mxu0
        %v9133 = vadd.f32 %v9000, %v9132
        %v9134 = vpop.f32.mrb[0].mxu0
        %v9135 = vadd.f32 %v9002, %v9134
        %v9136 = vpop.f32.mrb[0].mxu0
        %v9137 = vadd.f32 %v9004, %v9136
        %v9138 = vpop.f32.mrb[0].mxu0
        %v9139 = vadd.f32 %v9006, %v9138
        %9140 = vmatprep.mubr.bf16.mxu0 %v4758
        %9141 = vmatmul.mubr.bf16.gmra.mrb[0].mxu0 %v4757
        %v9142 = vpop.f32.mrb[0].mxu0
        %v9143 = vadd.f32 %v9010, %v9142
        %v9144 = vpop.f32.mrb[0].mxu0
        %v9145 = vadd.f32 %v9012, %v9144
        %v9146 = vpop.f32.mrb[0].mxu0
        %v9147 = vadd.f32 %v9014, %v9146
        %v9148 = vpop.f32.mrb[0].mxu0
        %v9149 = vadd.f32 %v9016, %v9148
        %9150 = vmatprep.mubr.bf16.mxu0 %v4766
        %9151 = vmatmul.mubr.bf16.gmra.mrb[0].mxu0 %v4765
        %v9152 = vpop.f32.mrb[0].mxu0
        %v9153 = vadd.f32 %v9020, %v9152
        %v9154 = vpop.f32.mrb[0].mxu0
        %v9155 = vadd.f32 %v9022, %v9154
        %v9156 = vpop.f32.mrb[0].mxu0
        %v9157 = vadd.f32 %v9024, %v9156
        %v9158 = vpop.f32.mrb[0].mxu0
        %v9159 = vadd.f32 %v9026, %v9158
        %9160 = vmatprep.mubr.bf16.mxu0 %v4774
        %9161 = vmatmul.mubr.bf16.gmra.mrb[0].mxu0 %v4773
        %v9162 = vpop.f32.mrb[0].mxu0
        %v9163 = vadd.f32 %v9030, %v9162
        %v9164 = vpop.f32.mrb[0].mxu0
        %v9165 = vadd.f32 %v9032, %v9164
        %v9166 = vpop.f32.mrb[0].mxu0
        %v9167 = vadd.f32 %v9034, %v9166
        %v9168 = vpop.f32.mrb[0].mxu0
        %v9169 = vadd.f32 %v9036, %v9168
        %9170 = vmatprep.mubr.bf16.mxu0 %v4782
        %9171 = vmatmul.mubr.bf16.gmra.mrb[0].mxu0 %v4781
        %v9172 = vpop.f32.mrb[0].mxu0
        %v9173 = vadd.f32 %v9040, %v9172
        %v9174 = vpop.f32.mrb[0].mxu0
        %v9175 = vadd.f32 %v9042, %v9174
        %v9176 = vpop.f32.mrb[0].mxu0
        %v9177 = vadd.f32 %v9044, %v9176
        %v9178 = vpop.f32.mrb[0].mxu0
        %v9179 = vadd.f32 %v9046, %v9178
        %9180 = vmatprep.mubr.bf16.mxu0 %v4790
        %9181 = vmatmul.mubr.bf16.gmra.mrb[0].mxu0 %v4789
        %v9182 = vpop.f32.mrb[0].mxu0
        %v9183 = vadd.f32 %v9050, %v9182
        %v9184 = vpop.f32.mrb[0].mxu0
        %v9185 = vadd.f32 %v9052, %v9184
        %v9186 = vpop.f32.mrb[0].mxu0
        %v9187 = vadd.f32 %v9054, %v9186
        %v9188 = vpop.f32.mrb[0].mxu0
        %v9189 = vadd.f32 %v9056, %v9188
        %9190 = vmatprep.mubr.bf16.mxu0 %v4798
        %9191 = vmatmul.mubr.bf16.gmra.mrb[0].mxu0 %v4797
        %v9192 = vpop.f32.mrb[0].mxu0
        %v9193 = vadd.f32 %v9060, %v9192
        %v9194 = vpop.f32.mrb[0].mxu0
        %v9195 = vadd.f32 %v9062, %v9194
        %v9196 = vpop.f32.mrb[0].mxu0
        %v9197 = vadd.f32 %v9064, %v9196
        %v9198 = vpop.f32.mrb[0].mxu0
        %v9199 = vadd.f32 %v9066, %v9198
        %9200 = vmatprep.mubr.bf16.mxu0 %v4806
        %9201 = vmatmul.mubr.bf16.gmra.mrb[0].mxu0 %v4805
        %v9202 = vpop.f32.mrb[0].mxu0
        %v9203 = vadd.f32 %v9070, %v9202
        %v9204 = vpop.f32.mrb[0].mxu0
        %v9205 = vadd.f32 %v9072, %v9204
        %v9206 = vpop.f32.mrb[0].mxu0
        %v9207 = vadd.f32 %v9074, %v9206
        %v9208 = vpop.f32.mrb[0].mxu0
        %v9209 = vadd.f32 %v9076, %v9208
        %9210 = vmatprep.mubr.bf16.mxu0 %v4814
        %9211 = vmatmul.mubr.bf16.gmra.mrb[0].mxu0 %v4813
        %v9212 = vpop.f32.mrb[0].mxu0
        %v9213 = vadd.f32 %v9080, %v9212
        %v9214 = vpop.f32.mrb[0].mxu0
        %v9215 = vadd.f32 %v9082, %v9214
        %v9216 = vpop.f32.mrb[0].mxu0
        %v9217 = vadd.f32 %v9084, %v9216
        %v9218 = vpop.f32.mrb[0].mxu0
        %v9219 = vadd.f32 %v9086, %v9218
        %9220 = vdwg.mxu0
        %9221 = vmatprep.subr.bf16.mxu0 %v7128
        %9222 = vmatpush1.bf16.msra.mxu0 %v7127
        %9223 = vmatprep.subr.bf16.mxu0 %v7136
        %9224 = vmatpush1.bf16.msra.mxu0 %v7135
        %9225 = vmatprep.subr.bf16.mxu0 %v7144
        %9226 = vmatpush1.bf16.msra.mxu0 %v7143
        %9227 = vmatprep.subr.bf16.mxu0 %v7152
        %9228 = vmatpush1.bf16.msra.mxu0 %v7151
        %9229 = vmatprep.subr.bf16.mxu0 %v7160
        %9230 = vmatpush1.bf16.msra.mxu0 %v7159
        %9231 = vmatprep.subr.bf16.mxu0 %v7168
        %9232 = vmatpush1.bf16.msra.mxu0 %v7167
        %9233 = vmatprep.subr.bf16.mxu0 %v7176
        %9234 = vmatpush1.bf16.msra.mxu0 %v7175
        %9235 = vmatprep.subr.bf16.mxu0 %v7184
        %9236 = vmatpush1.bf16.msra.mxu0 %v7183
        %9237 = vmatprep.subr.bf16.mxu0 %v7192
        %9238 = vmatpush1.bf16.msra.mxu0 %v7191
        %9239 = vmatprep.subr.bf16.mxu0 %v7200
        %9240 = vmatpush1.bf16.msra.mxu0 %v7199
        %9241 = vmatprep.subr.bf16.mxu0 %v7208
        %9242 = vmatpush1.bf16.msra.mxu0 %v7207
        %9243 = vmatprep.subr.bf16.mxu0 %v7216
        %9244 = vmatpush1.bf16.msra.mxu0 %v7215
        %9245 = vmatprep.subr.bf16.mxu0 %v7224
        %9246 = vmatpush1.bf16.msra.mxu0 %v7223
        %9247 = vmatprep.subr.bf16.mxu0 %v7232
        %9248 = vmatpush1.bf16.msra.mxu0 %v7231
        %9249 = vmatprep.subr.bf16.mxu0 %v7240
        %9250 = vmatpush1.bf16.msra.mxu0 %v7239
        %9251 = vmatprep.subr.bf16.mxu0 %v7248
        %9252 = vmatpush1.bf16.msra.mxu0 %v7247
        %9253 = vmatprep.mubr.bf16.mxu0 %v4744
        %9254 = vmatmul.mubr.bf16.gmra.mrb[0].mxu0 %v4743
        %v9255 = vpop.f32.mrb[0].mxu0
        %v9256 = vadd.f32 %v9123, %v9255
        %v9257 = vpop.f32.mrb[0].mxu0
        %v9258 = vadd.f32 %v9125, %v9257
        %v9259 = vpop.f32.mrb[0].mxu0
        %v9260 = vadd.f32 %v9127, %v9259
        %v9261 = vpop.f32.mrb[0].mxu0
        %v9262 = vadd.f32 %v9129, %v9261
        %9263 = vmatprep.mubr.bf16.mxu0 %v4752
        %9264 = vmatmul.mubr.bf16.gmra.mrb[0].mxu0 %v4751
        %v9265 = vpop.f32.mrb[0].mxu0
        %v9266 = vadd.f32 %v9133, %v9265
        %v9267 = vpop.f32.mrb[0].mxu0
        %v9268 = vadd.f32 %v9135, %v9267
        %v9269 = vpop.f32.mrb[0].mxu0
        %v9270 = vadd.f32 %v9137, %v9269
        %v9271 = vpop.f32.mrb[0].mxu0
        %v9272 = vadd.f32 %v9139, %v9271
        %9273 = vmatprep.mubr.bf16.mxu0 %v4760
        %9274 = vmatmul.mubr.bf16.gmra.mrb[0].mxu0 %v4759
        %v9275 = vpop.f32.mrb[0].mxu0
        %v9276 = vadd.f32 %v9143, %v9275
        %v9277 = vpop.f32.mrb[0].mxu0
        %v9278 = vadd.f32 %v9145, %v9277
        %v9279 = vpop.f32.mrb[0].mxu0
        %v9280 = vadd.f32 %v9147, %v9279
        %v9281 = vpop.f32.mrb[0].mxu0
        %v9282 = vadd.f32 %v9149, %v9281
        %9283 = vmatprep.mubr.bf16.mxu0 %v4768
        %9284 = vmatmul.mubr.bf16.gmra.mrb[0].mxu0 %v4767
        %v9285 = vpop.f32.mrb[0].mxu0
        %v9286 = vadd.f32 %v9153, %v9285
        %v9287 = vpop.f32.mrb[0].mxu0
        %v9288 = vadd.f32 %v9155, %v9287
        %v9289 = vpop.f32.mrb[0].mxu0
        %v9290 = vadd.f32 %v9157, %v9289
        %v9291 = vpop.f32.mrb[0].mxu0
        %v9292 = vadd.f32 %v9159, %v9291
        %9293 = vmatprep.mubr.bf16.mxu0 %v4776
        %9294 = vmatmul.mubr.bf16.gmra.mrb[0].mxu0 %v4775
        %v9295 = vpop.f32.mrb[0].mxu0
        %v9296 = vadd.f32 %v9163, %v9295
        %v9297 = vpop.f32.mrb[0].mxu0
        %v9298 = vadd.f32 %v9165, %v9297
        %v9299 = vpop.f32.mrb[0].mxu0
        %v9300 = vadd.f32 %v9167, %v9299
        %v9301 = vpop.f32.mrb[0].mxu0
        %v9302 = vadd.f32 %v9169, %v9301
        %9303 = vmatprep.mubr.bf16.mxu0 %v4784
        %9304 = vmatmul.mubr.bf16.gmra.mrb[0].mxu0 %v4783
        %v9305 = vpop.f32.mrb[0].mxu0
        %v9306 = vadd.f32 %v9173, %v9305
        %v9307 = vpop.f32.mrb[0].mxu0
        %v9308 = vadd.f32 %v9175, %v9307
        %v9309 = vpop.f32.mrb[0].mxu0
        %v9310 = vadd.f32 %v9177, %v9309
        %v9311 = vpop.f32.mrb[0].mxu0
        %v9312 = vadd.f32 %v9179, %v9311
        %9313 = vmatprep.mubr.bf16.mxu0 %v4792
        %9314 = vmatmul.mubr.bf16.gmra.mrb[0].mxu0 %v4791
        %v9315 = vpop.f32.mrb[0].mxu0
        %v9316 = vadd.f32 %v9183, %v9315
        %v9317 = vpop.f32.mrb[0].mxu0
        %v9318 = vadd.f32 %v9185, %v9317
        %v9319 = vpop.f32.mrb[0].mxu0
        %v9320 = vadd.f32 %v9187, %v9319
        %v9321 = vpop.f32.mrb[0].mxu0
        %v9322 = vadd.f32 %v9189, %v9321
        %9323 = vmatprep.mubr.bf16.mxu0 %v4800
        %9324 = vmatmul.mubr.bf16.gmra.mrb[0].mxu0 %v4799
        %v9325 = vpop.f32.mrb[0].mxu0
        %v9326 = vadd.f32 %v9193, %v9325
        %v9327 = vpop.f32.mrb[0].mxu0
        %v9328 = vadd.f32 %v9195, %v9327
        %v9329 = vpop.f32.mrb[0].mxu0
        %v9330 = vadd.f32 %v9197, %v9329
        %v9331 = vpop.f32.mrb[0].mxu0
        %v9332 = vadd.f32 %v9199, %v9331
        %9333 = vmatprep.mubr.bf16.mxu0 %v4808
        %9334 = vmatmul.mubr.bf16.gmra.mrb[0].mxu0 %v4807
        %v9335 = vpop.f32.mrb[0].mxu0
        %v9336 = vadd.f32 %v9203, %v9335
        %v9337 = vpop.f32.mrb[0].mxu0
        %v9338 = vadd.f32 %v9205, %v9337
        %v9339 = vpop.f32.mrb[0].mxu0
        %v9340 = vadd.f32 %v9207, %v9339
        %v9341 = vpop.f32.mrb[0].mxu0
        %v9342 = vadd.f32 %v9209, %v9341
        %9343 = vmatprep.mubr.bf16.mxu0 %v4816
        %9344 = vmatmul.mubr.bf16.gmra.mrb[0].mxu0 %v4815
        %v9345 = vpop.f32.mrb[0].mxu0
        %v9346 = vadd.f32 %v9213, %v9345
        %v9347 = vpop.f32.mrb[0].mxu0
        %v9348 = vadd.f32 %v9215, %v9347
        %v9349 = vpop.f32.mrb[0].mxu0
        %v9350 = vadd.f32 %v9217, %v9349
        %v9351 = vpop.f32.mrb[0].mxu0
        %v9352 = vadd.f32 %v9219, %v9351
        %9353 = vdwg.mxu0
        %9354 = vmatprep.subr.bf16.mxu0 %v7256
        %9355 = vmatpush1.bf16.msra.mxu0 %v7255
        %9356 = vmatprep.subr.bf16.mxu0 %v7264
        %9357 = vmatpush1.bf16.msra.mxu0 %v7263
        %9358 = vmatprep.subr.bf16.mxu0 %v7272
        %9359 = vmatpush1.bf16.msra.mxu0 %v7271
        %9360 = vmatprep.subr.bf16.mxu0 %v7280
        %9361 = vmatpush1.bf16.msra.mxu0 %v7279
        %9362 = vmatprep.subr.bf16.mxu0 %v7288
        %9363 = vmatpush1.bf16.msra.mxu0 %v7287
        %9364 = vmatprep.subr.bf16.mxu0 %v7296
        %9365 = vmatpush1.bf16.msra.mxu0 %v7295
        %9366 = vmatprep.subr.bf16.mxu0 %v7304
        %9367 = vmatpush1.bf16.msra.mxu0 %v7303
        %9368 = vmatprep.subr.bf16.mxu0 %v7312
        %9369 = vmatpush1.bf16.msra.mxu0 %v7311
        %9370 = vmatprep.subr.bf16.mxu0 %v7320
        %9371 = vmatpush1.bf16.msra.mxu0 %v7319
        %9372 = vmatprep.subr.bf16.mxu0 %v7328
        %9373 = vmatpush1.bf16.msra.mxu0 %v7327
        %9374 = vmatprep.subr.bf16.mxu0 %v7336
        %9375 = vmatpush1.bf16.msra.mxu0 %v7335
        %9376 = vmatprep.subr.bf16.mxu0 %v7344
        %9377 = vmatpush1.bf16.msra.mxu0 %v7343
        %9378 = vmatprep.subr.bf16.mxu0 %v7352
        %9379 = vmatpush1.bf16.msra.mxu0 %v7351
        %9380 = vmatprep.subr.bf16.mxu0 %v7360
        %9381 = vmatpush1.bf16.msra.mxu0 %v7359
        %9382 = vmatprep.subr.bf16.mxu0 %v7368
        %9383 = vmatpush1.bf16.msra.mxu0 %v7367
        %9384 = vmatprep.subr.bf16.mxu0 %v7376
        %9385 = vmatpush1.bf16.msra.mxu0 %v7375
        %9386 = vmatprep.mubr.bf16.mxu0 %v4746
        %9387 = vmatmul.mubr.bf16.gmra.mrb[0].mxu0 %v4745
        %v9388 = vpop.f32.mrb[0].mxu0
        %v9389 = vadd.f32 %v9256, %v9388
        %v9390 = vpop.f32.mrb[0].mxu0
        %v9391 = vadd.f32 %v9258, %v9390
        %v9392 = vpop.f32.mrb[0].mxu0
        %v9393 = vadd.f32 %v9260, %v9392
        %v9394 = vpop.f32.mrb[0].mxu0
        %v9395 = vadd.f32 %v9262, %v9394
        %9396 = vmatprep.mubr.bf16.mxu0 %v4754
        %9397 = vmatmul.mubr.bf16.gmra.mrb[0].mxu0 %v4753
        %v9398 = vpop.f32.mrb[0].mxu0
        %v9399 = vadd.f32 %v9266, %v9398
        %v9400 = vpop.f32.mrb[0].mxu0
        %v9401 = vadd.f32 %v9268, %v9400
        %v9402 = vpop.f32.mrb[0].mxu0
        %v9403 = vadd.f32 %v9270, %v9402
        %v9404 = vpop.f32.mrb[0].mxu0
        %v9405 = vadd.f32 %v9272, %v9404
        %9406 = vmatprep.mubr.bf16.mxu0 %v4762
        %9407 = vmatmul.mubr.bf16.gmra.mrb[0].mxu0 %v4761
        %v9408 = vpop.f32.mrb[0].mxu0
        %v9409 = vadd.f32 %v9276, %v9408
        %v9410 = vpop.f32.mrb[0].mxu0
        %v9411 = vadd.f32 %v9278, %v9410
        %v9412 = vpop.f32.mrb[0].mxu0
        %v9413 = vadd.f32 %v9280, %v9412
        %v9414 = vpop.f32.mrb[0].mxu0
        %v9415 = vadd.f32 %v9282, %v9414
        %9416 = vmatprep.mubr.bf16.mxu0 %v4770
        %9417 = vmatmul.mubr.bf16.gmra.mrb[0].mxu0 %v4769
        %v9418 = vpop.f32.mrb[0].mxu0
        %v9419 = vadd.f32 %v9286, %v9418
        %v9420 = vpop.f32.mrb[0].mxu0
        %v9421 = vadd.f32 %v9288, %v9420
        %v9422 = vpop.f32.mrb[0].mxu0
        %v9423 = vadd.f32 %v9290, %v9422
        %v9424 = vpop.f32.mrb[0].mxu0
        %v9425 = vadd.f32 %v9292, %v9424
        %9426 = vmatprep.mubr.bf16.mxu0 %v4778
        %9427 = vmatmul.mubr.bf16.gmra.mrb[0].mxu0 %v4777
        %v9428 = vpop.f32.mrb[0].mxu0
        %v9429 = vadd.f32 %v9296, %v9428
        %v9430 = vpop.f32.mrb[0].mxu0
        %v9431 = vadd.f32 %v9298, %v9430
        %v9432 = vpop.f32.mrb[0].mxu0
        %v9433 = vadd.f32 %v9300, %v9432
        %v9434 = vpop.f32.mrb[0].mxu0
        %v9435 = vadd.f32 %v9302, %v9434
        %9436 = vmatprep.mubr.bf16.mxu0 %v4786
        %9437 = vmatmul.mubr.bf16.gmra.mrb[0].mxu0 %v4785
        %v9438 = vpop.f32.mrb[0].mxu0
        %v9439 = vadd.f32 %v9306, %v9438
        %v9440 = vpop.f32.mrb[0].mxu0
        %v9441 = vadd.f32 %v9308, %v9440
        %v9442 = vpop.f32.mrb[0].mxu0
        %v9443 = vadd.f32 %v9310, %v9442
        %v9444 = vpop.f32.mrb[0].mxu0
        %v9445 = vadd.f32 %v9312, %v9444
        %9446 = vmatprep.mubr.bf16.mxu0 %v4794
        %9447 = vmatmul.mubr.bf16.gmra.mrb[0].mxu0 %v4793
        %v9448 = vpop.f32.mrb[0].mxu0
        %v9449 = vadd.f32 %v9316, %v9448
        %v9450 = vpop.f32.mrb[0].mxu0
        %v9451 = vadd.f32 %v9318, %v9450
        %v9452 = vpop.f32.mrb[0].mxu0
        %v9453 = vadd.f32 %v9320, %v9452
        %v9454 = vpop.f32.mrb[0].mxu0
        %v9455 = vadd.f32 %v9322, %v9454
        %9456 = vmatprep.mubr.bf16.mxu0 %v4802
        %9457 = vmatmul.mubr.bf16.gmra.mrb[0].mxu0 %v4801
        %v9458 = vpop.f32.mrb[0].mxu0
        %v9459 = vadd.f32 %v9326, %v9458
        %v9460 = vpop.f32.mrb[0].mxu0
        %v9461 = vadd.f32 %v9328, %v9460
        %v9462 = vpop.f32.mrb[0].mxu0
        %v9463 = vadd.f32 %v9330, %v9462
        %v9464 = vpop.f32.mrb[0].mxu0
        %v9465 = vadd.f32 %v9332, %v9464
        %9466 = vmatprep.mubr.bf16.mxu0 %v4810
        %9467 = vmatmul.mubr.bf16.gmra.mrb[0].mxu0 %v4809
        %v9468 = vpop.f32.mrb[0].mxu0
        %v9469 = vadd.f32 %v9336, %v9468
        %v9470 = vpop.f32.mrb[0].mxu0
        %v9471 = vadd.f32 %v9338, %v9470
        %v9472 = vpop.f32.mrb[0].mxu0
        %v9473 = vadd.f32 %v9340, %v9472
        %v9474 = vpop.f32.mrb[0].mxu0
        %v9475 = vadd.f32 %v9342, %v9474
        %9476 = vmatprep.mubr.bf16.mxu0 %v4818
        %9477 = vmatmul.mubr.bf16.gmra.mrb[0].mxu0 %v4817
        %v9478 = vpop.f32.mrb[0].mxu0
        %v9479 = vadd.f32 %v9346, %v9478
        %v9480 = vpop.f32.mrb[0].mxu0
        %v9481 = vadd.f32 %v9348, %v9480
        %v9482 = vpop.f32.mrb[0].mxu0
        %v9483 = vadd.f32 %v9350, %v9482
        %v9484 = vpop.f32.mrb[0].mxu0
        %v9485 = vadd.f32 %v9352, %v9484
        %9486 = vdwg.mxu0
        %9487 = vmatprep.subr.bf16.mxu0 %v6874
        %9488 = vmatpush1.bf16.msra.mxu0 %v6873
        %9489 = vmatprep.subr.bf16.mxu0 %v6882
        %9490 = vmatpush1.bf16.msra.mxu0 %v6881
        %9491 = vmatprep.subr.bf16.mxu0 %v6890
        %9492 = vmatpush1.bf16.msra.mxu0 %v6889
        %9493 = vmatprep.subr.bf16.mxu0 %v6898
        %9494 = vmatpush1.bf16.msra.mxu0 %v6897
        %9495 = vmatprep.subr.bf16.mxu0 %v6906
        %9496 = vmatpush1.bf16.msra.mxu0 %v6905
        %9497 = vmatprep.subr.bf16.mxu0 %v6914
        %9498 = vmatpush1.bf16.msra.mxu0 %v6913
        %9499 = vmatprep.subr.bf16.mxu0 %v6922
        %9500 = vmatpush1.bf16.msra.mxu0 %v6921
        %9501 = vmatprep.subr.bf16.mxu0 %v6930
        %9502 = vmatpush1.bf16.msra.mxu0 %v6929
        %9503 = vmatprep.subr.bf16.mxu0 %v6938
        %9504 = vmatpush1.bf16.msra.mxu0 %v6937
        %9505 = vmatprep.subr.bf16.mxu0 %v6946
        %9506 = vmatpush1.bf16.msra.mxu0 %v6945
        %9507 = vmatprep.subr.bf16.mxu0 %v6954
        %9508 = vmatpush1.bf16.msra.mxu0 %v6953
        %9509 = vmatprep.subr.bf16.mxu0 %v6962
        %9510 = vmatpush1.bf16.msra.mxu0 %v6961
        %9511 = vmatprep.subr.bf16.mxu0 %v6970
        %9512 = vmatpush1.bf16.msra.mxu0 %v6969
        %9513 = vmatprep.subr.bf16.mxu0 %v6978
        %9514 = vmatpush1.bf16.msra.mxu0 %v6977
        %9515 = vmatprep.subr.bf16.mxu0 %v6986
        %9516 = vmatpush1.bf16.msra.mxu0 %v6985
        %9517 = vmatprep.subr.bf16.mxu0 %v6994
        %9518 = vmatpush1.bf16.msra.mxu0 %v6993
        %9519 = vmatprep.mubr.bf16.mxu0 %v4740
        %9520 = vmatmul.mubr.bf16.gmra.mrb[0].mxu0 %v4739
        %v9521 = vpop.f32.mrb[0].mxu0
        %v9522 = vadd.f32 0.0, %v9521
        %v9523 = vpop.f32.mrb[0].mxu0
        %v9524 = vadd.f32 0.0, %v9523
        %v9525 = vpop.f32.mrb[0].mxu0
        %v9526 = vadd.f32 0.0, %v9525
        %v9527 = vpop.f32.mrb[0].mxu0
        %v9528 = vadd.f32 0.0, %v9527
        %9529 = vmatprep.mubr.bf16.mxu0 %v4748
        %9530 = vmatmul.mubr.bf16.gmra.mrb[0].mxu0 %v4747
        %v9531 = vpop.f32.mrb[0].mxu0
        %v9532 = vadd.f32 0.0, %v9531
        %v9533 = vpop.f32.mrb[0].mxu0
        %v9534 = vadd.f32 0.0, %v9533
        %v9535 = vpop.f32.mrb[0].mxu0
        %v9536 = vadd.f32 0.0, %v9535
        %v9537 = vpop.f32.mrb[0].mxu0
        %v9538 = vadd.f32 0.0, %v9537
        %9539 = vmatprep.mubr.bf16.mxu0 %v4756
        %9540 = vmatmul.mubr.bf16.gmra.mrb[0].mxu0 %v4755
        %v9541 = vpop.f32.mrb[0].mxu0
        %v9542 = vadd.f32 0.0, %v9541
        %v9543 = vpop.f32.mrb[0].mxu0
        %v9544 = vadd.f32 0.0, %v9543
        %v9545 = vpop.f32.mrb[0].mxu0
        %v9546 = vadd.f32 0.0, %v9545
        %v9547 = vpop.f32.mrb[0].mxu0
        %v9548 = vadd.f32 0.0, %v9547
        %9549 = vmatprep.mubr.bf16.mxu0 %v4764
        %9550 = vmatmul.mubr.bf16.gmra.mrb[0].mxu0 %v4763
        %v9551 = vpop.f32.mrb[0].mxu0
        %v9552 = vadd.f32 0.0, %v9551
        %v9553 = vpop.f32.mrb[0].mxu0
        %v9554 = vadd.f32 0.0, %v9553
        %v9555 = vpop.f32.mrb[0].mxu0
        %v9556 = vadd.f32 0.0, %v9555
        %v9557 = vpop.f32.mrb[0].mxu0
        %v9558 = vadd.f32 0.0, %v9557
        %9559 = vmatprep.mubr.bf16.mxu0 %v4772
        %9560 = vmatmul.mubr.bf16.gmra.mrb[0].mxu0 %v4771
        %v9561 = vpop.f32.mrb[0].mxu0
        %v9562 = vadd.f32 0.0, %v9561
        %v9563 = vpop.f32.mrb[0].mxu0
        %v9564 = vadd.f32 0.0, %v9563
        %v9565 = vpop.f32.mrb[0].mxu0
        %v9566 = vadd.f32 0.0, %v9565
        %v9567 = vpop.f32.mrb[0].mxu0
        %v9568 = vadd.f32 0.0, %v9567
        %9569 = vmatprep.mubr.bf16.mxu0 %v4780
        %9570 = vmatmul.mubr.bf16.gmra.mrb[0].mxu0 %v4779
        %v9571 = vpop.f32.mrb[0].mxu0
        %v9572 = vadd.f32 0.0, %v9571
        %v9573 = vpop.f32.mrb[0].mxu0
        %v9574 = vadd.f32 0.0, %v9573
        %v9575 = vpop.f32.mrb[0].mxu0
        %v9576 = vadd.f32 0.0, %v9575
        %v9577 = vpop.f32.mrb[0].mxu0
        %v9578 = vadd.f32 0.0, %v9577
        %9579 = vmatprep.mubr.bf16.mxu0 %v4788
        %9580 = vmatmul.mubr.bf16.gmra.mrb[0].mxu0 %v4787
        %v9581 = vpop.f32.mrb[0].mxu0
        %v9582 = vadd.f32 0.0, %v9581
        %v9583 = vpop.f32.mrb[0].mxu0
        %v9584 = vadd.f32 0.0, %v9583
        %v9585 = vpop.f32.mrb[0].mxu0
        %v9586 = vadd.f32 0.0, %v9585
        %v9587 = vpop.f32.mrb[0].mxu0
        %v9588 = vadd.f32 0.0, %v9587
        %9589 = vmatprep.mubr.bf16.mxu0 %v4796
        %9590 = vmatmul.mubr.bf16.gmra.mrb[0].mxu0 %v4795
        %v9591 = vpop.f32.mrb[0].mxu0
        %v9592 = vadd.f32 0.0, %v9591
        %v9593 = vpop.f32.mrb[0].mxu0
        %v9594 = vadd.f32 0.0, %v9593
        %v9595 = vpop.f32.mrb[0].mxu0
        %v9596 = vadd.f32 0.0, %v9595
        %v9597 = vpop.f32.mrb[0].mxu0
        %v9598 = vadd.f32 0.0, %v9597
        %9599 = vmatprep.mubr.bf16.mxu0 %v4804
        %9600 = vmatmul.mubr.bf16.gmra.mrb[0].mxu0 %v4803
        %v9601 = vpop.f32.mrb[0].mxu0
        %v9602 = vadd.f32 0.0, %v9601
        %v9603 = vpop.f32.mrb[0].mxu0
        %v9604 = vadd.f32 0.0, %v9603
        %v9605 = vpop.f32.mrb[0].mxu0
        %v9606 = vadd.f32 0.0, %v9605
        %v9607 = vpop.f32.mrb[0].mxu0
        %v9608 = vadd.f32 0.0, %v9607
        %9609 = vmatprep.mubr.bf16.mxu0 %v4812
        %9610 = vmatmul.mubr.bf16.gmra.mrb[0].mxu0 %v4811
        %v9611 = vpop.f32.mrb[0].mxu0
        %v9612 = vadd.f32 0.0, %v9611
        %v9613 = vpop.f32.mrb[0].mxu0
        %v9614 = vadd.f32 0.0, %v9613
        %v9615 = vpop.f32.mrb[0].mxu0
        %v9616 = vadd.f32 0.0, %v9615
        %v9617 = vpop.f32.mrb[0].mxu0
        %v9618 = vadd.f32 0.0, %v9617
        %9619 = vdwg.mxu0
        %9620 = vmatprep.subr.bf16.mxu0 %v7002
        %9621 = vmatpush1.bf16.msra.mxu0 %v7001
        %9622 = vmatprep.subr.bf16.mxu0 %v7010
        %9623 = vmatpush1.bf16.msra.mxu0 %v7009
        %9624 = vmatprep.subr.bf16.mxu0 %v7018
        %9625 = vmatpush1.bf16.msra.mxu0 %v7017
        %9626 = vmatprep.subr.bf16.mxu0 %v7026
        %9627 = vmatpush1.bf16.msra.mxu0 %v7025
        %9628 = vmatprep.subr.bf16.mxu0 %v7034
        %9629 = vmatpush1.bf16.msra.mxu0 %v7033
        %9630 = vmatprep.subr.bf16.mxu0 %v7042
        %9631 = vmatpush1.bf16.msra.mxu0 %v7041
        %9632 = vmatprep.subr.bf16.mxu0 %v7050
        %9633 = vmatpush1.bf16.msra.mxu0 %v7049
        %9634 = vmatprep.subr.bf16.mxu0 %v7058
        %9635 = vmatpush1.bf16.msra.mxu0 %v7057
        %9636 = vmatprep.subr.bf16.mxu0 %v7066
        %9637 = vmatpush1.bf16.msra.mxu0 %v7065
        %9638 = vmatprep.subr.bf16.mxu0 %v7074
        %9639 = vmatpush1.bf16.msra.mxu0 %v7073
        %9640 = vmatprep.subr.bf16.mxu0 %v7082
        %9641 = vmatpush1.bf16.msra.mxu0 %v7081
        %9642 = vmatprep.subr.bf16.mxu0 %v7090
        %9643 = vmatpush1.bf16.msra.mxu0 %v7089
        %9644 = vmatprep.subr.bf16.mxu0 %v7098
        %9645 = vmatpush1.bf16.msra.mxu0 %v7097
        %9646 = vmatprep.subr.bf16.mxu0 %v7106
        %9647 = vmatpush1.bf16.msra.mxu0 %v7105
        %9648 = vmatprep.subr.bf16.mxu0 %v7114
        %9649 = vmatpush1.bf16.msra.mxu0 %v7113
        %9650 = vmatprep.subr.bf16.mxu0 %v7122
        %9651 = vmatpush1.bf16.msra.mxu0 %v7121
        %9652 = vmatprep.mubr.bf16.mxu0 %v4742
        %9653 = vmatmul.mubr.bf16.gmra.mrb[0].mxu0 %v4741
        %v9654 = vpop.f32.mrb[0].mxu0
        %v9655 = vadd.f32 %v9522, %v9654
        %v9656 = vpop.f32.mrb[0].mxu0
        %v9657 = vadd.f32 %v9524, %v9656
        %v9658 = vpop.f32.mrb[0].mxu0
        %v9659 = vadd.f32 %v9526, %v9658
        %v9660 = vpop.f32.mrb[0].mxu0
        %v9661 = vadd.f32 %v9528, %v9660
        %9662 = vmatprep.mubr.bf16.mxu0 %v4750
        %9663 = vmatmul.mubr.bf16.gmra.mrb[0].mxu0 %v4749
        %v9664 = vpop.f32.mrb[0].mxu0
        %v9665 = vadd.f32 %v9532, %v9664
        %v9666 = vpop.f32.mrb[0].mxu0
        %v9667 = vadd.f32 %v9534, %v9666
        %v9668 = vpop.f32.mrb[0].mxu0
        %v9669 = vadd.f32 %v9536, %v9668
        %v9670 = vpop.f32.mrb[0].mxu0
        %v9671 = vadd.f32 %v9538, %v9670
        %9672 = vmatprep.mubr.bf16.mxu0 %v4758
        %9673 = vmatmul.mubr.bf16.gmra.mrb[0].mxu0 %v4757
        %v9674 = vpop.f32.mrb[0].mxu0
        %v9675 = vadd.f32 %v9542, %v9674
        %v9676 = vpop.f32.mrb[0].mxu0
        %v9677 = vadd.f32 %v9544, %v9676
        %v9678 = vpop.f32.mrb[0].mxu0
        %v9679 = vadd.f32 %v9546, %v9678
        %v9680 = vpop.f32.mrb[0].mxu0
        %v9681 = vadd.f32 %v9548, %v9680
        %9682 = vmatprep.mubr.bf16.mxu0 %v4766
        %9683 = vmatmul.mubr.bf16.gmra.mrb[0].mxu0 %v4765
        %v9684 = vpop.f32.mrb[0].mxu0
        %v9685 = vadd.f32 %v9552, %v9684
        %v9686 = vpop.f32.mrb[0].mxu0
        %v9687 = vadd.f32 %v9554, %v9686
        %v9688 = vpop.f32.mrb[0].mxu0
        %v9689 = vadd.f32 %v9556, %v9688
        %v9690 = vpop.f32.mrb[0].mxu0
        %v9691 = vadd.f32 %v9558, %v9690
        %9692 = vmatprep.mubr.bf16.mxu0 %v4774
        %9693 = vmatmul.mubr.bf16.gmra.mrb[0].mxu0 %v4773
        %v9694 = vpop.f32.mrb[0].mxu0
        %v9695 = vadd.f32 %v9562, %v9694
        %v9696 = vpop.f32.mrb[0].mxu0
        %v9697 = vadd.f32 %v9564, %v9696
        %v9698 = vpop.f32.mrb[0].mxu0
        %v9699 = vadd.f32 %v9566, %v9698
        %v9700 = vpop.f32.mrb[0].mxu0
        %v9701 = vadd.f32 %v9568, %v9700
        %9702 = vmatprep.mubr.bf16.mxu0 %v4782
        %9703 = vmatmul.mubr.bf16.gmra.mrb[0].mxu0 %v4781
        %v9704 = vpop.f32.mrb[0].mxu0
        %v9705 = vadd.f32 %v9572, %v9704
        %v9706 = vpop.f32.mrb[0].mxu0
        %v9707 = vadd.f32 %v9574, %v9706
        %v9708 = vpop.f32.mrb[0].mxu0
        %v9709 = vadd.f32 %v9576, %v9708
        %v9710 = vpop.f32.mrb[0].mxu0
        %v9711 = vadd.f32 %v9578, %v9710
        %9712 = vmatprep.mubr.bf16.mxu0 %v4790
        %9713 = vmatmul.mubr.bf16.gmra.mrb[0].mxu0 %v4789
        %v9714 = vpop.f32.mrb[0].mxu0
        %v9715 = vadd.f32 %v9582, %v9714
        %v9716 = vpop.f32.mrb[0].mxu0
        %v9717 = vadd.f32 %v9584, %v9716
        %v9718 = vpop.f32.mrb[0].mxu0
        %v9719 = vadd.f32 %v9586, %v9718
        %v9720 = vpop.f32.mrb[0].mxu0
        %v9721 = vadd.f32 %v9588, %v9720
        %9722 = vmatprep.mubr.bf16.mxu0 %v4798
        %9723 = vmatmul.mubr.bf16.gmra.mrb[0].mxu0 %v4797
        %v9724 = vpop.f32.mrb[0].mxu0
        %v9725 = vadd.f32 %v9592, %v9724
        %v9726 = vpop.f32.mrb[0].mxu0
        %v9727 = vadd.f32 %v9594, %v9726
        %v9728 = vpop.f32.mrb[0].mxu0
        %v9729 = vadd.f32 %v9596, %v9728
        %v9730 = vpop.f32.mrb[0].mxu0
        %v9731 = vadd.f32 %v9598, %v9730
        %9732 = vmatprep.mubr.bf16.mxu0 %v4806
        %9733 = vmatmul.mubr.bf16.gmra.mrb[0].mxu0 %v4805
        %v9734 = vpop.f32.mrb[0].mxu0
        %v9735 = vadd.f32 %v9602, %v9734
        %v9736 = vpop.f32.mrb[0].mxu0
        %v9737 = vadd.f32 %v9604, %v9736
        %v9738 = vpop.f32.mrb[0].mxu0
        %v9739 = vadd.f32 %v9606, %v9738
        %v9740 = vpop.f32.mrb[0].mxu0
        %v9741 = vadd.f32 %v9608, %v9740
        %9742 = vmatprep.mubr.bf16.mxu0 %v4814
        %9743 = vmatmul.mubr.bf16.gmra.mrb[0].mxu0 %v4813
        %v9744 = vpop.f32.mrb[0].mxu0
        %v9745 = vadd.f32 %v9612, %v9744
        %v9746 = vpop.f32.mrb[0].mxu0
        %v9747 = vadd.f32 %v9614, %v9746
        %v9748 = vpop.f32.mrb[0].mxu0
        %v9749 = vadd.f32 %v9616, %v9748
        %v9750 = vpop.f32.mrb[0].mxu0
        %v9751 = vadd.f32 %v9618, %v9750
        %9752 = vdwg.mxu0
        %9753 = vmatprep.subr.bf16.mxu0 %v7130
        %9754 = vmatpush1.bf16.msra.mxu0 %v7129
        %9755 = vmatprep.subr.bf16.mxu0 %v7138
        %9756 = vmatpush1.bf16.msra.mxu0 %v7137
        %9757 = vmatprep.subr.bf16.mxu0 %v7146
        %9758 = vmatpush1.bf16.msra.mxu0 %v7145
        %9759 = vmatprep.subr.bf16.mxu0 %v7154
        %9760 = vmatpush1.bf16.msra.mxu0 %v7153
        %9761 = vmatprep.subr.bf16.mxu0 %v7162
        %9762 = vmatpush1.bf16.msra.mxu0 %v7161
        %9763 = vmatprep.subr.bf16.mxu0 %v7170
        %9764 = vmatpush1.bf16.msra.mxu0 %v7169
        %9765 = vmatprep.subr.bf16.mxu0 %v7178
        %9766 = vmatpush1.bf16.msra.mxu0 %v7177
        %9767 = vmatprep.subr.bf16.mxu0 %v7186
        %9768 = vmatpush1.bf16.msra.mxu0 %v7185
        %9769 = vmatprep.subr.bf16.mxu0 %v7194
        %9770 = vmatpush1.bf16.msra.mxu0 %v7193
        %9771 = vmatprep.subr.bf16.mxu0 %v7202
        %9772 = vmatpush1.bf16.msra.mxu0 %v7201
        %9773 = vmatprep.subr.bf16.mxu0 %v7210
        %9774 = vmatpush1.bf16.msra.mxu0 %v7209
        %9775 = vmatprep.subr.bf16.mxu0 %v7218
        %9776 = vmatpush1.bf16.msra.mxu0 %v7217
        %9777 = vmatprep.subr.bf16.mxu0 %v7226
        %9778 = vmatpush1.bf16.msra.mxu0 %v7225
        %9779 = vmatprep.subr.bf16.mxu0 %v7234
        %9780 = vmatpush1.bf16.msra.mxu0 %v7233
        %9781 = vmatprep.subr.bf16.mxu0 %v7242
        %9782 = vmatpush1.bf16.msra.mxu0 %v7241
        %9783 = vmatprep.subr.bf16.mxu0 %v7250
        %9784 = vmatpush1.bf16.msra.mxu0 %v7249
        %9785 = vmatprep.mubr.bf16.mxu0 %v4744
        %9786 = vmatmul.mubr.bf16.gmra.mrb[0].mxu0 %v4743
        %v9787 = vpop.f32.mrb[0].mxu0
        %v9788 = vadd.f32 %v9655, %v9787
        %v9789 = vpop.f32.mrb[0].mxu0
        %v9790 = vadd.f32 %v9657, %v9789
        %v9791 = vpop.f32.mrb[0].mxu0
        %v9792 = vadd.f32 %v9659, %v9791
        %v9793 = vpop.f32.mrb[0].mxu0
        %v9794 = vadd.f32 %v9661, %v9793
        %9795 = vmatprep.mubr.bf16.mxu0 %v4752
        %9796 = vmatmul.mubr.bf16.gmra.mrb[0].mxu0 %v4751
        %v9797 = vpop.f32.mrb[0].mxu0
        %v9798 = vadd.f32 %v9665, %v9797
        %v9799 = vpop.f32.mrb[0].mxu0
        %v9800 = vadd.f32 %v9667, %v9799
        %v9801 = vpop.f32.mrb[0].mxu0
        %v9802 = vadd.f32 %v9669, %v9801
        %v9803 = vpop.f32.mrb[0].mxu0
        %v9804 = vadd.f32 %v9671, %v9803
        %9805 = vmatprep.mubr.bf16.mxu0 %v4760
        %9806 = vmatmul.mubr.bf16.gmra.mrb[0].mxu0 %v4759
        %v9807 = vpop.f32.mrb[0].mxu0
        %v9808 = vadd.f32 %v9675, %v9807
        %v9809 = vpop.f32.mrb[0].mxu0
        %v9810 = vadd.f32 %v9677, %v9809
        %v9811 = vpop.f32.mrb[0].mxu0
        %v9812 = vadd.f32 %v9679, %v9811
        %v9813 = vpop.f32.mrb[0].mxu0
        %v9814 = vadd.f32 %v9681, %v9813
        %9815 = vmatprep.mubr.bf16.mxu0 %v4768
        %9816 = vmatmul.mubr.bf16.gmra.mrb[0].mxu0 %v4767
        %v9817 = vpop.f32.mrb[0].mxu0
        %v9818 = vadd.f32 %v9685, %v9817
        %v9819 = vpop.f32.mrb[0].mxu0
        %v9820 = vadd.f32 %v9687, %v9819
        %v9821 = vpop.f32.mrb[0].mxu0
        %v9822 = vadd.f32 %v9689, %v9821
        %v9823 = vpop.f32.mrb[0].mxu0
        %v9824 = vadd.f32 %v9691, %v9823
        %9825 = vmatprep.mubr.bf16.mxu0 %v4776
        %9826 = vmatmul.mubr.bf16.gmra.mrb[0].mxu0 %v4775
        %v9827 = vpop.f32.mrb[0].mxu0
        %v9828 = vadd.f32 %v9695, %v9827
        %v9829 = vpop.f32.mrb[0].mxu0
        %v9830 = vadd.f32 %v9697, %v9829
        %v9831 = vpop.f32.mrb[0].mxu0
        %v9832 = vadd.f32 %v9699, %v9831
        %v9833 = vpop.f32.mrb[0].mxu0
        %v9834 = vadd.f32 %v9701, %v9833
        %9835 = vmatprep.mubr.bf16.mxu0 %v4784
        %9836 = vmatmul.mubr.bf16.gmra.mrb[0].mxu0 %v4783
        %v9837 = vpop.f32.mrb[0].mxu0
        %v9838 = vadd.f32 %v9705, %v9837
        %v9839 = vpop.f32.mrb[0].mxu0
        %v9840 = vadd.f32 %v9707, %v9839
        %v9841 = vpop.f32.mrb[0].mxu0
        %v9842 = vadd.f32 %v9709, %v9841
        %v9843 = vpop.f32.mrb[0].mxu0
        %v9844 = vadd.f32 %v9711, %v9843
        %9845 = vmatprep.mubr.bf16.mxu0 %v4792
        %9846 = vmatmul.mubr.bf16.gmra.mrb[0].mxu0 %v4791
        %v9847 = vpop.f32.mrb[0].mxu0
        %v9848 = vadd.f32 %v9715, %v9847
        %v9849 = vpop.f32.mrb[0].mxu0
        %v9850 = vadd.f32 %v9717, %v9849
        %v9851 = vpop.f32.mrb[0].mxu0
        %v9852 = vadd.f32 %v9719, %v9851
        %v9853 = vpop.f32.mrb[0].mxu0
        %v9854 = vadd.f32 %v9721, %v9853
        %9855 = vmatprep.mubr.bf16.mxu0 %v4800
        %9856 = vmatmul.mubr.bf16.gmra.mrb[0].mxu0 %v4799
        %v9857 = vpop.f32.mrb[0].mxu0
        %v9858 = vadd.f32 %v9725, %v9857
        %v9859 = vpop.f32.mrb[0].mxu0
        %v9860 = vadd.f32 %v9727, %v9859
        %v9861 = vpop.f32.mrb[0].mxu0
        %v9862 = vadd.f32 %v9729, %v9861
        %v9863 = vpop.f32.mrb[0].mxu0
        %v9864 = vadd.f32 %v9731, %v9863
        %9865 = vmatprep.mubr.bf16.mxu0 %v4808
        %9866 = vmatmul.mubr.bf16.gmra.mrb[0].mxu0 %v4807
        %v9867 = vpop.f32.mrb[0].mxu0
        %v9868 = vadd.f32 %v9735, %v9867
        %v9869 = vpop.f32.mrb[0].mxu0
        %v9870 = vadd.f32 %v9737, %v9869
        %v9871 = vpop.f32.mrb[0].mxu0
        %v9872 = vadd.f32 %v9739, %v9871
        %v9873 = vpop.f32.mrb[0].mxu0
        %v9874 = vadd.f32 %v9741, %v9873
        %9875 = vmatprep.mubr.bf16.mxu0 %v4816
        %9876 = vmatmul.mubr.bf16.gmra.mrb[0].mxu0 %v4815
        %v9877 = vpop.f32.mrb[0].mxu0
        %v9878 = vadd.f32 %v9745, %v9877
        %v9879 = vpop.f32.mrb[0].mxu0
        %v9880 = vadd.f32 %v9747, %v9879
        %v9881 = vpop.f32.mrb[0].mxu0
        %v9882 = vadd.f32 %v9749, %v9881
        %v9883 = vpop.f32.mrb[0].mxu0
        %v9884 = vadd.f32 %v9751, %v9883
        %9885 = vdwg.mxu0
        %9886 = vmatprep.subr.bf16.mxu0 %v7258
        %9887 = vmatpush1.bf16.msra.mxu0 %v7257
        %9888 = vmatprep.subr.bf16.mxu0 %v7266
        %9889 = vmatpush1.bf16.msra.mxu0 %v7265
        %9890 = vmatprep.subr.bf16.mxu0 %v7274
        %9891 = vmatpush1.bf16.msra.mxu0 %v7273
        %9892 = vmatprep.subr.bf16.mxu0 %v7282
        %9893 = vmatpush1.bf16.msra.mxu0 %v7281
        %9894 = vmatprep.subr.bf16.mxu0 %v7290
        %9895 = vmatpush1.bf16.msra.mxu0 %v7289
        %9896 = vmatprep.subr.bf16.mxu0 %v7298
        %9897 = vmatpush1.bf16.msra.mxu0 %v7297
        %9898 = vmatprep.subr.bf16.mxu0 %v7306
        %9899 = vmatpush1.bf16.msra.mxu0 %v7305
        %9900 = vmatprep.subr.bf16.mxu0 %v7314
        %9901 = vmatpush1.bf16.msra.mxu0 %v7313
        %9902 = vmatprep.subr.bf16.mxu0 %v7322
        %9903 = vmatpush1.bf16.msra.mxu0 %v7321
        %9904 = vmatprep.subr.bf16.mxu0 %v7330
        %9905 = vmatpush1.bf16.msra.mxu0 %v7329
        %9906 = vmatprep.subr.bf16.mxu0 %v7338
        %9907 = vmatpush1.bf16.msra.mxu0 %v7337
        %9908 = vmatprep.subr.bf16.mxu0 %v7346
        %9909 = vmatpush1.bf16.msra.mxu0 %v7345
        %9910 = vmatprep.subr.bf16.mxu0 %v7354
        %9911 = vmatpush1.bf16.msra.mxu0 %v7353
        %9912 = vmatprep.subr.bf16.mxu0 %v7362
        %9913 = vmatpush1.bf16.msra.mxu0 %v7361
        %9914 = vmatprep.subr.bf16.mxu0 %v7370
        %9915 = vmatpush1.bf16.msra.mxu0 %v7369
        %9916 = vmatprep.subr.bf16.mxu0 %v7378
        %9917 = vmatpush1.bf16.msra.mxu0 %v7377
        %9918 = vmatprep.mubr.bf16.mxu0 %v4746
        %9919 = vmatmul.mubr.bf16.gmra.mrb[0].mxu0 %v4745
        %v9920 = vpop.f32.mrb[0].mxu0
        %v9921 = vadd.f32 %v9788, %v9920
        %v9922 = vpop.f32.mrb[0].mxu0
        %v9923 = vadd.f32 %v9790, %v9922
        %v9924 = vpop.f32.mrb[0].mxu0
        %v9925 = vadd.f32 %v9792, %v9924
        %v9926 = vpop.f32.mrb[0].mxu0
        %v9927 = vadd.f32 %v9794, %v9926
        %9928 = vmatprep.mubr.bf16.mxu0 %v4754
        %9929 = vmatmul.mubr.bf16.gmra.mrb[0].mxu0 %v4753
        %v9930 = vpop.f32.mrb[0].mxu0
        %v9931 = vadd.f32 %v9798, %v9930
        %v9932 = vpop.f32.mrb[0].mxu0
        %v9933 = vadd.f32 %v9800, %v9932
        %v9934 = vpop.f32.mrb[0].mxu0
        %v9935 = vadd.f32 %v9802, %v9934
        %v9936 = vpop.f32.mrb[0].mxu0
        %v9937 = vadd.f32 %v9804, %v9936
        %9938 = vmatprep.mubr.bf16.mxu0 %v4762
        %9939 = vmatmul.mubr.bf16.gmra.mrb[0].mxu0 %v4761
        %v9940 = vpop.f32.mrb[0].mxu0
        %v9941 = vadd.f32 %v9808, %v9940
        %v9942 = vpop.f32.mrb[0].mxu0
        %v9943 = vadd.f32 %v9810, %v9942
        %v9944 = vpop.f32.mrb[0].mxu0
        %v9945 = vadd.f32 %v9812, %v9944
        %v9946 = vpop.f32.mrb[0].mxu0
        %v9947 = vadd.f32 %v9814, %v9946
        %9948 = vmatprep.mubr.bf16.mxu0 %v4770
        %9949 = vmatmul.mubr.bf16.gmra.mrb[0].mxu0 %v4769
        %v9950 = vpop.f32.mrb[0].mxu0
        %v9951 = vadd.f32 %v9818, %v9950
        %v9952 = vpop.f32.mrb[0].mxu0
        %v9953 = vadd.f32 %v9820, %v9952
        %v9954 = vpop.f32.mrb[0].mxu0
        %v9955 = vadd.f32 %v9822, %v9954
        %v9956 = vpop.f32.mrb[0].mxu0
        %v9957 = vadd.f32 %v9824, %v9956
        %9958 = vmatprep.mubr.bf16.mxu0 %v4778
        %9959 = vmatmul.mubr.bf16.gmra.mrb[0].mxu0 %v4777
        %v9960 = vpop.f32.mrb[0].mxu0
        %v9961 = vadd.f32 %v9828, %v9960
        %v9962 = vpop.f32.mrb[0].mxu0
        %v9963 = vadd.f32 %v9830, %v9962
        %v9964 = vpop.f32.mrb[0].mxu0
        %v9965 = vadd.f32 %v9832, %v9964
        %v9966 = vpop.f32.mrb[0].mxu0
        %v9967 = vadd.f32 %v9834, %v9966
        %9968 = vmatprep.mubr.bf16.mxu0 %v4786
        %9969 = vmatmul.mubr.bf16.gmra.mrb[0].mxu0 %v4785
        %v9970 = vpop.f32.mrb[0].mxu0
        %v9971 = vadd.f32 %v9838, %v9970
        %v9972 = vpop.f32.mrb[0].mxu0
        %v9973 = vadd.f32 %v9840, %v9972
        %v9974 = vpop.f32.mrb[0].mxu0
        %v9975 = vadd.f32 %v9842, %v9974
        %v9976 = vpop.f32.mrb[0].mxu0
        %v9977 = vadd.f32 %v9844, %v9976
        %9978 = vmatprep.mubr.bf16.mxu0 %v4794
        %9979 = vmatmul.mubr.bf16.gmra.mrb[0].mxu0 %v4793
        %v9980 = vpop.f32.mrb[0].mxu0
        %v9981 = vadd.f32 %v9848, %v9980
        %v9982 = vpop.f32.mrb[0].mxu0
        %v9983 = vadd.f32 %v9850, %v9982
        %v9984 = vpop.f32.mrb[0].mxu0
        %v9985 = vadd.f32 %v9852, %v9984
        %v9986 = vpop.f32.mrb[0].mxu0
        %v9987 = vadd.f32 %v9854, %v9986
        %9988 = vmatprep.mubr.bf16.mxu0 %v4802
        %9989 = vmatmul.mubr.bf16.gmra.mrb[0].mxu0 %v4801
        %v9990 = vpop.f32.mrb[0].mxu0
        %v9991 = vadd.f32 %v9858, %v9990
        %v9992 = vpop.f32.mrb[0].mxu0
        %v9993 = vadd.f32 %v9860, %v9992
        %v9994 = vpop.f32.mrb[0].mxu0
        %v9995 = vadd.f32 %v9862, %v9994
        %v9996 = vpop.f32.mrb[0].mxu0
        %v9997 = vadd.f32 %v9864, %v9996
        %9998 = vmatprep.mubr.bf16.mxu0 %v4810
        %9999 = vmatmul.mubr.bf16.gmra.mrb[0].mxu0 %v4809
        %v10000 = vpop.f32.mrb[0].mxu0
        %v10001 = vadd.f32 %v9868, %v10000
        %v10002 = vpop.f32.mrb[0].mxu0
        %v10003 = vadd.f32 %v9870, %v10002
        %v10004 = vpop.f32.mrb[0].mxu0
        %v10005 = vadd.f32 %v9872, %v10004
        %v10006 = vpop.f32.mrb[0].mxu0
        %v10007 = vadd.f32 %v9874, %v10006
        %10008 = vmatprep.mubr.bf16.mxu0 %v4818
        %10009 = vmatmul.mubr.bf16.gmra.mrb[0].mxu0 %v4817
        %v10010 = vpop.f32.mrb[0].mxu0
        %v10011 = vadd.f32 %v9878, %v10010
        %v10012 = vpop.f32.mrb[0].mxu0
        %v10013 = vadd.f32 %v9880, %v10012
        %v10014 = vpop.f32.mrb[0].mxu0
        %v10015 = vadd.f32 %v9882, %v10014
        %v10016 = vpop.f32.mrb[0].mxu0
        %v10017 = vadd.f32 %v9884, %v10016
        %10018 = vdwg.mxu0
        %v10019 = vtanh.pop %v8325
        %v10020 = vtanh.pop %v8327
        %v10021 = vtanh.pop %v8857
        %v10022 = vtanh.pop %v8859
        %v10023 = vtanh.pop %v9389
        %v10024 = vtanh.pop %v9391
        %v10025 = vtanh.pop %v9921
        %v10026 = vtanh.pop %v9923
        %v10027 = vtanh.pop %v8329
        %v10028 = vtanh.pop %v8331
        %v10029 = vtanh.pop %v8861
        %v10030 = vtanh.pop %v8863
        %v10031 = vtanh.pop %v9393
        %v10032 = vtanh.pop %v9395
        %v10033 = vtanh.pop %v9925
        %v10034 = vtanh.pop %v9927
        %v10035 = vtanh.pop %v8335
        %v10036 = vtanh.pop %v8337
        %v10037 = vtanh.pop %v8867
        %v10038 = vtanh.pop %v8869
        %v10039 = vtanh.pop %v9399
        %v10040 = vtanh.pop %v9401
        %v10041 = vtanh.pop %v9931
        %v10042 = vtanh.pop %v9933
        %v10043 = vtanh.pop %v8339
        %v10044 = vtanh.pop %v8341
        %v10045 = vtanh.pop %v8871
        %v10046 = vtanh.pop %v8873
        %v10047 = vtanh.pop %v9403
        %v10048 = vtanh.pop %v9405
        %v10049 = vtanh.pop %v9935
        %v10050 = vtanh.pop %v9937
        %v10051 = vtanh.pop %v8345
        %v10052 = vtanh.pop %v8347
        %v10053 = vtanh.pop %v8877
        %v10054 = vtanh.pop %v8879
        %v10055 = vtanh.pop %v9409
        %v10056 = vtanh.pop %v9411
        %v10057 = vtanh.pop %v9941
        %v10058 = vtanh.pop %v9943
        %v10059 = vtanh.pop %v8349
        %v10060 = vtanh.pop %v8351
        %v10061 = vtanh.pop %v8881
        %v10062 = vtanh.pop %v8883
        %v10063 = vtanh.pop %v9413
        %v10064 = vtanh.pop %v9415
        %v10065 = vtanh.pop %v9945
        %v10066 = vtanh.pop %v9947
        %v10067 = vtanh.pop %v8355
        %v10068 = vtanh.pop %v8357
        %v10069 = vtanh.pop %v8887
        %v10070 = vtanh.pop %v8889
        %v10071 = vtanh.pop %v9419
        %v10072 = vtanh.pop %v9421
        %v10073 = vtanh.pop %v9951
        %v10074 = vtanh.pop %v9953
        %v10075 = vtanh.pop %v8359
        %v10076 = vtanh.pop %v8361
        %v10077 = vtanh.pop %v8891
        %v10078 = vtanh.pop %v8893
        %v10079 = vtanh.pop %v9423
        %v10080 = vtanh.pop %v9425
        %v10081 = vtanh.pop %v9955
        %v10082 = vtanh.pop %v9957
        %v10083 = vtanh.pop %v8365
        %v10084 = vtanh.pop %v8367
        %v10085 = vtanh.pop %v8897
        %v10086 = vtanh.pop %v8899
        %v10087 = vtanh.pop %v9429
        %v10088 = vtanh.pop %v9431
        %v10089 = vtanh.pop %v9961
        %v10090 = vtanh.pop %v9963
        %v10091 = vtanh.pop %v8369
        %v10092 = vtanh.pop %v8371
        %v10093 = vtanh.pop %v8901
        %v10094 = vtanh.pop %v8903
        %v10095 = vtanh.pop %v9433
        %v10096 = vtanh.pop %v9435
        %v10097 = vtanh.pop %v9965
        %v10098 = vtanh.pop %v9967
        %v10099 = vtanh.pop %v8375
        %v10100 = vtanh.pop %v8377
        %v10101 = vtanh.pop %v8907
        %v10102 = vtanh.pop %v8909
        %v10103 = vtanh.pop %v9439
        %v10104 = vtanh.pop %v9441
        %v10105 = vtanh.pop %v9971
        %v10106 = vtanh.pop %v9973
        %v10107 = vtanh.pop %v8379
        %v10108 = vtanh.pop %v8381
        %v10109 = vtanh.pop %v8911
        %v10110 = vtanh.pop %v8913
        %v10111 = vtanh.pop %v9443
        %v10112 = vtanh.pop %v9445
        %v10113 = vtanh.pop %v9975
        %v10114 = vtanh.pop %v9977
        %v10115 = vtanh.pop %v8385
        %v10116 = vtanh.pop %v8387
        %v10117 = vtanh.pop %v8917
        %v10118 = vtanh.pop %v8919
        %v10119 = vtanh.pop %v9449
        %v10120 = vtanh.pop %v9451
        %v10121 = vtanh.pop %v9981
        %v10122 = vtanh.pop %v9983
        %v10123 = vtanh.pop %v8389
        %v10124 = vtanh.pop %v8391
        %v10125 = vtanh.pop %v8921
        %v10126 = vtanh.pop %v8923
        %v10127 = vtanh.pop %v9453
        %v10128 = vtanh.pop %v9455
        %v10129 = vtanh.pop %v9985
        %v10130 = vtanh.pop %v9987
        %v10131 = vtanh.pop %v8395
        %v10132 = vtanh.pop %v8397
        %v10133 = vtanh.pop %v8927
        %v10134 = vtanh.pop %v8929
        %v10135 = vtanh.pop %v9459
        %v10136 = vtanh.pop %v9461
        %v10137 = vtanh.pop %v9991
        %v10138 = vtanh.pop %v9993
        %v10139 = vtanh.pop %v8399
        %v10140 = vtanh.pop %v8401
        %v10141 = vtanh.pop %v8931
        %v10142 = vtanh.pop %v8933
        %v10143 = vtanh.pop %v9463
        %v10144 = vtanh.pop %v9465
        %v10145 = vtanh.pop %v9995
        %v10146 = vtanh.pop %v9997
        %v10147 = vtanh.pop %v8405
        %v10148 = vtanh.pop %v8407
        %v10149 = vtanh.pop %v8937
        %v10150 = vtanh.pop %v8939
        %v10151 = vtanh.pop %v9469
        %v10152 = vtanh.pop %v9471
        %v10153 = vtanh.pop %v10001
        %v10154 = vtanh.pop %v10003
        %v10155 = vtanh.pop %v8409
        %v10156 = vtanh.pop %v8411
        %v10157 = vtanh.pop %v8941
        %v10158 = vtanh.pop %v8943
        %v10159 = vtanh.pop %v9473
        %v10160 = vtanh.pop %v9475
        %v10161 = vtanh.pop %v10005
        %v10162 = vtanh.pop %v10007
        %v10163 = vtanh.pop %v8415
        %v10164 = vtanh.pop %v8417
        %v10165 = vtanh.pop %v8947
        %v10166 = vtanh.pop %v8949
        %v10167 = vtanh.pop %v9479
        %v10168 = vtanh.pop %v9481
        %v10169 = vtanh.pop %v10011
        %v10170 = vtanh.pop %v10013
        %v10171 = vtanh.pop %v8419
        %v10172 = vtanh.pop %v8421
        %v10173 = vtanh.pop %v8951
        %v10174 = vtanh.pop %v8953
        %v10175 = vtanh.pop %v9483
        %v10176 = vtanh.pop %v9485
        %v10177 = vtanh.pop %v10015
        %v10178 = vtanh.pop %v10017
        %10179 = vst [vmem:[%s285] sm:$0xff] %v10019
        %10180 = vst [vmem:[%s285 + $0x8] sm:$0xff] %v10020
        %10181 = vst [vmem:[%s285 + $0x10] sm:$0xff] %v10021
        %10182 = vst [vmem:[%s285 + $0x18] sm:$0xff] %v10022
        %10183 = vst [vmem:[%s285 + $0x20] sm:$0xff] %v10023
        %10184 = vst [vmem:[%s285 + $0x28] sm:$0xff] %v10024
        %10185 = vst [vmem:[%s285 + $0x30] sm:$0xff] %v10025
        %10186 = vst [vmem:[%s285 + $0x38] sm:$0xff] %v10026
        %10187 = vst [vmem:[%s285 + $0x40] sm:$0xff] %v10027
        %10188 = vst [vmem:[%s285 + $0x48] sm:$0xff] %v10028
        %10189 = vst [vmem:[%s285 + $0x50] sm:$0xff] %v10029
        %10190 = vst [vmem:[%s285 + $0x58] sm:$0xff] %v10030
        %10191 = vst [vmem:[%s285 + $0x60] sm:$0xff] %v10031
        %10192 = vst [vmem:[%s285 + $0x68] sm:$0xff] %v10032
        %10193 = vst [vmem:[%s285 + $0x70] sm:$0xff] %v10033
        %10194 = vst [vmem:[%s285 + $0x78] sm:$0xff] %v10034
        %10195 = vst [vmem:[%s285 + $0x80] sm:$0xff] %v10035
        %10196 = vst [vmem:[%s285 + $0x88] sm:$0xff] %v10036
        %10197 = vst [vmem:[%s285 + $0x90] sm:$0xff] %v10037
        %10198 = vst [vmem:[%s285 + $0x98] sm:$0xff] %v10038
        %10199 = vst [vmem:[%s285 + $0xa0] sm:$0xff] %v10039
        %10200 = vst [vmem:[%s285 + $0xa8] sm:$0xff] %v10040
        %10201 = vst [vmem:[%s285 + $0xb0] sm:$0xff] %v10041
        %10202 = vst [vmem:[%s285 + $0xb8] sm:$0xff] %v10042
        %10203 = vst [vmem:[%s285 + $0xc0] sm:$0xff] %v10043
        %10204 = vst [vmem:[%s285 + $0xc8] sm:$0xff] %v10044
        %10205 = vst [vmem:[%s285 + $0xd0] sm:$0xff] %v10045
        %10206 = vst [vmem:[%s285 + $0xd8] sm:$0xff] %v10046
        %10207 = vst [vmem:[%s285 + $0xe0] sm:$0xff] %v10047
        %10208 = vst [vmem:[%s285 + $0xe8] sm:$0xff] %v10048
        %10209 = vst [vmem:[%s285 + $0xf0] sm:$0xff] %v10049
        %10210 = vst [vmem:[%s285 + $0xf8] sm:$0xff] %v10050
        %10211 = vst [vmem:[%s285 + $0x100] sm:$0xff] %v10051
        %10212 = vst [vmem:[%s285 + $0x108] sm:$0xff] %v10052
        %10213 = vst [vmem:[%s285 + $0x110] sm:$0xff] %v10053
        %10214 = vst [vmem:[%s285 + $0x118] sm:$0xff] %v10054
        %10215 = vst [vmem:[%s285 + $0x120] sm:$0xff] %v10055
        %10216 = vst [vmem:[%s285 + $0x128] sm:$0xff] %v10056
        %10217 = vst [vmem:[%s285 + $0x130] sm:$0xff] %v10057
        %10218 = vst [vmem:[%s285 + $0x138] sm:$0xff] %v10058
        %10219 = vst [vmem:[%s285 + $0x140] sm:$0xff] %v10059
        %10220 = vst [vmem:[%s285 + $0x148] sm:$0xff] %v10060
        %10221 = vst [vmem:[%s285 + $0x150] sm:$0xff] %v10061
        %10222 = vst [vmem:[%s285 + $0x158] sm:$0xff] %v10062
        %10223 = vst [vmem:[%s285 + $0x160] sm:$0xff] %v10063
        %10224 = vst [vmem:[%s285 + $0x168] sm:$0xff] %v10064
        %10225 = vst [vmem:[%s285 + $0x170] sm:$0xff] %v10065
        %10226 = vst [vmem:[%s285 + $0x178] sm:$0xff] %v10066
        %10227 = vst [vmem:[%s285 + $0x180] sm:$0xff] %v10067
        %10228 = vst [vmem:[%s285 + $0x188] sm:$0xff] %v10068
        %10229 = vst [vmem:[%s285 + $0x190] sm:$0xff] %v10069
        %10230 = vst [vmem:[%s285 + $0x198] sm:$0xff] %v10070
        %10231 = vst [vmem:[%s285 + $0x1a0] sm:$0xff] %v10071
        %10232 = vst [vmem:[%s285 + $0x1a8] sm:$0xff] %v10072
        %10233 = vst [vmem:[%s285 + $0x1b0] sm:$0xff] %v10073
        %10234 = vst [vmem:[%s285 + $0x1b8] sm:$0xff] %v10074
        %10235 = vst [vmem:[%s285 + $0x1c0] sm:$0xff] %v10075
        %10236 = vst [vmem:[%s285 + $0x1c8] sm:$0xff] %v10076
        %10237 = vst [vmem:[%s285 + $0x1d0] sm:$0xff] %v10077
        %10238 = vst [vmem:[%s285 + $0x1d8] sm:$0xff] %v10078
        %10239 = vst [vmem:[%s285 + $0x1e0] sm:$0xff] %v10079
        %10240 = vst [vmem:[%s285 + $0x1e8] sm:$0xff] %v10080
        %10241 = vst [vmem:[%s285 + $0x1f0] sm:$0xff] %v10081
        %10242 = vst [vmem:[%s285 + $0x1f8] sm:$0xff] %v10082
        %10243 = vst [vmem:[%s285 + $0x200] sm:$0xff] %v10083
        %10244 = vst [vmem:[%s285 + $0x208] sm:$0xff] %v10084
        %10245 = vst [vmem:[%s285 + $0x210] sm:$0xff] %v10085
        %10246 = vst [vmem:[%s285 + $0x218] sm:$0xff] %v10086
        %10247 = vst [vmem:[%s285 + $0x220] sm:$0xff] %v10087
        %10248 = vst [vmem:[%s285 + $0x228] sm:$0xff] %v10088
        %10249 = vst [vmem:[%s285 + $0x230] sm:$0xff] %v10089
        %10250 = vst [vmem:[%s285 + $0x238] sm:$0xff] %v10090
        %10251 = vst [vmem:[%s285 + $0x240] sm:$0xff] %v10091
        %10252 = vst [vmem:[%s285 + $0x248] sm:$0xff] %v10092
        %10253 = vst [vmem:[%s285 + $0x250] sm:$0xff] %v10093
        %10254 = vst [vmem:[%s285 + $0x258] sm:$0xff] %v10094
        %10255 = vst [vmem:[%s285 + $0x260] sm:$0xff] %v10095
        %10256 = vst [vmem:[%s285 + $0x268] sm:$0xff] %v10096
        %10257 = vst [vmem:[%s285 + $0x270] sm:$0xff] %v10097
        %10258 = vst [vmem:[%s285 + $0x278] sm:$0xff] %v10098
        %10259 = vst [vmem:[%s285 + $0x280] sm:$0xff] %v10099
        %10260 = vst [vmem:[%s285 + $0x288] sm:$0xff] %v10100
        %10261 = vst [vmem:[%s285 + $0x290] sm:$0xff] %v10101
        %10262 = vst [vmem:[%s285 + $0x298] sm:$0xff] %v10102
        %10263 = vst [vmem:[%s285 + $0x2a0] sm:$0xff] %v10103
        %10264 = vst [vmem:[%s285 + $0x2a8] sm:$0xff] %v10104
        %10265 = vst [vmem:[%s285 + $0x2b0] sm:$0xff] %v10105
        %10266 = vst [vmem:[%s285 + $0x2b8] sm:$0xff] %v10106
        %10267 = vst [vmem:[%s285 + $0x2c0] sm:$0xff] %v10107
        %10268 = vst [vmem:[%s285 + $0x2c8] sm:$0xff] %v10108
        %10269 = vst [vmem:[%s285 + $0x2d0] sm:$0xff] %v10109
        %10270 = vst [vmem:[%s285 + $0x2d8] sm:$0xff] %v10110
        %10271 = vst [vmem:[%s285 + $0x2e0] sm:$0xff] %v10111
        %10272 = vst [vmem:[%s285 + $0x2e8] sm:$0xff] %v10112
        %10273 = vst [vmem:[%s285 + $0x2f0] sm:$0xff] %v10113
        %10274 = vst [vmem:[%s285 + $0x2f8] sm:$0xff] %v10114
        %10275 = vst [vmem:[%s285 + $0x300] sm:$0xff] %v10115
        %10276 = vst [vmem:[%s285 + $0x308] sm:$0xff] %v10116
        %10277 = vst [vmem:[%s285 + $0x310] sm:$0xff] %v10117
        %10278 = vst [vmem:[%s285 + $0x318] sm:$0xff] %v10118
        %10279 = vst [vmem:[%s285 + $0x320] sm:$0xff] %v10119
        %10280 = vst [vmem:[%s285 + $0x328] sm:$0xff] %v10120
        %10281 = vst [vmem:[%s285 + $0x330] sm:$0xff] %v10121
        %10282 = vst [vmem:[%s285 + $0x338] sm:$0xff] %v10122
        %10283 = vst [vmem:[%s285 + $0x340] sm:$0xff] %v10123
        %10284 = vst [vmem:[%s285 + $0x348] sm:$0xff] %v10124
        %10285 = vst [vmem:[%s285 + $0x350] sm:$0xff] %v10125
        %10286 = vst [vmem:[%s285 + $0x358] sm:$0xff] %v10126
        %10287 = vst [vmem:[%s285 + $0x360] sm:$0xff] %v10127
        %10288 = vst [vmem:[%s285 + $0x368] sm:$0xff] %v10128
        %10289 = vst [vmem:[%s285 + $0x370] sm:$0xff] %v10129
        %10290 = vst [vmem:[%s285 + $0x378] sm:$0xff] %v10130
        %10291 = vst [vmem:[%s285 + $0x380] sm:$0xff] %v10131
        %10292 = vst [vmem:[%s285 + $0x388] sm:$0xff] %v10132
        %10293 = vst [vmem:[%s285 + $0x390] sm:$0xff] %v10133
        %10294 = vst [vmem:[%s285 + $0x398] sm:$0xff] %v10134
        %10295 = vst [vmem:[%s285 + $0x3a0] sm:$0xff] %v10135
        %10296 = vst [vmem:[%s285 + $0x3a8] sm:$0xff] %v10136
        %10297 = vst [vmem:[%s285 + $0x3b0] sm:$0xff] %v10137
        %10298 = vst [vmem:[%s285 + $0x3b8] sm:$0xff] %v10138
        %10299 = vst [vmem:[%s285 + $0x3c0] sm:$0xff] %v10139
        %10300 = vst [vmem:[%s285 + $0x3c8] sm:$0xff] %v10140
        %10301 = vst [vmem:[%s285 + $0x3d0] sm:$0xff] %v10141
        %10302 = vst [vmem:[%s285 + $0x3d8] sm:$0xff] %v10142
        %10303 = vst [vmem:[%s285 + $0x3e0] sm:$0xff] %v10143
        %10304 = vst [vmem:[%s285 + $0x3e8] sm:$0xff] %v10144
        %10305 = vst [vmem:[%s285 + $0x3f0] sm:$0xff] %v10145
        %10306 = vst [vmem:[%s285 + $0x3f8] sm:$0xff] %v10146
        %10307 = vst [vmem:[%s285 + $0x400] sm:$0xff] %v10147
        %10308 = vst [vmem:[%s285 + $0x408] sm:$0xff] %v10148
        %10309 = vst [vmem:[%s285 + $0x410] sm:$0xff] %v10149
        %10310 = vst [vmem:[%s285 + $0x418] sm:$0xff] %v10150
        %10311 = vst [vmem:[%s285 + $0x420] sm:$0xff] %v10151
        %10312 = vst [vmem:[%s285 + $0x428] sm:$0xff] %v10152
        %10313 = vst [vmem:[%s285 + $0x430] sm:$0xff] %v10153
        %10314 = vst [vmem:[%s285 + $0x438] sm:$0xff] %v10154
        %10315 = vst [vmem:[%s285 + $0x440] sm:$0xff] %v10155
        %10316 = vst [vmem:[%s285 + $0x448] sm:$0xff] %v10156
        %10317 = vst [vmem:[%s285 + $0x450] sm:$0xff] %v10157
        %10318 = vst [vmem:[%s285 + $0x458] sm:$0xff] %v10158
        %10319 = vst [vmem:[%s285 + $0x460] sm:$0xff] %v10159
        %10320 = vst [vmem:[%s285 + $0x468] sm:$0xff] %v10160
        %10321 = vst [vmem:[%s285 + $0x470] sm:$0xff] %v10161
        %10322 = vst [vmem:[%s285 + $0x478] sm:$0xff] %v10162
        %10323 = vst [vmem:[%s285 + $0x480] sm:$0xff] %v10163
        %10324 = vst [vmem:[%s285 + $0x488] sm:$0xff] %v10164
        %10325 = vst [vmem:[%s285 + $0x490] sm:$0xff] %v10165
        %10326 = vst [vmem:[%s285 + $0x498] sm:$0xff] %v10166
        %10327 = vst [vmem:[%s285 + $0x4a0] sm:$0xff] %v10167
        %10328 = vst [vmem:[%s285 + $0x4a8] sm:$0xff] %v10168
        %10329 = vst [vmem:[%s285 + $0x4b0] sm:$0xff] %v10169
        %10330 = vst [vmem:[%s285 + $0x4b8] sm:$0xff] %v10170
        %10331 = vst [vmem:[%s285 + $0x4c0] sm:$0xff] %v10171
        %10332 = vst [vmem:[%s285 + $0x4c8] sm:$0xff] %v10172
        %10333 = vst [vmem:[%s285 + $0x4d0] sm:$0xff] %v10173
        %10334 = vst [vmem:[%s285 + $0x4d8] sm:$0xff] %v10174
        %10335 = vst [vmem:[%s285 + $0x4e0] sm:$0xff] %v10175
        %10336 = vst [vmem:[%s285 + $0x4e8] sm:$0xff] %v10176
        %10337 = vst [vmem:[%s285 + $0x4f0] sm:$0xff] %v10177
        %10338 = vst [vmem:[%s285 + $0x4f8] sm:$0xff] %v10178
        %s10339 = sand.u32 %s137, 1
        %s10340 = sand.u32 %s137, 1
        %s10341 = smul.addr %s10340, 1280
        %s10342 = scalar_lea.vmem [#allocation9], %s10341
        // Predicated region
        $region57: #{vanilla_generator_forward.1} parent=39 // pred_check
          %p10343 = pneg %p147
        $region58: #{vanilla_generator_forward.1} parent=39 // pred_check_branch
          %10345 = sbr.rel (%p10343) target = $region60
        $region59: #{vanilla_generator_forward.1} parent=39 // pred_region
          %s10346 = smul.u32 20, %s19
          %s10347 = ssub.s32 38, %s10346
          %p10348 = scmp.lt.s32.totalorder %s10347, 20
          %s10349 = scalar_select %p10348, %s10347, 20
          %s10350 = smul.u32 128, %s10349
          %s10351 = smul.u32 %s10350, 8
          %p10352 = scmp.ne.s32.totalorder 0, %s10351
          %s10353 = smul.addr %s10346, 8
          %s10354 = smul.addr %s10353, 8
          %s10355 = scalar_lea.vmem %s5, %s10354
          // Predicated region
          $region61: #{vanilla_generator_forward.1} parent=59 // pred_check
            %p10356 = pneg %p10352
          $region62: #{vanilla_generator_forward.1} parent=59 // pred_check_branch
            %10358 = sbr.rel (%p10356) target = $region64
          $region63: #{vanilla_generator_forward.1} parent=59 // pred_region
            // Predicated region
            $region65: #{vanilla_generator_forward.1} parent=63 // pred_check
              _
            $region66: #{vanilla_generator_forward.1} parent=63 // pred_check_branch
              %10360 = sbr.rel (0) target = $region68
            $region67: #{vanilla_generator_forward.1} parent=63 // pred_region
              %s10361 = sshrl.u32 %s10349, 3
              // While loop
              $region69: #{vanilla_generator_forward.1} parent=67 // loop_pre_header
                _
              $region70: #{vanilla_generator_forward.1} parent=67 // loop_header
                %s10363 = sphi 0, %s10365
                %p10364 = scmp.ge.s32.totalorder %s10363, %s10361
                %s10368 = sphi 0, %s10501
                %s10369 = sphi %s10342, %s10504
                %s10370 = sphi %s10355, %s10505
              $region71: #{vanilla_generator_forward.1} parent=67 // loop_header_branch
                %10367 = sbr.rel (%p10364) target = $region75
              $region72: #{vanilla_generator_forward.1} parent=67 // loop_body
                %v10371 = vld [vmem:[%s10369] sm:$0xff]
                %10372 = vst [vmem:[%s10370] sm:$0xff] %v10371
                %v10373 = vld [vmem:[%s10369 + $0x40] sm:$0xff]
                %10374 = vst [vmem:[%s10370 + $0x40] sm:$0xff] %v10373
                %v10375 = vld [vmem:[%s10369 + $0x80] sm:$0xff]
                %10376 = vst [vmem:[%s10370 + $0x80] sm:$0xff] %v10375
                %v10377 = vld [vmem:[%s10369 + $0xc0] sm:$0xff]
                %10378 = vst [vmem:[%s10370 + $0xc0] sm:$0xff] %v10377
                %v10379 = vld [vmem:[%s10369 + $0x100] sm:$0xff]
                %10380 = vst [vmem:[%s10370 + $0x100] sm:$0xff] %v10379
                %v10381 = vld [vmem:[%s10369 + $0x140] sm:$0xff]
                %10382 = vst [vmem:[%s10370 + $0x140] sm:$0xff] %v10381
                %v10383 = vld [vmem:[%s10369 + $0x180] sm:$0xff]
                %10384 = vst [vmem:[%s10370 + $0x180] sm:$0xff] %v10383
                %v10385 = vld [vmem:[%s10369 + $0x1c0] sm:$0xff]
                %10386 = vst [vmem:[%s10370 + $0x1c0] sm:$0xff] %v10385
                %v10387 = vld [vmem:[%s10369 + $0x8] sm:$0xff]
                %10388 = vst [vmem:[%s10370 + $0x8] sm:$0xff] %v10387
                %v10389 = vld [vmem:[%s10369 + $0x48] sm:$0xff]
                %10390 = vst [vmem:[%s10370 + $0x48] sm:$0xff] %v10389
                %v10391 = vld [vmem:[%s10369 + $0x88] sm:$0xff]
                %10392 = vst [vmem:[%s10370 + $0x88] sm:$0xff] %v10391
                %v10393 = vld [vmem:[%s10369 + $0xc8] sm:$0xff]
                %10394 = vst [vmem:[%s10370 + $0xc8] sm:$0xff] %v10393
                %v10395 = vld [vmem:[%s10369 + $0x108] sm:$0xff]
                %10396 = vst [vmem:[%s10370 + $0x108] sm:$0xff] %v10395
                %v10397 = vld [vmem:[%s10369 + $0x148] sm:$0xff]
                %10398 = vst [vmem:[%s10370 + $0x148] sm:$0xff] %v10397
                %v10399 = vld [vmem:[%s10369 + $0x188] sm:$0xff]
                %10400 = vst [vmem:[%s10370 + $0x188] sm:$0xff] %v10399
                %v10401 = vld [vmem:[%s10369 + $0x1c8] sm:$0xff]
                %10402 = vst [vmem:[%s10370 + $0x1c8] sm:$0xff] %v10401
                %v10403 = vld [vmem:[%s10369 + $0x10] sm:$0xff]
                %10404 = vst [vmem:[%s10370 + $0x10] sm:$0xff] %v10403
                %v10405 = vld [vmem:[%s10369 + $0x50] sm:$0xff]
                %10406 = vst [vmem:[%s10370 + $0x50] sm:$0xff] %v10405
                %v10407 = vld [vmem:[%s10369 + $0x90] sm:$0xff]
                %10408 = vst [vmem:[%s10370 + $0x90] sm:$0xff] %v10407
                %v10409 = vld [vmem:[%s10369 + $0xd0] sm:$0xff]
                %10410 = vst [vmem:[%s10370 + $0xd0] sm:$0xff] %v10409
                %v10411 = vld [vmem:[%s10369 + $0x110] sm:$0xff]
                %10412 = vst [vmem:[%s10370 + $0x110] sm:$0xff] %v10411
                %v10413 = vld [vmem:[%s10369 + $0x150] sm:$0xff]
                %10414 = vst [vmem:[%s10370 + $0x150] sm:$0xff] %v10413
                %v10415 = vld [vmem:[%s10369 + $0x190] sm:$0xff]
                %10416 = vst [vmem:[%s10370 + $0x190] sm:$0xff] %v10415
                %v10417 = vld [vmem:[%s10369 + $0x1d0] sm:$0xff]
                %10418 = vst [vmem:[%s10370 + $0x1d0] sm:$0xff] %v10417
                %v10419 = vld [vmem:[%s10369 + $0x18] sm:$0xff]
                %10420 = vst [vmem:[%s10370 + $0x18] sm:$0xff] %v10419
                %v10421 = vld [vmem:[%s10369 + $0x58] sm:$0xff]
                %10422 = vst [vmem:[%s10370 + $0x58] sm:$0xff] %v10421
                %v10423 = vld [vmem:[%s10369 + $0x98] sm:$0xff]
                %10424 = vst [vmem:[%s10370 + $0x98] sm:$0xff] %v10423
                %v10425 = vld [vmem:[%s10369 + $0xd8] sm:$0xff]
                %10426 = vst [vmem:[%s10370 + $0xd8] sm:$0xff] %v10425
                %v10427 = vld [vmem:[%s10369 + $0x118] sm:$0xff]
                %10428 = vst [vmem:[%s10370 + $0x118] sm:$0xff] %v10427
                %v10429 = vld [vmem:[%s10369 + $0x158] sm:$0xff]
                %10430 = vst [vmem:[%s10370 + $0x158] sm:$0xff] %v10429
                %v10431 = vld [vmem:[%s10369 + $0x198] sm:$0xff]
                %10432 = vst [vmem:[%s10370 + $0x198] sm:$0xff] %v10431
                %v10433 = vld [vmem:[%s10369 + $0x1d8] sm:$0xff]
                %10434 = vst [vmem:[%s10370 + $0x1d8] sm:$0xff] %v10433
                %v10435 = vld [vmem:[%s10369 + $0x20] sm:$0xff]
                %10436 = vst [vmem:[%s10370 + $0x20] sm:$0xff] %v10435
                %v10437 = vld [vmem:[%s10369 + $0x60] sm:$0xff]
                %10438 = vst [vmem:[%s10370 + $0x60] sm:$0xff] %v10437
                %v10439 = vld [vmem:[%s10369 + $0xa0] sm:$0xff]
                %10440 = vst [vmem:[%s10370 + $0xa0] sm:$0xff] %v10439
                %v10441 = vld [vmem:[%s10369 + $0xe0] sm:$0xff]
                %10442 = vst [vmem:[%s10370 + $0xe0] sm:$0xff] %v10441
                %v10443 = vld [vmem:[%s10369 + $0x120] sm:$0xff]
                %10444 = vst [vmem:[%s10370 + $0x120] sm:$0xff] %v10443
                %v10445 = vld [vmem:[%s10369 + $0x160] sm:$0xff]
                %10446 = vst [vmem:[%s10370 + $0x160] sm:$0xff] %v10445
                %v10447 = vld [vmem:[%s10369 + $0x1a0] sm:$0xff]
                %10448 = vst [vmem:[%s10370 + $0x1a0] sm:$0xff] %v10447
                %v10449 = vld [vmem:[%s10369 + $0x1e0] sm:$0xff]
                %10450 = vst [vmem:[%s10370 + $0x1e0] sm:$0xff] %v10449
                %v10451 = vld [vmem:[%s10369 + $0x28] sm:$0xff]
                %10452 = vst [vmem:[%s10370 + $0x28] sm:$0xff] %v10451
                %v10453 = vld [vmem:[%s10369 + $0x68] sm:$0xff]
                %10454 = vst [vmem:[%s10370 + $0x68] sm:$0xff] %v10453
                %v10455 = vld [vmem:[%s10369 + $0xa8] sm:$0xff]
                %10456 = vst [vmem:[%s10370 + $0xa8] sm:$0xff] %v10455
                %v10457 = vld [vmem:[%s10369 + $0xe8] sm:$0xff]
                %10458 = vst [vmem:[%s10370 + $0xe8] sm:$0xff] %v10457
                %v10459 = vld [vmem:[%s10369 + $0x128] sm:$0xff]
                %10460 = vst [vmem:[%s10370 + $0x128] sm:$0xff] %v10459
                %v10461 = vld [vmem:[%s10369 + $0x168] sm:$0xff]
                %10462 = vst [vmem:[%s10370 + $0x168] sm:$0xff] %v10461
                %v10463 = vld [vmem:[%s10369 + $0x1a8] sm:$0xff]
                %10464 = vst [vmem:[%s10370 + $0x1a8] sm:$0xff] %v10463
                %v10465 = vld [vmem:[%s10369 + $0x1e8] sm:$0xff]
                %10466 = vst [vmem:[%s10370 + $0x1e8] sm:$0xff] %v10465
                %v10467 = vld [vmem:[%s10369 + $0x30] sm:$0xff]
                %10468 = vst [vmem:[%s10370 + $0x30] sm:$0xff] %v10467
                %v10469 = vld [vmem:[%s10369 + $0x70] sm:$0xff]
                %10470 = vst [vmem:[%s10370 + $0x70] sm:$0xff] %v10469
                %v10471 = vld [vmem:[%s10369 + $0xb0] sm:$0xff]
                %10472 = vst [vmem:[%s10370 + $0xb0] sm:$0xff] %v10471
                %v10473 = vld [vmem:[%s10369 + $0xf0] sm:$0xff]
                %10474 = vst [vmem:[%s10370 + $0xf0] sm:$0xff] %v10473
                %v10475 = vld [vmem:[%s10369 + $0x130] sm:$0xff]
                %10476 = vst [vmem:[%s10370 + $0x130] sm:$0xff] %v10475
                %v10477 = vld [vmem:[%s10369 + $0x170] sm:$0xff]
                %10478 = vst [vmem:[%s10370 + $0x170] sm:$0xff] %v10477
                %v10479 = vld [vmem:[%s10369 + $0x1b0] sm:$0xff]
                %10480 = vst [vmem:[%s10370 + $0x1b0] sm:$0xff] %v10479
                %v10481 = vld [vmem:[%s10369 + $0x1f0] sm:$0xff]
                %10482 = vst [vmem:[%s10370 + $0x1f0] sm:$0xff] %v10481
                %v10483 = vld [vmem:[%s10369 + $0x38] sm:$0xff]
                %10484 = vst [vmem:[%s10370 + $0x38] sm:$0xff] %v10483
                %v10485 = vld [vmem:[%s10369 + $0x78] sm:$0xff]
                %10486 = vst [vmem:[%s10370 + $0x78] sm:$0xff] %v10485
                %v10487 = vld [vmem:[%s10369 + $0xb8] sm:$0xff]
                %10488 = vst [vmem:[%s10370 + $0xb8] sm:$0xff] %v10487
                %v10489 = vld [vmem:[%s10369 + $0xf8] sm:$0xff]
                %10490 = vst [vmem:[%s10370 + $0xf8] sm:$0xff] %v10489
                %v10491 = vld [vmem:[%s10369 + $0x138] sm:$0xff]
                %10492 = vst [vmem:[%s10370 + $0x138] sm:$0xff] %v10491
                %v10493 = vld [vmem:[%s10369 + $0x178] sm:$0xff]
                %10494 = vst [vmem:[%s10370 + $0x178] sm:$0xff] %v10493
                %v10495 = vld [vmem:[%s10369 + $0x1b8] sm:$0xff]
                %10496 = vst [vmem:[%s10370 + $0x1b8] sm:$0xff] %v10495
                %v10497 = vld [vmem:[%s10369 + $0x1f8] sm:$0xff]
                %10498 = vst [vmem:[%s10370 + $0x1f8] sm:$0xff] %v10497
                %s10499 = sadd.s32 1, %s10368
                %p10500 = scmp.ge.s32.totalorder %s10499, %s10361
                %s10501 = scalar_select %p10500, 0, %s10499
                %s10502 = smul.u32 %s10501, 512
                %s10503 = smul.u32 %s10501, 512
                %s10504 = scalar_lea.vmem %s10342, %s10502 [#allocation9]
                %s10505 = scalar_lea.vmem %s10355, %s10503
              $region73: #{vanilla_generator_forward.1} parent=67 // loop_footer
                %s10365 = sadd.s32 %s10363, 1
              $region74: #{vanilla_generator_forward.1} parent=67 // loop_footer_branch
                %10362 = sbr.rel target = $region70
              $region75: #{vanilla_generator_forward.1} parent=67 // loop_exit
                _
              %s10506 = sshrl.u32 %s10349, 3
              %s10507 = sand.u32 %s10349, 7
              %s10508 = smul.u32 %s10506, 8
              %s10509 = smul.u32 64, %s10508
              %s10510 = scalar_lea.vmem %s10342, %s10509 [#allocation9]
              %s10511 = smul.u32 64, %s10508
              %s10512 = scalar_lea.vmem %s10355, %s10511
              // While loop
              $region76: #{vanilla_generator_forward.1} parent=67 // loop_pre_header
                _
              $region77: #{vanilla_generator_forward.1} parent=67 // loop_header
                %s10514 = sphi 0, %s10516
                %p10515 = scmp.ge.s32.totalorder %s10514, %s10507
                %s10519 = sphi 0, %s10540
                %s10520 = sphi %s10510, %s10543
                %s10521 = sphi %s10512, %s10544
              $region78: #{vanilla_generator_forward.1} parent=67 // loop_header_branch
                %10518 = sbr.rel (%p10515) target = $region82
              $region79: #{vanilla_generator_forward.1} parent=67 // loop_body
                %v10522 = vld [vmem:[%s10520] sm:$0xff]
                %10523 = vst [vmem:[%s10521] sm:$0xff] %v10522
                %v10524 = vld [vmem:[%s10520 + $0x8] sm:$0xff]
                %10525 = vst [vmem:[%s10521 + $0x8] sm:$0xff] %v10524
                %v10526 = vld [vmem:[%s10520 + $0x10] sm:$0xff]
                %10527 = vst [vmem:[%s10521 + $0x10] sm:$0xff] %v10526
                %v10528 = vld [vmem:[%s10520 + $0x18] sm:$0xff]
                %10529 = vst [vmem:[%s10521 + $0x18] sm:$0xff] %v10528
                %v10530 = vld [vmem:[%s10520 + $0x20] sm:$0xff]
                %10531 = vst [vmem:[%s10521 + $0x20] sm:$0xff] %v10530
                %v10532 = vld [vmem:[%s10520 + $0x28] sm:$0xff]
                %10533 = vst [vmem:[%s10521 + $0x28] sm:$0xff] %v10532
                %v10534 = vld [vmem:[%s10520 + $0x30] sm:$0xff]
                %10535 = vst [vmem:[%s10521 + $0x30] sm:$0xff] %v10534
                %v10536 = vld [vmem:[%s10520 + $0x38] sm:$0xff]
                %10537 = vst [vmem:[%s10521 + $0x38] sm:$0xff] %v10536
                %s10538 = sadd.s32 1, %s10519
                %p10539 = scmp.ge.s32.totalorder %s10538, %s10507
                %s10540 = scalar_select %p10539, 0, %s10538
                %s10541 = smul.u32 %s10540, 64
                %s10542 = smul.u32 %s10540, 64
                %s10543 = scalar_lea.vmem %s10510, %s10541 [#allocation9]
                %s10544 = scalar_lea.vmem %s10512, %s10542
              $region80: #{vanilla_generator_forward.1} parent=67 // loop_footer
                %s10516 = sadd.s32 %s10514, 1
              $region81: #{vanilla_generator_forward.1} parent=67 // loop_footer_branch
                %10513 = sbr.rel target = $region77
              $region82: #{vanilla_generator_forward.1} parent=67 // loop_exit
                _
            $region68: #{vanilla_generator_forward.1} parent=63 // pred_fallthru
              _
            // Predicated region
            $region83: #{vanilla_generator_forward.1} parent=63 // pred_check
              _
            $region84: #{vanilla_generator_forward.1} parent=63 // pred_check_branch
              %10546 = sbr.rel target = $region86
            $region85: #{vanilla_generator_forward.1} parent=63 // pred_region
              _
            $region86: #{vanilla_generator_forward.1} parent=63 // pred_fallthru
              _
          $region64: #{vanilla_generator_forward.1} parent=59 // pred_fallthru
            _
          %10547 = vnop
        $region60: #{vanilla_generator_forward.1} parent=39 // pred_fallthru
          _
      $region40: #{vanilla_generator_forward.1} parent=5 // pred_fallthru
        _
      %p10548 = scmp.le.s32.totalorder 2, %s14
      // Predicated region
      $region87: #{vanilla_generator_forward.1} parent=5 // pred_check
        %p10549 = pneg %p10548
      $region88: #{vanilla_generator_forward.1} parent=5 // pred_check_branch
        %10551 = sbr.rel (%p10549) target = $region90
      $region89: #{vanilla_generator_forward.1} parent=5 // pred_region
        %s10552 = ssub.s32 %s14, 2
        // Predicated region
        $region91: #{vanilla_generator_forward.1} parent=89 // pred_check
          %p10553 = pneg %p153
        $region92: #{vanilla_generator_forward.1} parent=89 // pred_check_branch
          %10555 = sbr.rel (%p10553) target = $region94
        $region93: #{vanilla_generator_forward.1} parent=89 // pred_region
          %s10556 = sand.u32 %s138, 1
          %s10557 = sand.u32 %s138, 1
          %s10558 = smul.addr %s10557, 1280
          %s10559 = scalar_lea.vmem [#allocation9], %s10558
        $region94: #{vanilla_generator_forward.1} parent=89 // pred_fallthru
          _
      $region90: #{vanilla_generator_forward.1} parent=5 // pred_fallthru
        _
    $region6: #{vanilla_generator_forward.1} parent=1 // loop_footer
      %s18 = sadd.s32 1, %s14
    $region7: #{vanilla_generator_forward.1} parent=1 // loop_footer_branch
      %13 = sbr.rel target = $region3
    $region8: #{vanilla_generator_forward.1} parent=1 // loop_exit
      _
    %10560 = vsyncpa [#allocation3], 1
    %s10561 = scalar_lea.sflag [#allocation3], 1
    %10562 = vsyncpa %s10561, 1
    %10563 = vsyncpa [#allocation5], 1
    %10564 = vsyncpa [#allocation8], 1

</llo_original>
